<compile_context>
chip_gen: v7x
topology: tpu7x:2x2x1
jax: 0.10.0
libtpu: 0.0.40
codegen_flags: <defaults>
</compile_context>

<pallas_src>
import jax
import jax.numpy as jnp
from jax.experimental import pallas as pl
from jax.experimental.pallas import tpu as pltpu


VMEM_LIMIT = 32 * 1024 * 1024   # safe scoped limit on v5e/v6e (128 MiB) and v7x (64 MiB)


def _round_up(x, m):
    return (x + m - 1) // m * m


def _pick_tile(dim, cap):
    t = min(dim, cap)
    while t > 1 and dim % t != 0:
        t //= 2
    return max(t, 1)


def _pick_tn(n):
    # Aim for >= 4 lane-dense N blocks so every layer's grid has parallelism.
    cap = max(128, min(1024, n // 4))
    t = _pick_tile(n, cap)
    if t < 128 and n % 128 == 0:
        t = 128
    return t


# ------------------------------ Pallas kernels ------------------------------

def _mm_kernel(a_ref, b_ref, o_ref):
    """o = A @ B  (bf16 operands, f32 MXU accumulation, bf16 store)."""
    o_ref[...] = jnp.dot(a_ref[...], b_ref[...],
                         preferred_element_type=jnp.float32).astype(o_ref.dtype)


def _bn_relu_mm_kernel(a_ref, scale_ref, shift_ref, b_ref, o_ref):
    """o = relu(A*scale + shift) @ B  with per-K-column (= C_in channel)
    scale/shift: the previous layer's BatchNorm + ReLU fused into this
    matmul's A-load (no standalone activation pass)."""
    a = a_ref[...].astype(jnp.float32)
    a = jnp.maximum(a * scale_ref[...] + shift_ref[...], 0.0)
    o_ref[...] = jnp.dot(a.astype(jnp.bfloat16), b_ref[...],
                         preferred_element_type=jnp.float32).astype(o_ref.dtype)


# ----------------------------- Pallas wrappers -------------------------------

def _mm_grid_specs(M, K, N):
    tm = _pick_tile(M, 256)
    tn = _pick_tn(N)
    grid = (M // tm, N // tn)
    a_spec = pl.BlockSpec((tm, K), lambda i, j: (i, 0))
    b_spec = pl.BlockSpec((K, tn), lambda i, j: (0, j))
    o_spec = pl.BlockSpec((tm, tn), lambda i, j: (i, j))
    return grid, a_spec, b_spec, o_spec


def pallas_matmul(a, b):
    """(M,K) @ (K,N) -> bf16 (M,N).  Pads M up to 16 rows for tiny batches."""
    M0, K = a.shape
    _, N = b.shape
    M = _round_up(max(M0, 16), 16)
    if M != M0:
        a = jnp.pad(a, ((0, M - M0), (0, 0)))
    grid, a_spec, b_spec, o_spec = _mm_grid_specs(M, K, N)
    out = pl.pallas_call(
        _mm_kernel,
        out_shape=jax.ShapeDtypeStruct((M, N), jnp.bfloat16),
        grid=grid,
        in_specs=[a_spec, b_spec],
        out_specs=o_spec,
        compiler_params=pltpu.CompilerParams(
            dimension_semantics=("parallel", "parallel"),
            vmem_limit_bytes=VMEM_LIMIT),
    )(a.astype(jnp.bfloat16), b)
    return out[:M0] if M != M0 else out


def pallas_bn_relu_matmul(a, scale, shift, b):
    """relu(a*scale + shift) @ b -> bf16; scale/shift are per-C_in channel."""
    M, K = a.shape
    _, N = b.shape
    grid, a_spec, b_spec, o_spec = _mm_grid_specs(M, K, N)
    return pl.pallas_call(
        _bn_relu_mm_kernel,
        out_shape=jax.ShapeDtypeStruct((M, N), jnp.bfloat16),
        grid=grid,
        in_specs=[a_spec,
                  pl.BlockSpec((1, K), lambda i, j: (0, 0)),
                  pl.BlockSpec((1, K), lambda i, j: (0, 0)),
                  b_spec],
        out_specs=o_spec,
        compiler_params=pltpu.CompilerParams(
            dimension_semantics=("parallel", "parallel"),
            vmem_limit_bytes=VMEM_LIMIT),
    )(a.astype(jnp.bfloat16),
      scale.reshape(1, K).astype(jnp.float32),
      shift.reshape(1, K).astype(jnp.float32),
      b)


# ------------------------------ layer helpers --------------------------------

def _bn_scale_shift(x2d, gamma, beta, eps=1e-5):
    """Training-mode BatchNorm folded to a per-channel affine.

    Two-pass mean / centered variance in f32 (no E[x^2]-E[x]^2 cancellation).
    Conv biases of BN layers are omitted upstream: they cancel in (x - mean)."""
    xf = x2d.astype(jnp.float32)
    mean = jnp.mean(xf, axis=0)
    var = jnp.mean(jnp.square(xf - mean[None, :]), axis=0)     # biased, train mode
    scale = gamma * jax.lax.rsqrt(var + eps)
    shift = beta - mean * scale
    return scale, shift


def _assemble_stride2(y, n, h, w, c):
    """Sub-pixel assembly for ConvTranspose2d(k=4, s=2, p=1).

    y: (n*h*w, 16*c) per-input-pixel tap contributions, columns ordered
       (kh, kw, c_out).  Returns the (n, 2h, 2w, c) transposed-conv output, f32.

    1-D derivation (k=4, s=2, p=1):
        out[2m]   = tap1 . x[m] + tap3 . x[m-1]
        out[2m+1] = tap2 . x[m] + tap0 . x[m+1]
    """
    y = y.astype(jnp.float32).reshape(n, h, w, 4, 4, c)

    def sh(t, d, axis):                      # t[..., i, ...] -> t[..., i+d, ...] (zero-padded)
        if d == 0:
            return t
        pad = [(0, 0)] * 4
        if d < 0:
            idx = (slice(None),) * axis + (slice(None, d),)
            pad[axis] = (-d, 0)
        else:
            idx = (slice(None),) * axis + (slice(d, None),)
            pad[axis] = (0, d)
        return jnp.pad(t[idx], pad)

    taps = {0: ((1, 0), (3, -1)), 1: ((2, 0), (0, 1))}   # phase -> ((kernel idx, shift), ...)
    rows = []
    for pi in (0, 1):
        cols = []
        for pj in (0, 1):
            acc = None
            for kh, dh in taps[pi]:
                for kw, dw in taps[pj]:
                    term = sh(sh(y[:, :, :, kh, kw, :], dh, 1), dw, 2)
                    acc = term if acc is None else acc + term
            cols.append(acc)
        rows.append(jnp.stack(cols, axis=3))             # (n, h, w, 2, c)
    out = jnp.stack(rows, axis=2)                        # (n, h, 2, w, 2, c)
    return out.reshape(n, 2 * h, 2 * w, c)


def _deconv_block(a, scale, shift, w_packed, n, h, w, c_out):
    """Fused (prev BN + ReLU) -> ConvTranspose2d(k4,s2,p1) -> (n, 2h, 2w, c_out)."""
    y = pallas_bn_relu_matmul(a, scale, shift, w_packed)
    return _assemble_stride2(y[:, :16 * c_out], n, h, w, c_out)


# ----------------------------- weight packing --------------------------------

def _pack_convT_weight(w, k_pad=None):
    """PyTorch ConvTranspose2d weight (C_in, C_out, kh, kw) ->
    bf16 (C_in[_pad], kh*kw*C_out padded to a multiple of 128) matrix with
    columns ordered (kh, kw, c_out).  Done once, outside the jitted forward."""
    c_in, c_out, kh, kw = w.shape
    wp = jnp.transpose(w, (0, 2, 3, 1)).reshape(c_in, kh * kw * c_out)
    if k_pad is not None and k_pad > c_in:
        wp = jnp.pad(wp, ((0, k_pad - c_in), (0, 0)))
    ncols = wp.shape[1]
    npad = _round_up(ncols, 128)
    if npad > ncols:
        wp = jnp.pad(wp, ((0, 0), (0, npad - ncols)))
    return wp.astype(jnp.bfloat16)


def pack_params(p):
    z_dim = p["emb"].shape[1]
    return {
        "emb": p["emb"],
        "w1p": _pack_convT_weight(p["w1"], k_pad=_round_up(z_dim, 128)),
        "w2p": _pack_convT_weight(p["w2"]),
        "w3p": _pack_convT_weight(p["w3"]),
        "w4p": _pack_convT_weight(p["w4"]),
        "w5p": _pack_convT_weight(p["w5"]),
        "g1": p["g1"], "be1": p["be1"],
        "g2": p["g2"], "be2": p["be2"],
        "g3": p["g3"], "be3": p["be3"],
        "g4": p["g4"], "be4": p["be4"],
        "b5": p["b5"],
    }


# ------------------------------ full generator -------------------------------

def generator_forward(pp, z, y):
    # TODO(synk): the embedding gather, the per-layer sub-pixel shift-add
    # assembly, the BN statistic reductions and the final bias+tanh stay in
    # XLA on purpose: together they touch < 2 MB per forward, while all weight
    # traffic and MXU FLOPs run in the Pallas matmul kernels.
    x = pp["emb"][y] * z                                   # (B, 100)
    bsz, zdim = x.shape
    k0 = pp["w1p"].shape[0]                                # 128 (lane-dense K)
    x = jnp.pad(x, ((0, 0), (0, k0 - zdim)))

    # layer 1: ConvT(100->512, k4, s1, p0) on a 1x1 map == a single matmul.
    c1 = pp["g1"].shape[0]
    y1 = pallas_matmul(x, pp["w1p"])                       # (B, 16*512) bf16
    a1 = y1.reshape(bsz * 16, c1)                          # rows = (b, oh, ow)
    s1, t1 = _bn_scale_shift(a1, pp["g1"], pp["be1"])

    # layers 2-4: ConvT(k4,s2,p1) with the previous BN+ReLU fused into A-load.
    layer_cfg = [(pp["w2p"], pp["g2"], pp["be2"], 4, 4),
                 (pp["w3p"], pp["g3"], pp["be3"], 8, 8),
                 (pp["w4p"], pp["g4"], pp["be4"], 16, 16)]
    a, s, t = a1, s1, t1
    for w_p, g, be, hh, ww in layer_cfg:
        c_out = g.shape[0]
        xo = _deconv_block(a, s, t, w_p, bsz, hh, ww, c_out)   # (B, 2h, 2w, c)
        flat = xo.reshape(-1, c_out)
        s, t = _bn_scale_shift(flat, g, be)
        a = flat.astype(jnp.bfloat16)

    # layer 5: ConvT(64->3, k4, s2, p1) with fused BN4+ReLU; bias + tanh on
    # the 3 real channels only (padded lanes never reach the EUP).
    c5 = pp["b5"].shape[0]
    x5 = _deconv_block(a, s, t, pp["w5p"], bsz, 32, 32, c5)    # (B, 64, 64, 3)
    out = jnp.tanh(x5 + pp["b5"].reshape(1, 1, 1, -1))
    return jnp.transpose(out, (0, 3, 1, 2))                    # NCHW, f32


# ------------------------------ parameter init -------------------------------

def init_params(key, n_class=10, z_dim=100, out_channels=3):
    ks = jax.random.split(key, 6)

    def wn(k, shape, std=0.02):
        return (std * jax.random.normal(k, shape)).astype(jnp.float32)

    # Conv biases b1..b4 exist in the PyTorch module but are mathematically
    # cancelled by the training-mode BatchNorm that follows -> kept only for
    # parameter-set fidelity, never used.
    return {
        "emb": jax.random.normal(ks[0], (n_class, z_dim)).astype(jnp.float32),
        # ConvTranspose2d weights in PyTorch layout (C_in, C_out, kH, kW)
        "w1": wn(ks[1], (100, 512, 4, 4)), "b1": jnp.zeros((512,), jnp.float32),
        "g1": jnp.ones((512,), jnp.float32), "be1": jnp.zeros((512,), jnp.float32),
        "w2": wn(ks[2], (512, 256, 4, 4)), "b2": jnp.zeros((256,), jnp.float32),
        "g2": jnp.ones((256,), jnp.float32), "be2": jnp.zeros((256,), jnp.float32),
        "w3": wn(ks[3], (256, 128, 4, 4)), "b3": jnp.zeros((128,), jnp.float32),
        "g3": jnp.ones((128,), jnp.float32), "be3": jnp.zeros((128,), jnp.float32),
        "w4": wn(ks[4], (128, 64, 4, 4)), "b4": jnp.zeros((64,), jnp.float32),
        "g4": jnp.ones((64,), jnp.float32), "be4": jnp.zeros((64,), jnp.float32),
        "w5": wn(ks[5], (64, out_channels, 4, 4)),
        "b5": jnp.zeros((out_channels,), jnp.float32),
    }


# ---------------------------------- main --------------------------------------

if __name__ == "__main__":
    key = jax.random.PRNGKey(0)
    k_param, k_z, k_y = jax.random.split(key, 3)

    B, Z_DIM, N_CLASS = 2, 100, 10
    raw_params = init_params(k_param, n_class=N_CLASS, z_dim=Z_DIM, out_channels=3)
    params = pack_params(raw_params)        # one-time weight packing, outside jit

    z = jax.random.normal(k_z, (B, Z_DIM), dtype=jnp.float32)
    y = jax.random.randint(k_y, (B,), 0, N_CLASS, dtype=jnp.int32)

    fwd = jax.jit(generator_forward)
    out = jax.block_until_ready(fwd(params, z, y))

    assert out.shape == (B, 3, 64, 64), out.shape
    assert out.dtype == jnp.float32
    assert bool(jnp.all(jnp.isfinite(out)))
    assert bool(jnp.all(jnp.abs(out) <= 1.0 + 1e-6))   # tanh range

    print("KERNEL_OK")
</pallas_src>

<mosaic_0001>
module attributes {stable_mosaic.version = 11 : i64} {
  func.func @_mm_kernel(%arg0: i32, %arg1: i32, %arg2: memref<16x128xbf16, #tpu.memory_space<vmem>>, %arg3: memref<128x1024xbf16, #tpu.memory_space<vmem>>, %arg4: memref<16x1024xbf16, #tpu.memory_space<vmem>>) attributes {dimension_semantics = [#tpu.dimension_semantics<parallel>, #tpu.dimension_semantics<parallel>], iteration_bounds = array<i64: 1, 8>, scalar_prefetch = 0 : i64, scratch_operands = 0 : i64, tpu.core_type = #tpu.core_type<tc>, window_params = [{transform_indices = @transform_0, window_bounds = array<i64: 16, 128>}, {transform_indices = @transform_1, window_bounds = array<i64: 128, 1024>}, {transform_indices = @transform_2, window_bounds = array<i64: 16, 1024>}]} {
    %c0 = arith.constant 0 : index
    %c0_0 = arith.constant 0 : index
    %0 = vector.load %arg2[%c0, %c0_0] : memref<16x128xbf16, #tpu.memory_space<vmem>>, vector<16x128xbf16>
    %c0_1 = arith.constant 0 : index
    %c0_2 = arith.constant 0 : index
    %1 = vector.load %arg3[%c0_1, %c0_2] : memref<128x1024xbf16, #tpu.memory_space<vmem>>, vector<128x1024xbf16>
    %cst = arith.constant dense<0.000000e+00> : vector<16x1024xf32>
    %2 = tpu.matmul %0, %1, %cst {dimension_numbers = #tpu.dot_dimension_numbers<[1], [0], [0], [1], [0, 0, 1, 1], [], []>} : vector<16x128xbf16>, vector<128x1024xbf16>, vector<16x1024xf32> -> vector<16x1024xf32>
    %3 = arith.truncf %2 : vector<16x1024xf32> to vector<16x1024xbf16>
    %c0_3 = arith.constant 0 : index
    %c0_4 = arith.constant 0 : index
    %4 = vector.load %arg4[%c0_3, %c0_4] : memref<16x1024xbf16, #tpu.memory_space<vmem>>, vector<16x1024xbf16>
    tpu.vector_store %arg4[%c0_3, %c0_4], %3 {strides = array<i32>} : memref<16x1024xbf16, #tpu.memory_space<vmem>>, vector<16x1024xbf16>,
    return
  }
  func.func @transform_0(%arg0: i32, %arg1: i32) -> (i32, i32) {
    %c0_i32 = arith.constant 0 : i32
    %c0_i32_0 = arith.constant 0 : i32
    return %arg0, %c0_i32 : i32, i32
  }
  func.func @transform_1(%arg0: i32, %arg1: i32) -> (i32, i32) {
    %c0_i32 = arith.constant 0 : i32
    %c0_i32_0 = arith.constant 0 : i32
    return %c0_i32, %arg1 : i32, i32
  }
  func.func @transform_2(%arg0: i32, %arg1: i32) -> (i32, i32) {
    %c0_i32 = arith.constant 0 : i32
    return %arg0, %arg1 : i32, i32
  }
}

module attributes {stable_mosaic.version = 11 : i64} {
  func.func @_bn_relu_mm_kernel(%arg0: i32, %arg1: i32, %arg2: memref<32x512xbf16, #tpu.memory_space<vmem>>, %arg3: memref<1x512xf32, #tpu.memory_space<vmem>>, %arg4: memref<1x512xf32, #tpu.memory_space<vmem>>, %arg5: memref<512x1024xbf16, #tpu.memory_space<vmem>>, %arg6: memref<32x1024xbf16, #tpu.memory_space<vmem>>) attributes {dimension_semantics = [#tpu.dimension_semantics<parallel>, #tpu.dimension_semantics<parallel>], iteration_bounds = array<i64: 1, 4>, scalar_prefetch = 0 : i64, scratch_operands = 0 : i64, tpu.core_type = #tpu.core_type<tc>, window_params = [{transform_indices = @transform_0, window_bounds = array<i64: 32, 512>}, {pipeline_mode = #tpu.pipeline_mode<synchronous>, transform_indices = @transform_1, window_bounds = array<i64: 1, 512>}, {pipeline_mode = #tpu.pipeline_mode<synchronous>, transform_indices = @transform_2, window_bounds = array<i64: 1, 512>}, {transform_indices = @transform_3, window_bounds = array<i64: 512, 1024>}, {transform_indices = @transform_4, window_bounds = array<i64: 32, 1024>}]} {
    %c0 = arith.constant 0 : index
    %c0_0 = arith.constant 0 : index
    %0 = vector.load %arg2[%c0, %c0_0] : memref<32x512xbf16, #tpu.memory_space<vmem>>, vector<32x512xbf16>
    %1 = arith.extf %0 : vector<32x512xbf16> to vector<32x512xf32>
    %c0_1 = arith.constant 0 : index
    %c0_2 = arith.constant 0 : index
    %2 = vector.load %arg3[%c0_1, %c0_2] : memref<1x512xf32, #tpu.memory_space<vmem>>, vector<1x512xf32>
    %3 = vector.broadcast %2 : vector<1x512xf32> to vector<32x512xf32>
    %4 = arith.mulf %1, %3 : vector<32x512xf32>
    %c0_3 = arith.constant 0 : index
    %c0_4 = arith.constant 0 : index
    %5 = vector.load %arg4[%c0_3, %c0_4] : memref<1x512xf32, #tpu.memory_space<vmem>>, vector<1x512xf32>
    %6 = vector.broadcast %5 : vector<1x512xf32> to vector<32x512xf32>
    %7 = arith.addf %4, %6 : vector<32x512xf32>
    %cst = arith.constant 0.000000e+00 : f32
    %8 = vector.broadcast %cst : f32 to vector<32x512xf32>
    %9 = arith.maximumf %7, %8 : vector<32x512xf32>
    %10 = arith.truncf %9 : vector<32x512xf32> to vector<32x512xbf16>
    %c0_5 = arith.constant 0 : index
    %c0_6 = arith.constant 0 : index
    %11 = vector.load %arg5[%c0_5, %c0_6] : memref<512x1024xbf16, #tpu.memory_space<vmem>>, vector<512x1024xbf16>
    %cst_7 = arith.constant dense<0.000000e+00> : vector<32x1024xf32>
    %12 = tpu.matmul %10, %11, %cst_7 {dimension_numbers = #tpu.dot_dimension_numbers<[1], [0], [0], [1], [0, 0, 1, 1], [], []>} : vector<32x512xbf16>, vector<512x1024xbf16>, vector<32x1024xf32> -> vector<32x1024xf32>
    %13 = arith.truncf %12 : vector<32x1024xf32> to vector<32x1024xbf16>
    %c0_8 = arith.constant 0 : index
    %c0_9 = arith.constant 0 : index
    %14 = vector.load %arg6[%c0_8, %c0_9] : memref<32x1024xbf16, #tpu.memory_space<vmem>>, vector<32x1024xbf16>
    tpu.vector_store %arg6[%c0_8, %c0_9], %13 {strides = array<i32>} : memref<32x1024xbf16, #tpu.memory_space<vmem>>, vector<32x1024xbf16>,
    return
  }
  func.func @transform_0(%arg0: i32, %arg1: i32) -> (i32, i32) {
    %c0_i32 = arith.constant 0 : i32
    %c0_i32_0 = arith.constant 0 : i32
    return %arg0, %c0_i32 : i32, i32
  }
  func.func @transform_1(%arg0: i32, %arg1: i32) -> (i32, i32) {
    %c0_i32 = arith.constant 0 : i32
    %c0_i32_0 = arith.constant 0 : i32
    %c0_i32_1 = arith.constant 0 : i32
    return %c0_i32, %c0_i32_0 : i32, i32
  }
  func.func @transform_2(%arg0: i32, %arg1: i32) -> (i32, i32) {
    %c0_i32 = arith.constant 0 : i32
    %c0_i32_0 = arith.constant 0 : i32
    %c0_i32_1 = arith.constant 0 : i32
    return %c0_i32, %c0_i32_0 : i32, i32
  }
  func.func @transform_3(%arg0: i32, %arg1: i32) -> (i32, i32) {
    %c0_i32 = arith.constant 0 : i32
    %c0_i32_0 = arith.constant 0 : i32
    return %c0_i32, %arg1 : i32, i32
  }
  func.func @transform_4(%arg0: i32, %arg1: i32) -> (i32, i32) {
    %c0_i32 = arith.constant 0 : i32
    return %arg0, %arg1 : i32, i32
  }
}

module attributes {stable_mosaic.version = 11 : i64} {
  func.func @_bn_relu_mm_kernel(%arg0: i32, %arg1: i32, %arg2: memref<128x256xbf16, #tpu.memory_space<vmem>>, %arg3: memref<1x256xf32, #tpu.memory_space<vmem>>, %arg4: memref<1x256xf32, #tpu.memory_space<vmem>>, %arg5: memref<256x512xbf16, #tpu.memory_space<vmem>>, %arg6: memref<128x512xbf16, #tpu.memory_space<vmem>>) attributes {dimension_semantics = [#tpu.dimension_semantics<parallel>, #tpu.dimension_semantics<parallel>], iteration_bounds = array<i64: 1, 4>, scalar_prefetch = 0 : i64, scratch_operands = 0 : i64, tpu.core_type = #tpu.core_type<tc>, window_params = [{transform_indices = @transform_0, window_bounds = array<i64: 128, 256>}, {pipeline_mode = #tpu.pipeline_mode<synchronous>, transform_indices = @transform_1, window_bounds = array<i64: 1, 256>}, {pipeline_mode = #tpu.pipeline_mode<synchronous>, transform_indices = @transform_2, window_bounds = array<i64: 1, 256>}, {transform_indices = @transform_3, window_bounds = array<i64: 256, 512>}, {transform_indices = @transform_4, window_bounds = array<i64: 128, 512>}]} {
    %c0 = arith.constant 0 : index
    %c0_0 = arith.constant 0 : index
    %0 = vector.load %arg2[%c0, %c0_0] : memref<128x256xbf16, #tpu.memory_space<vmem>>, vector<128x256xbf16>
    %1 = arith.extf %0 : vector<128x256xbf16> to vector<128x256xf32>
    %c0_1 = arith.constant 0 : index
    %c0_2 = arith.constant 0 : index
    %2 = vector.load %arg3[%c0_1, %c0_2] : memref<1x256xf32, #tpu.memory_space<vmem>>, vector<1x256xf32>
    %3 = vector.broadcast %2 : vector<1x256xf32> to vector<128x256xf32>
    %4 = arith.mulf %1, %3 : vector<128x256xf32>
    %c0_3 = arith.constant 0 : index
    %c0_4 = arith.constant 0 : index
    %5 = vector.load %arg4[%c0_3, %c0_4] : memref<1x256xf32, #tpu.memory_space<vmem>>, vector<1x256xf32>
    %6 = vector.broadcast %5 : vector<1x256xf32> to vector<128x256xf32>
    %7 = arith.addf %4, %6 : vector<128x256xf32>
    %cst = arith.constant 0.000000e+00 : f32
    %8 = vector.broadcast %cst : f32 to vector<128x256xf32>
    %9 = arith.maximumf %7, %8 : vector<128x256xf32>
    %10 = arith.truncf %9 : vector<128x256xf32> to vector<128x256xbf16>
    %c0_5 = arith.constant 0 : index
    %c0_6 = arith.constant 0 : index
    %11 = vector.load %arg5[%c0_5, %c0_6] : memref<256x512xbf16, #tpu.memory_space<vmem>>, vector<256x512xbf16>
    %cst_7 = arith.constant dense<0.000000e+00> : vector<128x512xf32>
    %12 = tpu.matmul %10, %11, %cst_7 {dimension_numbers = #tpu.dot_dimension_numbers<[1], [0], [0], [1], [0, 0, 1, 1], [], []>} : vector<128x256xbf16>, vector<256x512xbf16>, vector<128x512xf32> -> vector<128x512xf32>
    %13 = arith.truncf %12 : vector<128x512xf32> to vector<128x512xbf16>
    %c0_8 = arith.constant 0 : index
    %c0_9 = arith.constant 0 : index
    %14 = vector.load %arg6[%c0_8, %c0_9] : memref<128x512xbf16, #tpu.memory_space<vmem>>, vector<128x512xbf16>
    tpu.vector_store %arg6[%c0_8, %c0_9], %13 {strides = array<i32>} : memref<128x512xbf16, #tpu.memory_space<vmem>>, vector<128x512xbf16>,
    return
  }
  func.func @transform_0(%arg0: i32, %arg1: i32) -> (i32, i32) {
    %c0_i32 = arith.constant 0 : i32
    %c0_i32_0 = arith.constant 0 : i32
    return %arg0, %c0_i32 : i32, i32
  }
  func.func @transform_1(%arg0: i32, %arg1: i32) -> (i32, i32) {
    %c0_i32 = arith.constant 0 : i32
    %c0_i32_0 = arith.constant 0 : i32
    %c0_i32_1 = arith.constant 0 : i32
    return %c0_i32, %c0_i32_0 : i32, i32
  }
  func.func @transform_2(%arg0: i32, %arg1: i32) -> (i32, i32) {
    %c0_i32 = arith.constant 0 : i32
    %c0_i32_0 = arith.constant 0 : i32
    %c0_i32_1 = arith.constant 0 : i32
    return %c0_i32, %c0_i32_0 : i32, i32
  }
  func.func @transform_3(%arg0: i32, %arg1: i32) -> (i32, i32) {
    %c0_i32 = arith.constant 0 : i32
    %c0_i32_0 = arith.constant 0 : i32
    return %c0_i32, %arg1 : i32, i32
  }
  func.func @transform_4(%arg0: i32, %arg1: i32) -> (i32, i32) {
    %c0_i32 = arith.constant 0 : i32
    return %arg0, %arg1 : i32, i32
  }
}

module attributes {stable_mosaic.version = 11 : i64} {
  func.func @_bn_relu_mm_kernel(%arg0: i32, %arg1: i32, %arg2: memref<256x128xbf16, #tpu.memory_space<vmem>>, %arg3: memref<1x128xf32, #tpu.memory_space<vmem>>, %arg4: memref<1x128xf32, #tpu.memory_space<vmem>>, %arg5: memref<128x256xbf16, #tpu.memory_space<vmem>>, %arg6: memref<256x256xbf16, #tpu.memory_space<vmem>>) attributes {dimension_semantics = [#tpu.dimension_semantics<parallel>, #tpu.dimension_semantics<parallel>], iteration_bounds = array<i64: 2, 4>, scalar_prefetch = 0 : i64, scratch_operands = 0 : i64, tpu.core_type = #tpu.core_type<tc>, window_params = [{transform_indices = @transform_0, window_bounds = array<i64: 256, 128>}, {pipeline_mode = #tpu.pipeline_mode<synchronous>, transform_indices = @transform_1, window_bounds = array<i64: 1, 128>}, {pipeline_mode = #tpu.pipeline_mode<synchronous>, transform_indices = @transform_2, window_bounds = array<i64: 1, 128>}, {transform_indices = @transform_3, window_bounds = array<i64: 128, 256>}, {transform_indices = @transform_4, window_bounds = array<i64: 256, 256>}]} {
    %c0 = arith.constant 0 : index
    %c0_0 = arith.constant 0 : index
    %0 = vector.load %arg2[%c0, %c0_0] : memref<256x128xbf16, #tpu.memory_space<vmem>>, vector<256x128xbf16>
    %1 = arith.extf %0 : vector<256x128xbf16> to vector<256x128xf32>
    %c0_1 = arith.constant 0 : index
    %c0_2 = arith.constant 0 : index
    %2 = vector.load %arg3[%c0_1, %c0_2] : memref<1x128xf32, #tpu.memory_space<vmem>>, vector<1x128xf32>
    %3 = vector.broadcast %2 : vector<1x128xf32> to vector<256x128xf32>
    %4 = arith.mulf %1, %3 : vector<256x128xf32>
    %c0_3 = arith.constant 0 : index
    %c0_4 = arith.constant 0 : index
    %5 = vector.load %arg4[%c0_3, %c0_4] : memref<1x128xf32, #tpu.memory_space<vmem>>, vector<1x128xf32>
    %6 = vector.broadcast %5 : vector<1x128xf32> to vector<256x128xf32>
    %7 = arith.addf %4, %6 : vector<256x128xf32>
    %cst = arith.constant 0.000000e+00 : f32
    %8 = vector.broadcast %cst : f32 to vector<256x128xf32>
    %9 = arith.maximumf %7, %8 : vector<256x128xf32>
    %10 = arith.truncf %9 : vector<256x128xf32> to vector<256x128xbf16>
    %c0_5 = arith.constant 0 : index
    %c0_6 = arith.constant 0 : index
    %11 = vector.load %arg5[%c0_5, %c0_6] : memref<128x256xbf16, #tpu.memory_space<vmem>>, vector<128x256xbf16>
    %cst_7 = arith.constant dense<0.000000e+00> : vector<256x256xf32>
    %12 = tpu.matmul %10, %11, %cst_7 {dimension_numbers = #tpu.dot_dimension_numbers<[1], [0], [0], [1], [0, 0, 1, 1], [], []>} : vector<256x128xbf16>, vector<128x256xbf16>, vector<256x256xf32> -> vector<256x256xf32>
    %13 = arith.truncf %12 : vector<256x256xf32> to vector<256x256xbf16>
    %c0_8 = arith.constant 0 : index
    %c0_9 = arith.constant 0 : index
    %14 = vector.load %arg6[%c0_8, %c0_9] : memref<256x256xbf16, #tpu.memory_space<vmem>>, vector<256x256xbf16>
    tpu.vector_store %arg6[%c0_8, %c0_9], %13 {strides = array<i32>} : memref<256x256xbf16, #tpu.memory_space<vmem>>, vector<256x256xbf16>,
    return
  }
  func.func @transform_0(%arg0: i32, %arg1: i32) -> (i32, i32) {
    %c0_i32 = arith.constant 0 : i32
    %c0_i32_0 = arith.constant 0 : i32
    return %arg0, %c0_i32 : i32, i32
  }
  func.func @transform_1(%arg0: i32, %arg1: i32) -> (i32, i32) {
    %c0_i32 = arith.constant 0 : i32
    %c0_i32_0 = arith.constant 0 : i32
    %c0_i32_1 = arith.constant 0 : i32
    return %c0_i32, %c0_i32_0 : i32, i32
  }
  func.func @transform_2(%arg0: i32, %arg1: i32) -> (i32, i32) {
    %c0_i32 = arith.constant 0 : i32
    %c0_i32_0 = arith.constant 0 : i32
    %c0_i32_1 = arith.constant 0 : i32
    return %c0_i32, %c0_i32_0 : i32, i32
  }
  func.func @transform_3(%arg0: i32, %arg1: i32) -> (i32, i32) {
    %c0_i32 = arith.constant 0 : i32
    %c0_i32_0 = arith.constant 0 : i32
    return %c0_i32, %arg1 : i32, i32
  }
  func.func @transform_4(%arg0: i32, %arg1: i32) -> (i32, i32) {
    %c0_i32 = arith.constant 0 : i32
    return %arg0, %arg1 : i32, i32
  }
}

module attributes {stable_mosaic.version = 11 : i64} {
  func.func @_bn_relu_mm_kernel(%arg0: i32, %arg1: i32, %arg2: memref<256x64xbf16, #tpu.memory_space<vmem>>, %arg3: memref<1x64xf32, #tpu.memory_space<vmem>>, %arg4: memref<1x64xf32, #tpu.memory_space<vmem>>, %arg5: memref<64x128xbf16, #tpu.memory_space<vmem>>, %arg6: memref<256x128xbf16, #tpu.memory_space<vmem>>) attributes {dimension_semantics = [#tpu.dimension_semantics<parallel>, #tpu.dimension_semantics<parallel>], iteration_bounds = array<i64: 8, 1>, scalar_prefetch = 0 : i64, scratch_operands = 0 : i64, tpu.core_type = #tpu.core_type<tc>, window_params = [{transform_indices = @transform_0, window_bounds = array<i64: 256, 64>}, {pipeline_mode = #tpu.pipeline_mode<synchronous>, transform_indices = @transform_1, window_bounds = array<i64: 1, 64>}, {pipeline_mode = #tpu.pipeline_mode<synchronous>, transform_indices = @transform_2, window_bounds = array<i64: 1, 64>}, {transform_indices = @transform_3, window_bounds = array<i64: 64, 128>}, {transform_indices = @transform_4, window_bounds = array<i64: 256, 128>}]} {
    %c0 = arith.constant 0 : index
    %c0_0 = arith.constant 0 : index
    %0 = vector.load %arg2[%c0, %c0_0] : memref<256x64xbf16, #tpu.memory_space<vmem>>, vector<256x64xbf16>
    %1 = arith.extf %0 : vector<256x64xbf16> to vector<256x64xf32>
    %c0_1 = arith.constant 0 : index
    %c0_2 = arith.constant 0 : index
    %2 = vector.load %arg3[%c0_1, %c0_2] : memref<1x64xf32, #tpu.memory_space<vmem>>, vector<1x64xf32>
    %3 = vector.broadcast %2 : vector<1x64xf32> to vector<256x64xf32>
    %4 = arith.mulf %1, %3 : vector<256x64xf32>
    %c0_3 = arith.constant 0 : index
    %c0_4 = arith.constant 0 : index
    %5 = vector.load %arg4[%c0_3, %c0_4] : memref<1x64xf32, #tpu.memory_space<vmem>>, vector<1x64xf32>
    %6 = vector.broadcast %5 : vector<1x64xf32> to vector<256x64xf32>
    %7 = arith.addf %4, %6 : vector<256x64xf32>
    %cst = arith.constant 0.000000e+00 : f32
    %8 = vector.broadcast %cst : f32 to vector<256x64xf32>
    %9 = arith.maximumf %7, %8 : vector<256x64xf32>
    %10 = arith.truncf %9 : vector<256x64xf32> to vector<256x64xbf16>
    %c0_5 = arith.constant 0 : index
    %c0_6 = arith.constant 0 : index
    %11 = vector.load %arg5[%c0_5, %c0_6] : memref<64x128xbf16, #tpu.memory_space<vmem>>, vector<64x128xbf16>
    %cst_7 = arith.constant dense<0.000000e+00> : vector<256x128xf32>
    %12 = tpu.matmul %10, %11, %cst_7 {dimension_numbers = #tpu.dot_dimension_numbers<[1], [0], [0], [1], [0, 0, 1, 1], [], []>} : vector<256x64xbf16>, vector<64x128xbf16>, vector<256x128xf32> -> vector<256x128xf32>
    %13 = arith.truncf %12 : vector<256x128xf32> to vector<256x128xbf16>
    %c0_8 = arith.constant 0 : index
    %c0_9 = arith.constant 0 : index
    %14 = vector.load %arg6[%c0_8, %c0_9] : memref<256x128xbf16, #tpu.memory_space<vmem>>, vector<256x128xbf16>
    tpu.vector_store %arg6[%c0_8, %c0_9], %13 {strides = array<i32>} : memref<256x128xbf16, #tpu.memory_space<vmem>>, vector<256x128xbf16>,
    return
  }
  func.func @transform_0(%arg0: i32, %arg1: i32) -> (i32, i32) {
    %c0_i32 = arith.constant 0 : i32
    %c0_i32_0 = arith.constant 0 : i32
    return %arg0, %c0_i32 : i32, i32
  }
  func.func @transform_1(%arg0: i32, %arg1: i32) -> (i32, i32) {
    %c0_i32 = arith.constant 0 : i32
    %c0_i32_0 = arith.constant 0 : i32
    %c0_i32_1 = arith.constant 0 : i32
    return %c0_i32, %c0_i32_0 : i32, i32
  }
  func.func @transform_2(%arg0: i32, %arg1: i32) -> (i32, i32) {
    %c0_i32 = arith.constant 0 : i32
    %c0_i32_0 = arith.constant 0 : i32
    %c0_i32_1 = arith.constant 0 : i32
    return %c0_i32, %c0_i32_0 : i32, i32
  }
  func.func @transform_3(%arg0: i32, %arg1: i32) -> (i32, i32) {
    %c0_i32 = arith.constant 0 : i32
    %c0_i32_0 = arith.constant 0 : i32
    return %c0_i32, %arg1 : i32, i32
  }
  func.func @transform_4(%arg0: i32, %arg1: i32) -> (i32, i32) {
    %c0_i32 = arith.constant 0 : i32
    return %arg0, %arg1 : i32, i32
  }
}

</mosaic_0001>

<llo_original>
// kernel: generator_forward.5
$region0: #{generator_forward.5}
  #allocation0 [shape = 'u32[]', space=smem, size = 0x4, offset = 0x4, fixed_abs, tag = 'smem constant byte address 0x4 - core index']
  #allocation1 [shape = 'u32[144,128]{1,0:T(1,128)}', space=vmem, size = 0x12000, scoped, tag = 'internal scratch']
  %s0 = inlined_call_operand.vmem [shape: bf16[16,128], index: 0, kind: input, shape index: {}]
  %s1 = inlined_call_operand.hbm [shape: bf16[128,8192], index: 1, kind: input, shape index: {}]
  %s2 = inlined_call_operand.vmem [shape: bf16[16,8192], index: 2, kind: output, shape index: {}]
  %s3 = sld [smem:[#allocation0]]
  $region64: #{generator_forward.5} parent=0
    _
  %s5 = ssub.s32 1, %s3
  %s6 = scalar_select 0, %s5, %s3
  $region1: #{generator_forward.5} parent=0
    #allocation2 [shape = 'u8[524288]{0}', space=vmem, size = 0x80000, scoped, tag = 'input window, operand 1']
    #allocation3 [shape = 's32[2]{0}', space=sflag, size = 0x8, scoped, tag = 'scoped memory for generator_forward.5']
    #allocation4 [shape = 'u8[65536]{0}', space=vmem, size = 0x10000, scoped, tag = 'output window, operand 0']
    %7 = vsyncpa [#allocation3], 0
    %s8 = scalar_lea.sflag [#allocation3], 1
    %9 = vsyncpa %s8, 0
    loop: start=0, step=1, limit=10
    $region2: #{generator_forward.5} parent=1 // loop_pre_header
      _
    $region3: #{generator_forward.5} parent=1 // loop_header
      %s11 = sphi 0, %s15
      %p12 = scmp.ge.s32.totalorder %s11, 10
      %s18 = sphi 0, %s30
      %s19 = sphi 0, %s26
      %s20 = sphi 0, %s18
      %s21 = sphi 0, %s19
      %s22 = sphi 0, %s20
      %s23 = sphi 0, %s21
      %s33 = sphi 0, %s35
      %s36 = sphi 0, %s33
      %s37 = sphi 0, %s36
      %s53 = sphi 0, %s37
      %s59 = sphi 0, %s61
      %s62 = sphi 0, %s59
      %s63 = sphi 0, %s62
      %s79 = sphi 0, %s63
      %s87 = sphi 0, %s89
      %s90 = sphi 0, %s87
      %s91 = sphi 0, %s90
      %s107 = sphi 0, %s91
    $region4: #{generator_forward.5} parent=1 // loop_header_branch
      %14 = sbr.rel (%p12) target = $region8
    $region5: #{generator_forward.5} parent=1 // loop_body
      %s16 = ssub.s32 %s11, 1
      %s17 = ssub.s32 %s11, 2
      %s24 = sadd.s32 1, %s19
      %p25 = scmp.ge.s32.totalorder %s24, 8
      %s26 = scalar_select %p25, 0, %s24
      %s27 = sadd.s32 1, %s18
      %s28 = scalar_select %p25, %s27, %s18
      %p29 = scmp.ge.s32.totalorder %s28, 1
      %s30 = scalar_select %p29, 0, %s28
      %s31 = ssub.s32 %s18, %s30
      %p32 = scmp.eq.s32.totalorder %s31, 0
      %s34 = sadd.s32 %s33, 1
      %s35 = scalar_select %p32, %s33, %s34
      %p38 = pneg %p32
      %p39 = scmp.eq.s32.totalorder %s11, 7
      %p40 = por %p38, %p39
      %p41 = scmp.ne.s32.totalorder %s33, %s36
      %p42 = scmp.eq.s32.totalorder %s11, 0
      %p43 = por %p41, %p42
      %p44 = scmp.ne.s32.totalorder %s33, %s36
      %p45 = scmp.eq.s32.totalorder %s16, 7
      %p46 = por %p44, %p45
      %p47 = scmp.ne.s32.totalorder %s36, %s37
      %p48 = scmp.eq.s32.totalorder %s16, 0
      %p49 = por %p47, %p48
      %p50 = scmp.ne.s32.totalorder %s36, %s37
      %p51 = scmp.eq.s32.totalorder %s17, 7
      %p52 = por %p50, %p51
      %p54 = scmp.ne.s32.totalorder %s37, %s53
      %p55 = scmp.eq.s32.totalorder %s17, 0
      %p56 = por %p54, %p55
      %s57 = ssub.s32 %s19, %s26
      %p58 = scmp.eq.s32.totalorder %s57, 0
      %s60 = sadd.s32 %s59, 1
      %s61 = scalar_select %p58, %s59, %s60
      %p64 = pneg %p58
      %p65 = scmp.eq.s32.totalorder %s11, 7
      %p66 = por %p64, %p65
      %p67 = scmp.ne.s32.totalorder %s59, %s62
      %p68 = scmp.eq.s32.totalorder %s11, 0
      %p69 = por %p67, %p68
      %p70 = scmp.ne.s32.totalorder %s59, %s62
      %p71 = scmp.eq.s32.totalorder %s16, 7
      %p72 = por %p70, %p71
      %p73 = scmp.ne.s32.totalorder %s62, %s63
      %p74 = scmp.eq.s32.totalorder %s16, 0
      %p75 = por %p73, %p74
      %p76 = scmp.ne.s32.totalorder %s62, %s63
      %p77 = scmp.eq.s32.totalorder %s17, 7
      %p78 = por %p76, %p77
      %p80 = scmp.ne.s32.totalorder %s63, %s79
      %p81 = scmp.eq.s32.totalorder %s17, 0
      %p82 = por %p80, %p81
      %s83 = ssub.s32 %s18, %s30
      %s84 = ssub.s32 %s19, %s26
      %s85 = sor.u32 %s83, %s84
      %p86 = scmp.eq.s32.totalorder %s85, 0
      %s88 = sadd.s32 %s87, 1
      %s89 = scalar_select %p86, %s87, %s88
      %p92 = pneg %p86
      %p93 = scmp.eq.s32.totalorder %s11, 7
      %p94 = por %p92, %p93
      %p95 = scmp.ne.s32.totalorder %s87, %s90
      %p96 = scmp.eq.s32.totalorder %s11, 0
      %p97 = por %p95, %p96
      %p98 = scmp.ne.s32.totalorder %s87, %s90
      %p99 = scmp.eq.s32.totalorder %s16, 7
      %p100 = por %p98, %p99
      %p101 = scmp.ne.s32.totalorder %s90, %s91
      %p102 = scmp.eq.s32.totalorder %s16, 0
      %p103 = por %p101, %p102
      %p104 = scmp.ne.s32.totalorder %s90, %s91
      %p105 = scmp.eq.s32.totalorder %s17, 7
      %p106 = por %p104, %p105
      %p108 = scmp.ne.s32.totalorder %s91, %s107
      %p109 = scmp.eq.s32.totalorder %s17, 0
      %p110 = por %p108, %p109
      %p111 = scmp.le.s32.totalorder 1, %s11
      %p112 = scmp.lt.s32.totalorder %s11, 9
      %p113 = pnand %p111, %p112
      %p114 = pneg %p113
      // Predicated region
      $region9: #{generator_forward.5} parent=5 // pred_check
        _
      $region10: #{generator_forward.5} parent=5 // pred_check_branch
        %116 = sbr.rel (%p113) target = $region12
      $region11: #{generator_forward.5} parent=5 // pred_region
        %s117 = ssub.s32 %s11, 1
        // Predicated region
        $region13: #{generator_forward.5} parent=11 // pred_check
          %p118 = pneg %p49
        $region14: #{generator_forward.5} parent=11 // pred_check_branch
          %120 = sbr.rel (%p118) target = $region16
        $region15: #{generator_forward.5} parent=11 // pred_region
          %s121 = smul.u32 2, %s20
          %p122 = scmp.lt.s32.totalorder %s121, 1
          %s123 = scalar_select %p122, %s121, 1
          %s124 = smul.addr %s123, 4
          %s125 = scalar_lea.vmem %s0, %s124
          %s126 = smul.u32 2, %s20
        $region16: #{generator_forward.5} parent=11 // pred_fallthru
          _
      $region12: #{generator_forward.5} parent=5 // pred_fallthru
        _
      %p127 = scmp.lt.s32.totalorder %s11, 8
      // Predicated region
      $region17: #{generator_forward.5} parent=5 // pred_check
        %p128 = pneg %p127
      $region18: #{generator_forward.5} parent=5 // pred_check_branch
        %130 = sbr.rel (%p128) target = $region20
      $region19: #{generator_forward.5} parent=5 // pred_region
        // Predicated region
        $region21: #{generator_forward.5} parent=19 // pred_check
          %p131 = pneg %p69
        $region22: #{generator_forward.5} parent=19 // pred_check_branch
          %133 = sbr.rel (%p131) target = $region24
        $region23: #{generator_forward.5} parent=19 // pred_region
          %s134 = sand.u32 %s59, 1
          %s135 = scalar_lea.sflag [#allocation3], %s134
          %s136 = sand.u32 %s59, 1
          %s137 = smul.addr %s136, 512
          %s138 = scalar_lea.vmem [#allocation2], %s137
          %s139 = smul.u32 8, %s19
          %s141 = ssub.s32 8192, 8192
          %142 = vsyncadd %s135, %s141
          %s143 = smul.addr %s139, 64
          %s144 = scalar_lea.hbm %s1, %s143
          %s145 = sshll.u32 %s138, 4
          %s146 = int_to_ptr.vmem [resolvable:$true] %s145
          %151 = dma.hbm_to_vmem [thread:$0]  %s144, 8192, %s146, %s135, 4096, 512, 32
        $region24: #{generator_forward.5} parent=19 // pred_fallthru
          _
      $region20: #{generator_forward.5} parent=5 // pred_fallthru
        _
      %p152 = scmp.le.s32.totalorder 1, %s11
      %p153 = scmp.lt.s32.totalorder %s11, 9
      %p154 = pnand %p152, %p153
      %p155 = pneg %p154
      // Predicated region
      $region25: #{generator_forward.5} parent=5 // pred_check
        _
      $region26: #{generator_forward.5} parent=5 // pred_check_branch
        %157 = sbr.rel (%p154) target = $region28
      $region27: #{generator_forward.5} parent=5 // pred_region
        %s158 = ssub.s32 %s11, 1
        %s159 = sand.u32 %s62, 1
        %s160 = scalar_lea.sflag [#allocation3], %s159
        %s161 = sand.u32 %s62, 1
        %s162 = smul.addr %s161, 512
        %s163 = scalar_lea.vmem [#allocation2], %s162
        // Predicated region
        $region29: #{generator_forward.5} parent=27 // pred_check
          %p164 = pneg %p75
        $region30: #{generator_forward.5} parent=27 // pred_check_branch
          %166 = sbr.rel (%p164) target = $region32
        $region31: #{generator_forward.5} parent=27 // pred_region
          %167 = dma.done %s160, 8192
        $region32: #{generator_forward.5} parent=27 // pred_fallthru
          _
        %s168 = smul.u32 2, %s20
        %p169 = scmp.lt.s32.totalorder %s168, 1
        %s170 = scalar_select %p169, %s168, 1
        %s171 = smul.addr %s170, 4
        %s172 = scalar_lea.vmem %s0, %s171
        %p173 = pneg %p49
        %p174 = pneg %p46
        %s175 = sand.u32 %s62, 1
        %s176 = scalar_lea.sflag [#allocation3], %s175
        %s177 = sand.u32 %s62, 1
        %s178 = smul.addr %s177, 512
        %s179 = scalar_lea.vmem [#allocation2], %s178
        %p180 = pneg %p75
        %p181 = pneg %p72
        %p182 = pneg %p103
        %p183 = pneg %p100
        %s184 = sand.u32 %s90, 1
        %s185 = sand.u32 %s90, 1
        %s186 = smul.addr %s185, 64
        %s187 = scalar_lea.vmem [#allocation4], %s186
        %s188 = smul.u32 2, %s20
        %p189 = scmp.lt.s32.totalorder %s188, 1
        %s190 = scalar_select %p189, %s188, 1
        %s191 = smul.addr %s190, 4
        %s192 = scalar_lea.vmem %s0, %s191
        %s193 = smul.u32 2, %s20
        %s194 = smul.u32 8, %s21
        %s195 = smul.u32 2, %s20
        %s196 = smul.u32 8, %s21
        %v198 = vld [vmem:[%s192] sm:$0xf]
        %v199 = vld [vmem:[%s192 + $0x4] sm:$0xf]
        %v200 = vld [vmem:[%s163] sm:$0xff]
        %v201 = vld [vmem:[%s163 + $0x8] sm:$0xff]
        %v202 = vld [vmem:[%s163 + $0x10] sm:$0xff]
        %v203 = vld [vmem:[%s163 + $0x18] sm:$0xff]
        %v204 = vld [vmem:[%s163 + $0x20] sm:$0xff]
        %v205 = vld [vmem:[%s163 + $0x28] sm:$0xff]
        %v206 = vld [vmem:[%s163 + $0x30] sm:$0xff]
        %v207 = vld [vmem:[%s163 + $0x38] sm:$0xff]
        %v208 = vld [vmem:[%s163 + $0x40] sm:$0xff]
        %v209 = vld [vmem:[%s163 + $0x48] sm:$0xff]
        %v210 = vld [vmem:[%s163 + $0x50] sm:$0xff]
        %v211 = vld [vmem:[%s163 + $0x58] sm:$0xff]
        %v212 = vld [vmem:[%s163 + $0x60] sm:$0xff]
        %v213 = vld [vmem:[%s163 + $0x68] sm:$0xff]
        %v214 = vld [vmem:[%s163 + $0x70] sm:$0xff]
        %v215 = vld [vmem:[%s163 + $0x78] sm:$0xff]
        %v216 = vld [vmem:[%s163 + $0x80] sm:$0xff]
        %v217 = vld [vmem:[%s163 + $0x88] sm:$0xff]
        %v218 = vld [vmem:[%s163 + $0x90] sm:$0xff]
        %v219 = vld [vmem:[%s163 + $0x98] sm:$0xff]
        %v220 = vld [vmem:[%s163 + $0xa0] sm:$0xff]
        %v221 = vld [vmem:[%s163 + $0xa8] sm:$0xff]
        %v222 = vld [vmem:[%s163 + $0xb0] sm:$0xff]
        %v223 = vld [vmem:[%s163 + $0xb8] sm:$0xff]
        %v224 = vld [vmem:[%s163 + $0xc0] sm:$0xff]
        %v225 = vld [vmem:[%s163 + $0xc8] sm:$0xff]
        %v226 = vld [vmem:[%s163 + $0xd0] sm:$0xff]
        %v227 = vld [vmem:[%s163 + $0xd8] sm:$0xff]
        %v228 = vld [vmem:[%s163 + $0xe0] sm:$0xff]
        %v229 = vld [vmem:[%s163 + $0xe8] sm:$0xff]
        %v230 = vld [vmem:[%s163 + $0xf0] sm:$0xff]
        %v231 = vld [vmem:[%s163 + $0xf8] sm:$0xff]
        %v232 = vld [vmem:[%s163 + $0x100] sm:$0xff]
        %v233 = vld [vmem:[%s163 + $0x108] sm:$0xff]
        %v234 = vld [vmem:[%s163 + $0x110] sm:$0xff]
        %v235 = vld [vmem:[%s163 + $0x118] sm:$0xff]
        %v236 = vld [vmem:[%s163 + $0x120] sm:$0xff]
        %v237 = vld [vmem:[%s163 + $0x128] sm:$0xff]
        %v238 = vld [vmem:[%s163 + $0x130] sm:$0xff]
        %v239 = vld [vmem:[%s163 + $0x138] sm:$0xff]
        %v240 = vld [vmem:[%s163 + $0x140] sm:$0xff]
        %v241 = vld [vmem:[%s163 + $0x148] sm:$0xff]
        %v242 = vld [vmem:[%s163 + $0x150] sm:$0xff]
        %v243 = vld [vmem:[%s163 + $0x158] sm:$0xff]
        %v244 = vld [vmem:[%s163 + $0x160] sm:$0xff]
        %v245 = vld [vmem:[%s163 + $0x168] sm:$0xff]
        %v246 = vld [vmem:[%s163 + $0x170] sm:$0xff]
        %v247 = vld [vmem:[%s163 + $0x178] sm:$0xff]
        %v248 = vld [vmem:[%s163 + $0x180] sm:$0xff]
        %v249 = vld [vmem:[%s163 + $0x188] sm:$0xff]
        %v250 = vld [vmem:[%s163 + $0x190] sm:$0xff]
        %v251 = vld [vmem:[%s163 + $0x198] sm:$0xff]
        %v252 = vld [vmem:[%s163 + $0x1a0] sm:$0xff]
        %v253 = vld [vmem:[%s163 + $0x1a8] sm:$0xff]
        %v254 = vld [vmem:[%s163 + $0x1b0] sm:$0xff]
        %v255 = vld [vmem:[%s163 + $0x1b8] sm:$0xff]
        %v256 = vld [vmem:[%s163 + $0x1c0] sm:$0xff]
        %v257 = vld [vmem:[%s163 + $0x1c8] sm:$0xff]
        %v258 = vld [vmem:[%s163 + $0x1d0] sm:$0xff]
        %v259 = vld [vmem:[%s163 + $0x1d8] sm:$0xff]
        %v260 = vld [vmem:[%s163 + $0x1e0] sm:$0xff]
        %v261 = vld [vmem:[%s163 + $0x1e8] sm:$0xff]
        %v262 = vld [vmem:[%s163 + $0x1f0] sm:$0xff]
        %v263 = vld [vmem:[%s163 + $0x1f8] sm:$0xff]
        %v266 = vunpack.c.l.b16 %v198
        %v267 = vunpack.c.l.b16 %v199
        %v268 = vpack.c.b16 %v267, %v266
        %v334 = vunpack.c.l.b16 %v200
        %v335 = vunpack.c.h.b16 %v200
        %v336 = vunpack.c.l.b16 %v201
        %v337 = vunpack.c.h.b16 %v201
        %v338 = vunpack.c.l.b16 %v202
        %v339 = vunpack.c.h.b16 %v202
        %v340 = vunpack.c.l.b16 %v203
        %v341 = vunpack.c.h.b16 %v203
        %v342 = vunpack.c.l.b16 %v204
        %v343 = vunpack.c.h.b16 %v204
        %v344 = vunpack.c.l.b16 %v205
        %v345 = vunpack.c.h.b16 %v205
        %v346 = vunpack.c.l.b16 %v206
        %v347 = vunpack.c.h.b16 %v206
        %v348 = vunpack.c.l.b16 %v207
        %v349 = vunpack.c.h.b16 %v207
        %v350 = vunpack.c.l.b16 %v208
        %v351 = vunpack.c.h.b16 %v208
        %v352 = vunpack.c.l.b16 %v209
        %v353 = vunpack.c.h.b16 %v209
        %v354 = vunpack.c.l.b16 %v210
        %v355 = vunpack.c.h.b16 %v210
        %v356 = vunpack.c.l.b16 %v211
        %v357 = vunpack.c.h.b16 %v211
        %v358 = vunpack.c.l.b16 %v212
        %v359 = vunpack.c.h.b16 %v212
        %v360 = vunpack.c.l.b16 %v213
        %v361 = vunpack.c.h.b16 %v213
        %v362 = vunpack.c.l.b16 %v214
        %v363 = vunpack.c.h.b16 %v214
        %v364 = vunpack.c.l.b16 %v215
        %v365 = vunpack.c.h.b16 %v215
        %v366 = vunpack.c.l.b16 %v216
        %v367 = vunpack.c.h.b16 %v216
        %v368 = vunpack.c.l.b16 %v217
        %v369 = vunpack.c.h.b16 %v217
        %v370 = vunpack.c.l.b16 %v218
        %v371 = vunpack.c.h.b16 %v218
        %v372 = vunpack.c.l.b16 %v219
        %v373 = vunpack.c.h.b16 %v219
        %v374 = vunpack.c.l.b16 %v220
        %v375 = vunpack.c.h.b16 %v220
        %v376 = vunpack.c.l.b16 %v221
        %v377 = vunpack.c.h.b16 %v221
        %v378 = vunpack.c.l.b16 %v222
        %v379 = vunpack.c.h.b16 %v222
        %v380 = vunpack.c.l.b16 %v223
        %v381 = vunpack.c.h.b16 %v223
        %v382 = vunpack.c.l.b16 %v224
        %v383 = vunpack.c.h.b16 %v224
        %v384 = vunpack.c.l.b16 %v225
        %v385 = vunpack.c.h.b16 %v225
        %v386 = vunpack.c.l.b16 %v226
        %v387 = vunpack.c.h.b16 %v226
        %v388 = vunpack.c.l.b16 %v227
        %v389 = vunpack.c.h.b16 %v227
        %v390 = vunpack.c.l.b16 %v228
        %v391 = vunpack.c.h.b16 %v228
        %v392 = vunpack.c.l.b16 %v229
        %v393 = vunpack.c.h.b16 %v229
        %v394 = vunpack.c.l.b16 %v230
        %v395 = vunpack.c.h.b16 %v230
        %v396 = vunpack.c.l.b16 %v231
        %v397 = vunpack.c.h.b16 %v231
        %v398 = vunpack.c.l.b16 %v232
        %v399 = vunpack.c.h.b16 %v232
        %v400 = vunpack.c.l.b16 %v233
        %v401 = vunpack.c.h.b16 %v233
        %v402 = vunpack.c.l.b16 %v234
        %v403 = vunpack.c.h.b16 %v234
        %v404 = vunpack.c.l.b16 %v235
        %v405 = vunpack.c.h.b16 %v235
        %v406 = vunpack.c.l.b16 %v236
        %v407 = vunpack.c.h.b16 %v236
        %v408 = vunpack.c.l.b16 %v237
        %v409 = vunpack.c.h.b16 %v237
        %v410 = vunpack.c.l.b16 %v238
        %v411 = vunpack.c.h.b16 %v238
        %v412 = vunpack.c.l.b16 %v239
        %v413 = vunpack.c.h.b16 %v239
        %v414 = vunpack.c.l.b16 %v240
        %v415 = vunpack.c.h.b16 %v240
        %v416 = vunpack.c.l.b16 %v241
        %v417 = vunpack.c.h.b16 %v241
        %v418 = vunpack.c.l.b16 %v242
        %v419 = vunpack.c.h.b16 %v242
        %v420 = vunpack.c.l.b16 %v243
        %v421 = vunpack.c.h.b16 %v243
        %v422 = vunpack.c.l.b16 %v244
        %v423 = vunpack.c.h.b16 %v244
        %v424 = vunpack.c.l.b16 %v245
        %v425 = vunpack.c.h.b16 %v245
        %v426 = vunpack.c.l.b16 %v246
        %v427 = vunpack.c.h.b16 %v246
        %v428 = vunpack.c.l.b16 %v247
        %v429 = vunpack.c.h.b16 %v247
        %v430 = vunpack.c.l.b16 %v248
        %v431 = vunpack.c.h.b16 %v248
        %v432 = vunpack.c.l.b16 %v249
        %v433 = vunpack.c.h.b16 %v249
        %v434 = vunpack.c.l.b16 %v250
        %v435 = vunpack.c.h.b16 %v250
        %v436 = vunpack.c.l.b16 %v251
        %v437 = vunpack.c.h.b16 %v251
        %v438 = vunpack.c.l.b16 %v252
        %v439 = vunpack.c.h.b16 %v252
        %v440 = vunpack.c.l.b16 %v253
        %v441 = vunpack.c.h.b16 %v253
        %v442 = vunpack.c.l.b16 %v254
        %v443 = vunpack.c.h.b16 %v254
        %v444 = vunpack.c.l.b16 %v255
        %v445 = vunpack.c.h.b16 %v255
        %v446 = vunpack.c.l.b16 %v256
        %v447 = vunpack.c.h.b16 %v256
        %v448 = vunpack.c.l.b16 %v257
        %v449 = vunpack.c.h.b16 %v257
        %v450 = vunpack.c.l.b16 %v258
        %v451 = vunpack.c.h.b16 %v258
        %v452 = vunpack.c.l.b16 %v259
        %v453 = vunpack.c.h.b16 %v259
        %v454 = vunpack.c.l.b16 %v260
        %v455 = vunpack.c.h.b16 %v260
        %v456 = vunpack.c.l.b16 %v261
        %v457 = vunpack.c.h.b16 %v261
        %v458 = vunpack.c.l.b16 %v262
        %v459 = vunpack.c.h.b16 %v262
        %v460 = vunpack.c.l.b16 %v263
        %v461 = vunpack.c.h.b16 %v263
        %v462 = vpack.c.b16 %v342, %v334
        %v463 = vpack.c.b16 %v343, %v335
        %v464 = vpack.c.b16 %v344, %v336
        %v465 = vpack.c.b16 %v345, %v337
        %v466 = vpack.c.b16 %v346, %v338
        %v467 = vpack.c.b16 %v347, %v339
        %v468 = vpack.c.b16 %v348, %v340
        %v469 = vpack.c.b16 %v349, %v341
        %v470 = vpack.c.b16 %v358, %v350
        %v471 = vpack.c.b16 %v359, %v351
        %v472 = vpack.c.b16 %v360, %v352
        %v473 = vpack.c.b16 %v361, %v353
        %v474 = vpack.c.b16 %v362, %v354
        %v475 = vpack.c.b16 %v363, %v355
        %v476 = vpack.c.b16 %v364, %v356
        %v477 = vpack.c.b16 %v365, %v357
        %v478 = vpack.c.b16 %v374, %v366
        %v479 = vpack.c.b16 %v375, %v367
        %v480 = vpack.c.b16 %v376, %v368
        %v481 = vpack.c.b16 %v377, %v369
        %v482 = vpack.c.b16 %v378, %v370
        %v483 = vpack.c.b16 %v379, %v371
        %v484 = vpack.c.b16 %v380, %v372
        %v485 = vpack.c.b16 %v381, %v373
        %v486 = vpack.c.b16 %v390, %v382
        %v487 = vpack.c.b16 %v391, %v383
        %v488 = vpack.c.b16 %v392, %v384
        %v489 = vpack.c.b16 %v393, %v385
        %v490 = vpack.c.b16 %v394, %v386
        %v491 = vpack.c.b16 %v395, %v387
        %v492 = vpack.c.b16 %v396, %v388
        %v493 = vpack.c.b16 %v397, %v389
        %v494 = vpack.c.b16 %v406, %v398
        %v495 = vpack.c.b16 %v407, %v399
        %v496 = vpack.c.b16 %v408, %v400
        %v497 = vpack.c.b16 %v409, %v401
        %v498 = vpack.c.b16 %v410, %v402
        %v499 = vpack.c.b16 %v411, %v403
        %v500 = vpack.c.b16 %v412, %v404
        %v501 = vpack.c.b16 %v413, %v405
        %v502 = vpack.c.b16 %v422, %v414
        %v503 = vpack.c.b16 %v423, %v415
        %v504 = vpack.c.b16 %v424, %v416
        %v505 = vpack.c.b16 %v425, %v417
        %v506 = vpack.c.b16 %v426, %v418
        %v507 = vpack.c.b16 %v427, %v419
        %v508 = vpack.c.b16 %v428, %v420
        %v509 = vpack.c.b16 %v429, %v421
        %v510 = vpack.c.b16 %v438, %v430
        %v511 = vpack.c.b16 %v439, %v431
        %v512 = vpack.c.b16 %v440, %v432
        %v513 = vpack.c.b16 %v441, %v433
        %v514 = vpack.c.b16 %v442, %v434
        %v515 = vpack.c.b16 %v443, %v435
        %v516 = vpack.c.b16 %v444, %v436
        %v517 = vpack.c.b16 %v445, %v437
        %v518 = vpack.c.b16 %v454, %v446
        %v519 = vpack.c.b16 %v455, %v447
        %v520 = vpack.c.b16 %v456, %v448
        %v521 = vpack.c.b16 %v457, %v449
        %v522 = vpack.c.b16 %v458, %v450
        %v523 = vpack.c.b16 %v459, %v451
        %v524 = vpack.c.b16 %v460, %v452
        %v525 = vpack.c.b16 %v461, %v453
        %590 = vmatprep.subr.bf16.mxu0 %v463
        %591 = vmatpush1.bf16.msra.mxu0 %v462
        %592 = vmatprep.subr.bf16.mxu0 %v471
        %593 = vmatpush1.bf16.msra.mxu0 %v470
        %594 = vmatprep.subr.bf16.mxu0 %v479
        %595 = vmatpush1.bf16.msra.mxu0 %v478
        %596 = vmatprep.subr.bf16.mxu0 %v487
        %597 = vmatpush1.bf16.msra.mxu0 %v486
        %598 = vmatprep.subr.bf16.mxu0 %v495
        %599 = vmatpush1.bf16.msra.mxu0 %v494
        %600 = vmatprep.subr.bf16.mxu0 %v503
        %601 = vmatpush1.bf16.msra.mxu0 %v502
        %602 = vmatprep.subr.bf16.mxu0 %v511
        %603 = vmatpush1.bf16.msra.mxu0 %v510
        %604 = vmatprep.subr.bf16.mxu0 %v519
        %605 = vmatpush1.bf16.msra.mxu0 %v518
        %606 = vmatprep.subr.bf16.mxu0 0
        %607 = vmatpush1.bf16.msra.mxu0 0
        %608 = vmatprep.subr.bf16.mxu0 0
        %609 = vmatpush1.bf16.msra.mxu0 0
        %610 = vmatprep.subr.bf16.mxu0 0
        %611 = vmatpush1.bf16.msra.mxu0 0
        %612 = vmatprep.subr.bf16.mxu0 0
        %613 = vmatpush1.bf16.msra.mxu0 0
        %614 = vmatprep.subr.bf16.mxu0 0
        %615 = vmatpush1.bf16.msra.mxu0 0
        %616 = vmatprep.subr.bf16.mxu0 0
        %617 = vmatpush1.bf16.msra.mxu0 0
        %618 = vmatprep.subr.bf16.mxu0 0
        %619 = vmatpush1.bf16.msra.mxu0 0
        %620 = vmatprep.subr.bf16.mxu0 0
        %621 = vmatpush1.bf16.msra.mxu0 0
        %622 = vmatprep.mubr.bf16.mxu0 0
        %623 = vmatmul.mubr.bf16.gmra.mrb[0].mxu0 %v268
        %v624 = vpop.f32.mrb[0].mxu0
        %v625 = vadd.f32 0.0, %v624
        %v626 = vpop.f32.mrb[0].mxu0
        %v627 = vadd.f32 0.0, %v626
        %v628 = vpop.f32.mrb[0].mxu0
        %v629 = vadd.f32 0.0, %v628
        %v630 = vpop.f32.mrb[0].mxu0
        %v631 = vadd.f32 0.0, %v630
        %632 = vdwg.mxu0
        %633 = vmatprep.subr.bf16.mxu0 %v465
        %634 = vmatpush1.bf16.msra.mxu0 %v464
        %635 = vmatprep.subr.bf16.mxu0 %v473
        %636 = vmatpush1.bf16.msra.mxu0 %v472
        %637 = vmatprep.subr.bf16.mxu0 %v481
        %638 = vmatpush1.bf16.msra.mxu0 %v480
        %639 = vmatprep.subr.bf16.mxu0 %v489
        %640 = vmatpush1.bf16.msra.mxu0 %v488
        %641 = vmatprep.subr.bf16.mxu0 %v497
        %642 = vmatpush1.bf16.msra.mxu0 %v496
        %643 = vmatprep.subr.bf16.mxu0 %v505
        %644 = vmatpush1.bf16.msra.mxu0 %v504
        %645 = vmatprep.subr.bf16.mxu0 %v513
        %646 = vmatpush1.bf16.msra.mxu0 %v512
        %647 = vmatprep.subr.bf16.mxu0 %v521
        %648 = vmatpush1.bf16.msra.mxu0 %v520
        %649 = vmatprep.subr.bf16.mxu0 0
        %650 = vmatpush1.bf16.msra.mxu0 0
        %651 = vmatprep.subr.bf16.mxu0 0
        %652 = vmatpush1.bf16.msra.mxu0 0
        %653 = vmatprep.subr.bf16.mxu0 0
        %654 = vmatpush1.bf16.msra.mxu0 0
        %655 = vmatprep.subr.bf16.mxu0 0
        %656 = vmatpush1.bf16.msra.mxu0 0
        %657 = vmatprep.subr.bf16.mxu0 0
        %658 = vmatpush1.bf16.msra.mxu0 0
        %659 = vmatprep.subr.bf16.mxu0 0
        %660 = vmatpush1.bf16.msra.mxu0 0
        %661 = vmatprep.subr.bf16.mxu0 0
        %662 = vmatpush1.bf16.msra.mxu0 0
        %663 = vmatprep.subr.bf16.mxu0 0
        %664 = vmatpush1.bf16.msra.mxu0 0
        %665 = vmatprep.mubr.bf16.mxu0 0
        %666 = vmatmul.mubr.bf16.gmra.mrb[0].mxu0 %v268
        %v667 = vpop.f32.mrb[0].mxu0
        %v668 = vadd.f32 0.0, %v667
        %v669 = vpop.f32.mrb[0].mxu0
        %v670 = vadd.f32 0.0, %v669
        %v671 = vpop.f32.mrb[0].mxu0
        %v672 = vadd.f32 0.0, %v671
        %v673 = vpop.f32.mrb[0].mxu0
        %v674 = vadd.f32 0.0, %v673
        %675 = vdwg.mxu0
        %676 = vmatprep.subr.bf16.mxu0 %v467
        %677 = vmatpush1.bf16.msra.mxu0 %v466
        %678 = vmatprep.subr.bf16.mxu0 %v475
        %679 = vmatpush1.bf16.msra.mxu0 %v474
        %680 = vmatprep.subr.bf16.mxu0 %v483
        %681 = vmatpush1.bf16.msra.mxu0 %v482
        %682 = vmatprep.subr.bf16.mxu0 %v491
        %683 = vmatpush1.bf16.msra.mxu0 %v490
        %684 = vmatprep.subr.bf16.mxu0 %v499
        %685 = vmatpush1.bf16.msra.mxu0 %v498
        %686 = vmatprep.subr.bf16.mxu0 %v507
        %687 = vmatpush1.bf16.msra.mxu0 %v506
        %688 = vmatprep.subr.bf16.mxu0 %v515
        %689 = vmatpush1.bf16.msra.mxu0 %v514
        %690 = vmatprep.subr.bf16.mxu0 %v523
        %691 = vmatpush1.bf16.msra.mxu0 %v522
        %692 = vmatprep.subr.bf16.mxu0 0
        %693 = vmatpush1.bf16.msra.mxu0 0
        %694 = vmatprep.subr.bf16.mxu0 0
        %695 = vmatpush1.bf16.msra.mxu0 0
        %696 = vmatprep.subr.bf16.mxu0 0
        %697 = vmatpush1.bf16.msra.mxu0 0
        %698 = vmatprep.subr.bf16.mxu0 0
        %699 = vmatpush1.bf16.msra.mxu0 0
        %700 = vmatprep.subr.bf16.mxu0 0
        %701 = vmatpush1.bf16.msra.mxu0 0
        %702 = vmatprep.subr.bf16.mxu0 0
        %703 = vmatpush1.bf16.msra.mxu0 0
        %704 = vmatprep.subr.bf16.mxu0 0
        %705 = vmatpush1.bf16.msra.mxu0 0
        %706 = vmatprep.subr.bf16.mxu0 0
        %707 = vmatpush1.bf16.msra.mxu0 0
        %708 = vmatprep.mubr.bf16.mxu0 0
        %709 = vmatmul.mubr.bf16.gmra.mrb[0].mxu0 %v268
        %v710 = vpop.f32.mrb[0].mxu0
        %v711 = vadd.f32 0.0, %v710
        %v712 = vpop.f32.mrb[0].mxu0
        %v713 = vadd.f32 0.0, %v712
        %v714 = vpop.f32.mrb[0].mxu0
        %v715 = vadd.f32 0.0, %v714
        %v716 = vpop.f32.mrb[0].mxu0
        %v717 = vadd.f32 0.0, %v716
        %718 = vdwg.mxu0
        %719 = vmatprep.subr.bf16.mxu0 %v469
        %720 = vmatpush1.bf16.msra.mxu0 %v468
        %721 = vmatprep.subr.bf16.mxu0 %v477
        %722 = vmatpush1.bf16.msra.mxu0 %v476
        %723 = vmatprep.subr.bf16.mxu0 %v485
        %724 = vmatpush1.bf16.msra.mxu0 %v484
        %725 = vmatprep.subr.bf16.mxu0 %v493
        %726 = vmatpush1.bf16.msra.mxu0 %v492
        %727 = vmatprep.subr.bf16.mxu0 %v501
        %728 = vmatpush1.bf16.msra.mxu0 %v500
        %729 = vmatprep.subr.bf16.mxu0 %v509
        %730 = vmatpush1.bf16.msra.mxu0 %v508
        %731 = vmatprep.subr.bf16.mxu0 %v517
        %732 = vmatpush1.bf16.msra.mxu0 %v516
        %733 = vmatprep.subr.bf16.mxu0 %v525
        %734 = vmatpush1.bf16.msra.mxu0 %v524
        %735 = vmatprep.subr.bf16.mxu0 0
        %736 = vmatpush1.bf16.msra.mxu0 0
        %737 = vmatprep.subr.bf16.mxu0 0
        %738 = vmatpush1.bf16.msra.mxu0 0
        %739 = vmatprep.subr.bf16.mxu0 0
        %740 = vmatpush1.bf16.msra.mxu0 0
        %741 = vmatprep.subr.bf16.mxu0 0
        %742 = vmatpush1.bf16.msra.mxu0 0
        %743 = vmatprep.subr.bf16.mxu0 0
        %744 = vmatpush1.bf16.msra.mxu0 0
        %745 = vmatprep.subr.bf16.mxu0 0
        %746 = vmatpush1.bf16.msra.mxu0 0
        %747 = vmatprep.subr.bf16.mxu0 0
        %748 = vmatpush1.bf16.msra.mxu0 0
        %749 = vmatprep.subr.bf16.mxu0 0
        %750 = vmatpush1.bf16.msra.mxu0 0
        %751 = vmatprep.mubr.bf16.mxu0 0
        %752 = vmatmul.mubr.bf16.gmra.mrb[0].mxu0 %v268
        %v753 = vpop.f32.mrb[0].mxu0
        %v754 = vadd.f32 0.0, %v753
        %v755 = vpop.f32.mrb[0].mxu0
        %v756 = vadd.f32 0.0, %v755
        %v757 = vpop.f32.mrb[0].mxu0
        %v758 = vadd.f32 0.0, %v757
        %v759 = vpop.f32.mrb[0].mxu0
        %v760 = vadd.f32 0.0, %v759
        %761 = vdwg.mxu0
        %v762 = vpack.c.bf16 %v629, %v625
        %v763 = vpack.c.bf16 %v631, %v627
        %v764 = vpack.c.bf16 %v672, %v668
        %v765 = vpack.c.bf16 %v674, %v670
        %v766 = vpack.c.bf16 %v715, %v711
        %v767 = vpack.c.bf16 %v717, %v713
        %v768 = vpack.c.bf16 %v758, %v754
        %v769 = vpack.c.bf16 %v760, %v756
        %v778 = vunpack.c.l.b16 %v762
        %v779 = vunpack.c.l.b16 %v763
        %v780 = vunpack.c.l.b16 %v764
        %v781 = vunpack.c.l.b16 %v765
        %v782 = vunpack.c.l.b16 %v766
        %v783 = vunpack.c.l.b16 %v767
        %v784 = vunpack.c.l.b16 %v768
        %v785 = vunpack.c.l.b16 %v769
        %v786 = vunpack.c.h.b16 %v762
        %v787 = vunpack.c.h.b16 %v763
        %v788 = vunpack.c.h.b16 %v764
        %v789 = vunpack.c.h.b16 %v765
        %v790 = vunpack.c.h.b16 %v766
        %v791 = vunpack.c.h.b16 %v767
        %v792 = vunpack.c.h.b16 %v768
        %v793 = vunpack.c.h.b16 %v769
        %v794 = vpack.c.b16 %v779, %v778
        %v795 = vpack.c.b16 %v781, %v780
        %v796 = vpack.c.b16 %v783, %v782
        %v797 = vpack.c.b16 %v785, %v784
        %v798 = vpack.c.b16 %v787, %v786
        %v799 = vpack.c.b16 %v789, %v788
        %v800 = vpack.c.b16 %v791, %v790
        %v801 = vpack.c.b16 %v793, %v792
        %810 = vst [vmem:[%s187] sm:$0xff] %v794
        %811 = vst [vmem:[%s187 + $0x8] sm:$0xff] %v795
        %812 = vst [vmem:[%s187 + $0x10] sm:$0xff] %v796
        %813 = vst [vmem:[%s187 + $0x18] sm:$0xff] %v797
        %814 = vst [vmem:[%s187 + $0x20] sm:$0xff] %v798
        %815 = vst [vmem:[%s187 + $0x28] sm:$0xff] %v799
        %816 = vst [vmem:[%s187 + $0x30] sm:$0xff] %v800
        %817 = vst [vmem:[%s187 + $0x38] sm:$0xff] %v801
        %s818 = sand.u32 %s90, 1
        %s819 = sand.u32 %s90, 1
        %s820 = smul.addr %s819, 64
        %s821 = scalar_lea.vmem [#allocation4], %s820
        // Predicated region
        $region33: #{generator_forward.5} parent=27 // pred_check
          %p822 = pneg %p100
        $region34: #{generator_forward.5} parent=27 // pred_check_branch
          %824 = sbr.rel (%p822) target = $region36
        $region35: #{generator_forward.5} parent=27 // pred_region
          %s825 = smul.u32 2, %s20
          %s826 = smul.u32 8, %s21
          %s827 = smul.addr %s825, 64
          %s828 = sadd.s32 %s826, %s827
          %s829 = smul.addr %s828, 4
          %s830 = scalar_lea.vmem %s2, %s829
          // Predicated region
          $region37: #{generator_forward.5} parent=35 // pred_check
            _
          $region38: #{generator_forward.5} parent=35 // pred_check_branch
            %832 = sbr.rel (0) target = $region40
          $region39: #{generator_forward.5} parent=35 // pred_region
            // Predicated region
            $region41: #{generator_forward.5} parent=39 // pred_check
              _
            $region42: #{generator_forward.5} parent=39 // pred_check_branch
              %834 = sbr.rel (0) target = $region44
            $region43: #{generator_forward.5} parent=39 // pred_region
              loop: start=0, step=1, limit=1
              $region45: #{generator_forward.5} parent=43 // loop_pre_header
                _
              $region46: #{generator_forward.5} parent=43 // loop_header
                %s836 = sphi 0, %s840
                %p837 = scmp.ge.s32.totalorder %s836, 1
                %s841 = sphi %s821, %s821
                %s842 = sphi %s830, %s830
              $region47: #{generator_forward.5} parent=43 // loop_header_branch
                %839 = sbr.rel (%p837) target = $region51
              $region48: #{generator_forward.5} parent=43 // loop_body
                %v843 = vld [vmem:[%s841] sm:$0xff]
                %844 = vst [vmem:[%s842] sm:$0xff] %v843
                %v845 = vld [vmem:[%s841 + $0x8] sm:$0xff]
                %846 = vst [vmem:[%s842 + $0x8] sm:$0xff] %v845
                %v847 = vld [vmem:[%s841 + $0x10] sm:$0xff]
                %848 = vst [vmem:[%s842 + $0x10] sm:$0xff] %v847
                %v849 = vld [vmem:[%s841 + $0x18] sm:$0xff]
                %850 = vst [vmem:[%s842 + $0x18] sm:$0xff] %v849
                %v851 = vld [vmem:[%s841 + $0x20] sm:$0xff]
                %852 = vst [vmem:[%s842 + $0x100] sm:$0xff] %v851
                %v853 = vld [vmem:[%s841 + $0x28] sm:$0xff]
                %854 = vst [vmem:[%s842 + $0x108] sm:$0xff] %v853
                %v855 = vld [vmem:[%s841 + $0x30] sm:$0xff]
                %856 = vst [vmem:[%s842 + $0x110] sm:$0xff] %v855
                %v857 = vld [vmem:[%s841 + $0x38] sm:$0xff]
                %858 = vst [vmem:[%s842 + $0x118] sm:$0xff] %v857
              $region49: #{generator_forward.5} parent=43 // loop_footer
                %s840 = sadd.s32 1, %s836
              $region50: #{generator_forward.5} parent=43 // loop_footer_branch
                %835 = sbr.rel target = $region46
              $region51: #{generator_forward.5} parent=43 // loop_exit
                _
            $region44: #{generator_forward.5} parent=39 // pred_fallthru
              _
            // Predicated region
            $region52: #{generator_forward.5} parent=39 // pred_check
              _
            $region53: #{generator_forward.5} parent=39 // pred_check_branch
              %860 = sbr.rel target = $region55
            $region54: #{generator_forward.5} parent=39 // pred_region
              _
            $region55: #{generator_forward.5} parent=39 // pred_fallthru
              _
          $region40: #{generator_forward.5} parent=35 // pred_fallthru
            _
          %861 = vnop
        $region36: #{generator_forward.5} parent=27 // pred_fallthru
          _
      $region28: #{generator_forward.5} parent=5 // pred_fallthru
        _
      %p862 = scmp.le.s32.totalorder 2, %s11
      // Predicated region
      $region56: #{generator_forward.5} parent=5 // pred_check
        %p863 = pneg %p862
      $region57: #{generator_forward.5} parent=5 // pred_check_branch
        %865 = sbr.rel (%p863) target = $region59
      $region58: #{generator_forward.5} parent=5 // pred_region
        %s866 = ssub.s32 %s11, 2
        // Predicated region
        $region60: #{generator_forward.5} parent=58 // pred_check
          %p867 = pneg %p106
        $region61: #{generator_forward.5} parent=58 // pred_check_branch
          %869 = sbr.rel (%p867) target = $region63
        $region62: #{generator_forward.5} parent=58 // pred_region
          %s870 = sand.u32 %s91, 1
          %s871 = sand.u32 %s91, 1
          %s872 = smul.addr %s871, 64
          %s873 = scalar_lea.vmem [#allocation4], %s872
        $region63: #{generator_forward.5} parent=58 // pred_fallthru
          _
      $region59: #{generator_forward.5} parent=5 // pred_fallthru
        _
    $region6: #{generator_forward.5} parent=1 // loop_footer
      %s15 = sadd.s32 1, %s11
    $region7: #{generator_forward.5} parent=1 // loop_footer_branch
      %10 = sbr.rel target = $region3
    $region8: #{generator_forward.5} parent=1 // loop_exit
      _
    %874 = vsyncpa [#allocation3], 1
    %s875 = scalar_lea.sflag [#allocation3], 1
    %876 = vsyncpa %s875, 1

// kernel: generator_forward.6
$region0: #{generator_forward.6}
  #allocation0 [shape = 'u32[]', space=smem, size = 0x4, offset = 0x4, fixed_abs, tag = 'smem constant byte address 0x4 - core index']
  #allocation1 [shape = 'u32[144,128]{1,0:T(1,128)}', space=vmem, size = 0x12000, scoped, tag = 'internal scratch']
  %s0 = inlined_call_operand.vmem [shape: bf16[32,512], index: 0, kind: input, shape index: {}]
  %s1 = inlined_call_operand.vmem [shape: f32[1,512], index: 1, kind: input, shape index: {}]
  %s2 = inlined_call_operand.vmem [shape: f32[1,512], index: 2, kind: input, shape index: {}]
  %s3 = inlined_call_operand.hbm [shape: bf16[512,4096], index: 3, kind: input, shape index: {}]
  %s4 = inlined_call_operand.vmem [shape: bf16[32,4096], index: 4, kind: output, shape index: {}]
  %s5 = sld [smem:[#allocation0]]
  $region72: #{generator_forward.6} parent=0
    _
  %s7 = ssub.s32 1, %s5
  %s8 = scalar_select 0, %s7, %s5
  $region1: #{generator_forward.6} parent=0
    #allocation2 [shape = 'u8[2097152]{0}', space=vmem, size = 0x200000, scoped, tag = 'input window, operand 3']
    #allocation3 [shape = 's32[2]{0}', space=sflag, size = 0x8, scoped, tag = 'scoped memory for generator_forward.6']
    #allocation4 [shape = 'u8[131072]{0}', space=vmem, size = 0x20000, scoped, tag = 'output window, operand 0']
    %9 = vsyncpa [#allocation3], 0
    %s10 = scalar_lea.sflag [#allocation3], 1
    %11 = vsyncpa %s10, 0
    loop: start=0, step=1, limit=6
    $region2: #{generator_forward.6} parent=1 // loop_pre_header
      _
    $region3: #{generator_forward.6} parent=1 // loop_header
      %s13 = sphi 0, %s17
      %p14 = scmp.ge.s32.totalorder %s13, 6
      %s20 = sphi 0, %s32
      %s21 = sphi 0, %s28
      %s22 = sphi 0, %s20
      %s23 = sphi 0, %s21
      %s24 = sphi 0, %s22
      %s25 = sphi 0, %s23
      %s35 = sphi 0, %s37
      %s38 = sphi 0, %s35
      %s39 = sphi 0, %s38
      %s55 = sphi 0, %s39
      %s59 = sphi 0, %s59
      %s61 = sphi 0, %s59
      %s62 = sphi 0, %s61
      %s76 = sphi 0, %s62
      %s80 = sphi 0, %s80
      %s82 = sphi 0, %s80
      %s83 = sphi 0, %s82
      %s97 = sphi 0, %s83
      %s103 = sphi 0, %s105
      %s106 = sphi 0, %s103
      %s107 = sphi 0, %s106
      %s123 = sphi 0, %s107
      %s131 = sphi 0, %s133
      %s134 = sphi 0, %s131
      %s135 = sphi 0, %s134
      %s151 = sphi 0, %s135
    $region4: #{generator_forward.6} parent=1 // loop_header_branch
      %16 = sbr.rel (%p14) target = $region8
    $region5: #{generator_forward.6} parent=1 // loop_body
      %s18 = ssub.s32 %s13, 1
      %s19 = ssub.s32 %s13, 2
      %s26 = sadd.s32 1, %s21
      %p27 = scmp.ge.s32.totalorder %s26, 4
      %s28 = scalar_select %p27, 0, %s26
      %s29 = sadd.s32 1, %s20
      %s30 = scalar_select %p27, %s29, %s20
      %p31 = scmp.ge.s32.totalorder %s30, 1
      %s32 = scalar_select %p31, 0, %s30
      %s33 = ssub.s32 %s20, %s32
      %p34 = scmp.eq.s32.totalorder %s33, 0
      %s36 = sadd.s32 %s35, 1
      %s37 = scalar_select %p34, %s35, %s36
      %p40 = pneg %p34
      %p41 = scmp.eq.s32.totalorder %s13, 3
      %p42 = por %p40, %p41
      %p43 = scmp.ne.s32.totalorder %s35, %s38
      %p44 = scmp.eq.s32.totalorder %s13, 0
      %p45 = por %p43, %p44
      %p46 = scmp.ne.s32.totalorder %s35, %s38
      %p47 = scmp.eq.s32.totalorder %s18, 3
      %p48 = por %p46, %p47
      %p49 = scmp.ne.s32.totalorder %s38, %s39
      %p50 = scmp.eq.s32.totalorder %s18, 0
      %p51 = por %p49, %p50
      %p52 = scmp.ne.s32.totalorder %s38, %s39
      %p53 = scmp.eq.s32.totalorder %s19, 3
      %p54 = por %p52, %p53
      %p56 = scmp.ne.s32.totalorder %s39, %s55
      %p57 = scmp.eq.s32.totalorder %s19, 0
      %p58 = por %p56, %p57
      %s60 = sadd.s32 %s59, 1
      %p63 = scmp.eq.s32.totalorder %s13, 3
      %p64 = scmp.ne.s32.totalorder %s59, %s61
      %p65 = scmp.eq.s32.totalorder %s13, 0
      %p66 = por %p64, %p65
      %p67 = scmp.ne.s32.totalorder %s59, %s61
      %p68 = scmp.eq.s32.totalorder %s18, 3
      %p69 = por %p67, %p68
      %p70 = scmp.ne.s32.totalorder %s61, %s62
      %p71 = scmp.eq.s32.totalorder %s18, 0
      %p72 = por %p70, %p71
      %p73 = scmp.ne.s32.totalorder %s61, %s62
      %p74 = scmp.eq.s32.totalorder %s19, 3
      %p75 = por %p73, %p74
      %p77 = scmp.ne.s32.totalorder %s62, %s76
      %p78 = scmp.eq.s32.totalorder %s19, 0
      %p79 = por %p77, %p78
      %s81 = sadd.s32 %s80, 1
      %p84 = scmp.eq.s32.totalorder %s13, 3
      %p85 = scmp.ne.s32.totalorder %s80, %s82
      %p86 = scmp.eq.s32.totalorder %s13, 0
      %p87 = por %p85, %p86
      %p88 = scmp.ne.s32.totalorder %s80, %s82
      %p89 = scmp.eq.s32.totalorder %s18, 3
      %p90 = por %p88, %p89
      %p91 = scmp.ne.s32.totalorder %s82, %s83
      %p92 = scmp.eq.s32.totalorder %s18, 0
      %p93 = por %p91, %p92
      %p94 = scmp.ne.s32.totalorder %s82, %s83
      %p95 = scmp.eq.s32.totalorder %s19, 3
      %p96 = por %p94, %p95
      %p98 = scmp.ne.s32.totalorder %s83, %s97
      %p99 = scmp.eq.s32.totalorder %s19, 0
      %p100 = por %p98, %p99
      %s101 = ssub.s32 %s21, %s28
      %p102 = scmp.eq.s32.totalorder %s101, 0
      %s104 = sadd.s32 %s103, 1
      %s105 = scalar_select %p102, %s103, %s104
      %p108 = pneg %p102
      %p109 = scmp.eq.s32.totalorder %s13, 3
      %p110 = por %p108, %p109
      %p111 = scmp.ne.s32.totalorder %s103, %s106
      %p112 = scmp.eq.s32.totalorder %s13, 0
      %p113 = por %p111, %p112
      %p114 = scmp.ne.s32.totalorder %s103, %s106
      %p115 = scmp.eq.s32.totalorder %s18, 3
      %p116 = por %p114, %p115
      %p117 = scmp.ne.s32.totalorder %s106, %s107
      %p118 = scmp.eq.s32.totalorder %s18, 0
      %p119 = por %p117, %p118
      %p120 = scmp.ne.s32.totalorder %s106, %s107
      %p121 = scmp.eq.s32.totalorder %s19, 3
      %p122 = por %p120, %p121
      %p124 = scmp.ne.s32.totalorder %s107, %s123
      %p125 = scmp.eq.s32.totalorder %s19, 0
      %p126 = por %p124, %p125
      %s127 = ssub.s32 %s20, %s32
      %s128 = ssub.s32 %s21, %s28
      %s129 = sor.u32 %s127, %s128
      %p130 = scmp.eq.s32.totalorder %s129, 0
      %s132 = sadd.s32 %s131, 1
      %s133 = scalar_select %p130, %s131, %s132
      %p136 = pneg %p130
      %p137 = scmp.eq.s32.totalorder %s13, 3
      %p138 = por %p136, %p137
      %p139 = scmp.ne.s32.totalorder %s131, %s134
      %p140 = scmp.eq.s32.totalorder %s13, 0
      %p141 = por %p139, %p140
      %p142 = scmp.ne.s32.totalorder %s131, %s134
      %p143 = scmp.eq.s32.totalorder %s18, 3
      %p144 = por %p142, %p143
      %p145 = scmp.ne.s32.totalorder %s134, %s135
      %p146 = scmp.eq.s32.totalorder %s18, 0
      %p147 = por %p145, %p146
      %p148 = scmp.ne.s32.totalorder %s134, %s135
      %p149 = scmp.eq.s32.totalorder %s19, 3
      %p150 = por %p148, %p149
      %p152 = scmp.ne.s32.totalorder %s135, %s151
      %p153 = scmp.eq.s32.totalorder %s19, 0
      %p154 = por %p152, %p153
      %p155 = scmp.le.s32.totalorder 1, %s13
      %p156 = scmp.lt.s32.totalorder %s13, 5
      %p157 = pnand %p155, %p156
      %p158 = pneg %p157
      // Predicated region
      $region9: #{generator_forward.6} parent=5 // pred_check
        _
      $region10: #{generator_forward.6} parent=5 // pred_check_branch
        %160 = sbr.rel (%p157) target = $region12
      $region11: #{generator_forward.6} parent=5 // pred_region
        %s161 = ssub.s32 %s13, 1
        // Predicated region
        $region13: #{generator_forward.6} parent=11 // pred_check
          %p162 = pneg %p51
        $region14: #{generator_forward.6} parent=11 // pred_check_branch
          %164 = sbr.rel (%p162) target = $region16
        $region15: #{generator_forward.6} parent=11 // pred_region
          %s165 = smul.u32 4, %s22
          %p166 = scmp.lt.s32.totalorder %s165, 3
          %s167 = scalar_select %p166, %s165, 3
          %s168 = smul.addr %s167, 4
          %s169 = smul.addr %s168, 4
          %s170 = scalar_lea.vmem %s0, %s169
          %s171 = smul.u32 4, %s22
        $region16: #{generator_forward.6} parent=11 // pred_fallthru
          _
        // Predicated region
        $region17: #{generator_forward.6} parent=11 // pred_check
          %p172 = pneg %p72
        $region18: #{generator_forward.6} parent=11 // pred_check_branch
          %174 = sbr.rel (%p172) target = $region20
        $region19: #{generator_forward.6} parent=11 // pred_region
          _
        $region20: #{generator_forward.6} parent=11 // pred_fallthru
          _
        // Predicated region
        $region21: #{generator_forward.6} parent=11 // pred_check
          %p175 = pneg %p93
        $region22: #{generator_forward.6} parent=11 // pred_check_branch
          %177 = sbr.rel (%p175) target = $region24
        $region23: #{generator_forward.6} parent=11 // pred_region
          _
        $region24: #{generator_forward.6} parent=11 // pred_fallthru
          _
      $region12: #{generator_forward.6} parent=5 // pred_fallthru
        _
      %p178 = scmp.lt.s32.totalorder %s13, 4
      // Predicated region
      $region25: #{generator_forward.6} parent=5 // pred_check
        %p179 = pneg %p178
      $region26: #{generator_forward.6} parent=5 // pred_check_branch
        %181 = sbr.rel (%p179) target = $region28
      $region27: #{generator_forward.6} parent=5 // pred_region
        // Predicated region
        $region29: #{generator_forward.6} parent=27 // pred_check
          %p182 = pneg %p113
        $region30: #{generator_forward.6} parent=27 // pred_check_branch
          %184 = sbr.rel (%p182) target = $region32
        $region31: #{generator_forward.6} parent=27 // pred_region
          %s185 = sand.u32 %s103, 1
          %s186 = scalar_lea.sflag [#allocation3], %s185
          %s187 = sand.u32 %s103, 1
          %s188 = smul.addr %s187, 2048
          %s189 = scalar_lea.vmem [#allocation2], %s188
          %s190 = smul.u32 8, %s21
          %s192 = ssub.s32 32768, 32768
          %193 = vsyncadd %s186, %s192
          %s194 = smul.addr %s190, 64
          %s195 = scalar_lea.hbm %s3, %s194
          %s196 = sshll.u32 %s189, 4
          %s197 = int_to_ptr.vmem [resolvable:$true] %s196
          %202 = dma.hbm_to_vmem [thread:$0]  %s195, 32768, %s197, %s186, 2048, 512, 32
        $region32: #{generator_forward.6} parent=27 // pred_fallthru
          _
      $region28: #{generator_forward.6} parent=5 // pred_fallthru
        _
      %p203 = scmp.le.s32.totalorder 1, %s13
      %p204 = scmp.lt.s32.totalorder %s13, 5
      %p205 = pnand %p203, %p204
      %p206 = pneg %p205
      // Predicated region
      $region33: #{generator_forward.6} parent=5 // pred_check
        _
      $region34: #{generator_forward.6} parent=5 // pred_check_branch
        %208 = sbr.rel (%p205) target = $region36
      $region35: #{generator_forward.6} parent=5 // pred_region
        %s209 = ssub.s32 %s13, 1
        %s210 = sand.u32 %s106, 1
        %s211 = scalar_lea.sflag [#allocation3], %s210
        %s212 = sand.u32 %s106, 1
        %s213 = smul.addr %s212, 2048
        %s214 = scalar_lea.vmem [#allocation2], %s213
        // Predicated region
        $region37: #{generator_forward.6} parent=35 // pred_check
          %p215 = pneg %p119
        $region38: #{generator_forward.6} parent=35 // pred_check_branch
          %217 = sbr.rel (%p215) target = $region40
        $region39: #{generator_forward.6} parent=35 // pred_region
          %218 = dma.done %s211, 32768
        $region40: #{generator_forward.6} parent=35 // pred_fallthru
          _
        %s219 = smul.u32 4, %s22
        %p220 = scmp.lt.s32.totalorder %s219, 3
        %s221 = scalar_select %p220, %s219, 3
        %s222 = smul.addr %s221, 4
        %s223 = smul.addr %s222, 4
        %s224 = scalar_lea.vmem %s0, %s223
        %p225 = pneg %p51
        %p226 = pneg %p48
        %p227 = pneg %p72
        %p228 = pneg %p69
        %p229 = pneg %p93
        %p230 = pneg %p90
        %s231 = sand.u32 %s106, 1
        %s232 = scalar_lea.sflag [#allocation3], %s231
        %s233 = sand.u32 %s106, 1
        %s234 = smul.addr %s233, 2048
        %s235 = scalar_lea.vmem [#allocation2], %s234
        %p236 = pneg %p119
        %p237 = pneg %p116
        %p238 = pneg %p147
        %p239 = pneg %p144
        %s240 = sand.u32 %s134, 1
        %s241 = sand.u32 %s134, 1
        %s242 = smul.addr %s241, 128
        %s243 = scalar_lea.vmem [#allocation4], %s242
        %s244 = smul.u32 4, %s22
        %p245 = scmp.lt.s32.totalorder %s244, 3
        %s246 = scalar_select %p245, %s244, 3
        %s247 = smul.addr %s246, 4
        %s248 = smul.addr %s247, 4
        %s249 = scalar_lea.vmem %s0, %s248
        %s250 = smul.u32 4, %s22
        %s251 = smul.u32 8, %s23
        %s252 = smul.u32 4, %s22
        %s253 = smul.u32 8, %s23
        %v254 = vld [vmem:[%s249] sm:$0xff]
        %v255 = vld [vmem:[%s249 + $0x8] sm:$0xff]
        %v256 = vld [vmem:[%s249 + $0x10] sm:$0xff]
        %v257 = vld [vmem:[%s249 + $0x18] sm:$0xff]
        %v258 = vld [vmem:[%s249 + $0x20] sm:$0xff]
        %v259 = vld [vmem:[%s249 + $0x28] sm:$0xff]
        %v260 = vld [vmem:[%s249 + $0x30] sm:$0xff]
        %v261 = vld [vmem:[%s249 + $0x38] sm:$0xff]
        %v262 = vunpack.c.l.bf16 %v254
        %v263 = vunpack.c.h.bf16 %v254
        %v264 = vunpack.c.l.bf16 %v255
        %v265 = vunpack.c.h.bf16 %v255
        %v266 = vunpack.c.l.bf16 %v256
        %v267 = vunpack.c.h.bf16 %v256
        %v268 = vunpack.c.l.bf16 %v257
        %v269 = vunpack.c.h.bf16 %v257
        %v270 = vunpack.c.l.bf16 %v258
        %v271 = vunpack.c.h.bf16 %v258
        %v272 = vunpack.c.l.bf16 %v259
        %v273 = vunpack.c.h.bf16 %v259
        %v274 = vunpack.c.l.bf16 %v260
        %v275 = vunpack.c.h.bf16 %v260
        %v276 = vunpack.c.l.bf16 %v261
        %v277 = vunpack.c.h.bf16 %v261
        %v278 = vld [vmem:[%s1] sm:$0xf]
        %v280 = vlaneseq
        %v281 = vshrl.u32 %v280, 7
        %v282 = vsub.s32 0, %v281
        %v283 = vrot.slane %v278, %v282
        %v284 = vlaneseq
        %v285 = vshrl.u32 %v284, 7
        %v286 = vsub.s32 1, %v285
        %v287 = vrot.slane %v278, %v286
        %v288 = vlaneseq
        %v289 = vshrl.u32 %v288, 7
        %v290 = vsub.s32 2, %v289
        %v291 = vrot.slane %v278, %v290
        %v292 = vlaneseq
        %v293 = vshrl.u32 %v292, 7
        %v294 = vsub.s32 3, %v293
        %v295 = vrot.slane %v278, %v294
        %v300 = vmul.f32 %v262, %v283
        %v301 = vmul.f32 %v263, %v287
        %v302 = vmul.f32 %v264, %v291
        %v303 = vmul.f32 %v265, %v295
        %v304 = vmul.f32 %v266, %v283
        %v305 = vmul.f32 %v267, %v287
        %v306 = vmul.f32 %v268, %v291
        %v307 = vmul.f32 %v269, %v295
        %v308 = vmul.f32 %v270, %v283
        %v309 = vmul.f32 %v271, %v287
        %v310 = vmul.f32 %v272, %v291
        %v311 = vmul.f32 %v273, %v295
        %v312 = vmul.f32 %v274, %v283
        %v313 = vmul.f32 %v275, %v287
        %v314 = vmul.f32 %v276, %v291
        %v315 = vmul.f32 %v277, %v295
        %v316 = vld [vmem:[%s2] sm:$0xf]
        %v318 = vlaneseq
        %v319 = vshrl.u32 %v318, 7
        %v320 = vsub.s32 0, %v319
        %v321 = vrot.slane %v316, %v320
        %v322 = vlaneseq
        %v323 = vshrl.u32 %v322, 7
        %v324 = vsub.s32 1, %v323
        %v325 = vrot.slane %v316, %v324
        %v326 = vlaneseq
        %v327 = vshrl.u32 %v326, 7
        %v328 = vsub.s32 2, %v327
        %v329 = vrot.slane %v316, %v328
        %v330 = vlaneseq
        %v331 = vshrl.u32 %v330, 7
        %v332 = vsub.s32 3, %v331
        %v333 = vrot.slane %v316, %v332
        %v338 = vadd.f32 %v300, %v321
        %v339 = vadd.f32 %v301, %v325
        %v340 = vadd.f32 %v302, %v329
        %v341 = vadd.f32 %v303, %v333
        %v342 = vadd.f32 %v304, %v321
        %v343 = vadd.f32 %v305, %v325
        %v344 = vadd.f32 %v306, %v329
        %v345 = vadd.f32 %v307, %v333
        %v346 = vadd.f32 %v308, %v321
        %v347 = vadd.f32 %v309, %v325
        %v348 = vadd.f32 %v310, %v329
        %v349 = vadd.f32 %v311, %v333
        %v350 = vadd.f32 %v312, %v321
        %v351 = vadd.f32 %v313, %v325
        %v352 = vadd.f32 %v314, %v329
        %v353 = vadd.f32 %v315, %v333
        %v354 = vmax.f32 %v338, 0.0
        %v355 = vmax.f32 %v339, 0.0
        %v356 = vmax.f32 %v340, 0.0
        %v357 = vmax.f32 %v341, 0.0
        %v358 = vmax.f32 %v342, 0.0
        %v359 = vmax.f32 %v343, 0.0
        %v360 = vmax.f32 %v344, 0.0
        %v361 = vmax.f32 %v345, 0.0
        %v362 = vmax.f32 %v346, 0.0
        %v363 = vmax.f32 %v347, 0.0
        %v364 = vmax.f32 %v348, 0.0
        %v365 = vmax.f32 %v349, 0.0
        %v366 = vmax.f32 %v350, 0.0
        %v367 = vmax.f32 %v351, 0.0
        %v368 = vmax.f32 %v352, 0.0
        %v369 = vmax.f32 %v353, 0.0
        %v370 = vpack.c.bf16 %v358, %v354
        %v371 = vpack.c.bf16 %v359, %v355
        %v372 = vpack.c.bf16 %v360, %v356
        %v373 = vpack.c.bf16 %v361, %v357
        %v374 = vpack.c.bf16 %v366, %v362
        %v375 = vpack.c.bf16 %v367, %v363
        %v376 = vpack.c.bf16 %v368, %v364
        %v377 = vpack.c.bf16 %v369, %v365
        %v378 = vld [vmem:[%s214] sm:$0xff]
        %v379 = vld [vmem:[%s214 + $0x8] sm:$0xff]
        %v380 = vld [vmem:[%s214 + $0x10] sm:$0xff]
        %v381 = vld [vmem:[%s214 + $0x18] sm:$0xff]
        %v382 = vld [vmem:[%s214 + $0x20] sm:$0xff]
        %v383 = vld [vmem:[%s214 + $0x28] sm:$0xff]
        %v384 = vld [vmem:[%s214 + $0x30] sm:$0xff]
        %v385 = vld [vmem:[%s214 + $0x38] sm:$0xff]
        %v386 = vld [vmem:[%s214 + $0x40] sm:$0xff]
        %v387 = vld [vmem:[%s214 + $0x48] sm:$0xff]
        %v388 = vld [vmem:[%s214 + $0x50] sm:$0xff]
        %v389 = vld [vmem:[%s214 + $0x58] sm:$0xff]
        %v390 = vld [vmem:[%s214 + $0x60] sm:$0xff]
        %v391 = vld [vmem:[%s214 + $0x68] sm:$0xff]
        %v392 = vld [vmem:[%s214 + $0x70] sm:$0xff]
        %v393 = vld [vmem:[%s214 + $0x78] sm:$0xff]
        %v394 = vld [vmem:[%s214 + $0x80] sm:$0xff]
        %v395 = vld [vmem:[%s214 + $0x88] sm:$0xff]
        %v396 = vld [vmem:[%s214 + $0x90] sm:$0xff]
        %v397 = vld [vmem:[%s214 + $0x98] sm:$0xff]
        %v398 = vld [vmem:[%s214 + $0xa0] sm:$0xff]
        %v399 = vld [vmem:[%s214 + $0xa8] sm:$0xff]
        %v400 = vld [vmem:[%s214 + $0xb0] sm:$0xff]
        %v401 = vld [vmem:[%s214 + $0xb8] sm:$0xff]
        %v402 = vld [vmem:[%s214 + $0xc0] sm:$0xff]
        %v403 = vld [vmem:[%s214 + $0xc8] sm:$0xff]
        %v404 = vld [vmem:[%s214 + $0xd0] sm:$0xff]
        %v405 = vld [vmem:[%s214 + $0xd8] sm:$0xff]
        %v406 = vld [vmem:[%s214 + $0xe0] sm:$0xff]
        %v407 = vld [vmem:[%s214 + $0xe8] sm:$0xff]
        %v408 = vld [vmem:[%s214 + $0xf0] sm:$0xff]
        %v409 = vld [vmem:[%s214 + $0xf8] sm:$0xff]
        %v410 = vld [vmem:[%s214 + $0x100] sm:$0xff]
        %v411 = vld [vmem:[%s214 + $0x108] sm:$0xff]
        %v412 = vld [vmem:[%s214 + $0x110] sm:$0xff]
        %v413 = vld [vmem:[%s214 + $0x118] sm:$0xff]
        %v414 = vld [vmem:[%s214 + $0x120] sm:$0xff]
        %v415 = vld [vmem:[%s214 + $0x128] sm:$0xff]
        %v416 = vld [vmem:[%s214 + $0x130] sm:$0xff]
        %v417 = vld [vmem:[%s214 + $0x138] sm:$0xff]
        %v418 = vld [vmem:[%s214 + $0x140] sm:$0xff]
        %v419 = vld [vmem:[%s214 + $0x148] sm:$0xff]
        %v420 = vld [vmem:[%s214 + $0x150] sm:$0xff]
        %v421 = vld [vmem:[%s214 + $0x158] sm:$0xff]
        %v422 = vld [vmem:[%s214 + $0x160] sm:$0xff]
        %v423 = vld [vmem:[%s214 + $0x168] sm:$0xff]
        %v424 = vld [vmem:[%s214 + $0x170] sm:$0xff]
        %v425 = vld [vmem:[%s214 + $0x178] sm:$0xff]
        %v426 = vld [vmem:[%s214 + $0x180] sm:$0xff]
        %v427 = vld [vmem:[%s214 + $0x188] sm:$0xff]
        %v428 = vld [vmem:[%s214 + $0x190] sm:$0xff]
        %v429 = vld [vmem:[%s214 + $0x198] sm:$0xff]
        %v430 = vld [vmem:[%s214 + $0x1a0] sm:$0xff]
        %v431 = vld [vmem:[%s214 + $0x1a8] sm:$0xff]
        %v432 = vld [vmem:[%s214 + $0x1b0] sm:$0xff]
        %v433 = vld [vmem:[%s214 + $0x1b8] sm:$0xff]
        %v434 = vld [vmem:[%s214 + $0x1c0] sm:$0xff]
        %v435 = vld [vmem:[%s214 + $0x1c8] sm:$0xff]
        %v436 = vld [vmem:[%s214 + $0x1d0] sm:$0xff]
        %v437 = vld [vmem:[%s214 + $0x1d8] sm:$0xff]
        %v438 = vld [vmem:[%s214 + $0x1e0] sm:$0xff]
        %v439 = vld [vmem:[%s214 + $0x1e8] sm:$0xff]
        %v440 = vld [vmem:[%s214 + $0x1f0] sm:$0xff]
        %v441 = vld [vmem:[%s214 + $0x1f8] sm:$0xff]
        %v442 = vld [vmem:[%s214 + $0x200] sm:$0xff]
        %v443 = vld [vmem:[%s214 + $0x208] sm:$0xff]
        %v444 = vld [vmem:[%s214 + $0x210] sm:$0xff]
        %v445 = vld [vmem:[%s214 + $0x218] sm:$0xff]
        %v446 = vld [vmem:[%s214 + $0x220] sm:$0xff]
        %v447 = vld [vmem:[%s214 + $0x228] sm:$0xff]
        %v448 = vld [vmem:[%s214 + $0x230] sm:$0xff]
        %v449 = vld [vmem:[%s214 + $0x238] sm:$0xff]
        %v450 = vld [vmem:[%s214 + $0x240] sm:$0xff]
        %v451 = vld [vmem:[%s214 + $0x248] sm:$0xff]
        %v452 = vld [vmem:[%s214 + $0x250] sm:$0xff]
        %v453 = vld [vmem:[%s214 + $0x258] sm:$0xff]
        %v454 = vld [vmem:[%s214 + $0x260] sm:$0xff]
        %v455 = vld [vmem:[%s214 + $0x268] sm:$0xff]
        %v456 = vld [vmem:[%s214 + $0x270] sm:$0xff]
        %v457 = vld [vmem:[%s214 + $0x278] sm:$0xff]
        %v458 = vld [vmem:[%s214 + $0x280] sm:$0xff]
        %v459 = vld [vmem:[%s214 + $0x288] sm:$0xff]
        %v460 = vld [vmem:[%s214 + $0x290] sm:$0xff]
        %v461 = vld [vmem:[%s214 + $0x298] sm:$0xff]
        %v462 = vld [vmem:[%s214 + $0x2a0] sm:$0xff]
        %v463 = vld [vmem:[%s214 + $0x2a8] sm:$0xff]
        %v464 = vld [vmem:[%s214 + $0x2b0] sm:$0xff]
        %v465 = vld [vmem:[%s214 + $0x2b8] sm:$0xff]
        %v466 = vld [vmem:[%s214 + $0x2c0] sm:$0xff]
        %v467 = vld [vmem:[%s214 + $0x2c8] sm:$0xff]
        %v468 = vld [vmem:[%s214 + $0x2d0] sm:$0xff]
        %v469 = vld [vmem:[%s214 + $0x2d8] sm:$0xff]
        %v470 = vld [vmem:[%s214 + $0x2e0] sm:$0xff]
        %v471 = vld [vmem:[%s214 + $0x2e8] sm:$0xff]
        %v472 = vld [vmem:[%s214 + $0x2f0] sm:$0xff]
        %v473 = vld [vmem:[%s214 + $0x2f8] sm:$0xff]
        %v474 = vld [vmem:[%s214 + $0x300] sm:$0xff]
        %v475 = vld [vmem:[%s214 + $0x308] sm:$0xff]
        %v476 = vld [vmem:[%s214 + $0x310] sm:$0xff]
        %v477 = vld [vmem:[%s214 + $0x318] sm:$0xff]
        %v478 = vld [vmem:[%s214 + $0x320] sm:$0xff]
        %v479 = vld [vmem:[%s214 + $0x328] sm:$0xff]
        %v480 = vld [vmem:[%s214 + $0x330] sm:$0xff]
        %v481 = vld [vmem:[%s214 + $0x338] sm:$0xff]
        %v482 = vld [vmem:[%s214 + $0x340] sm:$0xff]
        %v483 = vld [vmem:[%s214 + $0x348] sm:$0xff]
        %v484 = vld [vmem:[%s214 + $0x350] sm:$0xff]
        %v485 = vld [vmem:[%s214 + $0x358] sm:$0xff]
        %v486 = vld [vmem:[%s214 + $0x360] sm:$0xff]
        %v487 = vld [vmem:[%s214 + $0x368] sm:$0xff]
        %v488 = vld [vmem:[%s214 + $0x370] sm:$0xff]
        %v489 = vld [vmem:[%s214 + $0x378] sm:$0xff]
        %v490 = vld [vmem:[%s214 + $0x380] sm:$0xff]
        %v491 = vld [vmem:[%s214 + $0x388] sm:$0xff]
        %v492 = vld [vmem:[%s214 + $0x390] sm:$0xff]
        %v493 = vld [vmem:[%s214 + $0x398] sm:$0xff]
        %v494 = vld [vmem:[%s214 + $0x3a0] sm:$0xff]
        %v495 = vld [vmem:[%s214 + $0x3a8] sm:$0xff]
        %v496 = vld [vmem:[%s214 + $0x3b0] sm:$0xff]
        %v497 = vld [vmem:[%s214 + $0x3b8] sm:$0xff]
        %v498 = vld [vmem:[%s214 + $0x3c0] sm:$0xff]
        %v499 = vld [vmem:[%s214 + $0x3c8] sm:$0xff]
        %v500 = vld [vmem:[%s214 + $0x3d0] sm:$0xff]
        %v501 = vld [vmem:[%s214 + $0x3d8] sm:$0xff]
        %v502 = vld [vmem:[%s214 + $0x3e0] sm:$0xff]
        %v503 = vld [vmem:[%s214 + $0x3e8] sm:$0xff]
        %v504 = vld [vmem:[%s214 + $0x3f0] sm:$0xff]
        %v505 = vld [vmem:[%s214 + $0x3f8] sm:$0xff]
        %v506 = vld [vmem:[%s214 + $0x400] sm:$0xff]
        %v507 = vld [vmem:[%s214 + $0x408] sm:$0xff]
        %v508 = vld [vmem:[%s214 + $0x410] sm:$0xff]
        %v509 = vld [vmem:[%s214 + $0x418] sm:$0xff]
        %v510 = vld [vmem:[%s214 + $0x420] sm:$0xff]
        %v511 = vld [vmem:[%s214 + $0x428] sm:$0xff]
        %v512 = vld [vmem:[%s214 + $0x430] sm:$0xff]
        %v513 = vld [vmem:[%s214 + $0x438] sm:$0xff]
        %v514 = vld [vmem:[%s214 + $0x440] sm:$0xff]
        %v515 = vld [vmem:[%s214 + $0x448] sm:$0xff]
        %v516 = vld [vmem:[%s214 + $0x450] sm:$0xff]
        %v517 = vld [vmem:[%s214 + $0x458] sm:$0xff]
        %v518 = vld [vmem:[%s214 + $0x460] sm:$0xff]
        %v519 = vld [vmem:[%s214 + $0x468] sm:$0xff]
        %v520 = vld [vmem:[%s214 + $0x470] sm:$0xff]
        %v521 = vld [vmem:[%s214 + $0x478] sm:$0xff]
        %v522 = vld [vmem:[%s214 + $0x480] sm:$0xff]
        %v523 = vld [vmem:[%s214 + $0x488] sm:$0xff]
        %v524 = vld [vmem:[%s214 + $0x490] sm:$0xff]
        %v525 = vld [vmem:[%s214 + $0x498] sm:$0xff]
        %v526 = vld [vmem:[%s214 + $0x4a0] sm:$0xff]
        %v527 = vld [vmem:[%s214 + $0x4a8] sm:$0xff]
        %v528 = vld [vmem:[%s214 + $0x4b0] sm:$0xff]
        %v529 = vld [vmem:[%s214 + $0x4b8] sm:$0xff]
        %v530 = vld [vmem:[%s214 + $0x4c0] sm:$0xff]
        %v531 = vld [vmem:[%s214 + $0x4c8] sm:$0xff]
        %v532 = vld [vmem:[%s214 + $0x4d0] sm:$0xff]
        %v533 = vld [vmem:[%s214 + $0x4d8] sm:$0xff]
        %v534 = vld [vmem:[%s214 + $0x4e0] sm:$0xff]
        %v535 = vld [vmem:[%s214 + $0x4e8] sm:$0xff]
        %v536 = vld [vmem:[%s214 + $0x4f0] sm:$0xff]
        %v537 = vld [vmem:[%s214 + $0x4f8] sm:$0xff]
        %v538 = vld [vmem:[%s214 + $0x500] sm:$0xff]
        %v539 = vld [vmem:[%s214 + $0x508] sm:$0xff]
        %v540 = vld [vmem:[%s214 + $0x510] sm:$0xff]
        %v541 = vld [vmem:[%s214 + $0x518] sm:$0xff]
        %v542 = vld [vmem:[%s214 + $0x520] sm:$0xff]
        %v543 = vld [vmem:[%s214 + $0x528] sm:$0xff]
        %v544 = vld [vmem:[%s214 + $0x530] sm:$0xff]
        %v545 = vld [vmem:[%s214 + $0x538] sm:$0xff]
        %v546 = vld [vmem:[%s214 + $0x540] sm:$0xff]
        %v547 = vld [vmem:[%s214 + $0x548] sm:$0xff]
        %v548 = vld [vmem:[%s214 + $0x550] sm:$0xff]
        %v549 = vld [vmem:[%s214 + $0x558] sm:$0xff]
        %v550 = vld [vmem:[%s214 + $0x560] sm:$0xff]
        %v551 = vld [vmem:[%s214 + $0x568] sm:$0xff]
        %v552 = vld [vmem:[%s214 + $0x570] sm:$0xff]
        %v553 = vld [vmem:[%s214 + $0x578] sm:$0xff]
        %v554 = vld [vmem:[%s214 + $0x580] sm:$0xff]
        %v555 = vld [vmem:[%s214 + $0x588] sm:$0xff]
        %v556 = vld [vmem:[%s214 + $0x590] sm:$0xff]
        %v557 = vld [vmem:[%s214 + $0x598] sm:$0xff]
        %v558 = vld [vmem:[%s214 + $0x5a0] sm:$0xff]
        %v559 = vld [vmem:[%s214 + $0x5a8] sm:$0xff]
        %v560 = vld [vmem:[%s214 + $0x5b0] sm:$0xff]
        %v561 = vld [vmem:[%s214 + $0x5b8] sm:$0xff]
        %v562 = vld [vmem:[%s214 + $0x5c0] sm:$0xff]
        %v563 = vld [vmem:[%s214 + $0x5c8] sm:$0xff]
        %v564 = vld [vmem:[%s214 + $0x5d0] sm:$0xff]
        %v565 = vld [vmem:[%s214 + $0x5d8] sm:$0xff]
        %v566 = vld [vmem:[%s214 + $0x5e0] sm:$0xff]
        %v567 = vld [vmem:[%s214 + $0x5e8] sm:$0xff]
        %v568 = vld [vmem:[%s214 + $0x5f0] sm:$0xff]
        %v569 = vld [vmem:[%s214 + $0x5f8] sm:$0xff]
        %v570 = vld [vmem:[%s214 + $0x600] sm:$0xff]
        %v571 = vld [vmem:[%s214 + $0x608] sm:$0xff]
        %v572 = vld [vmem:[%s214 + $0x610] sm:$0xff]
        %v573 = vld [vmem:[%s214 + $0x618] sm:$0xff]
        %v574 = vld [vmem:[%s214 + $0x620] sm:$0xff]
        %v575 = vld [vmem:[%s214 + $0x628] sm:$0xff]
        %v576 = vld [vmem:[%s214 + $0x630] sm:$0xff]
        %v577 = vld [vmem:[%s214 + $0x638] sm:$0xff]
        %v578 = vld [vmem:[%s214 + $0x640] sm:$0xff]
        %v579 = vld [vmem:[%s214 + $0x648] sm:$0xff]
        %v580 = vld [vmem:[%s214 + $0x650] sm:$0xff]
        %v581 = vld [vmem:[%s214 + $0x658] sm:$0xff]
        %v582 = vld [vmem:[%s214 + $0x660] sm:$0xff]
        %v583 = vld [vmem:[%s214 + $0x668] sm:$0xff]
        %v584 = vld [vmem:[%s214 + $0x670] sm:$0xff]
        %v585 = vld [vmem:[%s214 + $0x678] sm:$0xff]
        %v586 = vld [vmem:[%s214 + $0x680] sm:$0xff]
        %v587 = vld [vmem:[%s214 + $0x688] sm:$0xff]
        %v588 = vld [vmem:[%s214 + $0x690] sm:$0xff]
        %v589 = vld [vmem:[%s214 + $0x698] sm:$0xff]
        %v590 = vld [vmem:[%s214 + $0x6a0] sm:$0xff]
        %v591 = vld [vmem:[%s214 + $0x6a8] sm:$0xff]
        %v592 = vld [vmem:[%s214 + $0x6b0] sm:$0xff]
        %v593 = vld [vmem:[%s214 + $0x6b8] sm:$0xff]
        %v594 = vld [vmem:[%s214 + $0x6c0] sm:$0xff]
        %v595 = vld [vmem:[%s214 + $0x6c8] sm:$0xff]
        %v596 = vld [vmem:[%s214 + $0x6d0] sm:$0xff]
        %v597 = vld [vmem:[%s214 + $0x6d8] sm:$0xff]
        %v598 = vld [vmem:[%s214 + $0x6e0] sm:$0xff]
        %v599 = vld [vmem:[%s214 + $0x6e8] sm:$0xff]
        %v600 = vld [vmem:[%s214 + $0x6f0] sm:$0xff]
        %v601 = vld [vmem:[%s214 + $0x6f8] sm:$0xff]
        %v602 = vld [vmem:[%s214 + $0x700] sm:$0xff]
        %v603 = vld [vmem:[%s214 + $0x708] sm:$0xff]
        %v604 = vld [vmem:[%s214 + $0x710] sm:$0xff]
        %v605 = vld [vmem:[%s214 + $0x718] sm:$0xff]
        %v606 = vld [vmem:[%s214 + $0x720] sm:$0xff]
        %v607 = vld [vmem:[%s214 + $0x728] sm:$0xff]
        %v608 = vld [vmem:[%s214 + $0x730] sm:$0xff]
        %v609 = vld [vmem:[%s214 + $0x738] sm:$0xff]
        %v610 = vld [vmem:[%s214 + $0x740] sm:$0xff]
        %v611 = vld [vmem:[%s214 + $0x748] sm:$0xff]
        %v612 = vld [vmem:[%s214 + $0x750] sm:$0xff]
        %v613 = vld [vmem:[%s214 + $0x758] sm:$0xff]
        %v614 = vld [vmem:[%s214 + $0x760] sm:$0xff]
        %v615 = vld [vmem:[%s214 + $0x768] sm:$0xff]
        %v616 = vld [vmem:[%s214 + $0x770] sm:$0xff]
        %v617 = vld [vmem:[%s214 + $0x778] sm:$0xff]
        %v618 = vld [vmem:[%s214 + $0x780] sm:$0xff]
        %v619 = vld [vmem:[%s214 + $0x788] sm:$0xff]
        %v620 = vld [vmem:[%s214 + $0x790] sm:$0xff]
        %v621 = vld [vmem:[%s214 + $0x798] sm:$0xff]
        %v622 = vld [vmem:[%s214 + $0x7a0] sm:$0xff]
        %v623 = vld [vmem:[%s214 + $0x7a8] sm:$0xff]
        %v624 = vld [vmem:[%s214 + $0x7b0] sm:$0xff]
        %v625 = vld [vmem:[%s214 + $0x7b8] sm:$0xff]
        %v626 = vld [vmem:[%s214 + $0x7c0] sm:$0xff]
        %v627 = vld [vmem:[%s214 + $0x7c8] sm:$0xff]
        %v628 = vld [vmem:[%s214 + $0x7d0] sm:$0xff]
        %v629 = vld [vmem:[%s214 + $0x7d8] sm:$0xff]
        %v630 = vld [vmem:[%s214 + $0x7e0] sm:$0xff]
        %v631 = vld [vmem:[%s214 + $0x7e8] sm:$0xff]
        %v632 = vld [vmem:[%s214 + $0x7f0] sm:$0xff]
        %v633 = vld [vmem:[%s214 + $0x7f8] sm:$0xff]
        %v890 = vunpack.c.l.b16 %v378
        %v891 = vunpack.c.h.b16 %v378
        %v892 = vunpack.c.l.b16 %v379
        %v893 = vunpack.c.h.b16 %v379
        %v894 = vunpack.c.l.b16 %v380
        %v895 = vunpack.c.h.b16 %v380
        %v896 = vunpack.c.l.b16 %v381
        %v897 = vunpack.c.h.b16 %v381
        %v898 = vunpack.c.l.b16 %v382
        %v899 = vunpack.c.h.b16 %v382
        %v900 = vunpack.c.l.b16 %v383
        %v901 = vunpack.c.h.b16 %v383
        %v902 = vunpack.c.l.b16 %v384
        %v903 = vunpack.c.h.b16 %v384
        %v904 = vunpack.c.l.b16 %v385
        %v905 = vunpack.c.h.b16 %v385
        %v906 = vunpack.c.l.b16 %v386
        %v907 = vunpack.c.h.b16 %v386
        %v908 = vunpack.c.l.b16 %v387
        %v909 = vunpack.c.h.b16 %v387
        %v910 = vunpack.c.l.b16 %v388
        %v911 = vunpack.c.h.b16 %v388
        %v912 = vunpack.c.l.b16 %v389
        %v913 = vunpack.c.h.b16 %v389
        %v914 = vunpack.c.l.b16 %v390
        %v915 = vunpack.c.h.b16 %v390
        %v916 = vunpack.c.l.b16 %v391
        %v917 = vunpack.c.h.b16 %v391
        %v918 = vunpack.c.l.b16 %v392
        %v919 = vunpack.c.h.b16 %v392
        %v920 = vunpack.c.l.b16 %v393
        %v921 = vunpack.c.h.b16 %v393
        %v922 = vunpack.c.l.b16 %v394
        %v923 = vunpack.c.h.b16 %v394
        %v924 = vunpack.c.l.b16 %v395
        %v925 = vunpack.c.h.b16 %v395
        %v926 = vunpack.c.l.b16 %v396
        %v927 = vunpack.c.h.b16 %v396
        %v928 = vunpack.c.l.b16 %v397
        %v929 = vunpack.c.h.b16 %v397
        %v930 = vunpack.c.l.b16 %v398
        %v931 = vunpack.c.h.b16 %v398
        %v932 = vunpack.c.l.b16 %v399
        %v933 = vunpack.c.h.b16 %v399
        %v934 = vunpack.c.l.b16 %v400
        %v935 = vunpack.c.h.b16 %v400
        %v936 = vunpack.c.l.b16 %v401
        %v937 = vunpack.c.h.b16 %v401
        %v938 = vunpack.c.l.b16 %v402
        %v939 = vunpack.c.h.b16 %v402
        %v940 = vunpack.c.l.b16 %v403
        %v941 = vunpack.c.h.b16 %v403
        %v942 = vunpack.c.l.b16 %v404
        %v943 = vunpack.c.h.b16 %v404
        %v944 = vunpack.c.l.b16 %v405
        %v945 = vunpack.c.h.b16 %v405
        %v946 = vunpack.c.l.b16 %v406
        %v947 = vunpack.c.h.b16 %v406
        %v948 = vunpack.c.l.b16 %v407
        %v949 = vunpack.c.h.b16 %v407
        %v950 = vunpack.c.l.b16 %v408
        %v951 = vunpack.c.h.b16 %v408
        %v952 = vunpack.c.l.b16 %v409
        %v953 = vunpack.c.h.b16 %v409
        %v954 = vunpack.c.l.b16 %v410
        %v955 = vunpack.c.h.b16 %v410
        %v956 = vunpack.c.l.b16 %v411
        %v957 = vunpack.c.h.b16 %v411
        %v958 = vunpack.c.l.b16 %v412
        %v959 = vunpack.c.h.b16 %v412
        %v960 = vunpack.c.l.b16 %v413
        %v961 = vunpack.c.h.b16 %v413
        %v962 = vunpack.c.l.b16 %v414
        %v963 = vunpack.c.h.b16 %v414
        %v964 = vunpack.c.l.b16 %v415
        %v965 = vunpack.c.h.b16 %v415
        %v966 = vunpack.c.l.b16 %v416
        %v967 = vunpack.c.h.b16 %v416
        %v968 = vunpack.c.l.b16 %v417
        %v969 = vunpack.c.h.b16 %v417
        %v970 = vunpack.c.l.b16 %v418
        %v971 = vunpack.c.h.b16 %v418
        %v972 = vunpack.c.l.b16 %v419
        %v973 = vunpack.c.h.b16 %v419
        %v974 = vunpack.c.l.b16 %v420
        %v975 = vunpack.c.h.b16 %v420
        %v976 = vunpack.c.l.b16 %v421
        %v977 = vunpack.c.h.b16 %v421
        %v978 = vunpack.c.l.b16 %v422
        %v979 = vunpack.c.h.b16 %v422
        %v980 = vunpack.c.l.b16 %v423
        %v981 = vunpack.c.h.b16 %v423
        %v982 = vunpack.c.l.b16 %v424
        %v983 = vunpack.c.h.b16 %v424
        %v984 = vunpack.c.l.b16 %v425
        %v985 = vunpack.c.h.b16 %v425
        %v986 = vunpack.c.l.b16 %v426
        %v987 = vunpack.c.h.b16 %v426
        %v988 = vunpack.c.l.b16 %v427
        %v989 = vunpack.c.h.b16 %v427
        %v990 = vunpack.c.l.b16 %v428
        %v991 = vunpack.c.h.b16 %v428
        %v992 = vunpack.c.l.b16 %v429
        %v993 = vunpack.c.h.b16 %v429
        %v994 = vunpack.c.l.b16 %v430
        %v995 = vunpack.c.h.b16 %v430
        %v996 = vunpack.c.l.b16 %v431
        %v997 = vunpack.c.h.b16 %v431
        %v998 = vunpack.c.l.b16 %v432
        %v999 = vunpack.c.h.b16 %v432
        %v1000 = vunpack.c.l.b16 %v433
        %v1001 = vunpack.c.h.b16 %v433
        %v1002 = vunpack.c.l.b16 %v434
        %v1003 = vunpack.c.h.b16 %v434
        %v1004 = vunpack.c.l.b16 %v435
        %v1005 = vunpack.c.h.b16 %v435
        %v1006 = vunpack.c.l.b16 %v436
        %v1007 = vunpack.c.h.b16 %v436
        %v1008 = vunpack.c.l.b16 %v437
        %v1009 = vunpack.c.h.b16 %v437
        %v1010 = vunpack.c.l.b16 %v438
        %v1011 = vunpack.c.h.b16 %v438
        %v1012 = vunpack.c.l.b16 %v439
        %v1013 = vunpack.c.h.b16 %v439
        %v1014 = vunpack.c.l.b16 %v440
        %v1015 = vunpack.c.h.b16 %v440
        %v1016 = vunpack.c.l.b16 %v441
        %v1017 = vunpack.c.h.b16 %v441
        %v1018 = vunpack.c.l.b16 %v442
        %v1019 = vunpack.c.h.b16 %v442
        %v1020 = vunpack.c.l.b16 %v443
        %v1021 = vunpack.c.h.b16 %v443
        %v1022 = vunpack.c.l.b16 %v444
        %v1023 = vunpack.c.h.b16 %v444
        %v1024 = vunpack.c.l.b16 %v445
        %v1025 = vunpack.c.h.b16 %v445
        %v1026 = vunpack.c.l.b16 %v446
        %v1027 = vunpack.c.h.b16 %v446
        %v1028 = vunpack.c.l.b16 %v447
        %v1029 = vunpack.c.h.b16 %v447
        %v1030 = vunpack.c.l.b16 %v448
        %v1031 = vunpack.c.h.b16 %v448
        %v1032 = vunpack.c.l.b16 %v449
        %v1033 = vunpack.c.h.b16 %v449
        %v1034 = vunpack.c.l.b16 %v450
        %v1035 = vunpack.c.h.b16 %v450
        %v1036 = vunpack.c.l.b16 %v451
        %v1037 = vunpack.c.h.b16 %v451
        %v1038 = vunpack.c.l.b16 %v452
        %v1039 = vunpack.c.h.b16 %v452
        %v1040 = vunpack.c.l.b16 %v453
        %v1041 = vunpack.c.h.b16 %v453
        %v1042 = vunpack.c.l.b16 %v454
        %v1043 = vunpack.c.h.b16 %v454
        %v1044 = vunpack.c.l.b16 %v455
        %v1045 = vunpack.c.h.b16 %v455
        %v1046 = vunpack.c.l.b16 %v456
        %v1047 = vunpack.c.h.b16 %v456
        %v1048 = vunpack.c.l.b16 %v457
        %v1049 = vunpack.c.h.b16 %v457
        %v1050 = vunpack.c.l.b16 %v458
        %v1051 = vunpack.c.h.b16 %v458
        %v1052 = vunpack.c.l.b16 %v459
        %v1053 = vunpack.c.h.b16 %v459
        %v1054 = vunpack.c.l.b16 %v460
        %v1055 = vunpack.c.h.b16 %v460
        %v1056 = vunpack.c.l.b16 %v461
        %v1057 = vunpack.c.h.b16 %v461
        %v1058 = vunpack.c.l.b16 %v462
        %v1059 = vunpack.c.h.b16 %v462
        %v1060 = vunpack.c.l.b16 %v463
        %v1061 = vunpack.c.h.b16 %v463
        %v1062 = vunpack.c.l.b16 %v464
        %v1063 = vunpack.c.h.b16 %v464
        %v1064 = vunpack.c.l.b16 %v465
        %v1065 = vunpack.c.h.b16 %v465
        %v1066 = vunpack.c.l.b16 %v466
        %v1067 = vunpack.c.h.b16 %v466
        %v1068 = vunpack.c.l.b16 %v467
        %v1069 = vunpack.c.h.b16 %v467
        %v1070 = vunpack.c.l.b16 %v468
        %v1071 = vunpack.c.h.b16 %v468
        %v1072 = vunpack.c.l.b16 %v469
        %v1073 = vunpack.c.h.b16 %v469
        %v1074 = vunpack.c.l.b16 %v470
        %v1075 = vunpack.c.h.b16 %v470
        %v1076 = vunpack.c.l.b16 %v471
        %v1077 = vunpack.c.h.b16 %v471
        %v1078 = vunpack.c.l.b16 %v472
        %v1079 = vunpack.c.h.b16 %v472
        %v1080 = vunpack.c.l.b16 %v473
        %v1081 = vunpack.c.h.b16 %v473
        %v1082 = vunpack.c.l.b16 %v474
        %v1083 = vunpack.c.h.b16 %v474
        %v1084 = vunpack.c.l.b16 %v475
        %v1085 = vunpack.c.h.b16 %v475
        %v1086 = vunpack.c.l.b16 %v476
        %v1087 = vunpack.c.h.b16 %v476
        %v1088 = vunpack.c.l.b16 %v477
        %v1089 = vunpack.c.h.b16 %v477
        %v1090 = vunpack.c.l.b16 %v478
        %v1091 = vunpack.c.h.b16 %v478
        %v1092 = vunpack.c.l.b16 %v479
        %v1093 = vunpack.c.h.b16 %v479
        %v1094 = vunpack.c.l.b16 %v480
        %v1095 = vunpack.c.h.b16 %v480
        %v1096 = vunpack.c.l.b16 %v481
        %v1097 = vunpack.c.h.b16 %v481
        %v1098 = vunpack.c.l.b16 %v482
        %v1099 = vunpack.c.h.b16 %v482
        %v1100 = vunpack.c.l.b16 %v483
        %v1101 = vunpack.c.h.b16 %v483
        %v1102 = vunpack.c.l.b16 %v484
        %v1103 = vunpack.c.h.b16 %v484
        %v1104 = vunpack.c.l.b16 %v485
        %v1105 = vunpack.c.h.b16 %v485
        %v1106 = vunpack.c.l.b16 %v486
        %v1107 = vunpack.c.h.b16 %v486
        %v1108 = vunpack.c.l.b16 %v487
        %v1109 = vunpack.c.h.b16 %v487
        %v1110 = vunpack.c.l.b16 %v488
        %v1111 = vunpack.c.h.b16 %v488
        %v1112 = vunpack.c.l.b16 %v489
        %v1113 = vunpack.c.h.b16 %v489
        %v1114 = vunpack.c.l.b16 %v490
        %v1115 = vunpack.c.h.b16 %v490
        %v1116 = vunpack.c.l.b16 %v491
        %v1117 = vunpack.c.h.b16 %v491
        %v1118 = vunpack.c.l.b16 %v492
        %v1119 = vunpack.c.h.b16 %v492
        %v1120 = vunpack.c.l.b16 %v493
        %v1121 = vunpack.c.h.b16 %v493
        %v1122 = vunpack.c.l.b16 %v494
        %v1123 = vunpack.c.h.b16 %v494
        %v1124 = vunpack.c.l.b16 %v495
        %v1125 = vunpack.c.h.b16 %v495
        %v1126 = vunpack.c.l.b16 %v496
        %v1127 = vunpack.c.h.b16 %v496
        %v1128 = vunpack.c.l.b16 %v497
        %v1129 = vunpack.c.h.b16 %v497
        %v1130 = vunpack.c.l.b16 %v498
        %v1131 = vunpack.c.h.b16 %v498
        %v1132 = vunpack.c.l.b16 %v499
        %v1133 = vunpack.c.h.b16 %v499
        %v1134 = vunpack.c.l.b16 %v500
        %v1135 = vunpack.c.h.b16 %v500
        %v1136 = vunpack.c.l.b16 %v501
        %v1137 = vunpack.c.h.b16 %v501
        %v1138 = vunpack.c.l.b16 %v502
        %v1139 = vunpack.c.h.b16 %v502
        %v1140 = vunpack.c.l.b16 %v503
        %v1141 = vunpack.c.h.b16 %v503
        %v1142 = vunpack.c.l.b16 %v504
        %v1143 = vunpack.c.h.b16 %v504
        %v1144 = vunpack.c.l.b16 %v505
        %v1145 = vunpack.c.h.b16 %v505
        %v1146 = vunpack.c.l.b16 %v506
        %v1147 = vunpack.c.h.b16 %v506
        %v1148 = vunpack.c.l.b16 %v507
        %v1149 = vunpack.c.h.b16 %v507
        %v1150 = vunpack.c.l.b16 %v508
        %v1151 = vunpack.c.h.b16 %v508
        %v1152 = vunpack.c.l.b16 %v509
        %v1153 = vunpack.c.h.b16 %v509
        %v1154 = vunpack.c.l.b16 %v510
        %v1155 = vunpack.c.h.b16 %v510
        %v1156 = vunpack.c.l.b16 %v511
        %v1157 = vunpack.c.h.b16 %v511
        %v1158 = vunpack.c.l.b16 %v512
        %v1159 = vunpack.c.h.b16 %v512
        %v1160 = vunpack.c.l.b16 %v513
        %v1161 = vunpack.c.h.b16 %v513
        %v1162 = vunpack.c.l.b16 %v514
        %v1163 = vunpack.c.h.b16 %v514
        %v1164 = vunpack.c.l.b16 %v515
        %v1165 = vunpack.c.h.b16 %v515
        %v1166 = vunpack.c.l.b16 %v516
        %v1167 = vunpack.c.h.b16 %v516
        %v1168 = vunpack.c.l.b16 %v517
        %v1169 = vunpack.c.h.b16 %v517
        %v1170 = vunpack.c.l.b16 %v518
        %v1171 = vunpack.c.h.b16 %v518
        %v1172 = vunpack.c.l.b16 %v519
        %v1173 = vunpack.c.h.b16 %v519
        %v1174 = vunpack.c.l.b16 %v520
        %v1175 = vunpack.c.h.b16 %v520
        %v1176 = vunpack.c.l.b16 %v521
        %v1177 = vunpack.c.h.b16 %v521
        %v1178 = vunpack.c.l.b16 %v522
        %v1179 = vunpack.c.h.b16 %v522
        %v1180 = vunpack.c.l.b16 %v523
        %v1181 = vunpack.c.h.b16 %v523
        %v1182 = vunpack.c.l.b16 %v524
        %v1183 = vunpack.c.h.b16 %v524
        %v1184 = vunpack.c.l.b16 %v525
        %v1185 = vunpack.c.h.b16 %v525
        %v1186 = vunpack.c.l.b16 %v526
        %v1187 = vunpack.c.h.b16 %v526
        %v1188 = vunpack.c.l.b16 %v527
        %v1189 = vunpack.c.h.b16 %v527
        %v1190 = vunpack.c.l.b16 %v528
        %v1191 = vunpack.c.h.b16 %v528
        %v1192 = vunpack.c.l.b16 %v529
        %v1193 = vunpack.c.h.b16 %v529
        %v1194 = vunpack.c.l.b16 %v530
        %v1195 = vunpack.c.h.b16 %v530
        %v1196 = vunpack.c.l.b16 %v531
        %v1197 = vunpack.c.h.b16 %v531
        %v1198 = vunpack.c.l.b16 %v532
        %v1199 = vunpack.c.h.b16 %v532
        %v1200 = vunpack.c.l.b16 %v533
        %v1201 = vunpack.c.h.b16 %v533
        %v1202 = vunpack.c.l.b16 %v534
        %v1203 = vunpack.c.h.b16 %v534
        %v1204 = vunpack.c.l.b16 %v535
        %v1205 = vunpack.c.h.b16 %v535
        %v1206 = vunpack.c.l.b16 %v536
        %v1207 = vunpack.c.h.b16 %v536
        %v1208 = vunpack.c.l.b16 %v537
        %v1209 = vunpack.c.h.b16 %v537
        %v1210 = vunpack.c.l.b16 %v538
        %v1211 = vunpack.c.h.b16 %v538
        %v1212 = vunpack.c.l.b16 %v539
        %v1213 = vunpack.c.h.b16 %v539
        %v1214 = vunpack.c.l.b16 %v540
        %v1215 = vunpack.c.h.b16 %v540
        %v1216 = vunpack.c.l.b16 %v541
        %v1217 = vunpack.c.h.b16 %v541
        %v1218 = vunpack.c.l.b16 %v542
        %v1219 = vunpack.c.h.b16 %v542
        %v1220 = vunpack.c.l.b16 %v543
        %v1221 = vunpack.c.h.b16 %v543
        %v1222 = vunpack.c.l.b16 %v544
        %v1223 = vunpack.c.h.b16 %v544
        %v1224 = vunpack.c.l.b16 %v545
        %v1225 = vunpack.c.h.b16 %v545
        %v1226 = vunpack.c.l.b16 %v546
        %v1227 = vunpack.c.h.b16 %v546
        %v1228 = vunpack.c.l.b16 %v547
        %v1229 = vunpack.c.h.b16 %v547
        %v1230 = vunpack.c.l.b16 %v548
        %v1231 = vunpack.c.h.b16 %v548
        %v1232 = vunpack.c.l.b16 %v549
        %v1233 = vunpack.c.h.b16 %v549
        %v1234 = vunpack.c.l.b16 %v550
        %v1235 = vunpack.c.h.b16 %v550
        %v1236 = vunpack.c.l.b16 %v551
        %v1237 = vunpack.c.h.b16 %v551
        %v1238 = vunpack.c.l.b16 %v552
        %v1239 = vunpack.c.h.b16 %v552
        %v1240 = vunpack.c.l.b16 %v553
        %v1241 = vunpack.c.h.b16 %v553
        %v1242 = vunpack.c.l.b16 %v554
        %v1243 = vunpack.c.h.b16 %v554
        %v1244 = vunpack.c.l.b16 %v555
        %v1245 = vunpack.c.h.b16 %v555
        %v1246 = vunpack.c.l.b16 %v556
        %v1247 = vunpack.c.h.b16 %v556
        %v1248 = vunpack.c.l.b16 %v557
        %v1249 = vunpack.c.h.b16 %v557
        %v1250 = vunpack.c.l.b16 %v558
        %v1251 = vunpack.c.h.b16 %v558
        %v1252 = vunpack.c.l.b16 %v559
        %v1253 = vunpack.c.h.b16 %v559
        %v1254 = vunpack.c.l.b16 %v560
        %v1255 = vunpack.c.h.b16 %v560
        %v1256 = vunpack.c.l.b16 %v561
        %v1257 = vunpack.c.h.b16 %v561
        %v1258 = vunpack.c.l.b16 %v562
        %v1259 = vunpack.c.h.b16 %v562
        %v1260 = vunpack.c.l.b16 %v563
        %v1261 = vunpack.c.h.b16 %v563
        %v1262 = vunpack.c.l.b16 %v564
        %v1263 = vunpack.c.h.b16 %v564
        %v1264 = vunpack.c.l.b16 %v565
        %v1265 = vunpack.c.h.b16 %v565
        %v1266 = vunpack.c.l.b16 %v566
        %v1267 = vunpack.c.h.b16 %v566
        %v1268 = vunpack.c.l.b16 %v567
        %v1269 = vunpack.c.h.b16 %v567
        %v1270 = vunpack.c.l.b16 %v568
        %v1271 = vunpack.c.h.b16 %v568
        %v1272 = vunpack.c.l.b16 %v569
        %v1273 = vunpack.c.h.b16 %v569
        %v1274 = vunpack.c.l.b16 %v570
        %v1275 = vunpack.c.h.b16 %v570
        %v1276 = vunpack.c.l.b16 %v571
        %v1277 = vunpack.c.h.b16 %v571
        %v1278 = vunpack.c.l.b16 %v572
        %v1279 = vunpack.c.h.b16 %v572
        %v1280 = vunpack.c.l.b16 %v573
        %v1281 = vunpack.c.h.b16 %v573
        %v1282 = vunpack.c.l.b16 %v574
        %v1283 = vunpack.c.h.b16 %v574
        %v1284 = vunpack.c.l.b16 %v575
        %v1285 = vunpack.c.h.b16 %v575
        %v1286 = vunpack.c.l.b16 %v576
        %v1287 = vunpack.c.h.b16 %v576
        %v1288 = vunpack.c.l.b16 %v577
        %v1289 = vunpack.c.h.b16 %v577
        %v1290 = vunpack.c.l.b16 %v578
        %v1291 = vunpack.c.h.b16 %v578
        %v1292 = vunpack.c.l.b16 %v579
        %v1293 = vunpack.c.h.b16 %v579
        %v1294 = vunpack.c.l.b16 %v580
        %v1295 = vunpack.c.h.b16 %v580
        %v1296 = vunpack.c.l.b16 %v581
        %v1297 = vunpack.c.h.b16 %v581
        %v1298 = vunpack.c.l.b16 %v582
        %v1299 = vunpack.c.h.b16 %v582
        %v1300 = vunpack.c.l.b16 %v583
        %v1301 = vunpack.c.h.b16 %v583
        %v1302 = vunpack.c.l.b16 %v584
        %v1303 = vunpack.c.h.b16 %v584
        %v1304 = vunpack.c.l.b16 %v585
        %v1305 = vunpack.c.h.b16 %v585
        %v1306 = vunpack.c.l.b16 %v586
        %v1307 = vunpack.c.h.b16 %v586
        %v1308 = vunpack.c.l.b16 %v587
        %v1309 = vunpack.c.h.b16 %v587
        %v1310 = vunpack.c.l.b16 %v588
        %v1311 = vunpack.c.h.b16 %v588
        %v1312 = vunpack.c.l.b16 %v589
        %v1313 = vunpack.c.h.b16 %v589
        %v1314 = vunpack.c.l.b16 %v590
        %v1315 = vunpack.c.h.b16 %v590
        %v1316 = vunpack.c.l.b16 %v591
        %v1317 = vunpack.c.h.b16 %v591
        %v1318 = vunpack.c.l.b16 %v592
        %v1319 = vunpack.c.h.b16 %v592
        %v1320 = vunpack.c.l.b16 %v593
        %v1321 = vunpack.c.h.b16 %v593
        %v1322 = vunpack.c.l.b16 %v594
        %v1323 = vunpack.c.h.b16 %v594
        %v1324 = vunpack.c.l.b16 %v595
        %v1325 = vunpack.c.h.b16 %v595
        %v1326 = vunpack.c.l.b16 %v596
        %v1327 = vunpack.c.h.b16 %v596
        %v1328 = vunpack.c.l.b16 %v597
        %v1329 = vunpack.c.h.b16 %v597
        %v1330 = vunpack.c.l.b16 %v598
        %v1331 = vunpack.c.h.b16 %v598
        %v1332 = vunpack.c.l.b16 %v599
        %v1333 = vunpack.c.h.b16 %v599
        %v1334 = vunpack.c.l.b16 %v600
        %v1335 = vunpack.c.h.b16 %v600
        %v1336 = vunpack.c.l.b16 %v601
        %v1337 = vunpack.c.h.b16 %v601
        %v1338 = vunpack.c.l.b16 %v602
        %v1339 = vunpack.c.h.b16 %v602
        %v1340 = vunpack.c.l.b16 %v603
        %v1341 = vunpack.c.h.b16 %v603
        %v1342 = vunpack.c.l.b16 %v604
        %v1343 = vunpack.c.h.b16 %v604
        %v1344 = vunpack.c.l.b16 %v605
        %v1345 = vunpack.c.h.b16 %v605
        %v1346 = vunpack.c.l.b16 %v606
        %v1347 = vunpack.c.h.b16 %v606
        %v1348 = vunpack.c.l.b16 %v607
        %v1349 = vunpack.c.h.b16 %v607
        %v1350 = vunpack.c.l.b16 %v608
        %v1351 = vunpack.c.h.b16 %v608
        %v1352 = vunpack.c.l.b16 %v609
        %v1353 = vunpack.c.h.b16 %v609
        %v1354 = vunpack.c.l.b16 %v610
        %v1355 = vunpack.c.h.b16 %v610
        %v1356 = vunpack.c.l.b16 %v611
        %v1357 = vunpack.c.h.b16 %v611
        %v1358 = vunpack.c.l.b16 %v612
        %v1359 = vunpack.c.h.b16 %v612
        %v1360 = vunpack.c.l.b16 %v613
        %v1361 = vunpack.c.h.b16 %v613
        %v1362 = vunpack.c.l.b16 %v614
        %v1363 = vunpack.c.h.b16 %v614
        %v1364 = vunpack.c.l.b16 %v615
        %v1365 = vunpack.c.h.b16 %v615
        %v1366 = vunpack.c.l.b16 %v616
        %v1367 = vunpack.c.h.b16 %v616
        %v1368 = vunpack.c.l.b16 %v617
        %v1369 = vunpack.c.h.b16 %v617
        %v1370 = vunpack.c.l.b16 %v618
        %v1371 = vunpack.c.h.b16 %v618
        %v1372 = vunpack.c.l.b16 %v619
        %v1373 = vunpack.c.h.b16 %v619
        %v1374 = vunpack.c.l.b16 %v620
        %v1375 = vunpack.c.h.b16 %v620
        %v1376 = vunpack.c.l.b16 %v621
        %v1377 = vunpack.c.h.b16 %v621
        %v1378 = vunpack.c.l.b16 %v622
        %v1379 = vunpack.c.h.b16 %v622
        %v1380 = vunpack.c.l.b16 %v623
        %v1381 = vunpack.c.h.b16 %v623
        %v1382 = vunpack.c.l.b16 %v624
        %v1383 = vunpack.c.h.b16 %v624
        %v1384 = vunpack.c.l.b16 %v625
        %v1385 = vunpack.c.h.b16 %v625
        %v1386 = vunpack.c.l.b16 %v626
        %v1387 = vunpack.c.h.b16 %v626
        %v1388 = vunpack.c.l.b16 %v627
        %v1389 = vunpack.c.h.b16 %v627
        %v1390 = vunpack.c.l.b16 %v628
        %v1391 = vunpack.c.h.b16 %v628
        %v1392 = vunpack.c.l.b16 %v629
        %v1393 = vunpack.c.h.b16 %v629
        %v1394 = vunpack.c.l.b16 %v630
        %v1395 = vunpack.c.h.b16 %v630
        %v1396 = vunpack.c.l.b16 %v631
        %v1397 = vunpack.c.h.b16 %v631
        %v1398 = vunpack.c.l.b16 %v632
        %v1399 = vunpack.c.h.b16 %v632
        %v1400 = vunpack.c.l.b16 %v633
        %v1401 = vunpack.c.h.b16 %v633
        %v1402 = vpack.c.b16 %v898, %v890
        %v1403 = vpack.c.b16 %v899, %v891
        %v1404 = vpack.c.b16 %v900, %v892
        %v1405 = vpack.c.b16 %v901, %v893
        %v1406 = vpack.c.b16 %v902, %v894
        %v1407 = vpack.c.b16 %v903, %v895
        %v1408 = vpack.c.b16 %v904, %v896
        %v1409 = vpack.c.b16 %v905, %v897
        %v1410 = vpack.c.b16 %v914, %v906
        %v1411 = vpack.c.b16 %v915, %v907
        %v1412 = vpack.c.b16 %v916, %v908
        %v1413 = vpack.c.b16 %v917, %v909
        %v1414 = vpack.c.b16 %v918, %v910
        %v1415 = vpack.c.b16 %v919, %v911
        %v1416 = vpack.c.b16 %v920, %v912
        %v1417 = vpack.c.b16 %v921, %v913
        %v1418 = vpack.c.b16 %v930, %v922
        %v1419 = vpack.c.b16 %v931, %v923
        %v1420 = vpack.c.b16 %v932, %v924
        %v1421 = vpack.c.b16 %v933, %v925
        %v1422 = vpack.c.b16 %v934, %v926
        %v1423 = vpack.c.b16 %v935, %v927
        %v1424 = vpack.c.b16 %v936, %v928
        %v1425 = vpack.c.b16 %v937, %v929
        %v1426 = vpack.c.b16 %v946, %v938
        %v1427 = vpack.c.b16 %v947, %v939
        %v1428 = vpack.c.b16 %v948, %v940
        %v1429 = vpack.c.b16 %v949, %v941
        %v1430 = vpack.c.b16 %v950, %v942
        %v1431 = vpack.c.b16 %v951, %v943
        %v1432 = vpack.c.b16 %v952, %v944
        %v1433 = vpack.c.b16 %v953, %v945
        %v1434 = vpack.c.b16 %v962, %v954
        %v1435 = vpack.c.b16 %v963, %v955
        %v1436 = vpack.c.b16 %v964, %v956
        %v1437 = vpack.c.b16 %v965, %v957
        %v1438 = vpack.c.b16 %v966, %v958
        %v1439 = vpack.c.b16 %v967, %v959
        %v1440 = vpack.c.b16 %v968, %v960
        %v1441 = vpack.c.b16 %v969, %v961
        %v1442 = vpack.c.b16 %v978, %v970
        %v1443 = vpack.c.b16 %v979, %v971
        %v1444 = vpack.c.b16 %v980, %v972
        %v1445 = vpack.c.b16 %v981, %v973
        %v1446 = vpack.c.b16 %v982, %v974
        %v1447 = vpack.c.b16 %v983, %v975
        %v1448 = vpack.c.b16 %v984, %v976
        %v1449 = vpack.c.b16 %v985, %v977
        %v1450 = vpack.c.b16 %v994, %v986
        %v1451 = vpack.c.b16 %v995, %v987
        %v1452 = vpack.c.b16 %v996, %v988
        %v1453 = vpack.c.b16 %v997, %v989
        %v1454 = vpack.c.b16 %v998, %v990
        %v1455 = vpack.c.b16 %v999, %v991
        %v1456 = vpack.c.b16 %v1000, %v992
        %v1457 = vpack.c.b16 %v1001, %v993
        %v1458 = vpack.c.b16 %v1010, %v1002
        %v1459 = vpack.c.b16 %v1011, %v1003
        %v1460 = vpack.c.b16 %v1012, %v1004
        %v1461 = vpack.c.b16 %v1013, %v1005
        %v1462 = vpack.c.b16 %v1014, %v1006
        %v1463 = vpack.c.b16 %v1015, %v1007
        %v1464 = vpack.c.b16 %v1016, %v1008
        %v1465 = vpack.c.b16 %v1017, %v1009
        %v1466 = vpack.c.b16 %v1026, %v1018
        %v1467 = vpack.c.b16 %v1027, %v1019
        %v1468 = vpack.c.b16 %v1028, %v1020
        %v1469 = vpack.c.b16 %v1029, %v1021
        %v1470 = vpack.c.b16 %v1030, %v1022
        %v1471 = vpack.c.b16 %v1031, %v1023
        %v1472 = vpack.c.b16 %v1032, %v1024
        %v1473 = vpack.c.b16 %v1033, %v1025
        %v1474 = vpack.c.b16 %v1042, %v1034
        %v1475 = vpack.c.b16 %v1043, %v1035
        %v1476 = vpack.c.b16 %v1044, %v1036
        %v1477 = vpack.c.b16 %v1045, %v1037
        %v1478 = vpack.c.b16 %v1046, %v1038
        %v1479 = vpack.c.b16 %v1047, %v1039
        %v1480 = vpack.c.b16 %v1048, %v1040
        %v1481 = vpack.c.b16 %v1049, %v1041
        %v1482 = vpack.c.b16 %v1058, %v1050
        %v1483 = vpack.c.b16 %v1059, %v1051
        %v1484 = vpack.c.b16 %v1060, %v1052
        %v1485 = vpack.c.b16 %v1061, %v1053
        %v1486 = vpack.c.b16 %v1062, %v1054
        %v1487 = vpack.c.b16 %v1063, %v1055
        %v1488 = vpack.c.b16 %v1064, %v1056
        %v1489 = vpack.c.b16 %v1065, %v1057
        %v1490 = vpack.c.b16 %v1074, %v1066
        %v1491 = vpack.c.b16 %v1075, %v1067
        %v1492 = vpack.c.b16 %v1076, %v1068
        %v1493 = vpack.c.b16 %v1077, %v1069
        %v1494 = vpack.c.b16 %v1078, %v1070
        %v1495 = vpack.c.b16 %v1079, %v1071
        %v1496 = vpack.c.b16 %v1080, %v1072
        %v1497 = vpack.c.b16 %v1081, %v1073
        %v1498 = vpack.c.b16 %v1090, %v1082
        %v1499 = vpack.c.b16 %v1091, %v1083
        %v1500 = vpack.c.b16 %v1092, %v1084
        %v1501 = vpack.c.b16 %v1093, %v1085
        %v1502 = vpack.c.b16 %v1094, %v1086
        %v1503 = vpack.c.b16 %v1095, %v1087
        %v1504 = vpack.c.b16 %v1096, %v1088
        %v1505 = vpack.c.b16 %v1097, %v1089
        %v1506 = vpack.c.b16 %v1106, %v1098
        %v1507 = vpack.c.b16 %v1107, %v1099
        %v1508 = vpack.c.b16 %v1108, %v1100
        %v1509 = vpack.c.b16 %v1109, %v1101
        %v1510 = vpack.c.b16 %v1110, %v1102
        %v1511 = vpack.c.b16 %v1111, %v1103
        %v1512 = vpack.c.b16 %v1112, %v1104
        %v1513 = vpack.c.b16 %v1113, %v1105
        %v1514 = vpack.c.b16 %v1122, %v1114
        %v1515 = vpack.c.b16 %v1123, %v1115
        %v1516 = vpack.c.b16 %v1124, %v1116
        %v1517 = vpack.c.b16 %v1125, %v1117
        %v1518 = vpack.c.b16 %v1126, %v1118
        %v1519 = vpack.c.b16 %v1127, %v1119
        %v1520 = vpack.c.b16 %v1128, %v1120
        %v1521 = vpack.c.b16 %v1129, %v1121
        %v1522 = vpack.c.b16 %v1138, %v1130
        %v1523 = vpack.c.b16 %v1139, %v1131
        %v1524 = vpack.c.b16 %v1140, %v1132
        %v1525 = vpack.c.b16 %v1141, %v1133
        %v1526 = vpack.c.b16 %v1142, %v1134
        %v1527 = vpack.c.b16 %v1143, %v1135
        %v1528 = vpack.c.b16 %v1144, %v1136
        %v1529 = vpack.c.b16 %v1145, %v1137
        %v1530 = vpack.c.b16 %v1154, %v1146
        %v1531 = vpack.c.b16 %v1155, %v1147
        %v1532 = vpack.c.b16 %v1156, %v1148
        %v1533 = vpack.c.b16 %v1157, %v1149
        %v1534 = vpack.c.b16 %v1158, %v1150
        %v1535 = vpack.c.b16 %v1159, %v1151
        %v1536 = vpack.c.b16 %v1160, %v1152
        %v1537 = vpack.c.b16 %v1161, %v1153
        %v1538 = vpack.c.b16 %v1170, %v1162
        %v1539 = vpack.c.b16 %v1171, %v1163
        %v1540 = vpack.c.b16 %v1172, %v1164
        %v1541 = vpack.c.b16 %v1173, %v1165
        %v1542 = vpack.c.b16 %v1174, %v1166
        %v1543 = vpack.c.b16 %v1175, %v1167
        %v1544 = vpack.c.b16 %v1176, %v1168
        %v1545 = vpack.c.b16 %v1177, %v1169
        %v1546 = vpack.c.b16 %v1186, %v1178
        %v1547 = vpack.c.b16 %v1187, %v1179
        %v1548 = vpack.c.b16 %v1188, %v1180
        %v1549 = vpack.c.b16 %v1189, %v1181
        %v1550 = vpack.c.b16 %v1190, %v1182
        %v1551 = vpack.c.b16 %v1191, %v1183
        %v1552 = vpack.c.b16 %v1192, %v1184
        %v1553 = vpack.c.b16 %v1193, %v1185
        %v1554 = vpack.c.b16 %v1202, %v1194
        %v1555 = vpack.c.b16 %v1203, %v1195
        %v1556 = vpack.c.b16 %v1204, %v1196
        %v1557 = vpack.c.b16 %v1205, %v1197
        %v1558 = vpack.c.b16 %v1206, %v1198
        %v1559 = vpack.c.b16 %v1207, %v1199
        %v1560 = vpack.c.b16 %v1208, %v1200
        %v1561 = vpack.c.b16 %v1209, %v1201
        %v1562 = vpack.c.b16 %v1218, %v1210
        %v1563 = vpack.c.b16 %v1219, %v1211
        %v1564 = vpack.c.b16 %v1220, %v1212
        %v1565 = vpack.c.b16 %v1221, %v1213
        %v1566 = vpack.c.b16 %v1222, %v1214
        %v1567 = vpack.c.b16 %v1223, %v1215
        %v1568 = vpack.c.b16 %v1224, %v1216
        %v1569 = vpack.c.b16 %v1225, %v1217
        %v1570 = vpack.c.b16 %v1234, %v1226
        %v1571 = vpack.c.b16 %v1235, %v1227
        %v1572 = vpack.c.b16 %v1236, %v1228
        %v1573 = vpack.c.b16 %v1237, %v1229
        %v1574 = vpack.c.b16 %v1238, %v1230
        %v1575 = vpack.c.b16 %v1239, %v1231
        %v1576 = vpack.c.b16 %v1240, %v1232
        %v1577 = vpack.c.b16 %v1241, %v1233
        %v1578 = vpack.c.b16 %v1250, %v1242
        %v1579 = vpack.c.b16 %v1251, %v1243
        %v1580 = vpack.c.b16 %v1252, %v1244
        %v1581 = vpack.c.b16 %v1253, %v1245
        %v1582 = vpack.c.b16 %v1254, %v1246
        %v1583 = vpack.c.b16 %v1255, %v1247
        %v1584 = vpack.c.b16 %v1256, %v1248
        %v1585 = vpack.c.b16 %v1257, %v1249
        %v1586 = vpack.c.b16 %v1266, %v1258
        %v1587 = vpack.c.b16 %v1267, %v1259
        %v1588 = vpack.c.b16 %v1268, %v1260
        %v1589 = vpack.c.b16 %v1269, %v1261
        %v1590 = vpack.c.b16 %v1270, %v1262
        %v1591 = vpack.c.b16 %v1271, %v1263
        %v1592 = vpack.c.b16 %v1272, %v1264
        %v1593 = vpack.c.b16 %v1273, %v1265
        %v1594 = vpack.c.b16 %v1282, %v1274
        %v1595 = vpack.c.b16 %v1283, %v1275
        %v1596 = vpack.c.b16 %v1284, %v1276
        %v1597 = vpack.c.b16 %v1285, %v1277
        %v1598 = vpack.c.b16 %v1286, %v1278
        %v1599 = vpack.c.b16 %v1287, %v1279
        %v1600 = vpack.c.b16 %v1288, %v1280
        %v1601 = vpack.c.b16 %v1289, %v1281
        %v1602 = vpack.c.b16 %v1298, %v1290
        %v1603 = vpack.c.b16 %v1299, %v1291
        %v1604 = vpack.c.b16 %v1300, %v1292
        %v1605 = vpack.c.b16 %v1301, %v1293
        %v1606 = vpack.c.b16 %v1302, %v1294
        %v1607 = vpack.c.b16 %v1303, %v1295
        %v1608 = vpack.c.b16 %v1304, %v1296
        %v1609 = vpack.c.b16 %v1305, %v1297
        %v1610 = vpack.c.b16 %v1314, %v1306
        %v1611 = vpack.c.b16 %v1315, %v1307
        %v1612 = vpack.c.b16 %v1316, %v1308
        %v1613 = vpack.c.b16 %v1317, %v1309
        %v1614 = vpack.c.b16 %v1318, %v1310
        %v1615 = vpack.c.b16 %v1319, %v1311
        %v1616 = vpack.c.b16 %v1320, %v1312
        %v1617 = vpack.c.b16 %v1321, %v1313
        %v1618 = vpack.c.b16 %v1330, %v1322
        %v1619 = vpack.c.b16 %v1331, %v1323
        %v1620 = vpack.c.b16 %v1332, %v1324
        %v1621 = vpack.c.b16 %v1333, %v1325
        %v1622 = vpack.c.b16 %v1334, %v1326
        %v1623 = vpack.c.b16 %v1335, %v1327
        %v1624 = vpack.c.b16 %v1336, %v1328
        %v1625 = vpack.c.b16 %v1337, %v1329
        %v1626 = vpack.c.b16 %v1346, %v1338
        %v1627 = vpack.c.b16 %v1347, %v1339
        %v1628 = vpack.c.b16 %v1348, %v1340
        %v1629 = vpack.c.b16 %v1349, %v1341
        %v1630 = vpack.c.b16 %v1350, %v1342
        %v1631 = vpack.c.b16 %v1351, %v1343
        %v1632 = vpack.c.b16 %v1352, %v1344
        %v1633 = vpack.c.b16 %v1353, %v1345
        %v1634 = vpack.c.b16 %v1362, %v1354
        %v1635 = vpack.c.b16 %v1363, %v1355
        %v1636 = vpack.c.b16 %v1364, %v1356
        %v1637 = vpack.c.b16 %v1365, %v1357
        %v1638 = vpack.c.b16 %v1366, %v1358
        %v1639 = vpack.c.b16 %v1367, %v1359
        %v1640 = vpack.c.b16 %v1368, %v1360
        %v1641 = vpack.c.b16 %v1369, %v1361
        %v1642 = vpack.c.b16 %v1378, %v1370
        %v1643 = vpack.c.b16 %v1379, %v1371
        %v1644 = vpack.c.b16 %v1380, %v1372
        %v1645 = vpack.c.b16 %v1381, %v1373
        %v1646 = vpack.c.b16 %v1382, %v1374
        %v1647 = vpack.c.b16 %v1383, %v1375
        %v1648 = vpack.c.b16 %v1384, %v1376
        %v1649 = vpack.c.b16 %v1385, %v1377
        %v1650 = vpack.c.b16 %v1394, %v1386
        %v1651 = vpack.c.b16 %v1395, %v1387
        %v1652 = vpack.c.b16 %v1396, %v1388
        %v1653 = vpack.c.b16 %v1397, %v1389
        %v1654 = vpack.c.b16 %v1398, %v1390
        %v1655 = vpack.c.b16 %v1399, %v1391
        %v1656 = vpack.c.b16 %v1400, %v1392
        %v1657 = vpack.c.b16 %v1401, %v1393
        %1914 = vmatprep.subr.bf16.mxu0 %v1403
        %1915 = vmatpush1.bf16.msra.mxu0 %v1402
        %1916 = vmatprep.subr.bf16.mxu0 %v1411
        %1917 = vmatpush1.bf16.msra.mxu0 %v1410
        %1918 = vmatprep.subr.bf16.mxu0 %v1419
        %1919 = vmatpush1.bf16.msra.mxu0 %v1418
        %1920 = vmatprep.subr.bf16.mxu0 %v1427
        %1921 = vmatpush1.bf16.msra.mxu0 %v1426
        %1922 = vmatprep.subr.bf16.mxu0 %v1435
        %1923 = vmatpush1.bf16.msra.mxu0 %v1434
        %1924 = vmatprep.subr.bf16.mxu0 %v1443
        %1925 = vmatpush1.bf16.msra.mxu0 %v1442
        %1926 = vmatprep.subr.bf16.mxu0 %v1451
        %1927 = vmatpush1.bf16.msra.mxu0 %v1450
        %1928 = vmatprep.subr.bf16.mxu0 %v1459
        %1929 = vmatpush1.bf16.msra.mxu0 %v1458
        %1930 = vmatprep.subr.bf16.mxu0 %v1467
        %1931 = vmatpush1.bf16.msra.mxu0 %v1466
        %1932 = vmatprep.subr.bf16.mxu0 %v1475
        %1933 = vmatpush1.bf16.msra.mxu0 %v1474
        %1934 = vmatprep.subr.bf16.mxu0 %v1483
        %1935 = vmatpush1.bf16.msra.mxu0 %v1482
        %1936 = vmatprep.subr.bf16.mxu0 %v1491
        %1937 = vmatpush1.bf16.msra.mxu0 %v1490
        %1938 = vmatprep.subr.bf16.mxu0 %v1499
        %1939 = vmatpush1.bf16.msra.mxu0 %v1498
        %1940 = vmatprep.subr.bf16.mxu0 %v1507
        %1941 = vmatpush1.bf16.msra.mxu0 %v1506
        %1942 = vmatprep.subr.bf16.mxu0 %v1515
        %1943 = vmatpush1.bf16.msra.mxu0 %v1514
        %1944 = vmatprep.subr.bf16.mxu0 %v1523
        %1945 = vmatpush1.bf16.msra.mxu0 %v1522
        %1946 = vmatprep.mubr.bf16.mxu0 %v371
        %1947 = vmatmul.mubr.bf16.gmra.mrb[0].mxu0 %v370
        %v1948 = vpop.f32.mrb[0].mxu0
        %v1949 = vadd.f32 0.0, %v1948
        %v1950 = vpop.f32.mrb[0].mxu0
        %v1951 = vadd.f32 0.0, %v1950
        %v1952 = vpop.f32.mrb[0].mxu0
        %v1953 = vadd.f32 0.0, %v1952
        %v1954 = vpop.f32.mrb[0].mxu0
        %v1955 = vadd.f32 0.0, %v1954
        %1956 = vmatprep.mubr.bf16.mxu0 %v375
        %1957 = vmatmul.mubr.bf16.gmra.mrb[0].mxu0 %v374
        %v1958 = vpop.f32.mrb[0].mxu0
        %v1959 = vadd.f32 0.0, %v1958
        %v1960 = vpop.f32.mrb[0].mxu0
        %v1961 = vadd.f32 0.0, %v1960
        %v1962 = vpop.f32.mrb[0].mxu0
        %v1963 = vadd.f32 0.0, %v1962
        %v1964 = vpop.f32.mrb[0].mxu0
        %v1965 = vadd.f32 0.0, %v1964
        %1966 = vdwg.mxu0
        %1967 = vmatprep.subr.bf16.mxu0 %v1531
        %1968 = vmatpush1.bf16.msra.mxu0 %v1530
        %1969 = vmatprep.subr.bf16.mxu0 %v1539
        %1970 = vmatpush1.bf16.msra.mxu0 %v1538
        %1971 = vmatprep.subr.bf16.mxu0 %v1547
        %1972 = vmatpush1.bf16.msra.mxu0 %v1546
        %1973 = vmatprep.subr.bf16.mxu0 %v1555
        %1974 = vmatpush1.bf16.msra.mxu0 %v1554
        %1975 = vmatprep.subr.bf16.mxu0 %v1563
        %1976 = vmatpush1.bf16.msra.mxu0 %v1562
        %1977 = vmatprep.subr.bf16.mxu0 %v1571
        %1978 = vmatpush1.bf16.msra.mxu0 %v1570
        %1979 = vmatprep.subr.bf16.mxu0 %v1579
        %1980 = vmatpush1.bf16.msra.mxu0 %v1578
        %1981 = vmatprep.subr.bf16.mxu0 %v1587
        %1982 = vmatpush1.bf16.msra.mxu0 %v1586
        %1983 = vmatprep.subr.bf16.mxu0 %v1595
        %1984 = vmatpush1.bf16.msra.mxu0 %v1594
        %1985 = vmatprep.subr.bf16.mxu0 %v1603
        %1986 = vmatpush1.bf16.msra.mxu0 %v1602
        %1987 = vmatprep.subr.bf16.mxu0 %v1611
        %1988 = vmatpush1.bf16.msra.mxu0 %v1610
        %1989 = vmatprep.subr.bf16.mxu0 %v1619
        %1990 = vmatpush1.bf16.msra.mxu0 %v1618
        %1991 = vmatprep.subr.bf16.mxu0 %v1627
        %1992 = vmatpush1.bf16.msra.mxu0 %v1626
        %1993 = vmatprep.subr.bf16.mxu0 %v1635
        %1994 = vmatpush1.bf16.msra.mxu0 %v1634
        %1995 = vmatprep.subr.bf16.mxu0 %v1643
        %1996 = vmatpush1.bf16.msra.mxu0 %v1642
        %1997 = vmatprep.subr.bf16.mxu0 %v1651
        %1998 = vmatpush1.bf16.msra.mxu0 %v1650
        %1999 = vmatprep.mubr.bf16.mxu0 %v373
        %2000 = vmatmul.mubr.bf16.gmra.mrb[0].mxu0 %v372
        %v2001 = vpop.f32.mrb[0].mxu0
        %v2002 = vadd.f32 %v1949, %v2001
        %v2003 = vpop.f32.mrb[0].mxu0
        %v2004 = vadd.f32 %v1951, %v2003
        %v2005 = vpop.f32.mrb[0].mxu0
        %v2006 = vadd.f32 %v1953, %v2005
        %v2007 = vpop.f32.mrb[0].mxu0
        %v2008 = vadd.f32 %v1955, %v2007
        %2009 = vmatprep.mubr.bf16.mxu0 %v377
        %2010 = vmatmul.mubr.bf16.gmra.mrb[0].mxu0 %v376
        %v2011 = vpop.f32.mrb[0].mxu0
        %v2012 = vadd.f32 %v1959, %v2011
        %v2013 = vpop.f32.mrb[0].mxu0
        %v2014 = vadd.f32 %v1961, %v2013
        %v2015 = vpop.f32.mrb[0].mxu0
        %v2016 = vadd.f32 %v1963, %v2015
        %v2017 = vpop.f32.mrb[0].mxu0
        %v2018 = vadd.f32 %v1965, %v2017
        %2019 = vdwg.mxu0
        %2020 = vmatprep.subr.bf16.mxu0 %v1405
        %2021 = vmatpush1.bf16.msra.mxu0 %v1404
        %2022 = vmatprep.subr.bf16.mxu0 %v1413
        %2023 = vmatpush1.bf16.msra.mxu0 %v1412
        %2024 = vmatprep.subr.bf16.mxu0 %v1421
        %2025 = vmatpush1.bf16.msra.mxu0 %v1420
        %2026 = vmatprep.subr.bf16.mxu0 %v1429
        %2027 = vmatpush1.bf16.msra.mxu0 %v1428
        %2028 = vmatprep.subr.bf16.mxu0 %v1437
        %2029 = vmatpush1.bf16.msra.mxu0 %v1436
        %2030 = vmatprep.subr.bf16.mxu0 %v1445
        %2031 = vmatpush1.bf16.msra.mxu0 %v1444
        %2032 = vmatprep.subr.bf16.mxu0 %v1453
        %2033 = vmatpush1.bf16.msra.mxu0 %v1452
        %2034 = vmatprep.subr.bf16.mxu0 %v1461
        %2035 = vmatpush1.bf16.msra.mxu0 %v1460
        %2036 = vmatprep.subr.bf16.mxu0 %v1469
        %2037 = vmatpush1.bf16.msra.mxu0 %v1468
        %2038 = vmatprep.subr.bf16.mxu0 %v1477
        %2039 = vmatpush1.bf16.msra.mxu0 %v1476
        %2040 = vmatprep.subr.bf16.mxu0 %v1485
        %2041 = vmatpush1.bf16.msra.mxu0 %v1484
        %2042 = vmatprep.subr.bf16.mxu0 %v1493
        %2043 = vmatpush1.bf16.msra.mxu0 %v1492
        %2044 = vmatprep.subr.bf16.mxu0 %v1501
        %2045 = vmatpush1.bf16.msra.mxu0 %v1500
        %2046 = vmatprep.subr.bf16.mxu0 %v1509
        %2047 = vmatpush1.bf16.msra.mxu0 %v1508
        %2048 = vmatprep.subr.bf16.mxu0 %v1517
        %2049 = vmatpush1.bf16.msra.mxu0 %v1516
        %2050 = vmatprep.subr.bf16.mxu0 %v1525
        %2051 = vmatpush1.bf16.msra.mxu0 %v1524
        %2052 = vmatprep.mubr.bf16.mxu0 %v371
        %2053 = vmatmul.mubr.bf16.gmra.mrb[0].mxu0 %v370
        %v2054 = vpop.f32.mrb[0].mxu0
        %v2055 = vadd.f32 0.0, %v2054
        %v2056 = vpop.f32.mrb[0].mxu0
        %v2057 = vadd.f32 0.0, %v2056
        %v2058 = vpop.f32.mrb[0].mxu0
        %v2059 = vadd.f32 0.0, %v2058
        %v2060 = vpop.f32.mrb[0].mxu0
        %v2061 = vadd.f32 0.0, %v2060
        %2062 = vmatprep.mubr.bf16.mxu0 %v375
        %2063 = vmatmul.mubr.bf16.gmra.mrb[0].mxu0 %v374
        %v2064 = vpop.f32.mrb[0].mxu0
        %v2065 = vadd.f32 0.0, %v2064
        %v2066 = vpop.f32.mrb[0].mxu0
        %v2067 = vadd.f32 0.0, %v2066
        %v2068 = vpop.f32.mrb[0].mxu0
        %v2069 = vadd.f32 0.0, %v2068
        %v2070 = vpop.f32.mrb[0].mxu0
        %v2071 = vadd.f32 0.0, %v2070
        %2072 = vdwg.mxu0
        %2073 = vmatprep.subr.bf16.mxu0 %v1533
        %2074 = vmatpush1.bf16.msra.mxu0 %v1532
        %2075 = vmatprep.subr.bf16.mxu0 %v1541
        %2076 = vmatpush1.bf16.msra.mxu0 %v1540
        %2077 = vmatprep.subr.bf16.mxu0 %v1549
        %2078 = vmatpush1.bf16.msra.mxu0 %v1548
        %2079 = vmatprep.subr.bf16.mxu0 %v1557
        %2080 = vmatpush1.bf16.msra.mxu0 %v1556
        %2081 = vmatprep.subr.bf16.mxu0 %v1565
        %2082 = vmatpush1.bf16.msra.mxu0 %v1564
        %2083 = vmatprep.subr.bf16.mxu0 %v1573
        %2084 = vmatpush1.bf16.msra.mxu0 %v1572
        %2085 = vmatprep.subr.bf16.mxu0 %v1581
        %2086 = vmatpush1.bf16.msra.mxu0 %v1580
        %2087 = vmatprep.subr.bf16.mxu0 %v1589
        %2088 = vmatpush1.bf16.msra.mxu0 %v1588
        %2089 = vmatprep.subr.bf16.mxu0 %v1597
        %2090 = vmatpush1.bf16.msra.mxu0 %v1596
        %2091 = vmatprep.subr.bf16.mxu0 %v1605
        %2092 = vmatpush1.bf16.msra.mxu0 %v1604
        %2093 = vmatprep.subr.bf16.mxu0 %v1613
        %2094 = vmatpush1.bf16.msra.mxu0 %v1612
        %2095 = vmatprep.subr.bf16.mxu0 %v1621
        %2096 = vmatpush1.bf16.msra.mxu0 %v1620
        %2097 = vmatprep.subr.bf16.mxu0 %v1629
        %2098 = vmatpush1.bf16.msra.mxu0 %v1628
        %2099 = vmatprep.subr.bf16.mxu0 %v1637
        %2100 = vmatpush1.bf16.msra.mxu0 %v1636
        %2101 = vmatprep.subr.bf16.mxu0 %v1645
        %2102 = vmatpush1.bf16.msra.mxu0 %v1644
        %2103 = vmatprep.subr.bf16.mxu0 %v1653
        %2104 = vmatpush1.bf16.msra.mxu0 %v1652
        %2105 = vmatprep.mubr.bf16.mxu0 %v373
        %2106 = vmatmul.mubr.bf16.gmra.mrb[0].mxu0 %v372
        %v2107 = vpop.f32.mrb[0].mxu0
        %v2108 = vadd.f32 %v2055, %v2107
        %v2109 = vpop.f32.mrb[0].mxu0
        %v2110 = vadd.f32 %v2057, %v2109
        %v2111 = vpop.f32.mrb[0].mxu0
        %v2112 = vadd.f32 %v2059, %v2111
        %v2113 = vpop.f32.mrb[0].mxu0
        %v2114 = vadd.f32 %v2061, %v2113
        %2115 = vmatprep.mubr.bf16.mxu0 %v377
        %2116 = vmatmul.mubr.bf16.gmra.mrb[0].mxu0 %v376
        %v2117 = vpop.f32.mrb[0].mxu0
        %v2118 = vadd.f32 %v2065, %v2117
        %v2119 = vpop.f32.mrb[0].mxu0
        %v2120 = vadd.f32 %v2067, %v2119
        %v2121 = vpop.f32.mrb[0].mxu0
        %v2122 = vadd.f32 %v2069, %v2121
        %v2123 = vpop.f32.mrb[0].mxu0
        %v2124 = vadd.f32 %v2071, %v2123
        %2125 = vdwg.mxu0
        %2126 = vmatprep.subr.bf16.mxu0 %v1407
        %2127 = vmatpush1.bf16.msra.mxu0 %v1406
        %2128 = vmatprep.subr.bf16.mxu0 %v1415
        %2129 = vmatpush1.bf16.msra.mxu0 %v1414
        %2130 = vmatprep.subr.bf16.mxu0 %v1423
        %2131 = vmatpush1.bf16.msra.mxu0 %v1422
        %2132 = vmatprep.subr.bf16.mxu0 %v1431
        %2133 = vmatpush1.bf16.msra.mxu0 %v1430
        %2134 = vmatprep.subr.bf16.mxu0 %v1439
        %2135 = vmatpush1.bf16.msra.mxu0 %v1438
        %2136 = vmatprep.subr.bf16.mxu0 %v1447
        %2137 = vmatpush1.bf16.msra.mxu0 %v1446
        %2138 = vmatprep.subr.bf16.mxu0 %v1455
        %2139 = vmatpush1.bf16.msra.mxu0 %v1454
        %2140 = vmatprep.subr.bf16.mxu0 %v1463
        %2141 = vmatpush1.bf16.msra.mxu0 %v1462
        %2142 = vmatprep.subr.bf16.mxu0 %v1471
        %2143 = vmatpush1.bf16.msra.mxu0 %v1470
        %2144 = vmatprep.subr.bf16.mxu0 %v1479
        %2145 = vmatpush1.bf16.msra.mxu0 %v1478
        %2146 = vmatprep.subr.bf16.mxu0 %v1487
        %2147 = vmatpush1.bf16.msra.mxu0 %v1486
        %2148 = vmatprep.subr.bf16.mxu0 %v1495
        %2149 = vmatpush1.bf16.msra.mxu0 %v1494
        %2150 = vmatprep.subr.bf16.mxu0 %v1503
        %2151 = vmatpush1.bf16.msra.mxu0 %v1502
        %2152 = vmatprep.subr.bf16.mxu0 %v1511
        %2153 = vmatpush1.bf16.msra.mxu0 %v1510
        %2154 = vmatprep.subr.bf16.mxu0 %v1519
        %2155 = vmatpush1.bf16.msra.mxu0 %v1518
        %2156 = vmatprep.subr.bf16.mxu0 %v1527
        %2157 = vmatpush1.bf16.msra.mxu0 %v1526
        %2158 = vmatprep.mubr.bf16.mxu0 %v371
        %2159 = vmatmul.mubr.bf16.gmra.mrb[0].mxu0 %v370
        %v2160 = vpop.f32.mrb[0].mxu0
        %v2161 = vadd.f32 0.0, %v2160
        %v2162 = vpop.f32.mrb[0].mxu0
        %v2163 = vadd.f32 0.0, %v2162
        %v2164 = vpop.f32.mrb[0].mxu0
        %v2165 = vadd.f32 0.0, %v2164
        %v2166 = vpop.f32.mrb[0].mxu0
        %v2167 = vadd.f32 0.0, %v2166
        %2168 = vmatprep.mubr.bf16.mxu0 %v375
        %2169 = vmatmul.mubr.bf16.gmra.mrb[0].mxu0 %v374
        %v2170 = vpop.f32.mrb[0].mxu0
        %v2171 = vadd.f32 0.0, %v2170
        %v2172 = vpop.f32.mrb[0].mxu0
        %v2173 = vadd.f32 0.0, %v2172
        %v2174 = vpop.f32.mrb[0].mxu0
        %v2175 = vadd.f32 0.0, %v2174
        %v2176 = vpop.f32.mrb[0].mxu0
        %v2177 = vadd.f32 0.0, %v2176
        %2178 = vdwg.mxu0
        %2179 = vmatprep.subr.bf16.mxu0 %v1535
        %2180 = vmatpush1.bf16.msra.mxu0 %v1534
        %2181 = vmatprep.subr.bf16.mxu0 %v1543
        %2182 = vmatpush1.bf16.msra.mxu0 %v1542
        %2183 = vmatprep.subr.bf16.mxu0 %v1551
        %2184 = vmatpush1.bf16.msra.mxu0 %v1550
        %2185 = vmatprep.subr.bf16.mxu0 %v1559
        %2186 = vmatpush1.bf16.msra.mxu0 %v1558
        %2187 = vmatprep.subr.bf16.mxu0 %v1567
        %2188 = vmatpush1.bf16.msra.mxu0 %v1566
        %2189 = vmatprep.subr.bf16.mxu0 %v1575
        %2190 = vmatpush1.bf16.msra.mxu0 %v1574
        %2191 = vmatprep.subr.bf16.mxu0 %v1583
        %2192 = vmatpush1.bf16.msra.mxu0 %v1582
        %2193 = vmatprep.subr.bf16.mxu0 %v1591
        %2194 = vmatpush1.bf16.msra.mxu0 %v1590
        %2195 = vmatprep.subr.bf16.mxu0 %v1599
        %2196 = vmatpush1.bf16.msra.mxu0 %v1598
        %2197 = vmatprep.subr.bf16.mxu0 %v1607
        %2198 = vmatpush1.bf16.msra.mxu0 %v1606
        %2199 = vmatprep.subr.bf16.mxu0 %v1615
        %2200 = vmatpush1.bf16.msra.mxu0 %v1614
        %2201 = vmatprep.subr.bf16.mxu0 %v1623
        %2202 = vmatpush1.bf16.msra.mxu0 %v1622
        %2203 = vmatprep.subr.bf16.mxu0 %v1631
        %2204 = vmatpush1.bf16.msra.mxu0 %v1630
        %2205 = vmatprep.subr.bf16.mxu0 %v1639
        %2206 = vmatpush1.bf16.msra.mxu0 %v1638
        %2207 = vmatprep.subr.bf16.mxu0 %v1647
        %2208 = vmatpush1.bf16.msra.mxu0 %v1646
        %2209 = vmatprep.subr.bf16.mxu0 %v1655
        %2210 = vmatpush1.bf16.msra.mxu0 %v1654
        %2211 = vmatprep.mubr.bf16.mxu0 %v373
        %2212 = vmatmul.mubr.bf16.gmra.mrb[0].mxu0 %v372
        %v2213 = vpop.f32.mrb[0].mxu0
        %v2214 = vadd.f32 %v2161, %v2213
        %v2215 = vpop.f32.mrb[0].mxu0
        %v2216 = vadd.f32 %v2163, %v2215
        %v2217 = vpop.f32.mrb[0].mxu0
        %v2218 = vadd.f32 %v2165, %v2217
        %v2219 = vpop.f32.mrb[0].mxu0
        %v2220 = vadd.f32 %v2167, %v2219
        %2221 = vmatprep.mubr.bf16.mxu0 %v377
        %2222 = vmatmul.mubr.bf16.gmra.mrb[0].mxu0 %v376
        %v2223 = vpop.f32.mrb[0].mxu0
        %v2224 = vadd.f32 %v2171, %v2223
        %v2225 = vpop.f32.mrb[0].mxu0
        %v2226 = vadd.f32 %v2173, %v2225
        %v2227 = vpop.f32.mrb[0].mxu0
        %v2228 = vadd.f32 %v2175, %v2227
        %v2229 = vpop.f32.mrb[0].mxu0
        %v2230 = vadd.f32 %v2177, %v2229
        %2231 = vdwg.mxu0
        %2232 = vmatprep.subr.bf16.mxu0 %v1409
        %2233 = vmatpush1.bf16.msra.mxu0 %v1408
        %2234 = vmatprep.subr.bf16.mxu0 %v1417
        %2235 = vmatpush1.bf16.msra.mxu0 %v1416
        %2236 = vmatprep.subr.bf16.mxu0 %v1425
        %2237 = vmatpush1.bf16.msra.mxu0 %v1424
        %2238 = vmatprep.subr.bf16.mxu0 %v1433
        %2239 = vmatpush1.bf16.msra.mxu0 %v1432
        %2240 = vmatprep.subr.bf16.mxu0 %v1441
        %2241 = vmatpush1.bf16.msra.mxu0 %v1440
        %2242 = vmatprep.subr.bf16.mxu0 %v1449
        %2243 = vmatpush1.bf16.msra.mxu0 %v1448
        %2244 = vmatprep.subr.bf16.mxu0 %v1457
        %2245 = vmatpush1.bf16.msra.mxu0 %v1456
        %2246 = vmatprep.subr.bf16.mxu0 %v1465
        %2247 = vmatpush1.bf16.msra.mxu0 %v1464
        %2248 = vmatprep.subr.bf16.mxu0 %v1473
        %2249 = vmatpush1.bf16.msra.mxu0 %v1472
        %2250 = vmatprep.subr.bf16.mxu0 %v1481
        %2251 = vmatpush1.bf16.msra.mxu0 %v1480
        %2252 = vmatprep.subr.bf16.mxu0 %v1489
        %2253 = vmatpush1.bf16.msra.mxu0 %v1488
        %2254 = vmatprep.subr.bf16.mxu0 %v1497
        %2255 = vmatpush1.bf16.msra.mxu0 %v1496
        %2256 = vmatprep.subr.bf16.mxu0 %v1505
        %2257 = vmatpush1.bf16.msra.mxu0 %v1504
        %2258 = vmatprep.subr.bf16.mxu0 %v1513
        %2259 = vmatpush1.bf16.msra.mxu0 %v1512
        %2260 = vmatprep.subr.bf16.mxu0 %v1521
        %2261 = vmatpush1.bf16.msra.mxu0 %v1520
        %2262 = vmatprep.subr.bf16.mxu0 %v1529
        %2263 = vmatpush1.bf16.msra.mxu0 %v1528
        %2264 = vmatprep.mubr.bf16.mxu0 %v371
        %2265 = vmatmul.mubr.bf16.gmra.mrb[0].mxu0 %v370
        %v2266 = vpop.f32.mrb[0].mxu0
        %v2267 = vadd.f32 0.0, %v2266
        %v2268 = vpop.f32.mrb[0].mxu0
        %v2269 = vadd.f32 0.0, %v2268
        %v2270 = vpop.f32.mrb[0].mxu0
        %v2271 = vadd.f32 0.0, %v2270
        %v2272 = vpop.f32.mrb[0].mxu0
        %v2273 = vadd.f32 0.0, %v2272
        %2274 = vmatprep.mubr.bf16.mxu0 %v375
        %2275 = vmatmul.mubr.bf16.gmra.mrb[0].mxu0 %v374
        %v2276 = vpop.f32.mrb[0].mxu0
        %v2277 = vadd.f32 0.0, %v2276
        %v2278 = vpop.f32.mrb[0].mxu0
        %v2279 = vadd.f32 0.0, %v2278
        %v2280 = vpop.f32.mrb[0].mxu0
        %v2281 = vadd.f32 0.0, %v2280
        %v2282 = vpop.f32.mrb[0].mxu0
        %v2283 = vadd.f32 0.0, %v2282
        %2284 = vdwg.mxu0
        %2285 = vmatprep.subr.bf16.mxu0 %v1537
        %2286 = vmatpush1.bf16.msra.mxu0 %v1536
        %2287 = vmatprep.subr.bf16.mxu0 %v1545
        %2288 = vmatpush1.bf16.msra.mxu0 %v1544
        %2289 = vmatprep.subr.bf16.mxu0 %v1553
        %2290 = vmatpush1.bf16.msra.mxu0 %v1552
        %2291 = vmatprep.subr.bf16.mxu0 %v1561
        %2292 = vmatpush1.bf16.msra.mxu0 %v1560
        %2293 = vmatprep.subr.bf16.mxu0 %v1569
        %2294 = vmatpush1.bf16.msra.mxu0 %v1568
        %2295 = vmatprep.subr.bf16.mxu0 %v1577
        %2296 = vmatpush1.bf16.msra.mxu0 %v1576
        %2297 = vmatprep.subr.bf16.mxu0 %v1585
        %2298 = vmatpush1.bf16.msra.mxu0 %v1584
        %2299 = vmatprep.subr.bf16.mxu0 %v1593
        %2300 = vmatpush1.bf16.msra.mxu0 %v1592
        %2301 = vmatprep.subr.bf16.mxu0 %v1601
        %2302 = vmatpush1.bf16.msra.mxu0 %v1600
        %2303 = vmatprep.subr.bf16.mxu0 %v1609
        %2304 = vmatpush1.bf16.msra.mxu0 %v1608
        %2305 = vmatprep.subr.bf16.mxu0 %v1617
        %2306 = vmatpush1.bf16.msra.mxu0 %v1616
        %2307 = vmatprep.subr.bf16.mxu0 %v1625
        %2308 = vmatpush1.bf16.msra.mxu0 %v1624
        %2309 = vmatprep.subr.bf16.mxu0 %v1633
        %2310 = vmatpush1.bf16.msra.mxu0 %v1632
        %2311 = vmatprep.subr.bf16.mxu0 %v1641
        %2312 = vmatpush1.bf16.msra.mxu0 %v1640
        %2313 = vmatprep.subr.bf16.mxu0 %v1649
        %2314 = vmatpush1.bf16.msra.mxu0 %v1648
        %2315 = vmatprep.subr.bf16.mxu0 %v1657
        %2316 = vmatpush1.bf16.msra.mxu0 %v1656
        %2317 = vmatprep.mubr.bf16.mxu0 %v373
        %2318 = vmatmul.mubr.bf16.gmra.mrb[0].mxu0 %v372
        %v2319 = vpop.f32.mrb[0].mxu0
        %v2320 = vadd.f32 %v2267, %v2319
        %v2321 = vpop.f32.mrb[0].mxu0
        %v2322 = vadd.f32 %v2269, %v2321
        %v2323 = vpop.f32.mrb[0].mxu0
        %v2324 = vadd.f32 %v2271, %v2323
        %v2325 = vpop.f32.mrb[0].mxu0
        %v2326 = vadd.f32 %v2273, %v2325
        %2327 = vmatprep.mubr.bf16.mxu0 %v377
        %2328 = vmatmul.mubr.bf16.gmra.mrb[0].mxu0 %v376
        %v2329 = vpop.f32.mrb[0].mxu0
        %v2330 = vadd.f32 %v2277, %v2329
        %v2331 = vpop.f32.mrb[0].mxu0
        %v2332 = vadd.f32 %v2279, %v2331
        %v2333 = vpop.f32.mrb[0].mxu0
        %v2334 = vadd.f32 %v2281, %v2333
        %v2335 = vpop.f32.mrb[0].mxu0
        %v2336 = vadd.f32 %v2283, %v2335
        %2337 = vdwg.mxu0
        %v2338 = vpack.c.bf16 %v2006, %v2002
        %v2339 = vpack.c.bf16 %v2008, %v2004
        %v2340 = vpack.c.bf16 %v2112, %v2108
        %v2341 = vpack.c.bf16 %v2114, %v2110
        %v2342 = vpack.c.bf16 %v2218, %v2214
        %v2343 = vpack.c.bf16 %v2220, %v2216
        %v2344 = vpack.c.bf16 %v2324, %v2320
        %v2345 = vpack.c.bf16 %v2326, %v2322
        %v2346 = vpack.c.bf16 %v2016, %v2012
        %v2347 = vpack.c.bf16 %v2018, %v2014
        %v2348 = vpack.c.bf16 %v2122, %v2118
        %v2349 = vpack.c.bf16 %v2124, %v2120
        %v2350 = vpack.c.bf16 %v2228, %v2224
        %v2351 = vpack.c.bf16 %v2230, %v2226
        %v2352 = vpack.c.bf16 %v2334, %v2330
        %v2353 = vpack.c.bf16 %v2336, %v2332
        %v2370 = vunpack.c.l.b16 %v2338
        %v2371 = vunpack.c.l.b16 %v2339
        %v2372 = vunpack.c.l.b16 %v2340
        %v2373 = vunpack.c.l.b16 %v2341
        %v2374 = vunpack.c.l.b16 %v2342
        %v2375 = vunpack.c.l.b16 %v2343
        %v2376 = vunpack.c.l.b16 %v2344
        %v2377 = vunpack.c.l.b16 %v2345
        %v2378 = vunpack.c.h.b16 %v2338
        %v2379 = vunpack.c.h.b16 %v2339
        %v2380 = vunpack.c.h.b16 %v2340
        %v2381 = vunpack.c.h.b16 %v2341
        %v2382 = vunpack.c.h.b16 %v2342
        %v2383 = vunpack.c.h.b16 %v2343
        %v2384 = vunpack.c.h.b16 %v2344
        %v2385 = vunpack.c.h.b16 %v2345
        %v2386 = vunpack.c.l.b16 %v2346
        %v2387 = vunpack.c.l.b16 %v2347
        %v2388 = vunpack.c.l.b16 %v2348
        %v2389 = vunpack.c.l.b16 %v2349
        %v2390 = vunpack.c.l.b16 %v2350
        %v2391 = vunpack.c.l.b16 %v2351
        %v2392 = vunpack.c.l.b16 %v2352
        %v2393 = vunpack.c.l.b16 %v2353
        %v2394 = vunpack.c.h.b16 %v2346
        %v2395 = vunpack.c.h.b16 %v2347
        %v2396 = vunpack.c.h.b16 %v2348
        %v2397 = vunpack.c.h.b16 %v2349
        %v2398 = vunpack.c.h.b16 %v2350
        %v2399 = vunpack.c.h.b16 %v2351
        %v2400 = vunpack.c.h.b16 %v2352
        %v2401 = vunpack.c.h.b16 %v2353
        %v2402 = vpack.c.b16 %v2371, %v2370
        %v2403 = vpack.c.b16 %v2373, %v2372
        %v2404 = vpack.c.b16 %v2375, %v2374
        %v2405 = vpack.c.b16 %v2377, %v2376
        %v2406 = vpack.c.b16 %v2379, %v2378
        %v2407 = vpack.c.b16 %v2381, %v2380
        %v2408 = vpack.c.b16 %v2383, %v2382
        %v2409 = vpack.c.b16 %v2385, %v2384
        %v2410 = vpack.c.b16 %v2387, %v2386
        %v2411 = vpack.c.b16 %v2389, %v2388
        %v2412 = vpack.c.b16 %v2391, %v2390
        %v2413 = vpack.c.b16 %v2393, %v2392
        %v2414 = vpack.c.b16 %v2395, %v2394
        %v2415 = vpack.c.b16 %v2397, %v2396
        %v2416 = vpack.c.b16 %v2399, %v2398
        %v2417 = vpack.c.b16 %v2401, %v2400
        %2434 = vst [vmem:[%s243] sm:$0xff] %v2402
        %2435 = vst [vmem:[%s243 + $0x8] sm:$0xff] %v2403
        %2436 = vst [vmem:[%s243 + $0x10] sm:$0xff] %v2404
        %2437 = vst [vmem:[%s243 + $0x18] sm:$0xff] %v2405
        %2438 = vst [vmem:[%s243 + $0x20] sm:$0xff] %v2406
        %2439 = vst [vmem:[%s243 + $0x28] sm:$0xff] %v2407
        %2440 = vst [vmem:[%s243 + $0x30] sm:$0xff] %v2408
        %2441 = vst [vmem:[%s243 + $0x38] sm:$0xff] %v2409
        %2442 = vst [vmem:[%s243 + $0x40] sm:$0xff] %v2410
        %2443 = vst [vmem:[%s243 + $0x48] sm:$0xff] %v2411
        %2444 = vst [vmem:[%s243 + $0x50] sm:$0xff] %v2412
        %2445 = vst [vmem:[%s243 + $0x58] sm:$0xff] %v2413
        %2446 = vst [vmem:[%s243 + $0x60] sm:$0xff] %v2414
        %2447 = vst [vmem:[%s243 + $0x68] sm:$0xff] %v2415
        %2448 = vst [vmem:[%s243 + $0x70] sm:$0xff] %v2416
        %2449 = vst [vmem:[%s243 + $0x78] sm:$0xff] %v2417
        %s2450 = sand.u32 %s134, 1
        %s2451 = sand.u32 %s134, 1
        %s2452 = smul.addr %s2451, 128
        %s2453 = scalar_lea.vmem [#allocation4], %s2452
        // Predicated region
        $region41: #{generator_forward.6} parent=35 // pred_check
          %p2454 = pneg %p144
        $region42: #{generator_forward.6} parent=35 // pred_check_branch
          %2456 = sbr.rel (%p2454) target = $region44
        $region43: #{generator_forward.6} parent=35 // pred_region
          %s2457 = smul.u32 4, %s22
          %s2458 = smul.u32 8, %s23
          %s2459 = smul.addr %s2457, 32
          %s2460 = sadd.s32 %s2458, %s2459
          %s2461 = smul.addr %s2460, 4
          %s2462 = scalar_lea.vmem %s4, %s2461
          // Predicated region
          $region45: #{generator_forward.6} parent=43 // pred_check
            _
          $region46: #{generator_forward.6} parent=43 // pred_check_branch
            %2464 = sbr.rel (0) target = $region48
          $region47: #{generator_forward.6} parent=43 // pred_region
            // Predicated region
            $region49: #{generator_forward.6} parent=47 // pred_check
              _
            $region50: #{generator_forward.6} parent=47 // pred_check_branch
              %2466 = sbr.rel (0) target = $region52
            $region51: #{generator_forward.6} parent=47 // pred_region
              loop: start=0, step=1, limit=1
              $region53: #{generator_forward.6} parent=51 // loop_pre_header
                _
              $region54: #{generator_forward.6} parent=51 // loop_header
                %s2468 = sphi 0, %s2472
                %p2469 = scmp.ge.s32.totalorder %s2468, 1
                %s2473 = sphi %s2453, %s2453
                %s2474 = sphi %s2462, %s2462
              $region55: #{generator_forward.6} parent=51 // loop_header_branch
                %2471 = sbr.rel (%p2469) target = $region59
              $region56: #{generator_forward.6} parent=51 // loop_body
                %v2475 = vld [vmem:[%s2473] sm:$0xff]
                %2476 = vst [vmem:[%s2474] sm:$0xff] %v2475
                %v2477 = vld [vmem:[%s2473 + $0x8] sm:$0xff]
                %2478 = vst [vmem:[%s2474 + $0x8] sm:$0xff] %v2477
                %v2479 = vld [vmem:[%s2473 + $0x10] sm:$0xff]
                %2480 = vst [vmem:[%s2474 + $0x10] sm:$0xff] %v2479
                %v2481 = vld [vmem:[%s2473 + $0x18] sm:$0xff]
                %2482 = vst [vmem:[%s2474 + $0x18] sm:$0xff] %v2481
                %v2483 = vld [vmem:[%s2473 + $0x20] sm:$0xff]
                %2484 = vst [vmem:[%s2474 + $0x80] sm:$0xff] %v2483
                %v2485 = vld [vmem:[%s2473 + $0x28] sm:$0xff]
                %2486 = vst [vmem:[%s2474 + $0x88] sm:$0xff] %v2485
                %v2487 = vld [vmem:[%s2473 + $0x30] sm:$0xff]
                %2488 = vst [vmem:[%s2474 + $0x90] sm:$0xff] %v2487
                %v2489 = vld [vmem:[%s2473 + $0x38] sm:$0xff]
                %2490 = vst [vmem:[%s2474 + $0x98] sm:$0xff] %v2489
                %v2491 = vld [vmem:[%s2473 + $0x40] sm:$0xff]
                %2492 = vst [vmem:[%s2474 + $0x100] sm:$0xff] %v2491
                %v2493 = vld [vmem:[%s2473 + $0x48] sm:$0xff]
                %2494 = vst [vmem:[%s2474 + $0x108] sm:$0xff] %v2493
                %v2495 = vld [vmem:[%s2473 + $0x50] sm:$0xff]
                %2496 = vst [vmem:[%s2474 + $0x110] sm:$0xff] %v2495
                %v2497 = vld [vmem:[%s2473 + $0x58] sm:$0xff]
                %2498 = vst [vmem:[%s2474 + $0x118] sm:$0xff] %v2497
                %v2499 = vld [vmem:[%s2473 + $0x60] sm:$0xff]
                %2500 = vst [vmem:[%s2474 + $0x180] sm:$0xff] %v2499
                %v2501 = vld [vmem:[%s2473 + $0x68] sm:$0xff]
                %2502 = vst [vmem:[%s2474 + $0x188] sm:$0xff] %v2501
                %v2503 = vld [vmem:[%s2473 + $0x70] sm:$0xff]
                %2504 = vst [vmem:[%s2474 + $0x190] sm:$0xff] %v2503
                %v2505 = vld [vmem:[%s2473 + $0x78] sm:$0xff]
                %2506 = vst [vmem:[%s2474 + $0x198] sm:$0xff] %v2505
              $region57: #{generator_forward.6} parent=51 // loop_footer
                %s2472 = sadd.s32 1, %s2468
              $region58: #{generator_forward.6} parent=51 // loop_footer_branch
                %2467 = sbr.rel target = $region54
              $region59: #{generator_forward.6} parent=51 // loop_exit
                _
            $region52: #{generator_forward.6} parent=47 // pred_fallthru
              _
            // Predicated region
            $region60: #{generator_forward.6} parent=47 // pred_check
              _
            $region61: #{generator_forward.6} parent=47 // pred_check_branch
              %2508 = sbr.rel target = $region63
            $region62: #{generator_forward.6} parent=47 // pred_region
              _
            $region63: #{generator_forward.6} parent=47 // pred_fallthru
              _
          $region48: #{generator_forward.6} parent=43 // pred_fallthru
            _
          %2509 = vnop
        $region44: #{generator_forward.6} parent=35 // pred_fallthru
          _
      $region36: #{generator_forward.6} parent=5 // pred_fallthru
        _
      %p2510 = scmp.le.s32.totalorder 2, %s13
      // Predicated region
      $region64: #{generator_forward.6} parent=5 // pred_check
        %p2511 = pneg %p2510
      $region65: #{generator_forward.6} parent=5 // pred_check_branch
        %2513 = sbr.rel (%p2511) target = $region67
      $region66: #{generator_forward.6} parent=5 // pred_region
        %s2514 = ssub.s32 %s13, 2
        // Predicated region
        $region68: #{generator_forward.6} parent=66 // pred_check
          %p2515 = pneg %p150
        $region69: #{generator_forward.6} parent=66 // pred_check_branch
          %2517 = sbr.rel (%p2515) target = $region71
        $region70: #{generator_forward.6} parent=66 // pred_region
          %s2518 = sand.u32 %s135, 1
          %s2519 = sand.u32 %s135, 1
          %s2520 = smul.addr %s2519, 128
          %s2521 = scalar_lea.vmem [#allocation4], %s2520
        $region71: #{generator_forward.6} parent=66 // pred_fallthru
          _
      $region67: #{generator_forward.6} parent=5 // pred_fallthru
        _
    $region6: #{generator_forward.6} parent=1 // loop_footer
      %s17 = sadd.s32 1, %s13
    $region7: #{generator_forward.6} parent=1 // loop_footer_branch
      %12 = sbr.rel target = $region3
    $region8: #{generator_forward.6} parent=1 // loop_exit
      _
    %2522 = vsyncpa [#allocation3], 1
    %s2523 = scalar_lea.sflag [#allocation3], 1
    %2524 = vsyncpa %s2523, 1

// kernel: generator_forward.7
$region0: #{generator_forward.7}
  #allocation0 [shape = 'u32[]', space=smem, size = 0x4, offset = 0x4, fixed_abs, tag = 'smem constant byte address 0x4 - core index']
  #allocation1 [shape = 'u32[144,128]{1,0:T(1,128)}', space=vmem, size = 0x12000, scoped, tag = 'internal scratch']
  %s0 = inlined_call_operand.vmem [shape: bf16[128,256], index: 0, kind: input, shape index: {}]
  %s1 = inlined_call_operand.vmem [shape: f32[1,256], index: 1, kind: input, shape index: {}]
  %s2 = inlined_call_operand.vmem [shape: f32[1,256], index: 2, kind: input, shape index: {}]
  %s3 = inlined_call_operand.vmem [shape: bf16[256,2048], index: 3, kind: input, shape index: {}]
  %s4 = inlined_call_operand.vmem [shape: bf16[128,2048], index: 4, kind: output, shape index: {}]
  %s5 = sld [smem:[#allocation0]]
  $region91: #{generator_forward.7} parent=0
    _
  %s7 = ssub.s32 1, %s5
  %s8 = scalar_select 0, %s7, %s5
  $region1: #{generator_forward.7} parent=0
    #allocation2 [shape = 'u8[524288]{0}', space=vmem, size = 0x80000, scoped, tag = 'input window, operand 3']
    #allocation3 [shape = 'u8[262144]{0}', space=vmem, size = 0x40000, scoped, tag = 'output window, operand 0']
    loop: start=0, step=1, limit=6
    $region2: #{generator_forward.7} parent=1 // loop_pre_header
      _
    $region3: #{generator_forward.7} parent=1 // loop_header
      %s10 = sphi 0, %s14
      %p11 = scmp.ge.s32.totalorder %s10, 6
      %s17 = sphi 0, %s29
      %s18 = sphi 0, %s25
      %s19 = sphi 0, %s17
      %s20 = sphi 0, %s18
      %s21 = sphi 0, %s19
      %s22 = sphi 0, %s20
      %s32 = sphi 0, %s34
      %s35 = sphi 0, %s32
      %s36 = sphi 0, %s35
      %s52 = sphi 0, %s36
      %s56 = sphi 0, %s56
      %s58 = sphi 0, %s56
      %s59 = sphi 0, %s58
      %s73 = sphi 0, %s59
      %s77 = sphi 0, %s77
      %s79 = sphi 0, %s77
      %s80 = sphi 0, %s79
      %s94 = sphi 0, %s80
      %s100 = sphi 0, %s102
      %s103 = sphi 0, %s100
      %s104 = sphi 0, %s103
      %s120 = sphi 0, %s104
      %s128 = sphi 0, %s130
      %s131 = sphi 0, %s128
      %s132 = sphi 0, %s131
      %s148 = sphi 0, %s132
    $region4: #{generator_forward.7} parent=1 // loop_header_branch
      %13 = sbr.rel (%p11) target = $region8
    $region5: #{generator_forward.7} parent=1 // loop_body
      %s15 = ssub.s32 %s10, 1
      %s16 = ssub.s32 %s10, 2
      %s23 = sadd.s32 1, %s18
      %p24 = scmp.ge.s32.totalorder %s23, 4
      %s25 = scalar_select %p24, 0, %s23
      %s26 = sadd.s32 1, %s17
      %s27 = scalar_select %p24, %s26, %s17
      %p28 = scmp.ge.s32.totalorder %s27, 1
      %s29 = scalar_select %p28, 0, %s27
      %s30 = ssub.s32 %s17, %s29
      %p31 = scmp.eq.s32.totalorder %s30, 0
      %s33 = sadd.s32 %s32, 1
      %s34 = scalar_select %p31, %s32, %s33
      %p37 = pneg %p31
      %p38 = scmp.eq.s32.totalorder %s10, 3
      %p39 = por %p37, %p38
      %p40 = scmp.ne.s32.totalorder %s32, %s35
      %p41 = scmp.eq.s32.totalorder %s10, 0
      %p42 = por %p40, %p41
      %p43 = scmp.ne.s32.totalorder %s32, %s35
      %p44 = scmp.eq.s32.totalorder %s15, 3
      %p45 = por %p43, %p44
      %p46 = scmp.ne.s32.totalorder %s35, %s36
      %p47 = scmp.eq.s32.totalorder %s15, 0
      %p48 = por %p46, %p47
      %p49 = scmp.ne.s32.totalorder %s35, %s36
      %p50 = scmp.eq.s32.totalorder %s16, 3
      %p51 = por %p49, %p50
      %p53 = scmp.ne.s32.totalorder %s36, %s52
      %p54 = scmp.eq.s32.totalorder %s16, 0
      %p55 = por %p53, %p54
      %s57 = sadd.s32 %s56, 1
      %p60 = scmp.eq.s32.totalorder %s10, 3
      %p61 = scmp.ne.s32.totalorder %s56, %s58
      %p62 = scmp.eq.s32.totalorder %s10, 0
      %p63 = por %p61, %p62
      %p64 = scmp.ne.s32.totalorder %s56, %s58
      %p65 = scmp.eq.s32.totalorder %s15, 3
      %p66 = por %p64, %p65
      %p67 = scmp.ne.s32.totalorder %s58, %s59
      %p68 = scmp.eq.s32.totalorder %s15, 0
      %p69 = por %p67, %p68
      %p70 = scmp.ne.s32.totalorder %s58, %s59
      %p71 = scmp.eq.s32.totalorder %s16, 3
      %p72 = por %p70, %p71
      %p74 = scmp.ne.s32.totalorder %s59, %s73
      %p75 = scmp.eq.s32.totalorder %s16, 0
      %p76 = por %p74, %p75
      %s78 = sadd.s32 %s77, 1
      %p81 = scmp.eq.s32.totalorder %s10, 3
      %p82 = scmp.ne.s32.totalorder %s77, %s79
      %p83 = scmp.eq.s32.totalorder %s10, 0
      %p84 = por %p82, %p83
      %p85 = scmp.ne.s32.totalorder %s77, %s79
      %p86 = scmp.eq.s32.totalorder %s15, 3
      %p87 = por %p85, %p86
      %p88 = scmp.ne.s32.totalorder %s79, %s80
      %p89 = scmp.eq.s32.totalorder %s15, 0
      %p90 = por %p88, %p89
      %p91 = scmp.ne.s32.totalorder %s79, %s80
      %p92 = scmp.eq.s32.totalorder %s16, 3
      %p93 = por %p91, %p92
      %p95 = scmp.ne.s32.totalorder %s80, %s94
      %p96 = scmp.eq.s32.totalorder %s16, 0
      %p97 = por %p95, %p96
      %s98 = ssub.s32 %s18, %s25
      %p99 = scmp.eq.s32.totalorder %s98, 0
      %s101 = sadd.s32 %s100, 1
      %s102 = scalar_select %p99, %s100, %s101
      %p105 = pneg %p99
      %p106 = scmp.eq.s32.totalorder %s10, 3
      %p107 = por %p105, %p106
      %p108 = scmp.ne.s32.totalorder %s100, %s103
      %p109 = scmp.eq.s32.totalorder %s10, 0
      %p110 = por %p108, %p109
      %p111 = scmp.ne.s32.totalorder %s100, %s103
      %p112 = scmp.eq.s32.totalorder %s15, 3
      %p113 = por %p111, %p112
      %p114 = scmp.ne.s32.totalorder %s103, %s104
      %p115 = scmp.eq.s32.totalorder %s15, 0
      %p116 = por %p114, %p115
      %p117 = scmp.ne.s32.totalorder %s103, %s104
      %p118 = scmp.eq.s32.totalorder %s16, 3
      %p119 = por %p117, %p118
      %p121 = scmp.ne.s32.totalorder %s104, %s120
      %p122 = scmp.eq.s32.totalorder %s16, 0
      %p123 = por %p121, %p122
      %s124 = ssub.s32 %s17, %s29
      %s125 = ssub.s32 %s18, %s25
      %s126 = sor.u32 %s124, %s125
      %p127 = scmp.eq.s32.totalorder %s126, 0
      %s129 = sadd.s32 %s128, 1
      %s130 = scalar_select %p127, %s128, %s129
      %p133 = pneg %p127
      %p134 = scmp.eq.s32.totalorder %s10, 3
      %p135 = por %p133, %p134
      %p136 = scmp.ne.s32.totalorder %s128, %s131
      %p137 = scmp.eq.s32.totalorder %s10, 0
      %p138 = por %p136, %p137
      %p139 = scmp.ne.s32.totalorder %s128, %s131
      %p140 = scmp.eq.s32.totalorder %s15, 3
      %p141 = por %p139, %p140
      %p142 = scmp.ne.s32.totalorder %s131, %s132
      %p143 = scmp.eq.s32.totalorder %s15, 0
      %p144 = por %p142, %p143
      %p145 = scmp.ne.s32.totalorder %s131, %s132
      %p146 = scmp.eq.s32.totalorder %s16, 3
      %p147 = por %p145, %p146
      %p149 = scmp.ne.s32.totalorder %s132, %s148
      %p150 = scmp.eq.s32.totalorder %s16, 0
      %p151 = por %p149, %p150
      %p152 = scmp.le.s32.totalorder 1, %s10
      %p153 = scmp.lt.s32.totalorder %s10, 5
      %p154 = pnand %p152, %p153
      %p155 = pneg %p154
      // Predicated region
      $region9: #{generator_forward.7} parent=5 // pred_check
        _
      $region10: #{generator_forward.7} parent=5 // pred_check_branch
        %157 = sbr.rel (%p154) target = $region12
      $region11: #{generator_forward.7} parent=5 // pred_region
        %s158 = ssub.s32 %s10, 1
        // Predicated region
        $region13: #{generator_forward.7} parent=11 // pred_check
          %p159 = pneg %p48
        $region14: #{generator_forward.7} parent=11 // pred_check_branch
          %161 = sbr.rel (%p159) target = $region16
        $region15: #{generator_forward.7} parent=11 // pred_region
          %s162 = smul.u32 16, %s19
          %p163 = scmp.lt.s32.totalorder %s162, 15
          %s164 = scalar_select %p163, %s162, 15
          %s165 = smul.addr %s164, 2
          %s166 = smul.addr %s165, 4
          %s167 = scalar_lea.vmem %s0, %s166
          %s168 = smul.u32 16, %s19
        $region16: #{generator_forward.7} parent=11 // pred_fallthru
          _
        // Predicated region
        $region17: #{generator_forward.7} parent=11 // pred_check
          %p169 = pneg %p69
        $region18: #{generator_forward.7} parent=11 // pred_check_branch
          %171 = sbr.rel (%p169) target = $region20
        $region19: #{generator_forward.7} parent=11 // pred_region
          _
        $region20: #{generator_forward.7} parent=11 // pred_fallthru
          _
        // Predicated region
        $region21: #{generator_forward.7} parent=11 // pred_check
          %p172 = pneg %p90
        $region22: #{generator_forward.7} parent=11 // pred_check_branch
          %174 = sbr.rel (%p172) target = $region24
        $region23: #{generator_forward.7} parent=11 // pred_region
          _
        $region24: #{generator_forward.7} parent=11 // pred_fallthru
          _
      $region12: #{generator_forward.7} parent=5 // pred_fallthru
        _
      %p175 = scmp.lt.s32.totalorder %s10, 4
      // Predicated region
      $region25: #{generator_forward.7} parent=5 // pred_check
        %p176 = pneg %p175
      $region26: #{generator_forward.7} parent=5 // pred_check_branch
        %178 = sbr.rel (%p176) target = $region28
      $region27: #{generator_forward.7} parent=5 // pred_region
        // Predicated region
        $region29: #{generator_forward.7} parent=27 // pred_check
          %p179 = pneg %p110
        $region30: #{generator_forward.7} parent=27 // pred_check_branch
          %181 = sbr.rel (%p179) target = $region32
        $region31: #{generator_forward.7} parent=27 // pred_region
          %s182 = sand.u32 %s100, 1
          %s183 = sand.u32 %s100, 1
          %s184 = smul.addr %s183, 512
          %s185 = scalar_lea.vmem [#allocation2], %s184
          %s186 = smul.u32 4, %s18
          %s187 = smul.addr %s186, 4
          %s188 = scalar_lea.vmem %s3, %s187
          // Predicated region
          $region33: #{generator_forward.7} parent=31 // pred_check
            _
          $region34: #{generator_forward.7} parent=31 // pred_check_branch
            %190 = sbr.rel (0) target = $region36
          $region35: #{generator_forward.7} parent=31 // pred_region
            // Predicated region
            $region37: #{generator_forward.7} parent=35 // pred_check
              _
            $region38: #{generator_forward.7} parent=35 // pred_check_branch
              %192 = sbr.rel (0) target = $region40
            $region39: #{generator_forward.7} parent=35 // pred_region
              loop: start=0, step=1, limit=1
              $region41: #{generator_forward.7} parent=39 // loop_pre_header
                _
              $region42: #{generator_forward.7} parent=39 // loop_header
                %s194 = sphi 0, %s198
                %p195 = scmp.ge.s32.totalorder %s194, 1
                %s199 = sphi %s188, %s188
                %s200 = sphi %s185, %s185
              $region43: #{generator_forward.7} parent=39 // loop_header_branch
                %197 = sbr.rel (%p195) target = $region47
              $region44: #{generator_forward.7} parent=39 // loop_body
                %v201 = vld [vmem:[%s199] sm:$0xff]
                %202 = vst [vmem:[%s200] sm:$0xff] %v201
                %v203 = vld [vmem:[%s199 + $0x8] sm:$0xff]
                %204 = vst [vmem:[%s200 + $0x8] sm:$0xff] %v203
                %v205 = vld [vmem:[%s199 + $0x40] sm:$0xff]
                %206 = vst [vmem:[%s200 + $0x10] sm:$0xff] %v205
                %v207 = vld [vmem:[%s199 + $0x48] sm:$0xff]
                %208 = vst [vmem:[%s200 + $0x18] sm:$0xff] %v207
                %v209 = vld [vmem:[%s199 + $0x80] sm:$0xff]
                %210 = vst [vmem:[%s200 + $0x20] sm:$0xff] %v209
                %v211 = vld [vmem:[%s199 + $0x88] sm:$0xff]
                %212 = vst [vmem:[%s200 + $0x28] sm:$0xff] %v211
                %v213 = vld [vmem:[%s199 + $0xc0] sm:$0xff]
                %214 = vst [vmem:[%s200 + $0x30] sm:$0xff] %v213
                %v215 = vld [vmem:[%s199 + $0xc8] sm:$0xff]
                %216 = vst [vmem:[%s200 + $0x38] sm:$0xff] %v215
                %v217 = vld [vmem:[%s199 + $0x100] sm:$0xff]
                %218 = vst [vmem:[%s200 + $0x40] sm:$0xff] %v217
                %v219 = vld [vmem:[%s199 + $0x108] sm:$0xff]
                %220 = vst [vmem:[%s200 + $0x48] sm:$0xff] %v219
                %v221 = vld [vmem:[%s199 + $0x140] sm:$0xff]
                %222 = vst [vmem:[%s200 + $0x50] sm:$0xff] %v221
                %v223 = vld [vmem:[%s199 + $0x148] sm:$0xff]
                %224 = vst [vmem:[%s200 + $0x58] sm:$0xff] %v223
                %v225 = vld [vmem:[%s199 + $0x180] sm:$0xff]
                %226 = vst [vmem:[%s200 + $0x60] sm:$0xff] %v225
                %v227 = vld [vmem:[%s199 + $0x188] sm:$0xff]
                %228 = vst [vmem:[%s200 + $0x68] sm:$0xff] %v227
                %v229 = vld [vmem:[%s199 + $0x1c0] sm:$0xff]
                %230 = vst [vmem:[%s200 + $0x70] sm:$0xff] %v229
                %v231 = vld [vmem:[%s199 + $0x1c8] sm:$0xff]
                %232 = vst [vmem:[%s200 + $0x78] sm:$0xff] %v231
                %v233 = vld [vmem:[%s199 + $0x200] sm:$0xff]
                %234 = vst [vmem:[%s200 + $0x80] sm:$0xff] %v233
                %v235 = vld [vmem:[%s199 + $0x208] sm:$0xff]
                %236 = vst [vmem:[%s200 + $0x88] sm:$0xff] %v235
                %v237 = vld [vmem:[%s199 + $0x240] sm:$0xff]
                %238 = vst [vmem:[%s200 + $0x90] sm:$0xff] %v237
                %v239 = vld [vmem:[%s199 + $0x248] sm:$0xff]
                %240 = vst [vmem:[%s200 + $0x98] sm:$0xff] %v239
                %v241 = vld [vmem:[%s199 + $0x280] sm:$0xff]
                %242 = vst [vmem:[%s200 + $0xa0] sm:$0xff] %v241
                %v243 = vld [vmem:[%s199 + $0x288] sm:$0xff]
                %244 = vst [vmem:[%s200 + $0xa8] sm:$0xff] %v243
                %v245 = vld [vmem:[%s199 + $0x2c0] sm:$0xff]
                %246 = vst [vmem:[%s200 + $0xb0] sm:$0xff] %v245
                %v247 = vld [vmem:[%s199 + $0x2c8] sm:$0xff]
                %248 = vst [vmem:[%s200 + $0xb8] sm:$0xff] %v247
                %v249 = vld [vmem:[%s199 + $0x300] sm:$0xff]
                %250 = vst [vmem:[%s200 + $0xc0] sm:$0xff] %v249
                %v251 = vld [vmem:[%s199 + $0x308] sm:$0xff]
                %252 = vst [vmem:[%s200 + $0xc8] sm:$0xff] %v251
                %v253 = vld [vmem:[%s199 + $0x340] sm:$0xff]
                %254 = vst [vmem:[%s200 + $0xd0] sm:$0xff] %v253
                %v255 = vld [vmem:[%s199 + $0x348] sm:$0xff]
                %256 = vst [vmem:[%s200 + $0xd8] sm:$0xff] %v255
                %v257 = vld [vmem:[%s199 + $0x380] sm:$0xff]
                %258 = vst [vmem:[%s200 + $0xe0] sm:$0xff] %v257
                %v259 = vld [vmem:[%s199 + $0x388] sm:$0xff]
                %260 = vst [vmem:[%s200 + $0xe8] sm:$0xff] %v259
                %v261 = vld [vmem:[%s199 + $0x3c0] sm:$0xff]
                %262 = vst [vmem:[%s200 + $0xf0] sm:$0xff] %v261
                %v263 = vld [vmem:[%s199 + $0x3c8] sm:$0xff]
                %264 = vst [vmem:[%s200 + $0xf8] sm:$0xff] %v263
                %v265 = vld [vmem:[%s199 + $0x400] sm:$0xff]
                %266 = vst [vmem:[%s200 + $0x100] sm:$0xff] %v265
                %v267 = vld [vmem:[%s199 + $0x408] sm:$0xff]
                %268 = vst [vmem:[%s200 + $0x108] sm:$0xff] %v267
                %v269 = vld [vmem:[%s199 + $0x440] sm:$0xff]
                %270 = vst [vmem:[%s200 + $0x110] sm:$0xff] %v269
                %v271 = vld [vmem:[%s199 + $0x448] sm:$0xff]
                %272 = vst [vmem:[%s200 + $0x118] sm:$0xff] %v271
                %v273 = vld [vmem:[%s199 + $0x480] sm:$0xff]
                %274 = vst [vmem:[%s200 + $0x120] sm:$0xff] %v273
                %v275 = vld [vmem:[%s199 + $0x488] sm:$0xff]
                %276 = vst [vmem:[%s200 + $0x128] sm:$0xff] %v275
                %v277 = vld [vmem:[%s199 + $0x4c0] sm:$0xff]
                %278 = vst [vmem:[%s200 + $0x130] sm:$0xff] %v277
                %v279 = vld [vmem:[%s199 + $0x4c8] sm:$0xff]
                %280 = vst [vmem:[%s200 + $0x138] sm:$0xff] %v279
                %v281 = vld [vmem:[%s199 + $0x500] sm:$0xff]
                %282 = vst [vmem:[%s200 + $0x140] sm:$0xff] %v281
                %v283 = vld [vmem:[%s199 + $0x508] sm:$0xff]
                %284 = vst [vmem:[%s200 + $0x148] sm:$0xff] %v283
                %v285 = vld [vmem:[%s199 + $0x540] sm:$0xff]
                %286 = vst [vmem:[%s200 + $0x150] sm:$0xff] %v285
                %v287 = vld [vmem:[%s199 + $0x548] sm:$0xff]
                %288 = vst [vmem:[%s200 + $0x158] sm:$0xff] %v287
                %v289 = vld [vmem:[%s199 + $0x580] sm:$0xff]
                %290 = vst [vmem:[%s200 + $0x160] sm:$0xff] %v289
                %v291 = vld [vmem:[%s199 + $0x588] sm:$0xff]
                %292 = vst [vmem:[%s200 + $0x168] sm:$0xff] %v291
                %v293 = vld [vmem:[%s199 + $0x5c0] sm:$0xff]
                %294 = vst [vmem:[%s200 + $0x170] sm:$0xff] %v293
                %v295 = vld [vmem:[%s199 + $0x5c8] sm:$0xff]
                %296 = vst [vmem:[%s200 + $0x178] sm:$0xff] %v295
                %v297 = vld [vmem:[%s199 + $0x600] sm:$0xff]
                %298 = vst [vmem:[%s200 + $0x180] sm:$0xff] %v297
                %v299 = vld [vmem:[%s199 + $0x608] sm:$0xff]
                %300 = vst [vmem:[%s200 + $0x188] sm:$0xff] %v299
                %v301 = vld [vmem:[%s199 + $0x640] sm:$0xff]
                %302 = vst [vmem:[%s200 + $0x190] sm:$0xff] %v301
                %v303 = vld [vmem:[%s199 + $0x648] sm:$0xff]
                %304 = vst [vmem:[%s200 + $0x198] sm:$0xff] %v303
                %v305 = vld [vmem:[%s199 + $0x680] sm:$0xff]
                %306 = vst [vmem:[%s200 + $0x1a0] sm:$0xff] %v305
                %v307 = vld [vmem:[%s199 + $0x688] sm:$0xff]
                %308 = vst [vmem:[%s200 + $0x1a8] sm:$0xff] %v307
                %v309 = vld [vmem:[%s199 + $0x6c0] sm:$0xff]
                %310 = vst [vmem:[%s200 + $0x1b0] sm:$0xff] %v309
                %v311 = vld [vmem:[%s199 + $0x6c8] sm:$0xff]
                %312 = vst [vmem:[%s200 + $0x1b8] sm:$0xff] %v311
                %v313 = vld [vmem:[%s199 + $0x700] sm:$0xff]
                %314 = vst [vmem:[%s200 + $0x1c0] sm:$0xff] %v313
                %v315 = vld [vmem:[%s199 + $0x708] sm:$0xff]
                %316 = vst [vmem:[%s200 + $0x1c8] sm:$0xff] %v315
                %v317 = vld [vmem:[%s199 + $0x740] sm:$0xff]
                %318 = vst [vmem:[%s200 + $0x1d0] sm:$0xff] %v317
                %v319 = vld [vmem:[%s199 + $0x748] sm:$0xff]
                %320 = vst [vmem:[%s200 + $0x1d8] sm:$0xff] %v319
                %v321 = vld [vmem:[%s199 + $0x780] sm:$0xff]
                %322 = vst [vmem:[%s200 + $0x1e0] sm:$0xff] %v321
                %v323 = vld [vmem:[%s199 + $0x788] sm:$0xff]
                %324 = vst [vmem:[%s200 + $0x1e8] sm:$0xff] %v323
                %v325 = vld [vmem:[%s199 + $0x7c0] sm:$0xff]
                %326 = vst [vmem:[%s200 + $0x1f0] sm:$0xff] %v325
                %v327 = vld [vmem:[%s199 + $0x7c8] sm:$0xff]
                %328 = vst [vmem:[%s200 + $0x1f8] sm:$0xff] %v327
              $region45: #{generator_forward.7} parent=39 // loop_footer
                %s198 = sadd.s32 1, %s194
              $region46: #{generator_forward.7} parent=39 // loop_footer_branch
                %193 = sbr.rel target = $region42
              $region47: #{generator_forward.7} parent=39 // loop_exit
                _
            $region40: #{generator_forward.7} parent=35 // pred_fallthru
              _
            // Predicated region
            $region48: #{generator_forward.7} parent=35 // pred_check
              _
            $region49: #{generator_forward.7} parent=35 // pred_check_branch
              %330 = sbr.rel target = $region51
            $region50: #{generator_forward.7} parent=35 // pred_region
              _
            $region51: #{generator_forward.7} parent=35 // pred_fallthru
              _
          $region36: #{generator_forward.7} parent=31 // pred_fallthru
            _
          %331 = vnop
        $region32: #{generator_forward.7} parent=27 // pred_fallthru
          _
      $region28: #{generator_forward.7} parent=5 // pred_fallthru
        _
      %p332 = scmp.le.s32.totalorder 1, %s10
      %p333 = scmp.lt.s32.totalorder %s10, 5
      %p334 = pnand %p332, %p333
      %p335 = pneg %p334
      // Predicated region
      $region52: #{generator_forward.7} parent=5 // pred_check
        _
      $region53: #{generator_forward.7} parent=5 // pred_check_branch
        %337 = sbr.rel (%p334) target = $region55
      $region54: #{generator_forward.7} parent=5 // pred_region
        %s338 = ssub.s32 %s10, 1
        %s339 = sand.u32 %s103, 1
        %s340 = sand.u32 %s103, 1
        %s341 = smul.addr %s340, 512
        %s342 = scalar_lea.vmem [#allocation2], %s341
        // Predicated region
        $region56: #{generator_forward.7} parent=54 // pred_check
          %p343 = pneg %p116
        $region57: #{generator_forward.7} parent=54 // pred_check_branch
          %345 = sbr.rel (%p343) target = $region59
        $region58: #{generator_forward.7} parent=54 // pred_region
          _
        $region59: #{generator_forward.7} parent=54 // pred_fallthru
          _
        %s346 = smul.u32 16, %s19
        %p347 = scmp.lt.s32.totalorder %s346, 15
        %s348 = scalar_select %p347, %s346, 15
        %s349 = smul.addr %s348, 2
        %s350 = smul.addr %s349, 4
        %s351 = scalar_lea.vmem %s0, %s350
        %p352 = pneg %p48
        %p353 = pneg %p45
        %p354 = pneg %p69
        %p355 = pneg %p66
        %p356 = pneg %p90
        %p357 = pneg %p87
        %s358 = sand.u32 %s103, 1
        %s359 = sand.u32 %s103, 1
        %s360 = smul.addr %s359, 512
        %s361 = scalar_lea.vmem [#allocation2], %s360
        %p362 = pneg %p116
        %p363 = pneg %p113
        %p364 = pneg %p144
        %p365 = pneg %p141
        %s366 = sand.u32 %s131, 1
        %s367 = sand.u32 %s131, 1
        %s368 = smul.addr %s367, 256
        %s369 = scalar_lea.vmem [#allocation3], %s368
        %s370 = smul.u32 16, %s19
        %p371 = scmp.lt.s32.totalorder %s370, 15
        %s372 = scalar_select %p371, %s370, 15
        %s373 = smul.addr %s372, 2
        %s374 = smul.addr %s373, 4
        %s375 = scalar_lea.vmem %s0, %s374
        %s376 = smul.u32 16, %s19
        %s377 = smul.u32 4, %s20
        %s378 = smul.u32 16, %s19
        %s379 = smul.u32 4, %s20
        %v380 = vld [vmem:[%s375] sm:$0xff]
        %v381 = vld [vmem:[%s375 + $0x8] sm:$0xff]
        %v382 = vld [vmem:[%s375 + $0x10] sm:$0xff]
        %v383 = vld [vmem:[%s375 + $0x18] sm:$0xff]
        %v384 = vld [vmem:[%s375 + $0x20] sm:$0xff]
        %v385 = vld [vmem:[%s375 + $0x28] sm:$0xff]
        %v386 = vld [vmem:[%s375 + $0x30] sm:$0xff]
        %v387 = vld [vmem:[%s375 + $0x38] sm:$0xff]
        %v388 = vld [vmem:[%s375 + $0x40] sm:$0xff]
        %v389 = vld [vmem:[%s375 + $0x48] sm:$0xff]
        %v390 = vld [vmem:[%s375 + $0x50] sm:$0xff]
        %v391 = vld [vmem:[%s375 + $0x58] sm:$0xff]
        %v392 = vld [vmem:[%s375 + $0x60] sm:$0xff]
        %v393 = vld [vmem:[%s375 + $0x68] sm:$0xff]
        %v394 = vld [vmem:[%s375 + $0x70] sm:$0xff]
        %v395 = vld [vmem:[%s375 + $0x78] sm:$0xff]
        %v396 = vunpack.c.l.bf16 %v380
        %v397 = vunpack.c.h.bf16 %v380
        %v398 = vunpack.c.l.bf16 %v381
        %v399 = vunpack.c.h.bf16 %v381
        %v400 = vunpack.c.l.bf16 %v382
        %v401 = vunpack.c.h.bf16 %v382
        %v402 = vunpack.c.l.bf16 %v383
        %v403 = vunpack.c.h.bf16 %v383
        %v404 = vunpack.c.l.bf16 %v384
        %v405 = vunpack.c.h.bf16 %v384
        %v406 = vunpack.c.l.bf16 %v385
        %v407 = vunpack.c.h.bf16 %v385
        %v408 = vunpack.c.l.bf16 %v386
        %v409 = vunpack.c.h.bf16 %v386
        %v410 = vunpack.c.l.bf16 %v387
        %v411 = vunpack.c.h.bf16 %v387
        %v412 = vunpack.c.l.bf16 %v388
        %v413 = vunpack.c.h.bf16 %v388
        %v414 = vunpack.c.l.bf16 %v389
        %v415 = vunpack.c.h.bf16 %v389
        %v416 = vunpack.c.l.bf16 %v390
        %v417 = vunpack.c.h.bf16 %v390
        %v418 = vunpack.c.l.bf16 %v391
        %v419 = vunpack.c.h.bf16 %v391
        %v420 = vunpack.c.l.bf16 %v392
        %v421 = vunpack.c.h.bf16 %v392
        %v422 = vunpack.c.l.bf16 %v393
        %v423 = vunpack.c.h.bf16 %v393
        %v424 = vunpack.c.l.bf16 %v394
        %v425 = vunpack.c.h.bf16 %v394
        %v426 = vunpack.c.l.bf16 %v395
        %v427 = vunpack.c.h.bf16 %v395
        %v428 = vld [vmem:[%s1] sm:$0x3]
        %v430 = vlaneseq
        %v431 = vshrl.u32 %v430, 7
        %v432 = vsub.s32 0, %v431
        %v433 = vrot.slane %v428, %v432
        %v434 = vlaneseq
        %v435 = vshrl.u32 %v434, 7
        %v436 = vsub.s32 1, %v435
        %v437 = vrot.slane %v428, %v436
        %v440 = vmul.f32 %v396, %v433
        %v441 = vmul.f32 %v397, %v437
        %v442 = vmul.f32 %v398, %v433
        %v443 = vmul.f32 %v399, %v437
        %v444 = vmul.f32 %v400, %v433
        %v445 = vmul.f32 %v401, %v437
        %v446 = vmul.f32 %v402, %v433
        %v447 = vmul.f32 %v403, %v437
        %v448 = vmul.f32 %v404, %v433
        %v449 = vmul.f32 %v405, %v437
        %v450 = vmul.f32 %v406, %v433
        %v451 = vmul.f32 %v407, %v437
        %v452 = vmul.f32 %v408, %v433
        %v453 = vmul.f32 %v409, %v437
        %v454 = vmul.f32 %v410, %v433
        %v455 = vmul.f32 %v411, %v437
        %v456 = vmul.f32 %v412, %v433
        %v457 = vmul.f32 %v413, %v437
        %v458 = vmul.f32 %v414, %v433
        %v459 = vmul.f32 %v415, %v437
        %v460 = vmul.f32 %v416, %v433
        %v461 = vmul.f32 %v417, %v437
        %v462 = vmul.f32 %v418, %v433
        %v463 = vmul.f32 %v419, %v437
        %v464 = vmul.f32 %v420, %v433
        %v465 = vmul.f32 %v421, %v437
        %v466 = vmul.f32 %v422, %v433
        %v467 = vmul.f32 %v423, %v437
        %v468 = vmul.f32 %v424, %v433
        %v469 = vmul.f32 %v425, %v437
        %v470 = vmul.f32 %v426, %v433
        %v471 = vmul.f32 %v427, %v437
        %v472 = vld [vmem:[%s2] sm:$0x3]
        %v474 = vlaneseq
        %v475 = vshrl.u32 %v474, 7
        %v476 = vsub.s32 0, %v475
        %v477 = vrot.slane %v472, %v476
        %v478 = vlaneseq
        %v479 = vshrl.u32 %v478, 7
        %v480 = vsub.s32 1, %v479
        %v481 = vrot.slane %v472, %v480
        %v484 = vadd.f32 %v440, %v477
        %v485 = vadd.f32 %v441, %v481
        %v486 = vadd.f32 %v442, %v477
        %v487 = vadd.f32 %v443, %v481
        %v488 = vadd.f32 %v444, %v477
        %v489 = vadd.f32 %v445, %v481
        %v490 = vadd.f32 %v446, %v477
        %v491 = vadd.f32 %v447, %v481
        %v492 = vadd.f32 %v448, %v477
        %v493 = vadd.f32 %v449, %v481
        %v494 = vadd.f32 %v450, %v477
        %v495 = vadd.f32 %v451, %v481
        %v496 = vadd.f32 %v452, %v477
        %v497 = vadd.f32 %v453, %v481
        %v498 = vadd.f32 %v454, %v477
        %v499 = vadd.f32 %v455, %v481
        %v500 = vadd.f32 %v456, %v477
        %v501 = vadd.f32 %v457, %v481
        %v502 = vadd.f32 %v458, %v477
        %v503 = vadd.f32 %v459, %v481
        %v504 = vadd.f32 %v460, %v477
        %v505 = vadd.f32 %v461, %v481
        %v506 = vadd.f32 %v462, %v477
        %v507 = vadd.f32 %v463, %v481
        %v508 = vadd.f32 %v464, %v477
        %v509 = vadd.f32 %v465, %v481
        %v510 = vadd.f32 %v466, %v477
        %v511 = vadd.f32 %v467, %v481
        %v512 = vadd.f32 %v468, %v477
        %v513 = vadd.f32 %v469, %v481
        %v514 = vadd.f32 %v470, %v477
        %v515 = vadd.f32 %v471, %v481
        %v516 = vmax.f32 %v484, 0.0
        %v517 = vmax.f32 %v485, 0.0
        %v518 = vmax.f32 %v486, 0.0
        %v519 = vmax.f32 %v487, 0.0
        %v520 = vmax.f32 %v488, 0.0
        %v521 = vmax.f32 %v489, 0.0
        %v522 = vmax.f32 %v490, 0.0
        %v523 = vmax.f32 %v491, 0.0
        %v524 = vmax.f32 %v492, 0.0
        %v525 = vmax.f32 %v493, 0.0
        %v526 = vmax.f32 %v494, 0.0
        %v527 = vmax.f32 %v495, 0.0
        %v528 = vmax.f32 %v496, 0.0
        %v529 = vmax.f32 %v497, 0.0
        %v530 = vmax.f32 %v498, 0.0
        %v531 = vmax.f32 %v499, 0.0
        %v532 = vmax.f32 %v500, 0.0
        %v533 = vmax.f32 %v501, 0.0
        %v534 = vmax.f32 %v502, 0.0
        %v535 = vmax.f32 %v503, 0.0
        %v536 = vmax.f32 %v504, 0.0
        %v537 = vmax.f32 %v505, 0.0
        %v538 = vmax.f32 %v506, 0.0
        %v539 = vmax.f32 %v507, 0.0
        %v540 = vmax.f32 %v508, 0.0
        %v541 = vmax.f32 %v509, 0.0
        %v542 = vmax.f32 %v510, 0.0
        %v543 = vmax.f32 %v511, 0.0
        %v544 = vmax.f32 %v512, 0.0
        %v545 = vmax.f32 %v513, 0.0
        %v546 = vmax.f32 %v514, 0.0
        %v547 = vmax.f32 %v515, 0.0
        %v548 = vpack.c.bf16 %v518, %v516
        %v549 = vpack.c.bf16 %v519, %v517
        %v550 = vpack.c.bf16 %v522, %v520
        %v551 = vpack.c.bf16 %v523, %v521
        %v552 = vpack.c.bf16 %v526, %v524
        %v553 = vpack.c.bf16 %v527, %v525
        %v554 = vpack.c.bf16 %v530, %v528
        %v555 = vpack.c.bf16 %v531, %v529
        %v556 = vpack.c.bf16 %v534, %v532
        %v557 = vpack.c.bf16 %v535, %v533
        %v558 = vpack.c.bf16 %v538, %v536
        %v559 = vpack.c.bf16 %v539, %v537
        %v560 = vpack.c.bf16 %v542, %v540
        %v561 = vpack.c.bf16 %v543, %v541
        %v562 = vpack.c.bf16 %v546, %v544
        %v563 = vpack.c.bf16 %v547, %v545
        %v564 = vld [vmem:[%s342] sm:$0xff]
        %v565 = vld [vmem:[%s342 + $0x8] sm:$0xff]
        %v566 = vld [vmem:[%s342 + $0x10] sm:$0xff]
        %v567 = vld [vmem:[%s342 + $0x18] sm:$0xff]
        %v568 = vld [vmem:[%s342 + $0x20] sm:$0xff]
        %v569 = vld [vmem:[%s342 + $0x28] sm:$0xff]
        %v570 = vld [vmem:[%s342 + $0x30] sm:$0xff]
        %v571 = vld [vmem:[%s342 + $0x38] sm:$0xff]
        %v572 = vld [vmem:[%s342 + $0x40] sm:$0xff]
        %v573 = vld [vmem:[%s342 + $0x48] sm:$0xff]
        %v574 = vld [vmem:[%s342 + $0x50] sm:$0xff]
        %v575 = vld [vmem:[%s342 + $0x58] sm:$0xff]
        %v576 = vld [vmem:[%s342 + $0x60] sm:$0xff]
        %v577 = vld [vmem:[%s342 + $0x68] sm:$0xff]
        %v578 = vld [vmem:[%s342 + $0x70] sm:$0xff]
        %v579 = vld [vmem:[%s342 + $0x78] sm:$0xff]
        %v580 = vld [vmem:[%s342 + $0x80] sm:$0xff]
        %v581 = vld [vmem:[%s342 + $0x88] sm:$0xff]
        %v582 = vld [vmem:[%s342 + $0x90] sm:$0xff]
        %v583 = vld [vmem:[%s342 + $0x98] sm:$0xff]
        %v584 = vld [vmem:[%s342 + $0xa0] sm:$0xff]
        %v585 = vld [vmem:[%s342 + $0xa8] sm:$0xff]
        %v586 = vld [vmem:[%s342 + $0xb0] sm:$0xff]
        %v587 = vld [vmem:[%s342 + $0xb8] sm:$0xff]
        %v588 = vld [vmem:[%s342 + $0xc0] sm:$0xff]
        %v589 = vld [vmem:[%s342 + $0xc8] sm:$0xff]
        %v590 = vld [vmem:[%s342 + $0xd0] sm:$0xff]
        %v591 = vld [vmem:[%s342 + $0xd8] sm:$0xff]
        %v592 = vld [vmem:[%s342 + $0xe0] sm:$0xff]
        %v593 = vld [vmem:[%s342 + $0xe8] sm:$0xff]
        %v594 = vld [vmem:[%s342 + $0xf0] sm:$0xff]
        %v595 = vld [vmem:[%s342 + $0xf8] sm:$0xff]
        %v596 = vld [vmem:[%s342 + $0x100] sm:$0xff]
        %v597 = vld [vmem:[%s342 + $0x108] sm:$0xff]
        %v598 = vld [vmem:[%s342 + $0x110] sm:$0xff]
        %v599 = vld [vmem:[%s342 + $0x118] sm:$0xff]
        %v600 = vld [vmem:[%s342 + $0x120] sm:$0xff]
        %v601 = vld [vmem:[%s342 + $0x128] sm:$0xff]
        %v602 = vld [vmem:[%s342 + $0x130] sm:$0xff]
        %v603 = vld [vmem:[%s342 + $0x138] sm:$0xff]
        %v604 = vld [vmem:[%s342 + $0x140] sm:$0xff]
        %v605 = vld [vmem:[%s342 + $0x148] sm:$0xff]
        %v606 = vld [vmem:[%s342 + $0x150] sm:$0xff]
        %v607 = vld [vmem:[%s342 + $0x158] sm:$0xff]
        %v608 = vld [vmem:[%s342 + $0x160] sm:$0xff]
        %v609 = vld [vmem:[%s342 + $0x168] sm:$0xff]
        %v610 = vld [vmem:[%s342 + $0x170] sm:$0xff]
        %v611 = vld [vmem:[%s342 + $0x178] sm:$0xff]
        %v612 = vld [vmem:[%s342 + $0x180] sm:$0xff]
        %v613 = vld [vmem:[%s342 + $0x188] sm:$0xff]
        %v614 = vld [vmem:[%s342 + $0x190] sm:$0xff]
        %v615 = vld [vmem:[%s342 + $0x198] sm:$0xff]
        %v616 = vld [vmem:[%s342 + $0x1a0] sm:$0xff]
        %v617 = vld [vmem:[%s342 + $0x1a8] sm:$0xff]
        %v618 = vld [vmem:[%s342 + $0x1b0] sm:$0xff]
        %v619 = vld [vmem:[%s342 + $0x1b8] sm:$0xff]
        %v620 = vld [vmem:[%s342 + $0x1c0] sm:$0xff]
        %v621 = vld [vmem:[%s342 + $0x1c8] sm:$0xff]
        %v622 = vld [vmem:[%s342 + $0x1d0] sm:$0xff]
        %v623 = vld [vmem:[%s342 + $0x1d8] sm:$0xff]
        %v624 = vld [vmem:[%s342 + $0x1e0] sm:$0xff]
        %v625 = vld [vmem:[%s342 + $0x1e8] sm:$0xff]
        %v626 = vld [vmem:[%s342 + $0x1f0] sm:$0xff]
        %v627 = vld [vmem:[%s342 + $0x1f8] sm:$0xff]
        %v692 = vunpack.c.l.b16 %v564
        %v693 = vunpack.c.h.b16 %v564
        %v694 = vunpack.c.l.b16 %v565
        %v695 = vunpack.c.h.b16 %v565
        %v696 = vunpack.c.l.b16 %v566
        %v697 = vunpack.c.h.b16 %v566
        %v698 = vunpack.c.l.b16 %v567
        %v699 = vunpack.c.h.b16 %v567
        %v700 = vunpack.c.l.b16 %v568
        %v701 = vunpack.c.h.b16 %v568
        %v702 = vunpack.c.l.b16 %v569
        %v703 = vunpack.c.h.b16 %v569
        %v704 = vunpack.c.l.b16 %v570
        %v705 = vunpack.c.h.b16 %v570
        %v706 = vunpack.c.l.b16 %v571
        %v707 = vunpack.c.h.b16 %v571
        %v708 = vunpack.c.l.b16 %v572
        %v709 = vunpack.c.h.b16 %v572
        %v710 = vunpack.c.l.b16 %v573
        %v711 = vunpack.c.h.b16 %v573
        %v712 = vunpack.c.l.b16 %v574
        %v713 = vunpack.c.h.b16 %v574
        %v714 = vunpack.c.l.b16 %v575
        %v715 = vunpack.c.h.b16 %v575
        %v716 = vunpack.c.l.b16 %v576
        %v717 = vunpack.c.h.b16 %v576
        %v718 = vunpack.c.l.b16 %v577
        %v719 = vunpack.c.h.b16 %v577
        %v720 = vunpack.c.l.b16 %v578
        %v721 = vunpack.c.h.b16 %v578
        %v722 = vunpack.c.l.b16 %v579
        %v723 = vunpack.c.h.b16 %v579
        %v724 = vunpack.c.l.b16 %v580
        %v725 = vunpack.c.h.b16 %v580
        %v726 = vunpack.c.l.b16 %v581
        %v727 = vunpack.c.h.b16 %v581
        %v728 = vunpack.c.l.b16 %v582
        %v729 = vunpack.c.h.b16 %v582
        %v730 = vunpack.c.l.b16 %v583
        %v731 = vunpack.c.h.b16 %v583
        %v732 = vunpack.c.l.b16 %v584
        %v733 = vunpack.c.h.b16 %v584
        %v734 = vunpack.c.l.b16 %v585
        %v735 = vunpack.c.h.b16 %v585
        %v736 = vunpack.c.l.b16 %v586
        %v737 = vunpack.c.h.b16 %v586
        %v738 = vunpack.c.l.b16 %v587
        %v739 = vunpack.c.h.b16 %v587
        %v740 = vunpack.c.l.b16 %v588
        %v741 = vunpack.c.h.b16 %v588
        %v742 = vunpack.c.l.b16 %v589
        %v743 = vunpack.c.h.b16 %v589
        %v744 = vunpack.c.l.b16 %v590
        %v745 = vunpack.c.h.b16 %v590
        %v746 = vunpack.c.l.b16 %v591
        %v747 = vunpack.c.h.b16 %v591
        %v748 = vunpack.c.l.b16 %v592
        %v749 = vunpack.c.h.b16 %v592
        %v750 = vunpack.c.l.b16 %v593
        %v751 = vunpack.c.h.b16 %v593
        %v752 = vunpack.c.l.b16 %v594
        %v753 = vunpack.c.h.b16 %v594
        %v754 = vunpack.c.l.b16 %v595
        %v755 = vunpack.c.h.b16 %v595
        %v756 = vunpack.c.l.b16 %v596
        %v757 = vunpack.c.h.b16 %v596
        %v758 = vunpack.c.l.b16 %v597
        %v759 = vunpack.c.h.b16 %v597
        %v760 = vunpack.c.l.b16 %v598
        %v761 = vunpack.c.h.b16 %v598
        %v762 = vunpack.c.l.b16 %v599
        %v763 = vunpack.c.h.b16 %v599
        %v764 = vunpack.c.l.b16 %v600
        %v765 = vunpack.c.h.b16 %v600
        %v766 = vunpack.c.l.b16 %v601
        %v767 = vunpack.c.h.b16 %v601
        %v768 = vunpack.c.l.b16 %v602
        %v769 = vunpack.c.h.b16 %v602
        %v770 = vunpack.c.l.b16 %v603
        %v771 = vunpack.c.h.b16 %v603
        %v772 = vunpack.c.l.b16 %v604
        %v773 = vunpack.c.h.b16 %v604
        %v774 = vunpack.c.l.b16 %v605
        %v775 = vunpack.c.h.b16 %v605
        %v776 = vunpack.c.l.b16 %v606
        %v777 = vunpack.c.h.b16 %v606
        %v778 = vunpack.c.l.b16 %v607
        %v779 = vunpack.c.h.b16 %v607
        %v780 = vunpack.c.l.b16 %v608
        %v781 = vunpack.c.h.b16 %v608
        %v782 = vunpack.c.l.b16 %v609
        %v783 = vunpack.c.h.b16 %v609
        %v784 = vunpack.c.l.b16 %v610
        %v785 = vunpack.c.h.b16 %v610
        %v786 = vunpack.c.l.b16 %v611
        %v787 = vunpack.c.h.b16 %v611
        %v788 = vunpack.c.l.b16 %v612
        %v789 = vunpack.c.h.b16 %v612
        %v790 = vunpack.c.l.b16 %v613
        %v791 = vunpack.c.h.b16 %v613
        %v792 = vunpack.c.l.b16 %v614
        %v793 = vunpack.c.h.b16 %v614
        %v794 = vunpack.c.l.b16 %v615
        %v795 = vunpack.c.h.b16 %v615
        %v796 = vunpack.c.l.b16 %v616
        %v797 = vunpack.c.h.b16 %v616
        %v798 = vunpack.c.l.b16 %v617
        %v799 = vunpack.c.h.b16 %v617
        %v800 = vunpack.c.l.b16 %v618
        %v801 = vunpack.c.h.b16 %v618
        %v802 = vunpack.c.l.b16 %v619
        %v803 = vunpack.c.h.b16 %v619
        %v804 = vunpack.c.l.b16 %v620
        %v805 = vunpack.c.h.b16 %v620
        %v806 = vunpack.c.l.b16 %v621
        %v807 = vunpack.c.h.b16 %v621
        %v808 = vunpack.c.l.b16 %v622
        %v809 = vunpack.c.h.b16 %v622
        %v810 = vunpack.c.l.b16 %v623
        %v811 = vunpack.c.h.b16 %v623
        %v812 = vunpack.c.l.b16 %v624
        %v813 = vunpack.c.h.b16 %v624
        %v814 = vunpack.c.l.b16 %v625
        %v815 = vunpack.c.h.b16 %v625
        %v816 = vunpack.c.l.b16 %v626
        %v817 = vunpack.c.h.b16 %v626
        %v818 = vunpack.c.l.b16 %v627
        %v819 = vunpack.c.h.b16 %v627
        %v820 = vpack.c.b16 %v696, %v692
        %v821 = vpack.c.b16 %v697, %v693
        %v822 = vpack.c.b16 %v698, %v694
        %v823 = vpack.c.b16 %v699, %v695
        %v824 = vpack.c.b16 %v704, %v700
        %v825 = vpack.c.b16 %v705, %v701
        %v826 = vpack.c.b16 %v706, %v702
        %v827 = vpack.c.b16 %v707, %v703
        %v828 = vpack.c.b16 %v712, %v708
        %v829 = vpack.c.b16 %v713, %v709
        %v830 = vpack.c.b16 %v714, %v710
        %v831 = vpack.c.b16 %v715, %v711
        %v832 = vpack.c.b16 %v720, %v716
        %v833 = vpack.c.b16 %v721, %v717
        %v834 = vpack.c.b16 %v722, %v718
        %v835 = vpack.c.b16 %v723, %v719
        %v836 = vpack.c.b16 %v728, %v724
        %v837 = vpack.c.b16 %v729, %v725
        %v838 = vpack.c.b16 %v730, %v726
        %v839 = vpack.c.b16 %v731, %v727
        %v840 = vpack.c.b16 %v736, %v732
        %v841 = vpack.c.b16 %v737, %v733
        %v842 = vpack.c.b16 %v738, %v734
        %v843 = vpack.c.b16 %v739, %v735
        %v844 = vpack.c.b16 %v744, %v740
        %v845 = vpack.c.b16 %v745, %v741
        %v846 = vpack.c.b16 %v746, %v742
        %v847 = vpack.c.b16 %v747, %v743
        %v848 = vpack.c.b16 %v752, %v748
        %v849 = vpack.c.b16 %v753, %v749
        %v850 = vpack.c.b16 %v754, %v750
        %v851 = vpack.c.b16 %v755, %v751
        %v852 = vpack.c.b16 %v760, %v756
        %v853 = vpack.c.b16 %v761, %v757
        %v854 = vpack.c.b16 %v762, %v758
        %v855 = vpack.c.b16 %v763, %v759
        %v856 = vpack.c.b16 %v768, %v764
        %v857 = vpack.c.b16 %v769, %v765
        %v858 = vpack.c.b16 %v770, %v766
        %v859 = vpack.c.b16 %v771, %v767
        %v860 = vpack.c.b16 %v776, %v772
        %v861 = vpack.c.b16 %v777, %v773
        %v862 = vpack.c.b16 %v778, %v774
        %v863 = vpack.c.b16 %v779, %v775
        %v864 = vpack.c.b16 %v784, %v780
        %v865 = vpack.c.b16 %v785, %v781
        %v866 = vpack.c.b16 %v786, %v782
        %v867 = vpack.c.b16 %v787, %v783
        %v868 = vpack.c.b16 %v792, %v788
        %v869 = vpack.c.b16 %v793, %v789
        %v870 = vpack.c.b16 %v794, %v790
        %v871 = vpack.c.b16 %v795, %v791
        %v872 = vpack.c.b16 %v800, %v796
        %v873 = vpack.c.b16 %v801, %v797
        %v874 = vpack.c.b16 %v802, %v798
        %v875 = vpack.c.b16 %v803, %v799
        %v876 = vpack.c.b16 %v808, %v804
        %v877 = vpack.c.b16 %v809, %v805
        %v878 = vpack.c.b16 %v810, %v806
        %v879 = vpack.c.b16 %v811, %v807
        %v880 = vpack.c.b16 %v816, %v812
        %v881 = vpack.c.b16 %v817, %v813
        %v882 = vpack.c.b16 %v818, %v814
        %v883 = vpack.c.b16 %v819, %v815
        %948 = vmatprep.subr.bf16.mxu0 %v821
        %949 = vmatpush1.bf16.msra.mxu0 %v820
        %950 = vmatprep.subr.bf16.mxu0 %v825
        %951 = vmatpush1.bf16.msra.mxu0 %v824
        %952 = vmatprep.subr.bf16.mxu0 %v829
        %953 = vmatpush1.bf16.msra.mxu0 %v828
        %954 = vmatprep.subr.bf16.mxu0 %v833
        %955 = vmatpush1.bf16.msra.mxu0 %v832
        %956 = vmatprep.subr.bf16.mxu0 %v837
        %957 = vmatpush1.bf16.msra.mxu0 %v836
        %958 = vmatprep.subr.bf16.mxu0 %v841
        %959 = vmatpush1.bf16.msra.mxu0 %v840
        %960 = vmatprep.subr.bf16.mxu0 %v845
        %961 = vmatpush1.bf16.msra.mxu0 %v844
        %962 = vmatprep.subr.bf16.mxu0 %v849
        %963 = vmatpush1.bf16.msra.mxu0 %v848
        %964 = vmatprep.subr.bf16.mxu0 %v853
        %965 = vmatpush1.bf16.msra.mxu0 %v852
        %966 = vmatprep.subr.bf16.mxu0 %v857
        %967 = vmatpush1.bf16.msra.mxu0 %v856
        %968 = vmatprep.subr.bf16.mxu0 %v861
        %969 = vmatpush1.bf16.msra.mxu0 %v860
        %970 = vmatprep.subr.bf16.mxu0 %v865
        %971 = vmatpush1.bf16.msra.mxu0 %v864
        %972 = vmatprep.subr.bf16.mxu0 %v869
        %973 = vmatpush1.bf16.msra.mxu0 %v868
        %974 = vmatprep.subr.bf16.mxu0 %v873
        %975 = vmatpush1.bf16.msra.mxu0 %v872
        %976 = vmatprep.subr.bf16.mxu0 %v877
        %977 = vmatpush1.bf16.msra.mxu0 %v876
        %978 = vmatprep.subr.bf16.mxu0 %v881
        %979 = vmatpush1.bf16.msra.mxu0 %v880
        %980 = vmatprep.mubr.bf16.mxu0 %v549
        %981 = vmatmul.mubr.bf16.gmra.mrb[0].mxu0 %v548
        %v982 = vpop.f32.mrb[0].mxu0
        %v983 = vadd.f32 0.0, %v982
        %v984 = vpop.f32.mrb[0].mxu0
        %v985 = vadd.f32 0.0, %v984
        %v986 = vpop.f32.mrb[0].mxu0
        %v987 = vadd.f32 0.0, %v986
        %v988 = vpop.f32.mrb[0].mxu0
        %v989 = vadd.f32 0.0, %v988
        %990 = vmatprep.mubr.bf16.mxu0 %v551
        %991 = vmatmul.mubr.bf16.gmra.mrb[0].mxu0 %v550
        %v992 = vpop.f32.mrb[0].mxu0
        %v993 = vadd.f32 0.0, %v992
        %v994 = vpop.f32.mrb[0].mxu0
        %v995 = vadd.f32 0.0, %v994
        %v996 = vpop.f32.mrb[0].mxu0
        %v997 = vadd.f32 0.0, %v996
        %v998 = vpop.f32.mrb[0].mxu0
        %v999 = vadd.f32 0.0, %v998
        %1000 = vmatprep.mubr.bf16.mxu0 %v553
        %1001 = vmatmul.mubr.bf16.gmra.mrb[0].mxu0 %v552
        %v1002 = vpop.f32.mrb[0].mxu0
        %v1003 = vadd.f32 0.0, %v1002
        %v1004 = vpop.f32.mrb[0].mxu0
        %v1005 = vadd.f32 0.0, %v1004
        %v1006 = vpop.f32.mrb[0].mxu0
        %v1007 = vadd.f32 0.0, %v1006
        %v1008 = vpop.f32.mrb[0].mxu0
        %v1009 = vadd.f32 0.0, %v1008
        %1010 = vmatprep.mubr.bf16.mxu0 %v555
        %1011 = vmatmul.mubr.bf16.gmra.mrb[0].mxu0 %v554
        %v1012 = vpop.f32.mrb[0].mxu0
        %v1013 = vadd.f32 0.0, %v1012
        %v1014 = vpop.f32.mrb[0].mxu0
        %v1015 = vadd.f32 0.0, %v1014
        %v1016 = vpop.f32.mrb[0].mxu0
        %v1017 = vadd.f32 0.0, %v1016
        %v1018 = vpop.f32.mrb[0].mxu0
        %v1019 = vadd.f32 0.0, %v1018
        %1020 = vmatprep.mubr.bf16.mxu0 %v557
        %1021 = vmatmul.mubr.bf16.gmra.mrb[0].mxu0 %v556
        %v1022 = vpop.f32.mrb[0].mxu0
        %v1023 = vadd.f32 0.0, %v1022
        %v1024 = vpop.f32.mrb[0].mxu0
        %v1025 = vadd.f32 0.0, %v1024
        %v1026 = vpop.f32.mrb[0].mxu0
        %v1027 = vadd.f32 0.0, %v1026
        %v1028 = vpop.f32.mrb[0].mxu0
        %v1029 = vadd.f32 0.0, %v1028
        %1030 = vmatprep.mubr.bf16.mxu0 %v559
        %1031 = vmatmul.mubr.bf16.gmra.mrb[0].mxu0 %v558
        %v1032 = vpop.f32.mrb[0].mxu0
        %v1033 = vadd.f32 0.0, %v1032
        %v1034 = vpop.f32.mrb[0].mxu0
        %v1035 = vadd.f32 0.0, %v1034
        %v1036 = vpop.f32.mrb[0].mxu0
        %v1037 = vadd.f32 0.0, %v1036
        %v1038 = vpop.f32.mrb[0].mxu0
        %v1039 = vadd.f32 0.0, %v1038
        %1040 = vmatprep.mubr.bf16.mxu0 %v561
        %1041 = vmatmul.mubr.bf16.gmra.mrb[0].mxu0 %v560
        %v1042 = vpop.f32.mrb[0].mxu0
        %v1043 = vadd.f32 0.0, %v1042
        %v1044 = vpop.f32.mrb[0].mxu0
        %v1045 = vadd.f32 0.0, %v1044
        %v1046 = vpop.f32.mrb[0].mxu0
        %v1047 = vadd.f32 0.0, %v1046
        %v1048 = vpop.f32.mrb[0].mxu0
        %v1049 = vadd.f32 0.0, %v1048
        %1050 = vmatprep.mubr.bf16.mxu0 %v563
        %1051 = vmatmul.mubr.bf16.gmra.mrb[0].mxu0 %v562
        %v1052 = vpop.f32.mrb[0].mxu0
        %v1053 = vadd.f32 0.0, %v1052
        %v1054 = vpop.f32.mrb[0].mxu0
        %v1055 = vadd.f32 0.0, %v1054
        %v1056 = vpop.f32.mrb[0].mxu0
        %v1057 = vadd.f32 0.0, %v1056
        %v1058 = vpop.f32.mrb[0].mxu0
        %v1059 = vadd.f32 0.0, %v1058
        %1060 = vdwg.mxu0
        %1061 = vmatprep.subr.bf16.mxu0 %v823
        %1062 = vmatpush1.bf16.msra.mxu0 %v822
        %1063 = vmatprep.subr.bf16.mxu0 %v827
        %1064 = vmatpush1.bf16.msra.mxu0 %v826
        %1065 = vmatprep.subr.bf16.mxu0 %v831
        %1066 = vmatpush1.bf16.msra.mxu0 %v830
        %1067 = vmatprep.subr.bf16.mxu0 %v835
        %1068 = vmatpush1.bf16.msra.mxu0 %v834
        %1069 = vmatprep.subr.bf16.mxu0 %v839
        %1070 = vmatpush1.bf16.msra.mxu0 %v838
        %1071 = vmatprep.subr.bf16.mxu0 %v843
        %1072 = vmatpush1.bf16.msra.mxu0 %v842
        %1073 = vmatprep.subr.bf16.mxu0 %v847
        %1074 = vmatpush1.bf16.msra.mxu0 %v846
        %1075 = vmatprep.subr.bf16.mxu0 %v851
        %1076 = vmatpush1.bf16.msra.mxu0 %v850
        %1077 = vmatprep.subr.bf16.mxu0 %v855
        %1078 = vmatpush1.bf16.msra.mxu0 %v854
        %1079 = vmatprep.subr.bf16.mxu0 %v859
        %1080 = vmatpush1.bf16.msra.mxu0 %v858
        %1081 = vmatprep.subr.bf16.mxu0 %v863
        %1082 = vmatpush1.bf16.msra.mxu0 %v862
        %1083 = vmatprep.subr.bf16.mxu0 %v867
        %1084 = vmatpush1.bf16.msra.mxu0 %v866
        %1085 = vmatprep.subr.bf16.mxu0 %v871
        %1086 = vmatpush1.bf16.msra.mxu0 %v870
        %1087 = vmatprep.subr.bf16.mxu0 %v875
        %1088 = vmatpush1.bf16.msra.mxu0 %v874
        %1089 = vmatprep.subr.bf16.mxu0 %v879
        %1090 = vmatpush1.bf16.msra.mxu0 %v878
        %1091 = vmatprep.subr.bf16.mxu0 %v883
        %1092 = vmatpush1.bf16.msra.mxu0 %v882
        %1093 = vmatprep.mubr.bf16.mxu0 %v549
        %1094 = vmatmul.mubr.bf16.gmra.mrb[0].mxu0 %v548
        %v1095 = vpop.f32.mrb[0].mxu0
        %v1096 = vadd.f32 0.0, %v1095
        %v1097 = vpop.f32.mrb[0].mxu0
        %v1098 = vadd.f32 0.0, %v1097
        %v1099 = vpop.f32.mrb[0].mxu0
        %v1100 = vadd.f32 0.0, %v1099
        %v1101 = vpop.f32.mrb[0].mxu0
        %v1102 = vadd.f32 0.0, %v1101
        %1103 = vmatprep.mubr.bf16.mxu0 %v551
        %1104 = vmatmul.mubr.bf16.gmra.mrb[0].mxu0 %v550
        %v1105 = vpop.f32.mrb[0].mxu0
        %v1106 = vadd.f32 0.0, %v1105
        %v1107 = vpop.f32.mrb[0].mxu0
        %v1108 = vadd.f32 0.0, %v1107
        %v1109 = vpop.f32.mrb[0].mxu0
        %v1110 = vadd.f32 0.0, %v1109
        %v1111 = vpop.f32.mrb[0].mxu0
        %v1112 = vadd.f32 0.0, %v1111
        %1113 = vmatprep.mubr.bf16.mxu0 %v553
        %1114 = vmatmul.mubr.bf16.gmra.mrb[0].mxu0 %v552
        %v1115 = vpop.f32.mrb[0].mxu0
        %v1116 = vadd.f32 0.0, %v1115
        %v1117 = vpop.f32.mrb[0].mxu0
        %v1118 = vadd.f32 0.0, %v1117
        %v1119 = vpop.f32.mrb[0].mxu0
        %v1120 = vadd.f32 0.0, %v1119
        %v1121 = vpop.f32.mrb[0].mxu0
        %v1122 = vadd.f32 0.0, %v1121
        %1123 = vmatprep.mubr.bf16.mxu0 %v555
        %1124 = vmatmul.mubr.bf16.gmra.mrb[0].mxu0 %v554
        %v1125 = vpop.f32.mrb[0].mxu0
        %v1126 = vadd.f32 0.0, %v1125
        %v1127 = vpop.f32.mrb[0].mxu0
        %v1128 = vadd.f32 0.0, %v1127
        %v1129 = vpop.f32.mrb[0].mxu0
        %v1130 = vadd.f32 0.0, %v1129
        %v1131 = vpop.f32.mrb[0].mxu0
        %v1132 = vadd.f32 0.0, %v1131
        %1133 = vmatprep.mubr.bf16.mxu0 %v557
        %1134 = vmatmul.mubr.bf16.gmra.mrb[0].mxu0 %v556
        %v1135 = vpop.f32.mrb[0].mxu0
        %v1136 = vadd.f32 0.0, %v1135
        %v1137 = vpop.f32.mrb[0].mxu0
        %v1138 = vadd.f32 0.0, %v1137
        %v1139 = vpop.f32.mrb[0].mxu0
        %v1140 = vadd.f32 0.0, %v1139
        %v1141 = vpop.f32.mrb[0].mxu0
        %v1142 = vadd.f32 0.0, %v1141
        %1143 = vmatprep.mubr.bf16.mxu0 %v559
        %1144 = vmatmul.mubr.bf16.gmra.mrb[0].mxu0 %v558
        %v1145 = vpop.f32.mrb[0].mxu0
        %v1146 = vadd.f32 0.0, %v1145
        %v1147 = vpop.f32.mrb[0].mxu0
        %v1148 = vadd.f32 0.0, %v1147
        %v1149 = vpop.f32.mrb[0].mxu0
        %v1150 = vadd.f32 0.0, %v1149
        %v1151 = vpop.f32.mrb[0].mxu0
        %v1152 = vadd.f32 0.0, %v1151
        %1153 = vmatprep.mubr.bf16.mxu0 %v561
        %1154 = vmatmul.mubr.bf16.gmra.mrb[0].mxu0 %v560
        %v1155 = vpop.f32.mrb[0].mxu0
        %v1156 = vadd.f32 0.0, %v1155
        %v1157 = vpop.f32.mrb[0].mxu0
        %v1158 = vadd.f32 0.0, %v1157
        %v1159 = vpop.f32.mrb[0].mxu0
        %v1160 = vadd.f32 0.0, %v1159
        %v1161 = vpop.f32.mrb[0].mxu0
        %v1162 = vadd.f32 0.0, %v1161
        %1163 = vmatprep.mubr.bf16.mxu0 %v563
        %1164 = vmatmul.mubr.bf16.gmra.mrb[0].mxu0 %v562
        %v1165 = vpop.f32.mrb[0].mxu0
        %v1166 = vadd.f32 0.0, %v1165
        %v1167 = vpop.f32.mrb[0].mxu0
        %v1168 = vadd.f32 0.0, %v1167
        %v1169 = vpop.f32.mrb[0].mxu0
        %v1170 = vadd.f32 0.0, %v1169
        %v1171 = vpop.f32.mrb[0].mxu0
        %v1172 = vadd.f32 0.0, %v1171
        %1173 = vdwg.mxu0
        %v1174 = vpack.c.bf16 %v987, %v983
        %v1175 = vpack.c.bf16 %v989, %v985
        %v1176 = vpack.c.bf16 %v1100, %v1096
        %v1177 = vpack.c.bf16 %v1102, %v1098
        %v1178 = vpack.c.bf16 %v997, %v993
        %v1179 = vpack.c.bf16 %v999, %v995
        %v1180 = vpack.c.bf16 %v1110, %v1106
        %v1181 = vpack.c.bf16 %v1112, %v1108
        %v1182 = vpack.c.bf16 %v1007, %v1003
        %v1183 = vpack.c.bf16 %v1009, %v1005
        %v1184 = vpack.c.bf16 %v1120, %v1116
        %v1185 = vpack.c.bf16 %v1122, %v1118
        %v1186 = vpack.c.bf16 %v1017, %v1013
        %v1187 = vpack.c.bf16 %v1019, %v1015
        %v1188 = vpack.c.bf16 %v1130, %v1126
        %v1189 = vpack.c.bf16 %v1132, %v1128
        %v1190 = vpack.c.bf16 %v1027, %v1023
        %v1191 = vpack.c.bf16 %v1029, %v1025
        %v1192 = vpack.c.bf16 %v1140, %v1136
        %v1193 = vpack.c.bf16 %v1142, %v1138
        %v1194 = vpack.c.bf16 %v1037, %v1033
        %v1195 = vpack.c.bf16 %v1039, %v1035
        %v1196 = vpack.c.bf16 %v1150, %v1146
        %v1197 = vpack.c.bf16 %v1152, %v1148
        %v1198 = vpack.c.bf16 %v1047, %v1043
        %v1199 = vpack.c.bf16 %v1049, %v1045
        %v1200 = vpack.c.bf16 %v1160, %v1156
        %v1201 = vpack.c.bf16 %v1162, %v1158
        %v1202 = vpack.c.bf16 %v1057, %v1053
        %v1203 = vpack.c.bf16 %v1059, %v1055
        %v1204 = vpack.c.bf16 %v1170, %v1166
        %v1205 = vpack.c.bf16 %v1172, %v1168
        %v1238 = vunpack.c.l.b16 %v1174
        %v1239 = vunpack.c.l.b16 %v1175
        %v1240 = vunpack.c.l.b16 %v1176
        %v1241 = vunpack.c.l.b16 %v1177
        %v1242 = vunpack.c.h.b16 %v1174
        %v1243 = vunpack.c.h.b16 %v1175
        %v1244 = vunpack.c.h.b16 %v1176
        %v1245 = vunpack.c.h.b16 %v1177
        %v1246 = vunpack.c.l.b16 %v1178
        %v1247 = vunpack.c.l.b16 %v1179
        %v1248 = vunpack.c.l.b16 %v1180
        %v1249 = vunpack.c.l.b16 %v1181
        %v1250 = vunpack.c.h.b16 %v1178
        %v1251 = vunpack.c.h.b16 %v1179
        %v1252 = vunpack.c.h.b16 %v1180
        %v1253 = vunpack.c.h.b16 %v1181
        %v1254 = vunpack.c.l.b16 %v1182
        %v1255 = vunpack.c.l.b16 %v1183
        %v1256 = vunpack.c.l.b16 %v1184
        %v1257 = vunpack.c.l.b16 %v1185
        %v1258 = vunpack.c.h.b16 %v1182
        %v1259 = vunpack.c.h.b16 %v1183
        %v1260 = vunpack.c.h.b16 %v1184
        %v1261 = vunpack.c.h.b16 %v1185
        %v1262 = vunpack.c.l.b16 %v1186
        %v1263 = vunpack.c.l.b16 %v1187
        %v1264 = vunpack.c.l.b16 %v1188
        %v1265 = vunpack.c.l.b16 %v1189
        %v1266 = vunpack.c.h.b16 %v1186
        %v1267 = vunpack.c.h.b16 %v1187
        %v1268 = vunpack.c.h.b16 %v1188
        %v1269 = vunpack.c.h.b16 %v1189
        %v1270 = vunpack.c.l.b16 %v1190
        %v1271 = vunpack.c.l.b16 %v1191
        %v1272 = vunpack.c.l.b16 %v1192
        %v1273 = vunpack.c.l.b16 %v1193
        %v1274 = vunpack.c.h.b16 %v1190
        %v1275 = vunpack.c.h.b16 %v1191
        %v1276 = vunpack.c.h.b16 %v1192
        %v1277 = vunpack.c.h.b16 %v1193
        %v1278 = vunpack.c.l.b16 %v1194
        %v1279 = vunpack.c.l.b16 %v1195
        %v1280 = vunpack.c.l.b16 %v1196
        %v1281 = vunpack.c.l.b16 %v1197
        %v1282 = vunpack.c.h.b16 %v1194
        %v1283 = vunpack.c.h.b16 %v1195
        %v1284 = vunpack.c.h.b16 %v1196
        %v1285 = vunpack.c.h.b16 %v1197
        %v1286 = vunpack.c.l.b16 %v1198
        %v1287 = vunpack.c.l.b16 %v1199
        %v1288 = vunpack.c.l.b16 %v1200
        %v1289 = vunpack.c.l.b16 %v1201
        %v1290 = vunpack.c.h.b16 %v1198
        %v1291 = vunpack.c.h.b16 %v1199
        %v1292 = vunpack.c.h.b16 %v1200
        %v1293 = vunpack.c.h.b16 %v1201
        %v1294 = vunpack.c.l.b16 %v1202
        %v1295 = vunpack.c.l.b16 %v1203
        %v1296 = vunpack.c.l.b16 %v1204
        %v1297 = vunpack.c.l.b16 %v1205
        %v1298 = vunpack.c.h.b16 %v1202
        %v1299 = vunpack.c.h.b16 %v1203
        %v1300 = vunpack.c.h.b16 %v1204
        %v1301 = vunpack.c.h.b16 %v1205
        %v1302 = vpack.c.b16 %v1239, %v1238
        %v1303 = vpack.c.b16 %v1241, %v1240
        %v1304 = vpack.c.b16 %v1243, %v1242
        %v1305 = vpack.c.b16 %v1245, %v1244
        %v1306 = vpack.c.b16 %v1247, %v1246
        %v1307 = vpack.c.b16 %v1249, %v1248
        %v1308 = vpack.c.b16 %v1251, %v1250
        %v1309 = vpack.c.b16 %v1253, %v1252
        %v1310 = vpack.c.b16 %v1255, %v1254
        %v1311 = vpack.c.b16 %v1257, %v1256
        %v1312 = vpack.c.b16 %v1259, %v1258
        %v1313 = vpack.c.b16 %v1261, %v1260
        %v1314 = vpack.c.b16 %v1263, %v1262
        %v1315 = vpack.c.b16 %v1265, %v1264
        %v1316 = vpack.c.b16 %v1267, %v1266
        %v1317 = vpack.c.b16 %v1269, %v1268
        %v1318 = vpack.c.b16 %v1271, %v1270
        %v1319 = vpack.c.b16 %v1273, %v1272
        %v1320 = vpack.c.b16 %v1275, %v1274
        %v1321 = vpack.c.b16 %v1277, %v1276
        %v1322 = vpack.c.b16 %v1279, %v1278
        %v1323 = vpack.c.b16 %v1281, %v1280
        %v1324 = vpack.c.b16 %v1283, %v1282
        %v1325 = vpack.c.b16 %v1285, %v1284
        %v1326 = vpack.c.b16 %v1287, %v1286
        %v1327 = vpack.c.b16 %v1289, %v1288
        %v1328 = vpack.c.b16 %v1291, %v1290
        %v1329 = vpack.c.b16 %v1293, %v1292
        %v1330 = vpack.c.b16 %v1295, %v1294
        %v1331 = vpack.c.b16 %v1297, %v1296
        %v1332 = vpack.c.b16 %v1299, %v1298
        %v1333 = vpack.c.b16 %v1301, %v1300
        %1366 = vst [vmem:[%s369] sm:$0xff] %v1302
        %1367 = vst [vmem:[%s369 + $0x8] sm:$0xff] %v1303
        %1368 = vst [vmem:[%s369 + $0x10] sm:$0xff] %v1304
        %1369 = vst [vmem:[%s369 + $0x18] sm:$0xff] %v1305
        %1370 = vst [vmem:[%s369 + $0x20] sm:$0xff] %v1306
        %1371 = vst [vmem:[%s369 + $0x28] sm:$0xff] %v1307
        %1372 = vst [vmem:[%s369 + $0x30] sm:$0xff] %v1308
        %1373 = vst [vmem:[%s369 + $0x38] sm:$0xff] %v1309
        %1374 = vst [vmem:[%s369 + $0x40] sm:$0xff] %v1310
        %1375 = vst [vmem:[%s369 + $0x48] sm:$0xff] %v1311
        %1376 = vst [vmem:[%s369 + $0x50] sm:$0xff] %v1312
        %1377 = vst [vmem:[%s369 + $0x58] sm:$0xff] %v1313
        %1378 = vst [vmem:[%s369 + $0x60] sm:$0xff] %v1314
        %1379 = vst [vmem:[%s369 + $0x68] sm:$0xff] %v1315
        %1380 = vst [vmem:[%s369 + $0x70] sm:$0xff] %v1316
        %1381 = vst [vmem:[%s369 + $0x78] sm:$0xff] %v1317
        %1382 = vst [vmem:[%s369 + $0x80] sm:$0xff] %v1318
        %1383 = vst [vmem:[%s369 + $0x88] sm:$0xff] %v1319
        %1384 = vst [vmem:[%s369 + $0x90] sm:$0xff] %v1320
        %1385 = vst [vmem:[%s369 + $0x98] sm:$0xff] %v1321
        %1386 = vst [vmem:[%s369 + $0xa0] sm:$0xff] %v1322
        %1387 = vst [vmem:[%s369 + $0xa8] sm:$0xff] %v1323
        %1388 = vst [vmem:[%s369 + $0xb0] sm:$0xff] %v1324
        %1389 = vst [vmem:[%s369 + $0xb8] sm:$0xff] %v1325
        %1390 = vst [vmem:[%s369 + $0xc0] sm:$0xff] %v1326
        %1391 = vst [vmem:[%s369 + $0xc8] sm:$0xff] %v1327
        %1392 = vst [vmem:[%s369 + $0xd0] sm:$0xff] %v1328
        %1393 = vst [vmem:[%s369 + $0xd8] sm:$0xff] %v1329
        %1394 = vst [vmem:[%s369 + $0xe0] sm:$0xff] %v1330
        %1395 = vst [vmem:[%s369 + $0xe8] sm:$0xff] %v1331
        %1396 = vst [vmem:[%s369 + $0xf0] sm:$0xff] %v1332
        %1397 = vst [vmem:[%s369 + $0xf8] sm:$0xff] %v1333
        %s1398 = sand.u32 %s131, 1
        %s1399 = sand.u32 %s131, 1
        %s1400 = smul.addr %s1399, 256
        %s1401 = scalar_lea.vmem [#allocation3], %s1400
        // Predicated region
        $region60: #{generator_forward.7} parent=54 // pred_check
          %p1402 = pneg %p141
        $region61: #{generator_forward.7} parent=54 // pred_check_branch
          %1404 = sbr.rel (%p1402) target = $region63
        $region62: #{generator_forward.7} parent=54 // pred_region
          %s1405 = smul.u32 16, %s19
          %s1406 = smul.u32 4, %s20
          %s1407 = smul.addr %s1405, 16
          %s1408 = sadd.s32 %s1406, %s1407
          %s1409 = smul.addr %s1408, 4
          %s1410 = scalar_lea.vmem %s4, %s1409
          // Predicated region
          $region64: #{generator_forward.7} parent=62 // pred_check
            _
          $region65: #{generator_forward.7} parent=62 // pred_check_branch
            %1412 = sbr.rel (0) target = $region67
          $region66: #{generator_forward.7} parent=62 // pred_region
            // Predicated region
            $region68: #{generator_forward.7} parent=66 // pred_check
              _
            $region69: #{generator_forward.7} parent=66 // pred_check_branch
              %1414 = sbr.rel (0) target = $region71
            $region70: #{generator_forward.7} parent=66 // pred_region
              loop: start=0, step=1, limit=1
              $region72: #{generator_forward.7} parent=70 // loop_pre_header
                _
              $region73: #{generator_forward.7} parent=70 // loop_header
                %s1416 = sphi 0, %s1420
                %p1417 = scmp.ge.s32.totalorder %s1416, 1
                %s1421 = sphi %s1401, %s1401
                %s1422 = sphi %s1410, %s1410
              $region74: #{generator_forward.7} parent=70 // loop_header_branch
                %1419 = sbr.rel (%p1417) target = $region78
              $region75: #{generator_forward.7} parent=70 // loop_body
                %v1423 = vld [vmem:[%s1421] sm:$0xff]
                %1424 = vst [vmem:[%s1422] sm:$0xff] %v1423
                %v1425 = vld [vmem:[%s1421 + $0x8] sm:$0xff]
                %1426 = vst [vmem:[%s1422 + $0x8] sm:$0xff] %v1425
                %v1427 = vld [vmem:[%s1421 + $0x10] sm:$0xff]
                %1428 = vst [vmem:[%s1422 + $0x40] sm:$0xff] %v1427
                %v1429 = vld [vmem:[%s1421 + $0x18] sm:$0xff]
                %1430 = vst [vmem:[%s1422 + $0x48] sm:$0xff] %v1429
                %v1431 = vld [vmem:[%s1421 + $0x20] sm:$0xff]
                %1432 = vst [vmem:[%s1422 + $0x80] sm:$0xff] %v1431
                %v1433 = vld [vmem:[%s1421 + $0x28] sm:$0xff]
                %1434 = vst [vmem:[%s1422 + $0x88] sm:$0xff] %v1433
                %v1435 = vld [vmem:[%s1421 + $0x30] sm:$0xff]
                %1436 = vst [vmem:[%s1422 + $0xc0] sm:$0xff] %v1435
                %v1437 = vld [vmem:[%s1421 + $0x38] sm:$0xff]
                %1438 = vst [vmem:[%s1422 + $0xc8] sm:$0xff] %v1437
                %v1439 = vld [vmem:[%s1421 + $0x40] sm:$0xff]
                %1440 = vst [vmem:[%s1422 + $0x100] sm:$0xff] %v1439
                %v1441 = vld [vmem:[%s1421 + $0x48] sm:$0xff]
                %1442 = vst [vmem:[%s1422 + $0x108] sm:$0xff] %v1441
                %v1443 = vld [vmem:[%s1421 + $0x50] sm:$0xff]
                %1444 = vst [vmem:[%s1422 + $0x140] sm:$0xff] %v1443
                %v1445 = vld [vmem:[%s1421 + $0x58] sm:$0xff]
                %1446 = vst [vmem:[%s1422 + $0x148] sm:$0xff] %v1445
                %v1447 = vld [vmem:[%s1421 + $0x60] sm:$0xff]
                %1448 = vst [vmem:[%s1422 + $0x180] sm:$0xff] %v1447
                %v1449 = vld [vmem:[%s1421 + $0x68] sm:$0xff]
                %1450 = vst [vmem:[%s1422 + $0x188] sm:$0xff] %v1449
                %v1451 = vld [vmem:[%s1421 + $0x70] sm:$0xff]
                %1452 = vst [vmem:[%s1422 + $0x1c0] sm:$0xff] %v1451
                %v1453 = vld [vmem:[%s1421 + $0x78] sm:$0xff]
                %1454 = vst [vmem:[%s1422 + $0x1c8] sm:$0xff] %v1453
                %v1455 = vld [vmem:[%s1421 + $0x80] sm:$0xff]
                %1456 = vst [vmem:[%s1422 + $0x200] sm:$0xff] %v1455
                %v1457 = vld [vmem:[%s1421 + $0x88] sm:$0xff]
                %1458 = vst [vmem:[%s1422 + $0x208] sm:$0xff] %v1457
                %v1459 = vld [vmem:[%s1421 + $0x90] sm:$0xff]
                %1460 = vst [vmem:[%s1422 + $0x240] sm:$0xff] %v1459
                %v1461 = vld [vmem:[%s1421 + $0x98] sm:$0xff]
                %1462 = vst [vmem:[%s1422 + $0x248] sm:$0xff] %v1461
                %v1463 = vld [vmem:[%s1421 + $0xa0] sm:$0xff]
                %1464 = vst [vmem:[%s1422 + $0x280] sm:$0xff] %v1463
                %v1465 = vld [vmem:[%s1421 + $0xa8] sm:$0xff]
                %1466 = vst [vmem:[%s1422 + $0x288] sm:$0xff] %v1465
                %v1467 = vld [vmem:[%s1421 + $0xb0] sm:$0xff]
                %1468 = vst [vmem:[%s1422 + $0x2c0] sm:$0xff] %v1467
                %v1469 = vld [vmem:[%s1421 + $0xb8] sm:$0xff]
                %1470 = vst [vmem:[%s1422 + $0x2c8] sm:$0xff] %v1469
                %v1471 = vld [vmem:[%s1421 + $0xc0] sm:$0xff]
                %1472 = vst [vmem:[%s1422 + $0x300] sm:$0xff] %v1471
                %v1473 = vld [vmem:[%s1421 + $0xc8] sm:$0xff]
                %1474 = vst [vmem:[%s1422 + $0x308] sm:$0xff] %v1473
                %v1475 = vld [vmem:[%s1421 + $0xd0] sm:$0xff]
                %1476 = vst [vmem:[%s1422 + $0x340] sm:$0xff] %v1475
                %v1477 = vld [vmem:[%s1421 + $0xd8] sm:$0xff]
                %1478 = vst [vmem:[%s1422 + $0x348] sm:$0xff] %v1477
                %v1479 = vld [vmem:[%s1421 + $0xe0] sm:$0xff]
                %1480 = vst [vmem:[%s1422 + $0x380] sm:$0xff] %v1479
                %v1481 = vld [vmem:[%s1421 + $0xe8] sm:$0xff]
                %1482 = vst [vmem:[%s1422 + $0x388] sm:$0xff] %v1481
                %v1483 = vld [vmem:[%s1421 + $0xf0] sm:$0xff]
                %1484 = vst [vmem:[%s1422 + $0x3c0] sm:$0xff] %v1483
                %v1485 = vld [vmem:[%s1421 + $0xf8] sm:$0xff]
                %1486 = vst [vmem:[%s1422 + $0x3c8] sm:$0xff] %v1485
              $region76: #{generator_forward.7} parent=70 // loop_footer
                %s1420 = sadd.s32 1, %s1416
              $region77: #{generator_forward.7} parent=70 // loop_footer_branch
                %1415 = sbr.rel target = $region73
              $region78: #{generator_forward.7} parent=70 // loop_exit
                _
            $region71: #{generator_forward.7} parent=66 // pred_fallthru
              _
            // Predicated region
            $region79: #{generator_forward.7} parent=66 // pred_check
              _
            $region80: #{generator_forward.7} parent=66 // pred_check_branch
              %1488 = sbr.rel target = $region82
            $region81: #{generator_forward.7} parent=66 // pred_region
              _
            $region82: #{generator_forward.7} parent=66 // pred_fallthru
              _
          $region67: #{generator_forward.7} parent=62 // pred_fallthru
            _
          %1489 = vnop
        $region63: #{generator_forward.7} parent=54 // pred_fallthru
          _
      $region55: #{generator_forward.7} parent=5 // pred_fallthru
        _
      %p1490 = scmp.le.s32.totalorder 2, %s10
      // Predicated region
      $region83: #{generator_forward.7} parent=5 // pred_check
        %p1491 = pneg %p1490
      $region84: #{generator_forward.7} parent=5 // pred_check_branch
        %1493 = sbr.rel (%p1491) target = $region86
      $region85: #{generator_forward.7} parent=5 // pred_region
        %s1494 = ssub.s32 %s10, 2
        // Predicated region
        $region87: #{generator_forward.7} parent=85 // pred_check
          %p1495 = pneg %p147
        $region88: #{generator_forward.7} parent=85 // pred_check_branch
          %1497 = sbr.rel (%p1495) target = $region90
        $region89: #{generator_forward.7} parent=85 // pred_region
          %s1498 = sand.u32 %s132, 1
          %s1499 = sand.u32 %s132, 1
          %s1500 = smul.addr %s1499, 256
          %s1501 = scalar_lea.vmem [#allocation3], %s1500
        $region90: #{generator_forward.7} parent=85 // pred_fallthru
          _
      $region86: #{generator_forward.7} parent=5 // pred_fallthru
        _
    $region6: #{generator_forward.7} parent=1 // loop_footer
      %s14 = sadd.s32 1, %s10
    $region7: #{generator_forward.7} parent=1 // loop_footer_branch
      %9 = sbr.rel target = $region3
    $region8: #{generator_forward.7} parent=1 // loop_exit
      _

// kernel: generator_forward.8
$region0: #{generator_forward.8}
  #allocation0 [shape = 'u32[]', space=smem, size = 0x4, offset = 0x4, fixed_abs, tag = 'smem constant byte address 0x4 - core index']
  #allocation1 [shape = 'u32[144,128]{1,0:T(1,128)}', space=vmem, size = 0x12000, scoped, tag = 'internal scratch']
  %s0 = inlined_call_operand.vmem [shape: bf16[512,128], index: 0, kind: input, shape index: {}]
  %s1 = inlined_call_operand.vmem [shape: f32[1,128], index: 1, kind: input, shape index: {}]
  %s2 = inlined_call_operand.vmem [shape: f32[1,128], index: 2, kind: input, shape index: {}]
  %s3 = inlined_call_operand.vmem [shape: bf16[128,1024], index: 3, kind: input, shape index: {}]
  %s4 = inlined_call_operand.vmem [shape: bf16[512,1024], index: 4, kind: output, shape index: {}]
  %s5 = sld [smem:[#allocation0]]
  $region121: #{generator_forward.8} parent=0
    _
  %s7 = ssub.s32 1, %s5
  %s8 = scalar_select 0, %s7, %s5
  $region1: #{generator_forward.8} parent=0
    #allocation2 [shape = 'u8[131072]{0}', space=vmem, size = 0x20000, scoped, tag = 'input window, operand 3']
    #allocation3 [shape = 'u8[262144]{0}', space=vmem, size = 0x40000, scoped, tag = 'output window, operand 0']
    loop: start=0, step=1, limit=10
    $region2: #{generator_forward.8} parent=1 // loop_pre_header
      _
    $region3: #{generator_forward.8} parent=1 // loop_header
      %s10 = sphi 0, %s14
      %p11 = scmp.ge.s32.totalorder %s10, 10
      %s17 = sphi 0, %s29
      %s18 = sphi 0, %s25
      %s19 = sphi 0, %s17
      %s20 = sphi 0, %s18
      %s21 = sphi 0, %s19
      %s22 = sphi 0, %s20
      %s32 = sphi 0, %s34
      %s35 = sphi 0, %s32
      %s36 = sphi 0, %s35
      %s52 = sphi 0, %s36
      %s56 = sphi 0, %s56
      %s58 = sphi 0, %s56
      %s59 = sphi 0, %s58
      %s73 = sphi 0, %s59
      %s77 = sphi 0, %s77
      %s79 = sphi 0, %s77
      %s80 = sphi 0, %s79
      %s94 = sphi 0, %s80
      %s100 = sphi 0, %s102
      %s103 = sphi 0, %s100
      %s104 = sphi 0, %s103
      %s120 = sphi 0, %s104
      %s128 = sphi 0, %s130
      %s131 = sphi 0, %s128
      %s132 = sphi 0, %s131
      %s148 = sphi 0, %s132
    $region4: #{generator_forward.8} parent=1 // loop_header_branch
      %13 = sbr.rel (%p11) target = $region8
    $region5: #{generator_forward.8} parent=1 // loop_body
      %s15 = ssub.s32 %s10, 1
      %s16 = ssub.s32 %s10, 2
      %s23 = sadd.s32 1, %s18
      %p24 = scmp.ge.s32.totalorder %s23, 4
      %s25 = scalar_select %p24, 0, %s23
      %s26 = sadd.s32 1, %s17
      %s27 = scalar_select %p24, %s26, %s17
      %p28 = scmp.ge.s32.totalorder %s27, 2
      %s29 = scalar_select %p28, 0, %s27
      %s30 = ssub.s32 %s17, %s29
      %p31 = scmp.eq.s32.totalorder %s30, 0
      %s33 = sadd.s32 %s32, 1
      %s34 = scalar_select %p31, %s32, %s33
      %p37 = pneg %p31
      %p38 = scmp.eq.s32.totalorder %s10, 7
      %p39 = por %p37, %p38
      %p40 = scmp.ne.s32.totalorder %s32, %s35
      %p41 = scmp.eq.s32.totalorder %s10, 0
      %p42 = por %p40, %p41
      %p43 = scmp.ne.s32.totalorder %s32, %s35
      %p44 = scmp.eq.s32.totalorder %s15, 7
      %p45 = por %p43, %p44
      %p46 = scmp.ne.s32.totalorder %s35, %s36
      %p47 = scmp.eq.s32.totalorder %s15, 0
      %p48 = por %p46, %p47
      %p49 = scmp.ne.s32.totalorder %s35, %s36
      %p50 = scmp.eq.s32.totalorder %s16, 7
      %p51 = por %p49, %p50
      %p53 = scmp.ne.s32.totalorder %s36, %s52
      %p54 = scmp.eq.s32.totalorder %s16, 0
      %p55 = por %p53, %p54
      %s57 = sadd.s32 %s56, 1
      %p60 = scmp.eq.s32.totalorder %s10, 7
      %p61 = scmp.ne.s32.totalorder %s56, %s58
      %p62 = scmp.eq.s32.totalorder %s10, 0
      %p63 = por %p61, %p62
      %p64 = scmp.ne.s32.totalorder %s56, %s58
      %p65 = scmp.eq.s32.totalorder %s15, 7
      %p66 = por %p64, %p65
      %p67 = scmp.ne.s32.totalorder %s58, %s59
      %p68 = scmp.eq.s32.totalorder %s15, 0
      %p69 = por %p67, %p68
      %p70 = scmp.ne.s32.totalorder %s58, %s59
      %p71 = scmp.eq.s32.totalorder %s16, 7
      %p72 = por %p70, %p71
      %p74 = scmp.ne.s32.totalorder %s59, %s73
      %p75 = scmp.eq.s32.totalorder %s16, 0
      %p76 = por %p74, %p75
      %s78 = sadd.s32 %s77, 1
      %p81 = scmp.eq.s32.totalorder %s10, 7
      %p82 = scmp.ne.s32.totalorder %s77, %s79
      %p83 = scmp.eq.s32.totalorder %s10, 0
      %p84 = por %p82, %p83
      %p85 = scmp.ne.s32.totalorder %s77, %s79
      %p86 = scmp.eq.s32.totalorder %s15, 7
      %p87 = por %p85, %p86
      %p88 = scmp.ne.s32.totalorder %s79, %s80
      %p89 = scmp.eq.s32.totalorder %s15, 0
      %p90 = por %p88, %p89
      %p91 = scmp.ne.s32.totalorder %s79, %s80
      %p92 = scmp.eq.s32.totalorder %s16, 7
      %p93 = por %p91, %p92
      %p95 = scmp.ne.s32.totalorder %s80, %s94
      %p96 = scmp.eq.s32.totalorder %s16, 0
      %p97 = por %p95, %p96
      %s98 = ssub.s32 %s18, %s25
      %p99 = scmp.eq.s32.totalorder %s98, 0
      %s101 = sadd.s32 %s100, 1
      %s102 = scalar_select %p99, %s100, %s101
      %p105 = pneg %p99
      %p106 = scmp.eq.s32.totalorder %s10, 7
      %p107 = por %p105, %p106
      %p108 = scmp.ne.s32.totalorder %s100, %s103
      %p109 = scmp.eq.s32.totalorder %s10, 0
      %p110 = por %p108, %p109
      %p111 = scmp.ne.s32.totalorder %s100, %s103
      %p112 = scmp.eq.s32.totalorder %s15, 7
      %p113 = por %p111, %p112
      %p114 = scmp.ne.s32.totalorder %s103, %s104
      %p115 = scmp.eq.s32.totalorder %s15, 0
      %p116 = por %p114, %p115
      %p117 = scmp.ne.s32.totalorder %s103, %s104
      %p118 = scmp.eq.s32.totalorder %s16, 7
      %p119 = por %p117, %p118
      %p121 = scmp.ne.s32.totalorder %s104, %s120
      %p122 = scmp.eq.s32.totalorder %s16, 0
      %p123 = por %p121, %p122
      %s124 = ssub.s32 %s17, %s29
      %s125 = ssub.s32 %s18, %s25
      %s126 = sor.u32 %s124, %s125
      %p127 = scmp.eq.s32.totalorder %s126, 0
      %s129 = sadd.s32 %s128, 1
      %s130 = scalar_select %p127, %s128, %s129
      %p133 = pneg %p127
      %p134 = scmp.eq.s32.totalorder %s10, 7
      %p135 = por %p133, %p134
      %p136 = scmp.ne.s32.totalorder %s128, %s131
      %p137 = scmp.eq.s32.totalorder %s10, 0
      %p138 = por %p136, %p137
      %p139 = scmp.ne.s32.totalorder %s128, %s131
      %p140 = scmp.eq.s32.totalorder %s15, 7
      %p141 = por %p139, %p140
      %p142 = scmp.ne.s32.totalorder %s131, %s132
      %p143 = scmp.eq.s32.totalorder %s15, 0
      %p144 = por %p142, %p143
      %p145 = scmp.ne.s32.totalorder %s131, %s132
      %p146 = scmp.eq.s32.totalorder %s16, 7
      %p147 = por %p145, %p146
      %p149 = scmp.ne.s32.totalorder %s132, %s148
      %p150 = scmp.eq.s32.totalorder %s16, 0
      %p151 = por %p149, %p150
      %p152 = scmp.le.s32.totalorder 1, %s10
      %p153 = scmp.lt.s32.totalorder %s10, 9
      %p154 = pnand %p152, %p153
      %p155 = pneg %p154
      // Predicated region
      $region9: #{generator_forward.8} parent=5 // pred_check
        _
      $region10: #{generator_forward.8} parent=5 // pred_check_branch
        %157 = sbr.rel (%p154) target = $region12
      $region11: #{generator_forward.8} parent=5 // pred_region
        %s158 = ssub.s32 %s10, 1
        // Predicated region
        $region13: #{generator_forward.8} parent=11 // pred_check
          %p159 = pneg %p69
        $region14: #{generator_forward.8} parent=11 // pred_check_branch
          %161 = sbr.rel (%p159) target = $region16
        $region15: #{generator_forward.8} parent=11 // pred_region
          _
        $region16: #{generator_forward.8} parent=11 // pred_fallthru
          _
        // Predicated region
        $region17: #{generator_forward.8} parent=11 // pred_check
          %p162 = pneg %p90
        $region18: #{generator_forward.8} parent=11 // pred_check_branch
          %164 = sbr.rel (%p162) target = $region20
        $region19: #{generator_forward.8} parent=11 // pred_region
          _
        $region20: #{generator_forward.8} parent=11 // pred_fallthru
          _
      $region12: #{generator_forward.8} parent=5 // pred_fallthru
        _
      %p165 = scmp.lt.s32.totalorder %s10, 8
      // Predicated region
      $region21: #{generator_forward.8} parent=5 // pred_check
        %p166 = pneg %p165
      $region22: #{generator_forward.8} parent=5 // pred_check_branch
        %168 = sbr.rel (%p166) target = $region24
      $region23: #{generator_forward.8} parent=5 // pred_region
        // Predicated region
        $region25: #{generator_forward.8} parent=23 // pred_check
          %p169 = pneg %p42
        $region26: #{generator_forward.8} parent=23 // pred_check_branch
          %171 = sbr.rel (%p169) target = $region28
        $region27: #{generator_forward.8} parent=23 // pred_region
          %s172 = smul.u32 32, %s17
          %p173 = scmp.lt.s32.totalorder %s172, 63
          %s174 = scalar_select %p173, %s172, 63
          %s175 = smul.addr %s174, 4
          %s176 = scalar_lea.vmem %s0, %s175
          %s177 = smul.u32 32, %s17
        $region28: #{generator_forward.8} parent=23 // pred_fallthru
          _
        // Predicated region
        $region29: #{generator_forward.8} parent=23 // pred_check
          %p178 = pneg %p110
        $region30: #{generator_forward.8} parent=23 // pred_check_branch
          %180 = sbr.rel (%p178) target = $region32
        $region31: #{generator_forward.8} parent=23 // pred_region
          %s181 = sand.u32 %s100, 1
          %s182 = sand.u32 %s100, 1
          %s183 = smul.addr %s182, 128
          %s184 = scalar_lea.vmem [#allocation2], %s183
          %s185 = smul.u32 2, %s18
          %s186 = smul.addr %s185, 4
          %s187 = scalar_lea.vmem %s3, %s186
          // Predicated region
          $region33: #{generator_forward.8} parent=31 // pred_check
            _
          $region34: #{generator_forward.8} parent=31 // pred_check_branch
            %189 = sbr.rel (0) target = $region36
          $region35: #{generator_forward.8} parent=31 // pred_region
            // Predicated region
            $region37: #{generator_forward.8} parent=35 // pred_check
              _
            $region38: #{generator_forward.8} parent=35 // pred_check_branch
              %191 = sbr.rel (0) target = $region40
            $region39: #{generator_forward.8} parent=35 // pred_region
              // Predicated region
              $region52: #{generator_forward.8} parent=39 // pred_check
                _
              $region53: #{generator_forward.8} parent=39 // pred_check_branch
                %236 = sbr.rel (0) target = $region55
              $region54: #{generator_forward.8} parent=39 // pred_region
                loop: start=0, step=1, limit=1
                $region56: #{generator_forward.8} parent=54 // loop_pre_header
                  _
                $region57: #{generator_forward.8} parent=54 // loop_header
                  %s238 = sphi 0, %s242
                  %p239 = scmp.ge.s32.totalorder %s238, 1
                  %s243 = sphi %s187, %s187
                  %s244 = sphi %s184, %s184
                $region58: #{generator_forward.8} parent=54 // loop_header_branch
                  %241 = sbr.rel (%p239) target = $region62
                $region59: #{generator_forward.8} parent=54 // loop_body
                  %v245 = vld [vmem:[%s243] sm:$0xff]
                  %246 = vst [vmem:[%s244] sm:$0xff] %v245
                  %v247 = vld [vmem:[%s243 + $0x20] sm:$0xff]
                  %248 = vst [vmem:[%s244 + $0x8] sm:$0xff] %v247
                  %v249 = vld [vmem:[%s243 + $0x40] sm:$0xff]
                  %250 = vst [vmem:[%s244 + $0x10] sm:$0xff] %v249
                  %v251 = vld [vmem:[%s243 + $0x60] sm:$0xff]
                  %252 = vst [vmem:[%s244 + $0x18] sm:$0xff] %v251
                  %v253 = vld [vmem:[%s243 + $0x80] sm:$0xff]
                  %254 = vst [vmem:[%s244 + $0x20] sm:$0xff] %v253
                  %v255 = vld [vmem:[%s243 + $0xa0] sm:$0xff]
                  %256 = vst [vmem:[%s244 + $0x28] sm:$0xff] %v255
                  %v257 = vld [vmem:[%s243 + $0xc0] sm:$0xff]
                  %258 = vst [vmem:[%s244 + $0x30] sm:$0xff] %v257
                  %v259 = vld [vmem:[%s243 + $0xe0] sm:$0xff]
                  %260 = vst [vmem:[%s244 + $0x38] sm:$0xff] %v259
                  %v261 = vld [vmem:[%s243 + $0x100] sm:$0xff]
                  %262 = vst [vmem:[%s244 + $0x40] sm:$0xff] %v261
                  %v263 = vld [vmem:[%s243 + $0x120] sm:$0xff]
                  %264 = vst [vmem:[%s244 + $0x48] sm:$0xff] %v263
                  %v265 = vld [vmem:[%s243 + $0x140] sm:$0xff]
                  %266 = vst [vmem:[%s244 + $0x50] sm:$0xff] %v265
                  %v267 = vld [vmem:[%s243 + $0x160] sm:$0xff]
                  %268 = vst [vmem:[%s244 + $0x58] sm:$0xff] %v267
                  %v269 = vld [vmem:[%s243 + $0x180] sm:$0xff]
                  %270 = vst [vmem:[%s244 + $0x60] sm:$0xff] %v269
                  %v271 = vld [vmem:[%s243 + $0x1a0] sm:$0xff]
                  %272 = vst [vmem:[%s244 + $0x68] sm:$0xff] %v271
                  %v273 = vld [vmem:[%s243 + $0x1c0] sm:$0xff]
                  %274 = vst [vmem:[%s244 + $0x70] sm:$0xff] %v273
                  %v275 = vld [vmem:[%s243 + $0x1e0] sm:$0xff]
                  %276 = vst [vmem:[%s244 + $0x78] sm:$0xff] %v275
                $region60: #{generator_forward.8} parent=54 // loop_footer
                  %s242 = sadd.s32 1, %s238
                $region61: #{generator_forward.8} parent=54 // loop_footer_branch
                  %237 = sbr.rel target = $region57
                $region62: #{generator_forward.8} parent=54 // loop_exit
                  _
              $region55: #{generator_forward.8} parent=39 // pred_fallthru
                _
              // Predicated region
              $region63: #{generator_forward.8} parent=39 // pred_check
                _
              $region64: #{generator_forward.8} parent=39 // pred_check_branch
                %278 = sbr.rel target = $region66
              $region65: #{generator_forward.8} parent=39 // pred_region
                _
              $region66: #{generator_forward.8} parent=39 // pred_fallthru
                _
            $region40: #{generator_forward.8} parent=35 // pred_fallthru
              _
            // Predicated region
            $region41: #{generator_forward.8} parent=35 // pred_check
              _
            $region42: #{generator_forward.8} parent=35 // pred_check_branch
              %193 = sbr.rel target = $region44
            $region43: #{generator_forward.8} parent=35 // pred_region
              loop: start=0, step=1, limit=1
              $region45: #{generator_forward.8} parent=43 // loop_pre_header
                _
              $region46: #{generator_forward.8} parent=43 // loop_header
                %s196 = sphi 0, %s200
                %p197 = scmp.ge.s32.totalorder %s196, 1
                %s201 = sphi %s187, %s187
                %s202 = sphi %s184, %s184
              $region47: #{generator_forward.8} parent=43 // loop_header_branch
                %199 = sbr.rel (%p197) target = $region51
              $region48: #{generator_forward.8} parent=43 // loop_body
                %v203 = vld [vmem:[%s201] sm:$0xff]
                %204 = vst [vmem:[%s202] sm:$0xff] %v203
                %v205 = vld [vmem:[%s201 + $0x20] sm:$0xff]
                %206 = vst [vmem:[%s202 + $0x8] sm:$0xff] %v205
                %v207 = vld [vmem:[%s201 + $0x40] sm:$0xff]
                %208 = vst [vmem:[%s202 + $0x10] sm:$0xff] %v207
                %v209 = vld [vmem:[%s201 + $0x60] sm:$0xff]
                %210 = vst [vmem:[%s202 + $0x18] sm:$0xff] %v209
                %v211 = vld [vmem:[%s201 + $0x80] sm:$0xff]
                %212 = vst [vmem:[%s202 + $0x20] sm:$0xff] %v211
                %v213 = vld [vmem:[%s201 + $0xa0] sm:$0xff]
                %214 = vst [vmem:[%s202 + $0x28] sm:$0xff] %v213
                %v215 = vld [vmem:[%s201 + $0xc0] sm:$0xff]
                %216 = vst [vmem:[%s202 + $0x30] sm:$0xff] %v215
                %v217 = vld [vmem:[%s201 + $0xe0] sm:$0xff]
                %218 = vst [vmem:[%s202 + $0x38] sm:$0xff] %v217
                %v219 = vld [vmem:[%s201 + $0x100] sm:$0xff]
                %220 = vst [vmem:[%s202 + $0x40] sm:$0xff] %v219
                %v221 = vld [vmem:[%s201 + $0x120] sm:$0xff]
                %222 = vst [vmem:[%s202 + $0x48] sm:$0xff] %v221
                %v223 = vld [vmem:[%s201 + $0x140] sm:$0xff]
                %224 = vst [vmem:[%s202 + $0x50] sm:$0xff] %v223
                %v225 = vld [vmem:[%s201 + $0x160] sm:$0xff]
                %226 = vst [vmem:[%s202 + $0x58] sm:$0xff] %v225
                %v227 = vld [vmem:[%s201 + $0x180] sm:$0xff]
                %228 = vst [vmem:[%s202 + $0x60] sm:$0xff] %v227
                %v229 = vld [vmem:[%s201 + $0x1a0] sm:$0xff]
                %230 = vst [vmem:[%s202 + $0x68] sm:$0xff] %v229
                %v231 = vld [vmem:[%s201 + $0x1c0] sm:$0xff]
                %232 = vst [vmem:[%s202 + $0x70] sm:$0xff] %v231
                %v233 = vld [vmem:[%s201 + $0x1e0] sm:$0xff]
                %234 = vst [vmem:[%s202 + $0x78] sm:$0xff] %v233
              $region49: #{generator_forward.8} parent=43 // loop_footer
                %s200 = sadd.s32 1, %s196
              $region50: #{generator_forward.8} parent=43 // loop_footer_branch
                %195 = sbr.rel target = $region46
              $region51: #{generator_forward.8} parent=43 // loop_exit
                _
            $region44: #{generator_forward.8} parent=35 // pred_fallthru
              _
          $region36: #{generator_forward.8} parent=31 // pred_fallthru
            _
          %279 = vnop
        $region32: #{generator_forward.8} parent=23 // pred_fallthru
          _
      $region24: #{generator_forward.8} parent=5 // pred_fallthru
        _
      %p280 = scmp.le.s32.totalorder 1, %s10
      %p281 = scmp.lt.s32.totalorder %s10, 9
      %p282 = pnand %p280, %p281
      %p283 = pneg %p282
      // Predicated region
      $region67: #{generator_forward.8} parent=5 // pred_check
        _
      $region68: #{generator_forward.8} parent=5 // pred_check_branch
        %285 = sbr.rel (%p282) target = $region70
      $region69: #{generator_forward.8} parent=5 // pred_region
        %s286 = ssub.s32 %s10, 1
        %s287 = sand.u32 %s103, 1
        %s288 = sand.u32 %s103, 1
        %s289 = smul.addr %s288, 128
        %s290 = scalar_lea.vmem [#allocation2], %s289
        // Predicated region
        $region71: #{generator_forward.8} parent=69 // pred_check
          %p291 = pneg %p116
        $region72: #{generator_forward.8} parent=69 // pred_check_branch
          %293 = sbr.rel (%p291) target = $region74
        $region73: #{generator_forward.8} parent=69 // pred_region
          _
        $region74: #{generator_forward.8} parent=69 // pred_fallthru
          _
        %s294 = smul.u32 32, %s19
        %p295 = scmp.lt.s32.totalorder %s294, 63
        %s296 = scalar_select %p295, %s294, 63
        %s297 = smul.addr %s296, 4
        %s298 = scalar_lea.vmem %s0, %s297
        %p299 = pneg %p48
        %p300 = pneg %p45
        %p301 = pneg %p69
        %p302 = pneg %p66
        %p303 = pneg %p90
        %p304 = pneg %p87
        %s305 = sand.u32 %s103, 1
        %s306 = sand.u32 %s103, 1
        %s307 = smul.addr %s306, 128
        %s308 = scalar_lea.vmem [#allocation2], %s307
        %p309 = pneg %p116
        %p310 = pneg %p113
        %p311 = pneg %p144
        %p312 = pneg %p141
        %s313 = sand.u32 %s131, 1
        %s314 = sand.u32 %s131, 1
        %s315 = smul.addr %s314, 256
        %s316 = scalar_lea.vmem [#allocation3], %s315
        %s317 = smul.u32 32, %s19
        %p318 = scmp.lt.s32.totalorder %s317, 63
        %s319 = scalar_select %p318, %s317, 63
        %s320 = smul.addr %s319, 4
        %s321 = scalar_lea.vmem %s0, %s320
        %s322 = smul.u32 32, %s19
        %s323 = smul.u32 2, %s20
        %s324 = smul.u32 32, %s19
        %s325 = smul.u32 2, %s20
        %v327 = vld [vmem:[%s321] sm:$0xf]
        %v328 = vld [vmem:[%s321 + $0x4] sm:$0xf]
        %v329 = vld [vmem:[%s321 + $0x8] sm:$0xf]
        %v330 = vld [vmem:[%s321 + $0xc] sm:$0xf]
        %v331 = vld [vmem:[%s321 + $0x10] sm:$0xf]
        %v332 = vld [vmem:[%s321 + $0x14] sm:$0xf]
        %v333 = vld [vmem:[%s321 + $0x18] sm:$0xf]
        %v334 = vld [vmem:[%s321 + $0x1c] sm:$0xf]
        %v335 = vld [vmem:[%s321 + $0x20] sm:$0xf]
        %v336 = vld [vmem:[%s321 + $0x24] sm:$0xf]
        %v337 = vld [vmem:[%s321 + $0x28] sm:$0xf]
        %v338 = vld [vmem:[%s321 + $0x2c] sm:$0xf]
        %v339 = vld [vmem:[%s321 + $0x30] sm:$0xf]
        %v340 = vld [vmem:[%s321 + $0x34] sm:$0xf]
        %v341 = vld [vmem:[%s321 + $0x38] sm:$0xf]
        %v342 = vld [vmem:[%s321 + $0x3c] sm:$0xf]
        %v343 = vld [vmem:[%s321 + $0x40] sm:$0xf]
        %v344 = vld [vmem:[%s321 + $0x44] sm:$0xf]
        %v345 = vld [vmem:[%s321 + $0x48] sm:$0xf]
        %v346 = vld [vmem:[%s321 + $0x4c] sm:$0xf]
        %v347 = vld [vmem:[%s321 + $0x50] sm:$0xf]
        %v348 = vld [vmem:[%s321 + $0x54] sm:$0xf]
        %v349 = vld [vmem:[%s321 + $0x58] sm:$0xf]
        %v350 = vld [vmem:[%s321 + $0x5c] sm:$0xf]
        %v351 = vld [vmem:[%s321 + $0x60] sm:$0xf]
        %v352 = vld [vmem:[%s321 + $0x64] sm:$0xf]
        %v353 = vld [vmem:[%s321 + $0x68] sm:$0xf]
        %v354 = vld [vmem:[%s321 + $0x6c] sm:$0xf]
        %v355 = vld [vmem:[%s321 + $0x70] sm:$0xf]
        %v356 = vld [vmem:[%s321 + $0x74] sm:$0xf]
        %v357 = vld [vmem:[%s321 + $0x78] sm:$0xf]
        %v358 = vld [vmem:[%s321 + $0x7c] sm:$0xf]
        %v359 = vunpack.c.l.bf16 %v327
        %v360 = vunpack.c.l.bf16 %v328
        %v361 = vunpack.c.l.bf16 %v329
        %v362 = vunpack.c.l.bf16 %v330
        %v363 = vunpack.c.l.bf16 %v331
        %v364 = vunpack.c.l.bf16 %v332
        %v365 = vunpack.c.l.bf16 %v333
        %v366 = vunpack.c.l.bf16 %v334
        %v367 = vunpack.c.l.bf16 %v335
        %v368 = vunpack.c.l.bf16 %v336
        %v369 = vunpack.c.l.bf16 %v337
        %v370 = vunpack.c.l.bf16 %v338
        %v371 = vunpack.c.l.bf16 %v339
        %v372 = vunpack.c.l.bf16 %v340
        %v373 = vunpack.c.l.bf16 %v341
        %v374 = vunpack.c.l.bf16 %v342
        %v375 = vunpack.c.l.bf16 %v343
        %v376 = vunpack.c.l.bf16 %v344
        %v377 = vunpack.c.l.bf16 %v345
        %v378 = vunpack.c.l.bf16 %v346
        %v379 = vunpack.c.l.bf16 %v347
        %v380 = vunpack.c.l.bf16 %v348
        %v381 = vunpack.c.l.bf16 %v349
        %v382 = vunpack.c.l.bf16 %v350
        %v383 = vunpack.c.l.bf16 %v351
        %v384 = vunpack.c.l.bf16 %v352
        %v385 = vunpack.c.l.bf16 %v353
        %v386 = vunpack.c.l.bf16 %v354
        %v387 = vunpack.c.l.bf16 %v355
        %v388 = vunpack.c.l.bf16 %v356
        %v389 = vunpack.c.l.bf16 %v357
        %v390 = vunpack.c.l.bf16 %v358
        %v391 = vld [vmem:[%s1] sm:$0x1]
        %v393 = vlaneseq
        %v394 = vshrl.u32 %v393, 7
        %v395 = vsub.s32 0, %v394
        %v396 = vrot.slane %v391, %v395
        %v398 = vmul.f32 %v359, %v396
        %v399 = vmul.f32 %v360, %v396
        %v400 = vmul.f32 %v361, %v396
        %v401 = vmul.f32 %v362, %v396
        %v402 = vmul.f32 %v363, %v396
        %v403 = vmul.f32 %v364, %v396
        %v404 = vmul.f32 %v365, %v396
        %v405 = vmul.f32 %v366, %v396
        %v406 = vmul.f32 %v367, %v396
        %v407 = vmul.f32 %v368, %v396
        %v408 = vmul.f32 %v369, %v396
        %v409 = vmul.f32 %v370, %v396
        %v410 = vmul.f32 %v371, %v396
        %v411 = vmul.f32 %v372, %v396
        %v412 = vmul.f32 %v373, %v396
        %v413 = vmul.f32 %v374, %v396
        %v414 = vmul.f32 %v375, %v396
        %v415 = vmul.f32 %v376, %v396
        %v416 = vmul.f32 %v377, %v396
        %v417 = vmul.f32 %v378, %v396
        %v418 = vmul.f32 %v379, %v396
        %v419 = vmul.f32 %v380, %v396
        %v420 = vmul.f32 %v381, %v396
        %v421 = vmul.f32 %v382, %v396
        %v422 = vmul.f32 %v383, %v396
        %v423 = vmul.f32 %v384, %v396
        %v424 = vmul.f32 %v385, %v396
        %v425 = vmul.f32 %v386, %v396
        %v426 = vmul.f32 %v387, %v396
        %v427 = vmul.f32 %v388, %v396
        %v428 = vmul.f32 %v389, %v396
        %v429 = vmul.f32 %v390, %v396
        %v430 = vld [vmem:[%s2] sm:$0x1]
        %v432 = vlaneseq
        %v433 = vshrl.u32 %v432, 7
        %v434 = vsub.s32 0, %v433
        %v435 = vrot.slane %v430, %v434
        %v437 = vadd.f32 %v398, %v435
        %v438 = vadd.f32 %v399, %v435
        %v439 = vadd.f32 %v400, %v435
        %v440 = vadd.f32 %v401, %v435
        %v441 = vadd.f32 %v402, %v435
        %v442 = vadd.f32 %v403, %v435
        %v443 = vadd.f32 %v404, %v435
        %v444 = vadd.f32 %v405, %v435
        %v445 = vadd.f32 %v406, %v435
        %v446 = vadd.f32 %v407, %v435
        %v447 = vadd.f32 %v408, %v435
        %v448 = vadd.f32 %v409, %v435
        %v449 = vadd.f32 %v410, %v435
        %v450 = vadd.f32 %v411, %v435
        %v451 = vadd.f32 %v412, %v435
        %v452 = vadd.f32 %v413, %v435
        %v453 = vadd.f32 %v414, %v435
        %v454 = vadd.f32 %v415, %v435
        %v455 = vadd.f32 %v416, %v435
        %v456 = vadd.f32 %v417, %v435
        %v457 = vadd.f32 %v418, %v435
        %v458 = vadd.f32 %v419, %v435
        %v459 = vadd.f32 %v420, %v435
        %v460 = vadd.f32 %v421, %v435
        %v461 = vadd.f32 %v422, %v435
        %v462 = vadd.f32 %v423, %v435
        %v463 = vadd.f32 %v424, %v435
        %v464 = vadd.f32 %v425, %v435
        %v465 = vadd.f32 %v426, %v435
        %v466 = vadd.f32 %v427, %v435
        %v467 = vadd.f32 %v428, %v435
        %v468 = vadd.f32 %v429, %v435
        %v469 = vmax.f32 %v437, 0.0
        %v470 = vmax.f32 %v438, 0.0
        %v471 = vmax.f32 %v439, 0.0
        %v472 = vmax.f32 %v440, 0.0
        %v473 = vmax.f32 %v441, 0.0
        %v474 = vmax.f32 %v442, 0.0
        %v475 = vmax.f32 %v443, 0.0
        %v476 = vmax.f32 %v444, 0.0
        %v477 = vmax.f32 %v445, 0.0
        %v478 = vmax.f32 %v446, 0.0
        %v479 = vmax.f32 %v447, 0.0
        %v480 = vmax.f32 %v448, 0.0
        %v481 = vmax.f32 %v449, 0.0
        %v482 = vmax.f32 %v450, 0.0
        %v483 = vmax.f32 %v451, 0.0
        %v484 = vmax.f32 %v452, 0.0
        %v485 = vmax.f32 %v453, 0.0
        %v486 = vmax.f32 %v454, 0.0
        %v487 = vmax.f32 %v455, 0.0
        %v488 = vmax.f32 %v456, 0.0
        %v489 = vmax.f32 %v457, 0.0
        %v490 = vmax.f32 %v458, 0.0
        %v491 = vmax.f32 %v459, 0.0
        %v492 = vmax.f32 %v460, 0.0
        %v493 = vmax.f32 %v461, 0.0
        %v494 = vmax.f32 %v462, 0.0
        %v495 = vmax.f32 %v463, 0.0
        %v496 = vmax.f32 %v464, 0.0
        %v497 = vmax.f32 %v465, 0.0
        %v498 = vmax.f32 %v466, 0.0
        %v499 = vmax.f32 %v467, 0.0
        %v500 = vmax.f32 %v468, 0.0
        %v501 = vpack.c.bf16 %v470, %v469
        %v502 = vpack.c.bf16 %v472, %v471
        %v503 = vpack.c.bf16 %v474, %v473
        %v504 = vpack.c.bf16 %v476, %v475
        %v505 = vpack.c.bf16 %v478, %v477
        %v506 = vpack.c.bf16 %v480, %v479
        %v507 = vpack.c.bf16 %v482, %v481
        %v508 = vpack.c.bf16 %v484, %v483
        %v509 = vpack.c.bf16 %v486, %v485
        %v510 = vpack.c.bf16 %v488, %v487
        %v511 = vpack.c.bf16 %v490, %v489
        %v512 = vpack.c.bf16 %v492, %v491
        %v513 = vpack.c.bf16 %v494, %v493
        %v514 = vpack.c.bf16 %v496, %v495
        %v515 = vpack.c.bf16 %v498, %v497
        %v516 = vpack.c.bf16 %v500, %v499
        %v517 = vld [vmem:[%s290] sm:$0xff]
        %v518 = vld [vmem:[%s290 + $0x8] sm:$0xff]
        %v519 = vld [vmem:[%s290 + $0x10] sm:$0xff]
        %v520 = vld [vmem:[%s290 + $0x18] sm:$0xff]
        %v521 = vld [vmem:[%s290 + $0x20] sm:$0xff]
        %v522 = vld [vmem:[%s290 + $0x28] sm:$0xff]
        %v523 = vld [vmem:[%s290 + $0x30] sm:$0xff]
        %v524 = vld [vmem:[%s290 + $0x38] sm:$0xff]
        %v525 = vld [vmem:[%s290 + $0x40] sm:$0xff]
        %v526 = vld [vmem:[%s290 + $0x48] sm:$0xff]
        %v527 = vld [vmem:[%s290 + $0x50] sm:$0xff]
        %v528 = vld [vmem:[%s290 + $0x58] sm:$0xff]
        %v529 = vld [vmem:[%s290 + $0x60] sm:$0xff]
        %v530 = vld [vmem:[%s290 + $0x68] sm:$0xff]
        %v531 = vld [vmem:[%s290 + $0x70] sm:$0xff]
        %v532 = vld [vmem:[%s290 + $0x78] sm:$0xff]
        %v549 = vunpack.c.l.b16 %v517
        %v550 = vunpack.c.h.b16 %v517
        %v551 = vunpack.c.l.b16 %v518
        %v552 = vunpack.c.h.b16 %v518
        %v553 = vunpack.c.l.b16 %v519
        %v554 = vunpack.c.h.b16 %v519
        %v555 = vunpack.c.l.b16 %v520
        %v556 = vunpack.c.h.b16 %v520
        %v557 = vunpack.c.l.b16 %v521
        %v558 = vunpack.c.h.b16 %v521
        %v559 = vunpack.c.l.b16 %v522
        %v560 = vunpack.c.h.b16 %v522
        %v561 = vunpack.c.l.b16 %v523
        %v562 = vunpack.c.h.b16 %v523
        %v563 = vunpack.c.l.b16 %v524
        %v564 = vunpack.c.h.b16 %v524
        %v565 = vunpack.c.l.b16 %v525
        %v566 = vunpack.c.h.b16 %v525
        %v567 = vunpack.c.l.b16 %v526
        %v568 = vunpack.c.h.b16 %v526
        %v569 = vunpack.c.l.b16 %v527
        %v570 = vunpack.c.h.b16 %v527
        %v571 = vunpack.c.l.b16 %v528
        %v572 = vunpack.c.h.b16 %v528
        %v573 = vunpack.c.l.b16 %v529
        %v574 = vunpack.c.h.b16 %v529
        %v575 = vunpack.c.l.b16 %v530
        %v576 = vunpack.c.h.b16 %v530
        %v577 = vunpack.c.l.b16 %v531
        %v578 = vunpack.c.h.b16 %v531
        %v579 = vunpack.c.l.b16 %v532
        %v580 = vunpack.c.h.b16 %v532
        %v581 = vpack.c.b16 %v551, %v549
        %v582 = vpack.c.b16 %v552, %v550
        %v583 = vpack.c.b16 %v555, %v553
        %v584 = vpack.c.b16 %v556, %v554
        %v585 = vpack.c.b16 %v559, %v557
        %v586 = vpack.c.b16 %v560, %v558
        %v587 = vpack.c.b16 %v563, %v561
        %v588 = vpack.c.b16 %v564, %v562
        %v589 = vpack.c.b16 %v567, %v565
        %v590 = vpack.c.b16 %v568, %v566
        %v591 = vpack.c.b16 %v571, %v569
        %v592 = vpack.c.b16 %v572, %v570
        %v593 = vpack.c.b16 %v575, %v573
        %v594 = vpack.c.b16 %v576, %v574
        %v595 = vpack.c.b16 %v579, %v577
        %v596 = vpack.c.b16 %v580, %v578
        %613 = vmatprep.subr.bf16.mxu0 %v582
        %614 = vmatpush1.bf16.msra.mxu0 %v581
        %615 = vmatprep.subr.bf16.mxu0 %v584
        %616 = vmatpush1.bf16.msra.mxu0 %v583
        %617 = vmatprep.subr.bf16.mxu0 %v586
        %618 = vmatpush1.bf16.msra.mxu0 %v585
        %619 = vmatprep.subr.bf16.mxu0 %v588
        %620 = vmatpush1.bf16.msra.mxu0 %v587
        %621 = vmatprep.subr.bf16.mxu0 %v590
        %622 = vmatpush1.bf16.msra.mxu0 %v589
        %623 = vmatprep.subr.bf16.mxu0 %v592
        %624 = vmatpush1.bf16.msra.mxu0 %v591
        %625 = vmatprep.subr.bf16.mxu0 %v594
        %626 = vmatpush1.bf16.msra.mxu0 %v593
        %627 = vmatprep.subr.bf16.mxu0 %v596
        %628 = vmatpush1.bf16.msra.mxu0 %v595
        %629 = vmatprep.subr.bf16.mxu0 0
        %630 = vmatpush1.bf16.msra.mxu0 0
        %631 = vmatprep.subr.bf16.mxu0 0
        %632 = vmatpush1.bf16.msra.mxu0 0
        %633 = vmatprep.subr.bf16.mxu0 0
        %634 = vmatpush1.bf16.msra.mxu0 0
        %635 = vmatprep.subr.bf16.mxu0 0
        %636 = vmatpush1.bf16.msra.mxu0 0
        %637 = vmatprep.subr.bf16.mxu0 0
        %638 = vmatpush1.bf16.msra.mxu0 0
        %639 = vmatprep.subr.bf16.mxu0 0
        %640 = vmatpush1.bf16.msra.mxu0 0
        %641 = vmatprep.subr.bf16.mxu0 0
        %642 = vmatpush1.bf16.msra.mxu0 0
        %643 = vmatprep.subr.bf16.mxu0 0
        %644 = vmatpush1.bf16.msra.mxu0 0
        %645 = vmatprep.mubr.bf16.mxu0 0
        %646 = vmatmul.mubr.bf16.gmra.mrb[0].mxu0 %v501
        %v647 = vpop.f32.mrb[0].mxu0
        %v648 = vadd.f32 0.0, %v647
        %v649 = vpop.f32.mrb[0].mxu0
        %v650 = vadd.f32 0.0, %v649
        %v651 = vpop.f32.mrb[0].mxu0
        %v652 = vadd.f32 0.0, %v651
        %v653 = vpop.f32.mrb[0].mxu0
        %v654 = vadd.f32 0.0, %v653
        %655 = vmatprep.mubr.bf16.mxu0 0
        %656 = vmatmul.mubr.bf16.gmra.mrb[0].mxu0 %v502
        %v657 = vpop.f32.mrb[0].mxu0
        %v658 = vadd.f32 0.0, %v657
        %v659 = vpop.f32.mrb[0].mxu0
        %v660 = vadd.f32 0.0, %v659
        %v661 = vpop.f32.mrb[0].mxu0
        %v662 = vadd.f32 0.0, %v661
        %v663 = vpop.f32.mrb[0].mxu0
        %v664 = vadd.f32 0.0, %v663
        %665 = vmatprep.mubr.bf16.mxu0 0
        %666 = vmatmul.mubr.bf16.gmra.mrb[0].mxu0 %v503
        %v667 = vpop.f32.mrb[0].mxu0
        %v668 = vadd.f32 0.0, %v667
        %v669 = vpop.f32.mrb[0].mxu0
        %v670 = vadd.f32 0.0, %v669
        %v671 = vpop.f32.mrb[0].mxu0
        %v672 = vadd.f32 0.0, %v671
        %v673 = vpop.f32.mrb[0].mxu0
        %v674 = vadd.f32 0.0, %v673
        %675 = vmatprep.mubr.bf16.mxu0 0
        %676 = vmatmul.mubr.bf16.gmra.mrb[0].mxu0 %v504
        %v677 = vpop.f32.mrb[0].mxu0
        %v678 = vadd.f32 0.0, %v677
        %v679 = vpop.f32.mrb[0].mxu0
        %v680 = vadd.f32 0.0, %v679
        %v681 = vpop.f32.mrb[0].mxu0
        %v682 = vadd.f32 0.0, %v681
        %v683 = vpop.f32.mrb[0].mxu0
        %v684 = vadd.f32 0.0, %v683
        %685 = vmatprep.mubr.bf16.mxu0 0
        %686 = vmatmul.mubr.bf16.gmra.mrb[0].mxu0 %v505
        %v687 = vpop.f32.mrb[0].mxu0
        %v688 = vadd.f32 0.0, %v687
        %v689 = vpop.f32.mrb[0].mxu0
        %v690 = vadd.f32 0.0, %v689
        %v691 = vpop.f32.mrb[0].mxu0
        %v692 = vadd.f32 0.0, %v691
        %v693 = vpop.f32.mrb[0].mxu0
        %v694 = vadd.f32 0.0, %v693
        %695 = vmatprep.mubr.bf16.mxu0 0
        %696 = vmatmul.mubr.bf16.gmra.mrb[0].mxu0 %v506
        %v697 = vpop.f32.mrb[0].mxu0
        %v698 = vadd.f32 0.0, %v697
        %v699 = vpop.f32.mrb[0].mxu0
        %v700 = vadd.f32 0.0, %v699
        %v701 = vpop.f32.mrb[0].mxu0
        %v702 = vadd.f32 0.0, %v701
        %v703 = vpop.f32.mrb[0].mxu0
        %v704 = vadd.f32 0.0, %v703
        %705 = vmatprep.mubr.bf16.mxu0 0
        %706 = vmatmul.mubr.bf16.gmra.mrb[0].mxu0 %v507
        %v707 = vpop.f32.mrb[0].mxu0
        %v708 = vadd.f32 0.0, %v707
        %v709 = vpop.f32.mrb[0].mxu0
        %v710 = vadd.f32 0.0, %v709
        %v711 = vpop.f32.mrb[0].mxu0
        %v712 = vadd.f32 0.0, %v711
        %v713 = vpop.f32.mrb[0].mxu0
        %v714 = vadd.f32 0.0, %v713
        %715 = vmatprep.mubr.bf16.mxu0 0
        %716 = vmatmul.mubr.bf16.gmra.mrb[0].mxu0 %v508
        %v717 = vpop.f32.mrb[0].mxu0
        %v718 = vadd.f32 0.0, %v717
        %v719 = vpop.f32.mrb[0].mxu0
        %v720 = vadd.f32 0.0, %v719
        %v721 = vpop.f32.mrb[0].mxu0
        %v722 = vadd.f32 0.0, %v721
        %v723 = vpop.f32.mrb[0].mxu0
        %v724 = vadd.f32 0.0, %v723
        %725 = vmatprep.mubr.bf16.mxu0 0
        %726 = vmatmul.mubr.bf16.gmra.mrb[0].mxu0 %v509
        %v727 = vpop.f32.mrb[0].mxu0
        %v728 = vadd.f32 0.0, %v727
        %v729 = vpop.f32.mrb[0].mxu0
        %v730 = vadd.f32 0.0, %v729
        %v731 = vpop.f32.mrb[0].mxu0
        %v732 = vadd.f32 0.0, %v731
        %v733 = vpop.f32.mrb[0].mxu0
        %v734 = vadd.f32 0.0, %v733
        %735 = vmatprep.mubr.bf16.mxu0 0
        %736 = vmatmul.mubr.bf16.gmra.mrb[0].mxu0 %v510
        %v737 = vpop.f32.mrb[0].mxu0
        %v738 = vadd.f32 0.0, %v737
        %v739 = vpop.f32.mrb[0].mxu0
        %v740 = vadd.f32 0.0, %v739
        %v741 = vpop.f32.mrb[0].mxu0
        %v742 = vadd.f32 0.0, %v741
        %v743 = vpop.f32.mrb[0].mxu0
        %v744 = vadd.f32 0.0, %v743
        %745 = vmatprep.mubr.bf16.mxu0 0
        %746 = vmatmul.mubr.bf16.gmra.mrb[0].mxu0 %v511
        %v747 = vpop.f32.mrb[0].mxu0
        %v748 = vadd.f32 0.0, %v747
        %v749 = vpop.f32.mrb[0].mxu0
        %v750 = vadd.f32 0.0, %v749
        %v751 = vpop.f32.mrb[0].mxu0
        %v752 = vadd.f32 0.0, %v751
        %v753 = vpop.f32.mrb[0].mxu0
        %v754 = vadd.f32 0.0, %v753
        %755 = vmatprep.mubr.bf16.mxu0 0
        %756 = vmatmul.mubr.bf16.gmra.mrb[0].mxu0 %v512
        %v757 = vpop.f32.mrb[0].mxu0
        %v758 = vadd.f32 0.0, %v757
        %v759 = vpop.f32.mrb[0].mxu0
        %v760 = vadd.f32 0.0, %v759
        %v761 = vpop.f32.mrb[0].mxu0
        %v762 = vadd.f32 0.0, %v761
        %v763 = vpop.f32.mrb[0].mxu0
        %v764 = vadd.f32 0.0, %v763
        %765 = vmatprep.mubr.bf16.mxu0 0
        %766 = vmatmul.mubr.bf16.gmra.mrb[0].mxu0 %v513
        %v767 = vpop.f32.mrb[0].mxu0
        %v768 = vadd.f32 0.0, %v767
        %v769 = vpop.f32.mrb[0].mxu0
        %v770 = vadd.f32 0.0, %v769
        %v771 = vpop.f32.mrb[0].mxu0
        %v772 = vadd.f32 0.0, %v771
        %v773 = vpop.f32.mrb[0].mxu0
        %v774 = vadd.f32 0.0, %v773
        %775 = vmatprep.mubr.bf16.mxu0 0
        %776 = vmatmul.mubr.bf16.gmra.mrb[0].mxu0 %v514
        %v777 = vpop.f32.mrb[0].mxu0
        %v778 = vadd.f32 0.0, %v777
        %v779 = vpop.f32.mrb[0].mxu0
        %v780 = vadd.f32 0.0, %v779
        %v781 = vpop.f32.mrb[0].mxu0
        %v782 = vadd.f32 0.0, %v781
        %v783 = vpop.f32.mrb[0].mxu0
        %v784 = vadd.f32 0.0, %v783
        %785 = vmatprep.mubr.bf16.mxu0 0
        %786 = vmatmul.mubr.bf16.gmra.mrb[0].mxu0 %v515
        %v787 = vpop.f32.mrb[0].mxu0
        %v788 = vadd.f32 0.0, %v787
        %v789 = vpop.f32.mrb[0].mxu0
        %v790 = vadd.f32 0.0, %v789
        %v791 = vpop.f32.mrb[0].mxu0
        %v792 = vadd.f32 0.0, %v791
        %v793 = vpop.f32.mrb[0].mxu0
        %v794 = vadd.f32 0.0, %v793
        %795 = vmatprep.mubr.bf16.mxu0 0
        %796 = vmatmul.mubr.bf16.gmra.mrb[0].mxu0 %v516
        %v797 = vpop.f32.mrb[0].mxu0
        %v798 = vadd.f32 0.0, %v797
        %v799 = vpop.f32.mrb[0].mxu0
        %v800 = vadd.f32 0.0, %v799
        %v801 = vpop.f32.mrb[0].mxu0
        %v802 = vadd.f32 0.0, %v801
        %v803 = vpop.f32.mrb[0].mxu0
        %v804 = vadd.f32 0.0, %v803
        %805 = vdwg.mxu0
        %v806 = vpack.c.bf16 %v652, %v648
        %v807 = vpack.c.bf16 %v654, %v650
        %v808 = vpack.c.bf16 %v662, %v658
        %v809 = vpack.c.bf16 %v664, %v660
        %v810 = vpack.c.bf16 %v672, %v668
        %v811 = vpack.c.bf16 %v674, %v670
        %v812 = vpack.c.bf16 %v682, %v678
        %v813 = vpack.c.bf16 %v684, %v680
        %v814 = vpack.c.bf16 %v692, %v688
        %v815 = vpack.c.bf16 %v694, %v690
        %v816 = vpack.c.bf16 %v702, %v698
        %v817 = vpack.c.bf16 %v704, %v700
        %v818 = vpack.c.bf16 %v712, %v708
        %v819 = vpack.c.bf16 %v714, %v710
        %v820 = vpack.c.bf16 %v722, %v718
        %v821 = vpack.c.bf16 %v724, %v720
        %v822 = vpack.c.bf16 %v732, %v728
        %v823 = vpack.c.bf16 %v734, %v730
        %v824 = vpack.c.bf16 %v742, %v738
        %v825 = vpack.c.bf16 %v744, %v740
        %v826 = vpack.c.bf16 %v752, %v748
        %v827 = vpack.c.bf16 %v754, %v750
        %v828 = vpack.c.bf16 %v762, %v758
        %v829 = vpack.c.bf16 %v764, %v760
        %v830 = vpack.c.bf16 %v772, %v768
        %v831 = vpack.c.bf16 %v774, %v770
        %v832 = vpack.c.bf16 %v782, %v778
        %v833 = vpack.c.bf16 %v784, %v780
        %v834 = vpack.c.bf16 %v792, %v788
        %v835 = vpack.c.bf16 %v794, %v790
        %v836 = vpack.c.bf16 %v802, %v798
        %v837 = vpack.c.bf16 %v804, %v800
        %v870 = vunpack.c.l.b16 %v806
        %v871 = vunpack.c.l.b16 %v807
        %v872 = vunpack.c.h.b16 %v806
        %v873 = vunpack.c.h.b16 %v807
        %v874 = vunpack.c.l.b16 %v808
        %v875 = vunpack.c.l.b16 %v809
        %v876 = vunpack.c.h.b16 %v808
        %v877 = vunpack.c.h.b16 %v809
        %v878 = vunpack.c.l.b16 %v810
        %v879 = vunpack.c.l.b16 %v811
        %v880 = vunpack.c.h.b16 %v810
        %v881 = vunpack.c.h.b16 %v811
        %v882 = vunpack.c.l.b16 %v812
        %v883 = vunpack.c.l.b16 %v813
        %v884 = vunpack.c.h.b16 %v812
        %v885 = vunpack.c.h.b16 %v813
        %v886 = vunpack.c.l.b16 %v814
        %v887 = vunpack.c.l.b16 %v815
        %v888 = vunpack.c.h.b16 %v814
        %v889 = vunpack.c.h.b16 %v815
        %v890 = vunpack.c.l.b16 %v816
        %v891 = vunpack.c.l.b16 %v817
        %v892 = vunpack.c.h.b16 %v816
        %v893 = vunpack.c.h.b16 %v817
        %v894 = vunpack.c.l.b16 %v818
        %v895 = vunpack.c.l.b16 %v819
        %v896 = vunpack.c.h.b16 %v818
        %v897 = vunpack.c.h.b16 %v819
        %v898 = vunpack.c.l.b16 %v820
        %v899 = vunpack.c.l.b16 %v821
        %v900 = vunpack.c.h.b16 %v820
        %v901 = vunpack.c.h.b16 %v821
        %v902 = vunpack.c.l.b16 %v822
        %v903 = vunpack.c.l.b16 %v823
        %v904 = vunpack.c.h.b16 %v822
        %v905 = vunpack.c.h.b16 %v823
        %v906 = vunpack.c.l.b16 %v824
        %v907 = vunpack.c.l.b16 %v825
        %v908 = vunpack.c.h.b16 %v824
        %v909 = vunpack.c.h.b16 %v825
        %v910 = vunpack.c.l.b16 %v826
        %v911 = vunpack.c.l.b16 %v827
        %v912 = vunpack.c.h.b16 %v826
        %v913 = vunpack.c.h.b16 %v827
        %v914 = vunpack.c.l.b16 %v828
        %v915 = vunpack.c.l.b16 %v829
        %v916 = vunpack.c.h.b16 %v828
        %v917 = vunpack.c.h.b16 %v829
        %v918 = vunpack.c.l.b16 %v830
        %v919 = vunpack.c.l.b16 %v831
        %v920 = vunpack.c.h.b16 %v830
        %v921 = vunpack.c.h.b16 %v831
        %v922 = vunpack.c.l.b16 %v832
        %v923 = vunpack.c.l.b16 %v833
        %v924 = vunpack.c.h.b16 %v832
        %v925 = vunpack.c.h.b16 %v833
        %v926 = vunpack.c.l.b16 %v834
        %v927 = vunpack.c.l.b16 %v835
        %v928 = vunpack.c.h.b16 %v834
        %v929 = vunpack.c.h.b16 %v835
        %v930 = vunpack.c.l.b16 %v836
        %v931 = vunpack.c.l.b16 %v837
        %v932 = vunpack.c.h.b16 %v836
        %v933 = vunpack.c.h.b16 %v837
        %v934 = vpack.c.b16 %v871, %v870
        %v935 = vpack.c.b16 %v873, %v872
        %v936 = vpack.c.b16 %v875, %v874
        %v937 = vpack.c.b16 %v877, %v876
        %v938 = vpack.c.b16 %v879, %v878
        %v939 = vpack.c.b16 %v881, %v880
        %v940 = vpack.c.b16 %v883, %v882
        %v941 = vpack.c.b16 %v885, %v884
        %v942 = vpack.c.b16 %v887, %v886
        %v943 = vpack.c.b16 %v889, %v888
        %v944 = vpack.c.b16 %v891, %v890
        %v945 = vpack.c.b16 %v893, %v892
        %v946 = vpack.c.b16 %v895, %v894
        %v947 = vpack.c.b16 %v897, %v896
        %v948 = vpack.c.b16 %v899, %v898
        %v949 = vpack.c.b16 %v901, %v900
        %v950 = vpack.c.b16 %v903, %v902
        %v951 = vpack.c.b16 %v905, %v904
        %v952 = vpack.c.b16 %v907, %v906
        %v953 = vpack.c.b16 %v909, %v908
        %v954 = vpack.c.b16 %v911, %v910
        %v955 = vpack.c.b16 %v913, %v912
        %v956 = vpack.c.b16 %v915, %v914
        %v957 = vpack.c.b16 %v917, %v916
        %v958 = vpack.c.b16 %v919, %v918
        %v959 = vpack.c.b16 %v921, %v920
        %v960 = vpack.c.b16 %v923, %v922
        %v961 = vpack.c.b16 %v925, %v924
        %v962 = vpack.c.b16 %v927, %v926
        %v963 = vpack.c.b16 %v929, %v928
        %v964 = vpack.c.b16 %v931, %v930
        %v965 = vpack.c.b16 %v933, %v932
        %998 = vst [vmem:[%s316] sm:$0xff] %v934
        %999 = vst [vmem:[%s316 + $0x8] sm:$0xff] %v935
        %1000 = vst [vmem:[%s316 + $0x10] sm:$0xff] %v936
        %1001 = vst [vmem:[%s316 + $0x18] sm:$0xff] %v937
        %1002 = vst [vmem:[%s316 + $0x20] sm:$0xff] %v938
        %1003 = vst [vmem:[%s316 + $0x28] sm:$0xff] %v939
        %1004 = vst [vmem:[%s316 + $0x30] sm:$0xff] %v940
        %1005 = vst [vmem:[%s316 + $0x38] sm:$0xff] %v941
        %1006 = vst [vmem:[%s316 + $0x40] sm:$0xff] %v942
        %1007 = vst [vmem:[%s316 + $0x48] sm:$0xff] %v943
        %1008 = vst [vmem:[%s316 + $0x50] sm:$0xff] %v944
        %1009 = vst [vmem:[%s316 + $0x58] sm:$0xff] %v945
        %1010 = vst [vmem:[%s316 + $0x60] sm:$0xff] %v946
        %1011 = vst [vmem:[%s316 + $0x68] sm:$0xff] %v947
        %1012 = vst [vmem:[%s316 + $0x70] sm:$0xff] %v948
        %1013 = vst [vmem:[%s316 + $0x78] sm:$0xff] %v949
        %1014 = vst [vmem:[%s316 + $0x80] sm:$0xff] %v950
        %1015 = vst [vmem:[%s316 + $0x88] sm:$0xff] %v951
        %1016 = vst [vmem:[%s316 + $0x90] sm:$0xff] %v952
        %1017 = vst [vmem:[%s316 + $0x98] sm:$0xff] %v953
        %1018 = vst [vmem:[%s316 + $0xa0] sm:$0xff] %v954
        %1019 = vst [vmem:[%s316 + $0xa8] sm:$0xff] %v955
        %1020 = vst [vmem:[%s316 + $0xb0] sm:$0xff] %v956
        %1021 = vst [vmem:[%s316 + $0xb8] sm:$0xff] %v957
        %1022 = vst [vmem:[%s316 + $0xc0] sm:$0xff] %v958
        %1023 = vst [vmem:[%s316 + $0xc8] sm:$0xff] %v959
        %1024 = vst [vmem:[%s316 + $0xd0] sm:$0xff] %v960
        %1025 = vst [vmem:[%s316 + $0xd8] sm:$0xff] %v961
        %1026 = vst [vmem:[%s316 + $0xe0] sm:$0xff] %v962
        %1027 = vst [vmem:[%s316 + $0xe8] sm:$0xff] %v963
        %1028 = vst [vmem:[%s316 + $0xf0] sm:$0xff] %v964
        %1029 = vst [vmem:[%s316 + $0xf8] sm:$0xff] %v965
        %s1030 = sand.u32 %s131, 1
        %s1031 = sand.u32 %s131, 1
        %s1032 = smul.addr %s1031, 256
        %s1033 = scalar_lea.vmem [#allocation3], %s1032
        // Predicated region
        $region75: #{generator_forward.8} parent=69 // pred_check
          %p1034 = pneg %p141
        $region76: #{generator_forward.8} parent=69 // pred_check_branch
          %1036 = sbr.rel (%p1034) target = $region78
        $region77: #{generator_forward.8} parent=69 // pred_region
          %s1037 = smul.u32 32, %s19
          %s1038 = smul.u32 2, %s20
          %s1039 = smul.addr %s1037, 8
          %s1040 = sadd.s32 %s1038, %s1039
          %s1041 = smul.addr %s1040, 4
          %s1042 = scalar_lea.vmem %s4, %s1041
          // Predicated region
          $region79: #{generator_forward.8} parent=77 // pred_check
            _
          $region80: #{generator_forward.8} parent=77 // pred_check_branch
            %1044 = sbr.rel (0) target = $region82
          $region81: #{generator_forward.8} parent=77 // pred_region
            // Predicated region
            $region83: #{generator_forward.8} parent=81 // pred_check
              _
            $region84: #{generator_forward.8} parent=81 // pred_check_branch
              %1046 = sbr.rel (0) target = $region86
            $region85: #{generator_forward.8} parent=81 // pred_region
              // Predicated region
              $region98: #{generator_forward.8} parent=85 // pred_check
                _
              $region99: #{generator_forward.8} parent=85 // pred_check_branch
                %1123 = sbr.rel (0) target = $region101
              $region100: #{generator_forward.8} parent=85 // pred_region
                loop: start=0, step=1, limit=1
                $region102: #{generator_forward.8} parent=100 // loop_pre_header
                  _
                $region103: #{generator_forward.8} parent=100 // loop_header
                  %s1125 = sphi 0, %s1129
                  %p1126 = scmp.ge.s32.totalorder %s1125, 1
                  %s1130 = sphi %s1033, %s1033
                  %s1131 = sphi %s1042, %s1042
                $region104: #{generator_forward.8} parent=100 // loop_header_branch
                  %1128 = sbr.rel (%p1126) target = $region108
                $region105: #{generator_forward.8} parent=100 // loop_body
                  %v1132 = vld [vmem:[%s1130] sm:$0xff]
                  %1133 = vst [vmem:[%s1131] sm:$0xff] %v1132
                  %v1134 = vld [vmem:[%s1130 + $0x8] sm:$0xff]
                  %1135 = vst [vmem:[%s1131 + $0x20] sm:$0xff] %v1134
                  %v1136 = vld [vmem:[%s1130 + $0x10] sm:$0xff]
                  %1137 = vst [vmem:[%s1131 + $0x40] sm:$0xff] %v1136
                  %v1138 = vld [vmem:[%s1130 + $0x18] sm:$0xff]
                  %1139 = vst [vmem:[%s1131 + $0x60] sm:$0xff] %v1138
                  %v1140 = vld [vmem:[%s1130 + $0x20] sm:$0xff]
                  %1141 = vst [vmem:[%s1131 + $0x80] sm:$0xff] %v1140
                  %v1142 = vld [vmem:[%s1130 + $0x28] sm:$0xff]
                  %1143 = vst [vmem:[%s1131 + $0xa0] sm:$0xff] %v1142
                  %v1144 = vld [vmem:[%s1130 + $0x30] sm:$0xff]
                  %1145 = vst [vmem:[%s1131 + $0xc0] sm:$0xff] %v1144
                  %v1146 = vld [vmem:[%s1130 + $0x38] sm:$0xff]
                  %1147 = vst [vmem:[%s1131 + $0xe0] sm:$0xff] %v1146
                  %v1148 = vld [vmem:[%s1130 + $0x40] sm:$0xff]
                  %1149 = vst [vmem:[%s1131 + $0x100] sm:$0xff] %v1148
                  %v1150 = vld [vmem:[%s1130 + $0x48] sm:$0xff]
                  %1151 = vst [vmem:[%s1131 + $0x120] sm:$0xff] %v1150
                  %v1152 = vld [vmem:[%s1130 + $0x50] sm:$0xff]
                  %1153 = vst [vmem:[%s1131 + $0x140] sm:$0xff] %v1152
                  %v1154 = vld [vmem:[%s1130 + $0x58] sm:$0xff]
                  %1155 = vst [vmem:[%s1131 + $0x160] sm:$0xff] %v1154
                  %v1156 = vld [vmem:[%s1130 + $0x60] sm:$0xff]
                  %1157 = vst [vmem:[%s1131 + $0x180] sm:$0xff] %v1156
                  %v1158 = vld [vmem:[%s1130 + $0x68] sm:$0xff]
                  %1159 = vst [vmem:[%s1131 + $0x1a0] sm:$0xff] %v1158
                  %v1160 = vld [vmem:[%s1130 + $0x70] sm:$0xff]
                  %1161 = vst [vmem:[%s1131 + $0x1c0] sm:$0xff] %v1160
                  %v1162 = vld [vmem:[%s1130 + $0x78] sm:$0xff]
                  %1163 = vst [vmem:[%s1131 + $0x1e0] sm:$0xff] %v1162
                  %v1164 = vld [vmem:[%s1130 + $0x80] sm:$0xff]
                  %1165 = vst [vmem:[%s1131 + $0x200] sm:$0xff] %v1164
                  %v1166 = vld [vmem:[%s1130 + $0x88] sm:$0xff]
                  %1167 = vst [vmem:[%s1131 + $0x220] sm:$0xff] %v1166
                  %v1168 = vld [vmem:[%s1130 + $0x90] sm:$0xff]
                  %1169 = vst [vmem:[%s1131 + $0x240] sm:$0xff] %v1168
                  %v1170 = vld [vmem:[%s1130 + $0x98] sm:$0xff]
                  %1171 = vst [vmem:[%s1131 + $0x260] sm:$0xff] %v1170
                  %v1172 = vld [vmem:[%s1130 + $0xa0] sm:$0xff]
                  %1173 = vst [vmem:[%s1131 + $0x280] sm:$0xff] %v1172
                  %v1174 = vld [vmem:[%s1130 + $0xa8] sm:$0xff]
                  %1175 = vst [vmem:[%s1131 + $0x2a0] sm:$0xff] %v1174
                  %v1176 = vld [vmem:[%s1130 + $0xb0] sm:$0xff]
                  %1177 = vst [vmem:[%s1131 + $0x2c0] sm:$0xff] %v1176
                  %v1178 = vld [vmem:[%s1130 + $0xb8] sm:$0xff]
                  %1179 = vst [vmem:[%s1131 + $0x2e0] sm:$0xff] %v1178
                  %v1180 = vld [vmem:[%s1130 + $0xc0] sm:$0xff]
                  %1181 = vst [vmem:[%s1131 + $0x300] sm:$0xff] %v1180
                  %v1182 = vld [vmem:[%s1130 + $0xc8] sm:$0xff]
                  %1183 = vst [vmem:[%s1131 + $0x320] sm:$0xff] %v1182
                  %v1184 = vld [vmem:[%s1130 + $0xd0] sm:$0xff]
                  %1185 = vst [vmem:[%s1131 + $0x340] sm:$0xff] %v1184
                  %v1186 = vld [vmem:[%s1130 + $0xd8] sm:$0xff]
                  %1187 = vst [vmem:[%s1131 + $0x360] sm:$0xff] %v1186
                  %v1188 = vld [vmem:[%s1130 + $0xe0] sm:$0xff]
                  %1189 = vst [vmem:[%s1131 + $0x380] sm:$0xff] %v1188
                  %v1190 = vld [vmem:[%s1130 + $0xe8] sm:$0xff]
                  %1191 = vst [vmem:[%s1131 + $0x3a0] sm:$0xff] %v1190
                  %v1192 = vld [vmem:[%s1130 + $0xf0] sm:$0xff]
                  %1193 = vst [vmem:[%s1131 + $0x3c0] sm:$0xff] %v1192
                  %v1194 = vld [vmem:[%s1130 + $0xf8] sm:$0xff]
                  %1195 = vst [vmem:[%s1131 + $0x3e0] sm:$0xff] %v1194
                $region106: #{generator_forward.8} parent=100 // loop_footer
                  %s1129 = sadd.s32 1, %s1125
                $region107: #{generator_forward.8} parent=100 // loop_footer_branch
                  %1124 = sbr.rel target = $region103
                $region108: #{generator_forward.8} parent=100 // loop_exit
                  _
              $region101: #{generator_forward.8} parent=85 // pred_fallthru
                _
              // Predicated region
              $region109: #{generator_forward.8} parent=85 // pred_check
                _
              $region110: #{generator_forward.8} parent=85 // pred_check_branch
                %1197 = sbr.rel target = $region112
              $region111: #{generator_forward.8} parent=85 // pred_region
                _
              $region112: #{generator_forward.8} parent=85 // pred_fallthru
                _
            $region86: #{generator_forward.8} parent=81 // pred_fallthru
              _
            // Predicated region
            $region87: #{generator_forward.8} parent=81 // pred_check
              _
            $region88: #{generator_forward.8} parent=81 // pred_check_branch
              %1048 = sbr.rel target = $region90
            $region89: #{generator_forward.8} parent=81 // pred_region
              loop: start=0, step=1, limit=1
              $region91: #{generator_forward.8} parent=89 // loop_pre_header
                _
              $region92: #{generator_forward.8} parent=89 // loop_header
                %s1051 = sphi 0, %s1055
                %p1052 = scmp.ge.s32.totalorder %s1051, 1
                %s1056 = sphi %s1033, %s1033
                %s1057 = sphi %s1042, %s1042
              $region93: #{generator_forward.8} parent=89 // loop_header_branch
                %1054 = sbr.rel (%p1052) target = $region97
              $region94: #{generator_forward.8} parent=89 // loop_body
                %v1058 = vld [vmem:[%s1056] sm:$0xff]
                %1059 = vst [vmem:[%s1057] sm:$0xff] %v1058
                %v1060 = vld [vmem:[%s1056 + $0x8] sm:$0xff]
                %1061 = vst [vmem:[%s1057 + $0x20] sm:$0xff] %v1060
                %v1062 = vld [vmem:[%s1056 + $0x10] sm:$0xff]
                %1063 = vst [vmem:[%s1057 + $0x40] sm:$0xff] %v1062
                %v1064 = vld [vmem:[%s1056 + $0x18] sm:$0xff]
                %1065 = vst [vmem:[%s1057 + $0x60] sm:$0xff] %v1064
                %v1066 = vld [vmem:[%s1056 + $0x20] sm:$0xff]
                %1067 = vst [vmem:[%s1057 + $0x80] sm:$0xff] %v1066
                %v1068 = vld [vmem:[%s1056 + $0x28] sm:$0xff]
                %1069 = vst [vmem:[%s1057 + $0xa0] sm:$0xff] %v1068
                %v1070 = vld [vmem:[%s1056 + $0x30] sm:$0xff]
                %1071 = vst [vmem:[%s1057 + $0xc0] sm:$0xff] %v1070
                %v1072 = vld [vmem:[%s1056 + $0x38] sm:$0xff]
                %1073 = vst [vmem:[%s1057 + $0xe0] sm:$0xff] %v1072
                %v1074 = vld [vmem:[%s1056 + $0x40] sm:$0xff]
                %1075 = vst [vmem:[%s1057 + $0x100] sm:$0xff] %v1074
                %v1076 = vld [vmem:[%s1056 + $0x48] sm:$0xff]
                %1077 = vst [vmem:[%s1057 + $0x120] sm:$0xff] %v1076
                %v1078 = vld [vmem:[%s1056 + $0x50] sm:$0xff]
                %1079 = vst [vmem:[%s1057 + $0x140] sm:$0xff] %v1078
                %v1080 = vld [vmem:[%s1056 + $0x58] sm:$0xff]
                %1081 = vst [vmem:[%s1057 + $0x160] sm:$0xff] %v1080
                %v1082 = vld [vmem:[%s1056 + $0x60] sm:$0xff]
                %1083 = vst [vmem:[%s1057 + $0x180] sm:$0xff] %v1082
                %v1084 = vld [vmem:[%s1056 + $0x68] sm:$0xff]
                %1085 = vst [vmem:[%s1057 + $0x1a0] sm:$0xff] %v1084
                %v1086 = vld [vmem:[%s1056 + $0x70] sm:$0xff]
                %1087 = vst [vmem:[%s1057 + $0x1c0] sm:$0xff] %v1086
                %v1088 = vld [vmem:[%s1056 + $0x78] sm:$0xff]
                %1089 = vst [vmem:[%s1057 + $0x1e0] sm:$0xff] %v1088
                %v1090 = vld [vmem:[%s1056 + $0x80] sm:$0xff]
                %1091 = vst [vmem:[%s1057 + $0x200] sm:$0xff] %v1090
                %v1092 = vld [vmem:[%s1056 + $0x88] sm:$0xff]
                %1093 = vst [vmem:[%s1057 + $0x220] sm:$0xff] %v1092
                %v1094 = vld [vmem:[%s1056 + $0x90] sm:$0xff]
                %1095 = vst [vmem:[%s1057 + $0x240] sm:$0xff] %v1094
                %v1096 = vld [vmem:[%s1056 + $0x98] sm:$0xff]
                %1097 = vst [vmem:[%s1057 + $0x260] sm:$0xff] %v1096
                %v1098 = vld [vmem:[%s1056 + $0xa0] sm:$0xff]
                %1099 = vst [vmem:[%s1057 + $0x280] sm:$0xff] %v1098
                %v1100 = vld [vmem:[%s1056 + $0xa8] sm:$0xff]
                %1101 = vst [vmem:[%s1057 + $0x2a0] sm:$0xff] %v1100
                %v1102 = vld [vmem:[%s1056 + $0xb0] sm:$0xff]
                %1103 = vst [vmem:[%s1057 + $0x2c0] sm:$0xff] %v1102
                %v1104 = vld [vmem:[%s1056 + $0xb8] sm:$0xff]
                %1105 = vst [vmem:[%s1057 + $0x2e0] sm:$0xff] %v1104
                %v1106 = vld [vmem:[%s1056 + $0xc0] sm:$0xff]
                %1107 = vst [vmem:[%s1057 + $0x300] sm:$0xff] %v1106
                %v1108 = vld [vmem:[%s1056 + $0xc8] sm:$0xff]
                %1109 = vst [vmem:[%s1057 + $0x320] sm:$0xff] %v1108
                %v1110 = vld [vmem:[%s1056 + $0xd0] sm:$0xff]
                %1111 = vst [vmem:[%s1057 + $0x340] sm:$0xff] %v1110
                %v1112 = vld [vmem:[%s1056 + $0xd8] sm:$0xff]
                %1113 = vst [vmem:[%s1057 + $0x360] sm:$0xff] %v1112
                %v1114 = vld [vmem:[%s1056 + $0xe0] sm:$0xff]
                %1115 = vst [vmem:[%s1057 + $0x380] sm:$0xff] %v1114
                %v1116 = vld [vmem:[%s1056 + $0xe8] sm:$0xff]
                %1117 = vst [vmem:[%s1057 + $0x3a0] sm:$0xff] %v1116
                %v1118 = vld [vmem:[%s1056 + $0xf0] sm:$0xff]
                %1119 = vst [vmem:[%s1057 + $0x3c0] sm:$0xff] %v1118
                %v1120 = vld [vmem:[%s1056 + $0xf8] sm:$0xff]
                %1121 = vst [vmem:[%s1057 + $0x3e0] sm:$0xff] %v1120
              $region95: #{generator_forward.8} parent=89 // loop_footer
                %s1055 = sadd.s32 1, %s1051
              $region96: #{generator_forward.8} parent=89 // loop_footer_branch
                %1050 = sbr.rel target = $region92
              $region97: #{generator_forward.8} parent=89 // loop_exit
                _
            $region90: #{generator_forward.8} parent=81 // pred_fallthru
              _
          $region82: #{generator_forward.8} parent=77 // pred_fallthru
            _
          %1198 = vnop
        $region78: #{generator_forward.8} parent=69 // pred_fallthru
          _
      $region70: #{generator_forward.8} parent=5 // pred_fallthru
        _
      %p1199 = scmp.le.s32.totalorder 2, %s10
      // Predicated region
      $region113: #{generator_forward.8} parent=5 // pred_check
        %p1200 = pneg %p1199
      $region114: #{generator_forward.8} parent=5 // pred_check_branch
        %1202 = sbr.rel (%p1200) target = $region116
      $region115: #{generator_forward.8} parent=5 // pred_region
        %s1203 = ssub.s32 %s10, 2
        // Predicated region
        $region117: #{generator_forward.8} parent=115 // pred_check
          %p1204 = pneg %p147
        $region118: #{generator_forward.8} parent=115 // pred_check_branch
          %1206 = sbr.rel (%p1204) target = $region120
        $region119: #{generator_forward.8} parent=115 // pred_region
          %s1207 = sand.u32 %s132, 1
          %s1208 = sand.u32 %s132, 1
          %s1209 = smul.addr %s1208, 256
          %s1210 = scalar_lea.vmem [#allocation3], %s1209
        $region120: #{generator_forward.8} parent=115 // pred_fallthru
          _
      $region116: #{generator_forward.8} parent=5 // pred_fallthru
        _
    $region6: #{generator_forward.8} parent=1 // loop_footer
      %s14 = sadd.s32 1, %s10
    $region7: #{generator_forward.8} parent=1 // loop_footer_branch
      %9 = sbr.rel target = $region3
    $region8: #{generator_forward.8} parent=1 // loop_exit
      _

// kernel: generator_forward.9
$region0: #{generator_forward.9}
  #allocation0 [shape = 'u32[]', space=smem, size = 0x4, offset = 0x4, fixed_abs, tag = 'smem constant byte address 0x4 - core index']
  #allocation1 [shape = 'u32[144,128]{1,0:T(1,128)}', space=vmem, size = 0x12000, scoped, tag = 'internal scratch']
  %s0 = inlined_call_operand.vmem [shape: bf16[2048,64], index: 0, kind: input, shape index: {}]
  %s1 = inlined_call_operand.vmem [shape: f32[1,64], index: 1, kind: input, shape index: {}]
  %s2 = inlined_call_operand.vmem [shape: f32[1,64], index: 2, kind: input, shape index: {}]
  %s3 = inlined_call_operand.vmem [shape: bf16[64,128], index: 3, kind: input, shape index: {}]
  %s4 = inlined_call_operand.vmem [shape: bf16[2048,128], index: 4, kind: output, shape index: {}]
  %s5 = sld [smem:[#allocation0]]
  $region49: #{generator_forward.9} parent=0
    _
  %s7 = ssub.s32 1, %s5
  %s8 = scalar_select 0, %s7, %s5
  loop: start=0, step=1, limit=10
  $region2: #{generator_forward.9} parent=0 // loop_pre_header
    _
  $region3: #{generator_forward.9} parent=0 // loop_header
    %s10 = sphi 0, %s14
    %p11 = scmp.ge.s32.totalorder %s10, 10
    %s17 = sphi 0, %s29
    %s18 = sphi 0, %s25
    %s19 = sphi 0, %s17
    %s20 = sphi 0, %s18
    %s21 = sphi 0, %s19
    %s22 = sphi 0, %s20
    %s32 = sphi 0, %s34
    %s35 = sphi 0, %s32
    %s36 = sphi 0, %s35
    %s52 = sphi 0, %s36
    %s56 = sphi 0, %s56
    %s58 = sphi 0, %s56
    %s59 = sphi 0, %s58
    %s73 = sphi 0, %s59
    %s77 = sphi 0, %s77
    %s79 = sphi 0, %s77
    %s80 = sphi 0, %s79
    %s94 = sphi 0, %s80
    %s100 = sphi 0, %s102
    %s103 = sphi 0, %s100
    %s104 = sphi 0, %s103
    %s120 = sphi 0, %s104
    %s128 = sphi 0, %s130
    %s131 = sphi 0, %s128
    %s132 = sphi 0, %s131
    %s148 = sphi 0, %s132
  $region4: #{generator_forward.9} parent=0 // loop_header_branch
    %13 = sbr.rel (%p11) target = $region8
  $region5: #{generator_forward.9} parent=0 // loop_body
    %s15 = ssub.s32 %s10, 1
    %s16 = ssub.s32 %s10, 2
    %s23 = sadd.s32 1, %s18
    %p24 = scmp.ge.s32.totalorder %s23, 1
    %s25 = scalar_select %p24, 0, %s23
    %s26 = sadd.s32 1, %s17
    %s27 = scalar_select %p24, %s26, %s17
    %p28 = scmp.ge.s32.totalorder %s27, 8
    %s29 = scalar_select %p28, 0, %s27
    %s30 = ssub.s32 %s17, %s29
    %p31 = scmp.eq.s32.totalorder %s30, 0
    %s33 = sadd.s32 %s32, 1
    %s34 = scalar_select %p31, %s32, %s33
    %p37 = pneg %p31
    %p38 = scmp.eq.s32.totalorder %s10, 7
    %p39 = por %p37, %p38
    %p40 = scmp.ne.s32.totalorder %s32, %s35
    %p41 = scmp.eq.s32.totalorder %s10, 0
    %p42 = por %p40, %p41
    %p43 = scmp.ne.s32.totalorder %s32, %s35
    %p44 = scmp.eq.s32.totalorder %s15, 7
    %p45 = por %p43, %p44
    %p46 = scmp.ne.s32.totalorder %s35, %s36
    %p47 = scmp.eq.s32.totalorder %s15, 0
    %p48 = por %p46, %p47
    %p49 = scmp.ne.s32.totalorder %s35, %s36
    %p50 = scmp.eq.s32.totalorder %s16, 7
    %p51 = por %p49, %p50
    %p53 = scmp.ne.s32.totalorder %s36, %s52
    %p54 = scmp.eq.s32.totalorder %s16, 0
    %p55 = por %p53, %p54
    %s57 = sadd.s32 %s56, 1
    %p60 = scmp.eq.s32.totalorder %s10, 7
    %p61 = scmp.ne.s32.totalorder %s56, %s58
    %p62 = scmp.eq.s32.totalorder %s10, 0
    %p63 = por %p61, %p62
    %p64 = scmp.ne.s32.totalorder %s56, %s58
    %p65 = scmp.eq.s32.totalorder %s15, 7
    %p66 = por %p64, %p65
    %p67 = scmp.ne.s32.totalorder %s58, %s59
    %p68 = scmp.eq.s32.totalorder %s15, 0
    %p69 = por %p67, %p68
    %p70 = scmp.ne.s32.totalorder %s58, %s59
    %p71 = scmp.eq.s32.totalorder %s16, 7
    %p72 = por %p70, %p71
    %p74 = scmp.ne.s32.totalorder %s59, %s73
    %p75 = scmp.eq.s32.totalorder %s16, 0
    %p76 = por %p74, %p75
    %s78 = sadd.s32 %s77, 1
    %p81 = scmp.eq.s32.totalorder %s10, 7
    %p82 = scmp.ne.s32.totalorder %s77, %s79
    %p83 = scmp.eq.s32.totalorder %s10, 0
    %p84 = por %p82, %p83
    %p85 = scmp.ne.s32.totalorder %s77, %s79
    %p86 = scmp.eq.s32.totalorder %s15, 7
    %p87 = por %p85, %p86
    %p88 = scmp.ne.s32.totalorder %s79, %s80
    %p89 = scmp.eq.s32.totalorder %s15, 0
    %p90 = por %p88, %p89
    %p91 = scmp.ne.s32.totalorder %s79, %s80
    %p92 = scmp.eq.s32.totalorder %s16, 7
    %p93 = por %p91, %p92
    %p95 = scmp.ne.s32.totalorder %s80, %s94
    %p96 = scmp.eq.s32.totalorder %s16, 0
    %p97 = por %p95, %p96
    %s98 = ssub.s32 %s18, %s25
    %p99 = scmp.eq.s32.totalorder %s98, 0
    %s101 = sadd.s32 %s100, 1
    %s102 = scalar_select %p99, %s100, %s101
    %p105 = pneg %p99
    %p106 = scmp.eq.s32.totalorder %s10, 7
    %p107 = por %p105, %p106
    %p108 = scmp.ne.s32.totalorder %s100, %s103
    %p109 = scmp.eq.s32.totalorder %s10, 0
    %p110 = por %p108, %p109
    %p111 = scmp.ne.s32.totalorder %s100, %s103
    %p112 = scmp.eq.s32.totalorder %s15, 7
    %p113 = por %p111, %p112
    %p114 = scmp.ne.s32.totalorder %s103, %s104
    %p115 = scmp.eq.s32.totalorder %s15, 0
    %p116 = por %p114, %p115
    %p117 = scmp.ne.s32.totalorder %s103, %s104
    %p118 = scmp.eq.s32.totalorder %s16, 7
    %p119 = por %p117, %p118
    %p121 = scmp.ne.s32.totalorder %s104, %s120
    %p122 = scmp.eq.s32.totalorder %s16, 0
    %p123 = por %p121, %p122
    %s124 = ssub.s32 %s17, %s29
    %s125 = ssub.s32 %s18, %s25
    %s126 = sor.u32 %s124, %s125
    %p127 = scmp.eq.s32.totalorder %s126, 0
    %s129 = sadd.s32 %s128, 1
    %s130 = scalar_select %p127, %s128, %s129
    %p133 = pneg %p127
    %p134 = scmp.eq.s32.totalorder %s10, 7
    %p135 = por %p133, %p134
    %p136 = scmp.ne.s32.totalorder %s128, %s131
    %p137 = scmp.eq.s32.totalorder %s10, 0
    %p138 = por %p136, %p137
    %p139 = scmp.ne.s32.totalorder %s128, %s131
    %p140 = scmp.eq.s32.totalorder %s15, 7
    %p141 = por %p139, %p140
    %p142 = scmp.ne.s32.totalorder %s131, %s132
    %p143 = scmp.eq.s32.totalorder %s15, 0
    %p144 = por %p142, %p143
    %p145 = scmp.ne.s32.totalorder %s131, %s132
    %p146 = scmp.eq.s32.totalorder %s16, 7
    %p147 = por %p145, %p146
    %p149 = scmp.ne.s32.totalorder %s132, %s148
    %p150 = scmp.eq.s32.totalorder %s16, 0
    %p151 = por %p149, %p150
    %p152 = scmp.le.s32.totalorder 1, %s10
    %p153 = scmp.lt.s32.totalorder %s10, 9
    %p154 = pnand %p152, %p153
    %p155 = pneg %p154
    // Predicated region
    $region9: #{generator_forward.9} parent=5 // pred_check
      _
    $region10: #{generator_forward.9} parent=5 // pred_check_branch
      %157 = sbr.rel (%p154) target = $region12
    $region11: #{generator_forward.9} parent=5 // pred_region
      %s158 = ssub.s32 %s10, 1
      // Predicated region
      $region13: #{generator_forward.9} parent=11 // pred_check
        %p159 = pneg %p69
      $region14: #{generator_forward.9} parent=11 // pred_check_branch
        %161 = sbr.rel (%p159) target = $region16
      $region15: #{generator_forward.9} parent=11 // pred_region
        _
      $region16: #{generator_forward.9} parent=11 // pred_fallthru
        _
      // Predicated region
      $region17: #{generator_forward.9} parent=11 // pred_check
        %p162 = pneg %p90
      $region18: #{generator_forward.9} parent=11 // pred_check_branch
        %164 = sbr.rel (%p162) target = $region20
      $region19: #{generator_forward.9} parent=11 // pred_region
        _
      $region20: #{generator_forward.9} parent=11 // pred_fallthru
        _
      // Predicated region
      $region21: #{generator_forward.9} parent=11 // pred_check
        %p165 = pneg %p116
      $region22: #{generator_forward.9} parent=11 // pred_check_branch
        %167 = sbr.rel (%p165) target = $region24
      $region23: #{generator_forward.9} parent=11 // pred_region
        %p168 = scmp.lt.s32.totalorder %s20, 0
        %s169 = scalar_select %p168, %s20, 0
        %s170 = smul.addr %s169, 4
        %s171 = scalar_lea.vmem %s3, %s170
      $region24: #{generator_forward.9} parent=11 // pred_fallthru
        _
    $region12: #{generator_forward.9} parent=5 // pred_fallthru
      _
    %p172 = scmp.lt.s32.totalorder %s10, 8
    // Predicated region
    $region25: #{generator_forward.9} parent=5 // pred_check
      %p173 = pneg %p172
    $region26: #{generator_forward.9} parent=5 // pred_check_branch
      %175 = sbr.rel (%p173) target = $region28
    $region27: #{generator_forward.9} parent=5 // pred_region
      // Predicated region
      $region29: #{generator_forward.9} parent=27 // pred_check
        %p176 = pneg %p42
      $region30: #{generator_forward.9} parent=27 // pred_check_branch
        %178 = sbr.rel (%p176) target = $region32
      $region31: #{generator_forward.9} parent=27 // pred_region
        %s179 = smul.u32 32, %s17
        %p180 = scmp.lt.s32.totalorder %s179, 255
        %s181 = scalar_select %p180, %s179, 255
        %s182 = smul.addr %s181, 4
        %s183 = scalar_lea.vmem %s0, %s182
        %s184 = smul.u32 32, %s17
      $region32: #{generator_forward.9} parent=27 // pred_fallthru
        _
    $region28: #{generator_forward.9} parent=5 // pred_fallthru
      _
    %p185 = scmp.le.s32.totalorder 1, %s10
    %p186 = scmp.lt.s32.totalorder %s10, 9
    %p187 = pnand %p185, %p186
    %p188 = pneg %p187
    // Predicated region
    $region33: #{generator_forward.9} parent=5 // pred_check
      _
    $region34: #{generator_forward.9} parent=5 // pred_check_branch
      %190 = sbr.rel (%p187) target = $region36
    $region35: #{generator_forward.9} parent=5 // pred_region
      %s191 = ssub.s32 %s10, 1
      %s192 = smul.u32 32, %s19
      %p193 = scmp.lt.s32.totalorder %s192, 255
      %s194 = scalar_select %p193, %s192, 255
      %s195 = smul.addr %s194, 4
      %s196 = scalar_lea.vmem %s0, %s195
      %p197 = pneg %p48
      %p198 = pneg %p45
      %p199 = pneg %p69
      %p200 = pneg %p66
      %p201 = pneg %p90
      %p202 = pneg %p87
      %p203 = scmp.lt.s32.totalorder %s20, 0
      %s204 = scalar_select %p203, %s20, 0
      %s205 = smul.addr %s204, 4
      %s206 = scalar_lea.vmem %s3, %s205
      %p207 = pneg %p116
      %p208 = pneg %p113
      %p209 = pneg %p144
      %p210 = pneg %p141
      %s211 = smul.u32 32, %s19
      %p212 = scmp.lt.s32.totalorder %s211, 255
      %s213 = scalar_select %p212, %s211, 255
      %p214 = scmp.lt.s32.totalorder %s20, 0
      %s215 = scalar_select %p214, %s20, 0
      %s216 = sadd.s32 %s215, %s213
      %s217 = smul.addr %s216, 4
      %s218 = scalar_lea.vmem %s4, %s217
      %s219 = smul.u32 32, %s19
      %p220 = scmp.lt.s32.totalorder %s219, 255
      %s221 = scalar_select %p220, %s219, 255
      %s222 = smul.addr %s221, 4
      %s223 = scalar_lea.vmem %s0, %s222
      %s224 = smul.u32 32, %s19
      %p225 = scmp.lt.s32.totalorder %s20, 0
      %s226 = scalar_select %p225, %s20, 0
      %s227 = smul.addr %s226, 4
      %s228 = scalar_lea.vmem %s3, %s227
      %s229 = smul.u32 32, %s19
      %p230 = scmp.lt.s32.totalorder %s229, 255
      %s231 = scalar_select %p230, %s229, 255
      %p232 = scmp.lt.s32.totalorder %s20, 0
      %s233 = scalar_select %p232, %s20, 0
      %s234 = sadd.s32 %s233, %s231
      %s235 = smul.addr %s234, 4
      %s236 = scalar_lea.vmem %s4, %s235
      %s237 = smul.u32 32, %s19
      %v239 = vld [vmem:[%s223] sm:$0xf]
      %v240 = vld [vmem:[%s223 + $0x4] sm:$0xf]
      %v241 = vld [vmem:[%s223 + $0x8] sm:$0xf]
      %v242 = vld [vmem:[%s223 + $0xc] sm:$0xf]
      %v243 = vld [vmem:[%s223 + $0x10] sm:$0xf]
      %v244 = vld [vmem:[%s223 + $0x14] sm:$0xf]
      %v245 = vld [vmem:[%s223 + $0x18] sm:$0xf]
      %v246 = vld [vmem:[%s223 + $0x1c] sm:$0xf]
      %v247 = vld [vmem:[%s223 + $0x20] sm:$0xf]
      %v248 = vld [vmem:[%s223 + $0x24] sm:$0xf]
      %v249 = vld [vmem:[%s223 + $0x28] sm:$0xf]
      %v250 = vld [vmem:[%s223 + $0x2c] sm:$0xf]
      %v251 = vld [vmem:[%s223 + $0x30] sm:$0xf]
      %v252 = vld [vmem:[%s223 + $0x34] sm:$0xf]
      %v253 = vld [vmem:[%s223 + $0x38] sm:$0xf]
      %v254 = vld [vmem:[%s223 + $0x3c] sm:$0xf]
      %v255 = vld [vmem:[%s223 + $0x40] sm:$0xf]
      %v256 = vld [vmem:[%s223 + $0x44] sm:$0xf]
      %v257 = vld [vmem:[%s223 + $0x48] sm:$0xf]
      %v258 = vld [vmem:[%s223 + $0x4c] sm:$0xf]
      %v259 = vld [vmem:[%s223 + $0x50] sm:$0xf]
      %v260 = vld [vmem:[%s223 + $0x54] sm:$0xf]
      %v261 = vld [vmem:[%s223 + $0x58] sm:$0xf]
      %v262 = vld [vmem:[%s223 + $0x5c] sm:$0xf]
      %v263 = vld [vmem:[%s223 + $0x60] sm:$0xf]
      %v264 = vld [vmem:[%s223 + $0x64] sm:$0xf]
      %v265 = vld [vmem:[%s223 + $0x68] sm:$0xf]
      %v266 = vld [vmem:[%s223 + $0x6c] sm:$0xf]
      %v267 = vld [vmem:[%s223 + $0x70] sm:$0xf]
      %v268 = vld [vmem:[%s223 + $0x74] sm:$0xf]
      %v269 = vld [vmem:[%s223 + $0x78] sm:$0xf]
      %v270 = vld [vmem:[%s223 + $0x7c] sm:$0xf]
      %v271 = vunpack.c.l.bf16 %v239
      %v272 = vunpack.c.l.bf16 %v240
      %v273 = vunpack.c.l.bf16 %v241
      %v274 = vunpack.c.l.bf16 %v242
      %v275 = vunpack.c.l.bf16 %v243
      %v276 = vunpack.c.l.bf16 %v244
      %v277 = vunpack.c.l.bf16 %v245
      %v278 = vunpack.c.l.bf16 %v246
      %v279 = vunpack.c.l.bf16 %v247
      %v280 = vunpack.c.l.bf16 %v248
      %v281 = vunpack.c.l.bf16 %v249
      %v282 = vunpack.c.l.bf16 %v250
      %v283 = vunpack.c.l.bf16 %v251
      %v284 = vunpack.c.l.bf16 %v252
      %v285 = vunpack.c.l.bf16 %v253
      %v286 = vunpack.c.l.bf16 %v254
      %v287 = vunpack.c.l.bf16 %v255
      %v288 = vunpack.c.l.bf16 %v256
      %v289 = vunpack.c.l.bf16 %v257
      %v290 = vunpack.c.l.bf16 %v258
      %v291 = vunpack.c.l.bf16 %v259
      %v292 = vunpack.c.l.bf16 %v260
      %v293 = vunpack.c.l.bf16 %v261
      %v294 = vunpack.c.l.bf16 %v262
      %v295 = vunpack.c.l.bf16 %v263
      %v296 = vunpack.c.l.bf16 %v264
      %v297 = vunpack.c.l.bf16 %v265
      %v298 = vunpack.c.l.bf16 %v266
      %v299 = vunpack.c.l.bf16 %v267
      %v300 = vunpack.c.l.bf16 %v268
      %v301 = vunpack.c.l.bf16 %v269
      %v302 = vunpack.c.l.bf16 %v270
      %v303 = vld [vmem:[%s1] sm:$0x1]
      %v305 = vlaneseq
      %v306 = vshrl.u32 %v305, 7
      %v307 = vsub.s32 0, %v306
      %v308 = vrot.slane %v303, %v307
      %v310 = vmul.f32 %v271, %v308
      %v311 = vmul.f32 %v272, %v308
      %v312 = vmul.f32 %v273, %v308
      %v313 = vmul.f32 %v274, %v308
      %v314 = vmul.f32 %v275, %v308
      %v315 = vmul.f32 %v276, %v308
      %v316 = vmul.f32 %v277, %v308
      %v317 = vmul.f32 %v278, %v308
      %v318 = vmul.f32 %v279, %v308
      %v319 = vmul.f32 %v280, %v308
      %v320 = vmul.f32 %v281, %v308
      %v321 = vmul.f32 %v282, %v308
      %v322 = vmul.f32 %v283, %v308
      %v323 = vmul.f32 %v284, %v308
      %v324 = vmul.f32 %v285, %v308
      %v325 = vmul.f32 %v286, %v308
      %v326 = vmul.f32 %v287, %v308
      %v327 = vmul.f32 %v288, %v308
      %v328 = vmul.f32 %v289, %v308
      %v329 = vmul.f32 %v290, %v308
      %v330 = vmul.f32 %v291, %v308
      %v331 = vmul.f32 %v292, %v308
      %v332 = vmul.f32 %v293, %v308
      %v333 = vmul.f32 %v294, %v308
      %v334 = vmul.f32 %v295, %v308
      %v335 = vmul.f32 %v296, %v308
      %v336 = vmul.f32 %v297, %v308
      %v337 = vmul.f32 %v298, %v308
      %v338 = vmul.f32 %v299, %v308
      %v339 = vmul.f32 %v300, %v308
      %v340 = vmul.f32 %v301, %v308
      %v341 = vmul.f32 %v302, %v308
      %v342 = vld [vmem:[%s2] sm:$0x1]
      %v344 = vlaneseq
      %v345 = vshrl.u32 %v344, 7
      %v346 = vsub.s32 0, %v345
      %v347 = vrot.slane %v342, %v346
      %v349 = vadd.f32 %v310, %v347
      %v350 = vadd.f32 %v311, %v347
      %v351 = vadd.f32 %v312, %v347
      %v352 = vadd.f32 %v313, %v347
      %v353 = vadd.f32 %v314, %v347
      %v354 = vadd.f32 %v315, %v347
      %v355 = vadd.f32 %v316, %v347
      %v356 = vadd.f32 %v317, %v347
      %v357 = vadd.f32 %v318, %v347
      %v358 = vadd.f32 %v319, %v347
      %v359 = vadd.f32 %v320, %v347
      %v360 = vadd.f32 %v321, %v347
      %v361 = vadd.f32 %v322, %v347
      %v362 = vadd.f32 %v323, %v347
      %v363 = vadd.f32 %v324, %v347
      %v364 = vadd.f32 %v325, %v347
      %v365 = vadd.f32 %v326, %v347
      %v366 = vadd.f32 %v327, %v347
      %v367 = vadd.f32 %v328, %v347
      %v368 = vadd.f32 %v329, %v347
      %v369 = vadd.f32 %v330, %v347
      %v370 = vadd.f32 %v331, %v347
      %v371 = vadd.f32 %v332, %v347
      %v372 = vadd.f32 %v333, %v347
      %v373 = vadd.f32 %v334, %v347
      %v374 = vadd.f32 %v335, %v347
      %v375 = vadd.f32 %v336, %v347
      %v376 = vadd.f32 %v337, %v347
      %v377 = vadd.f32 %v338, %v347
      %v378 = vadd.f32 %v339, %v347
      %v379 = vadd.f32 %v340, %v347
      %v380 = vadd.f32 %v341, %v347
      %v381 = vmax.f32 %v349, 0.0
      %v382 = vmax.f32 %v350, 0.0
      %v383 = vmax.f32 %v351, 0.0
      %v384 = vmax.f32 %v352, 0.0
      %v385 = vmax.f32 %v353, 0.0
      %v386 = vmax.f32 %v354, 0.0
      %v387 = vmax.f32 %v355, 0.0
      %v388 = vmax.f32 %v356, 0.0
      %v389 = vmax.f32 %v357, 0.0
      %v390 = vmax.f32 %v358, 0.0
      %v391 = vmax.f32 %v359, 0.0
      %v392 = vmax.f32 %v360, 0.0
      %v393 = vmax.f32 %v361, 0.0
      %v394 = vmax.f32 %v362, 0.0
      %v395 = vmax.f32 %v363, 0.0
      %v396 = vmax.f32 %v364, 0.0
      %v397 = vmax.f32 %v365, 0.0
      %v398 = vmax.f32 %v366, 0.0
      %v399 = vmax.f32 %v367, 0.0
      %v400 = vmax.f32 %v368, 0.0
      %v401 = vmax.f32 %v369, 0.0
      %v402 = vmax.f32 %v370, 0.0
      %v403 = vmax.f32 %v371, 0.0
      %v404 = vmax.f32 %v372, 0.0
      %v405 = vmax.f32 %v373, 0.0
      %v406 = vmax.f32 %v374, 0.0
      %v407 = vmax.f32 %v375, 0.0
      %v408 = vmax.f32 %v376, 0.0
      %v409 = vmax.f32 %v377, 0.0
      %v410 = vmax.f32 %v378, 0.0
      %v411 = vmax.f32 %v379, 0.0
      %v412 = vmax.f32 %v380, 0.0
      %v413 = vpack.c.bf16 %v382, %v381
      %v414 = vpack.c.bf16 %v384, %v383
      %v415 = vpack.c.bf16 %v386, %v385
      %v416 = vpack.c.bf16 %v388, %v387
      %v417 = vpack.c.bf16 %v390, %v389
      %v418 = vpack.c.bf16 %v392, %v391
      %v419 = vpack.c.bf16 %v394, %v393
      %v420 = vpack.c.bf16 %v396, %v395
      %v421 = vpack.c.bf16 %v398, %v397
      %v422 = vpack.c.bf16 %v400, %v399
      %v423 = vpack.c.bf16 %v402, %v401
      %v424 = vpack.c.bf16 %v404, %v403
      %v425 = vpack.c.bf16 %v406, %v405
      %v426 = vpack.c.bf16 %v408, %v407
      %v427 = vpack.c.bf16 %v410, %v409
      %v428 = vpack.c.bf16 %v412, %v411
      %v429 = vld [vmem:[%s228] sm:$0xf]
      %v430 = vld [vmem:[%s228 + $0x4] sm:$0xf]
      %v431 = vld [vmem:[%s228 + $0x8] sm:$0xf]
      %v432 = vld [vmem:[%s228 + $0xc] sm:$0xf]
      %v433 = vld [vmem:[%s228 + $0x10] sm:$0xf]
      %v434 = vld [vmem:[%s228 + $0x14] sm:$0xf]
      %v435 = vld [vmem:[%s228 + $0x18] sm:$0xf]
      %v436 = vld [vmem:[%s228 + $0x1c] sm:$0xf]
      %v445 = vunpack.c.l.b16 %v429
      %v446 = vunpack.c.l.b16 %v430
      %v447 = vunpack.c.l.b16 %v431
      %v448 = vunpack.c.l.b16 %v432
      %v449 = vunpack.c.l.b16 %v433
      %v450 = vunpack.c.l.b16 %v434
      %v451 = vunpack.c.l.b16 %v435
      %v452 = vunpack.c.l.b16 %v436
      %v453 = vpack.c.b16 %v446, %v445
      %v454 = vpack.c.b16 %v448, %v447
      %v455 = vpack.c.b16 %v450, %v449
      %v456 = vpack.c.b16 %v452, %v451
      %vm461 = vcmask 523264
      %v463 = vsel %vm461, %v413, 0
      %v466 = vsel %vm461, %v414, 0
      %v469 = vsel %vm461, %v415, 0
      %v472 = vsel %vm461, %v416, 0
      %v475 = vsel %vm461, %v417, 0
      %v478 = vsel %vm461, %v418, 0
      %v481 = vsel %vm461, %v419, 0
      %v484 = vsel %vm461, %v420, 0
      %v487 = vsel %vm461, %v421, 0
      %v490 = vsel %vm461, %v422, 0
      %v493 = vsel %vm461, %v423, 0
      %v496 = vsel %vm461, %v424, 0
      %v499 = vsel %vm461, %v425, 0
      %v502 = vsel %vm461, %v426, 0
      %v505 = vsel %vm461, %v427, 0
      %v508 = vsel %vm461, %v428, 0
      %510 = vmatprep.subr.bf16.mxu0 0
      %511 = vmatpush1.bf16.msra.mxu0 %v453
      %512 = vmatprep.subr.bf16.mxu0 0
      %513 = vmatpush1.bf16.msra.mxu0 %v454
      %514 = vmatprep.subr.bf16.mxu0 0
      %515 = vmatpush1.bf16.msra.mxu0 %v455
      %516 = vmatprep.subr.bf16.mxu0 0
      %517 = vmatpush1.bf16.msra.mxu0 %v456
      %518 = vmatprep.subr.bf16.mxu0 0
      %519 = vmatpush1.bf16.msra.mxu0 0
      %520 = vmatprep.subr.bf16.mxu0 0
      %521 = vmatpush1.bf16.msra.mxu0 0
      %522 = vmatprep.subr.bf16.mxu0 0
      %523 = vmatpush1.bf16.msra.mxu0 0
      %524 = vmatprep.subr.bf16.mxu0 0
      %525 = vmatpush1.bf16.msra.mxu0 0
      %526 = vmatprep.subr.bf16.mxu0 0
      %527 = vmatpush1.bf16.msra.mxu0 0
      %528 = vmatprep.subr.bf16.mxu0 0
      %529 = vmatpush1.bf16.msra.mxu0 0
      %530 = vmatprep.subr.bf16.mxu0 0
      %531 = vmatpush1.bf16.msra.mxu0 0
      %532 = vmatprep.subr.bf16.mxu0 0
      %533 = vmatpush1.bf16.msra.mxu0 0
      %534 = vmatprep.subr.bf16.mxu0 0
      %535 = vmatpush1.bf16.msra.mxu0 0
      %536 = vmatprep.subr.bf16.mxu0 0
      %537 = vmatpush1.bf16.msra.mxu0 0
      %538 = vmatprep.subr.bf16.mxu0 0
      %539 = vmatpush1.bf16.msra.mxu0 0
      %540 = vmatprep.subr.bf16.mxu0 0
      %541 = vmatpush1.bf16.msra.mxu0 0
      %542 = vmatprep.mubr.bf16.mxu0 0
      %543 = vmatmul.mubr.bf16.gmra.mrb[0].mxu0 %v463
      %v544 = vpop.f32.mrb[0].mxu0
      %v545 = vadd.f32 0.0, %v544
      %v546 = vpop.f32.mrb[0].mxu0
      %v547 = vpop.f32.mrb[0].mxu0
      %v548 = vadd.f32 0.0, %v547
      %v549 = vpop.f32.mrb[0].mxu0
      %550 = vmatprep.mubr.bf16.mxu0 0
      %551 = vmatmul.mubr.bf16.gmra.mrb[0].mxu0 %v466
      %v552 = vpop.f32.mrb[0].mxu0
      %v553 = vadd.f32 0.0, %v552
      %v554 = vpop.f32.mrb[0].mxu0
      %v555 = vpop.f32.mrb[0].mxu0
      %v556 = vadd.f32 0.0, %v555
      %v557 = vpop.f32.mrb[0].mxu0
      %558 = vmatprep.mubr.bf16.mxu0 0
      %559 = vmatmul.mubr.bf16.gmra.mrb[0].mxu0 %v469
      %v560 = vpop.f32.mrb[0].mxu0
      %v561 = vadd.f32 0.0, %v560
      %v562 = vpop.f32.mrb[0].mxu0
      %v563 = vpop.f32.mrb[0].mxu0
      %v564 = vadd.f32 0.0, %v563
      %v565 = vpop.f32.mrb[0].mxu0
      %566 = vmatprep.mubr.bf16.mxu0 0
      %567 = vmatmul.mubr.bf16.gmra.mrb[0].mxu0 %v472
      %v568 = vpop.f32.mrb[0].mxu0
      %v569 = vadd.f32 0.0, %v568
      %v570 = vpop.f32.mrb[0].mxu0
      %v571 = vpop.f32.mrb[0].mxu0
      %v572 = vadd.f32 0.0, %v571
      %v573 = vpop.f32.mrb[0].mxu0
      %574 = vmatprep.mubr.bf16.mxu0 0
      %575 = vmatmul.mubr.bf16.gmra.mrb[0].mxu0 %v475
      %v576 = vpop.f32.mrb[0].mxu0
      %v577 = vadd.f32 0.0, %v576
      %v578 = vpop.f32.mrb[0].mxu0
      %v579 = vpop.f32.mrb[0].mxu0
      %v580 = vadd.f32 0.0, %v579
      %v581 = vpop.f32.mrb[0].mxu0
      %582 = vmatprep.mubr.bf16.mxu0 0
      %583 = vmatmul.mubr.bf16.gmra.mrb[0].mxu0 %v478
      %v584 = vpop.f32.mrb[0].mxu0
      %v585 = vadd.f32 0.0, %v584
      %v586 = vpop.f32.mrb[0].mxu0
      %v587 = vpop.f32.mrb[0].mxu0
      %v588 = vadd.f32 0.0, %v587
      %v589 = vpop.f32.mrb[0].mxu0
      %590 = vmatprep.mubr.bf16.mxu0 0
      %591 = vmatmul.mubr.bf16.gmra.mrb[0].mxu0 %v481
      %v592 = vpop.f32.mrb[0].mxu0
      %v593 = vadd.f32 0.0, %v592
      %v594 = vpop.f32.mrb[0].mxu0
      %v595 = vpop.f32.mrb[0].mxu0
      %v596 = vadd.f32 0.0, %v595
      %v597 = vpop.f32.mrb[0].mxu0
      %598 = vmatprep.mubr.bf16.mxu0 0
      %599 = vmatmul.mubr.bf16.gmra.mrb[0].mxu0 %v484
      %v600 = vpop.f32.mrb[0].mxu0
      %v601 = vadd.f32 0.0, %v600
      %v602 = vpop.f32.mrb[0].mxu0
      %v603 = vpop.f32.mrb[0].mxu0
      %v604 = vadd.f32 0.0, %v603
      %v605 = vpop.f32.mrb[0].mxu0
      %606 = vmatprep.mubr.bf16.mxu0 0
      %607 = vmatmul.mubr.bf16.gmra.mrb[0].mxu0 %v487
      %v608 = vpop.f32.mrb[0].mxu0
      %v609 = vadd.f32 0.0, %v608
      %v610 = vpop.f32.mrb[0].mxu0
      %v611 = vpop.f32.mrb[0].mxu0
      %v612 = vadd.f32 0.0, %v611
      %v613 = vpop.f32.mrb[0].mxu0
      %614 = vmatprep.mubr.bf16.mxu0 0
      %615 = vmatmul.mubr.bf16.gmra.mrb[0].mxu0 %v490
      %v616 = vpop.f32.mrb[0].mxu0
      %v617 = vadd.f32 0.0, %v616
      %v618 = vpop.f32.mrb[0].mxu0
      %v619 = vpop.f32.mrb[0].mxu0
      %v620 = vadd.f32 0.0, %v619
      %v621 = vpop.f32.mrb[0].mxu0
      %622 = vmatprep.mubr.bf16.mxu0 0
      %623 = vmatmul.mubr.bf16.gmra.mrb[0].mxu0 %v493
      %v624 = vpop.f32.mrb[0].mxu0
      %v625 = vadd.f32 0.0, %v624
      %v626 = vpop.f32.mrb[0].mxu0
      %v627 = vpop.f32.mrb[0].mxu0
      %v628 = vadd.f32 0.0, %v627
      %v629 = vpop.f32.mrb[0].mxu0
      %630 = vmatprep.mubr.bf16.mxu0 0
      %631 = vmatmul.mubr.bf16.gmra.mrb[0].mxu0 %v496
      %v632 = vpop.f32.mrb[0].mxu0
      %v633 = vadd.f32 0.0, %v632
      %v634 = vpop.f32.mrb[0].mxu0
      %v635 = vpop.f32.mrb[0].mxu0
      %v636 = vadd.f32 0.0, %v635
      %v637 = vpop.f32.mrb[0].mxu0
      %638 = vmatprep.mubr.bf16.mxu0 0
      %639 = vmatmul.mubr.bf16.gmra.mrb[0].mxu0 %v499
      %v640 = vpop.f32.mrb[0].mxu0
      %v641 = vadd.f32 0.0, %v640
      %v642 = vpop.f32.mrb[0].mxu0
      %v643 = vpop.f32.mrb[0].mxu0
      %v644 = vadd.f32 0.0, %v643
      %v645 = vpop.f32.mrb[0].mxu0
      %646 = vmatprep.mubr.bf16.mxu0 0
      %647 = vmatmul.mubr.bf16.gmra.mrb[0].mxu0 %v502
      %v648 = vpop.f32.mrb[0].mxu0
      %v649 = vadd.f32 0.0, %v648
      %v650 = vpop.f32.mrb[0].mxu0
      %v651 = vpop.f32.mrb[0].mxu0
      %v652 = vadd.f32 0.0, %v651
      %v653 = vpop.f32.mrb[0].mxu0
      %654 = vmatprep.mubr.bf16.mxu0 0
      %655 = vmatmul.mubr.bf16.gmra.mrb[0].mxu0 %v505
      %v656 = vpop.f32.mrb[0].mxu0
      %v657 = vadd.f32 0.0, %v656
      %v658 = vpop.f32.mrb[0].mxu0
      %v659 = vpop.f32.mrb[0].mxu0
      %v660 = vadd.f32 0.0, %v659
      %v661 = vpop.f32.mrb[0].mxu0
      %662 = vmatprep.mubr.bf16.mxu0 0
      %663 = vmatmul.mubr.bf16.gmra.mrb[0].mxu0 %v508
      %v664 = vpop.f32.mrb[0].mxu0
      %v665 = vadd.f32 0.0, %v664
      %v666 = vpop.f32.mrb[0].mxu0
      %v667 = vpop.f32.mrb[0].mxu0
      %v668 = vadd.f32 0.0, %v667
      %v669 = vpop.f32.mrb[0].mxu0
      %670 = vdwg.mxu0
      %v671 = vpack.c.bf16 %v548, %v545
      %v672 = vpack.c.bf16 %v556, %v553
      %v673 = vpack.c.bf16 %v564, %v561
      %v674 = vpack.c.bf16 %v572, %v569
      %v675 = vpack.c.bf16 %v580, %v577
      %v676 = vpack.c.bf16 %v588, %v585
      %v677 = vpack.c.bf16 %v596, %v593
      %v678 = vpack.c.bf16 %v604, %v601
      %v679 = vpack.c.bf16 %v612, %v609
      %v680 = vpack.c.bf16 %v620, %v617
      %v681 = vpack.c.bf16 %v628, %v625
      %v682 = vpack.c.bf16 %v636, %v633
      %v683 = vpack.c.bf16 %v644, %v641
      %v684 = vpack.c.bf16 %v652, %v649
      %v685 = vpack.c.bf16 %v660, %v657
      %v686 = vpack.c.bf16 %v668, %v665
      %v703 = vunpack.c.l.b16 %v671
      %v704 = vunpack.c.h.b16 %v671
      %v705 = vunpack.c.l.b16 %v672
      %v706 = vunpack.c.h.b16 %v672
      %v707 = vunpack.c.l.b16 %v673
      %v708 = vunpack.c.h.b16 %v673
      %v709 = vunpack.c.l.b16 %v674
      %v710 = vunpack.c.h.b16 %v674
      %v711 = vunpack.c.l.b16 %v675
      %v712 = vunpack.c.h.b16 %v675
      %v713 = vunpack.c.l.b16 %v676
      %v714 = vunpack.c.h.b16 %v676
      %v715 = vunpack.c.l.b16 %v677
      %v716 = vunpack.c.h.b16 %v677
      %v717 = vunpack.c.l.b16 %v678
      %v718 = vunpack.c.h.b16 %v678
      %v719 = vunpack.c.l.b16 %v679
      %v720 = vunpack.c.h.b16 %v679
      %v721 = vunpack.c.l.b16 %v680
      %v722 = vunpack.c.h.b16 %v680
      %v723 = vunpack.c.l.b16 %v681
      %v724 = vunpack.c.h.b16 %v681
      %v725 = vunpack.c.l.b16 %v682
      %v726 = vunpack.c.h.b16 %v682
      %v727 = vunpack.c.l.b16 %v683
      %v728 = vunpack.c.h.b16 %v683
      %v729 = vunpack.c.l.b16 %v684
      %v730 = vunpack.c.h.b16 %v684
      %v731 = vunpack.c.l.b16 %v685
      %v732 = vunpack.c.h.b16 %v685
      %v733 = vunpack.c.l.b16 %v686
      %v734 = vunpack.c.h.b16 %v686
      %v735 = vpack.c.b16 %v703, %v703
      %v736 = vpack.c.b16 %v704, %v704
      %v737 = vpack.c.b16 %v705, %v705
      %v738 = vpack.c.b16 %v706, %v706
      %v739 = vpack.c.b16 %v707, %v707
      %v740 = vpack.c.b16 %v708, %v708
      %v741 = vpack.c.b16 %v709, %v709
      %v742 = vpack.c.b16 %v710, %v710
      %v743 = vpack.c.b16 %v711, %v711
      %v744 = vpack.c.b16 %v712, %v712
      %v745 = vpack.c.b16 %v713, %v713
      %v746 = vpack.c.b16 %v714, %v714
      %v747 = vpack.c.b16 %v715, %v715
      %v748 = vpack.c.b16 %v716, %v716
      %v749 = vpack.c.b16 %v717, %v717
      %v750 = vpack.c.b16 %v718, %v718
      %v751 = vpack.c.b16 %v719, %v719
      %v752 = vpack.c.b16 %v720, %v720
      %v753 = vpack.c.b16 %v721, %v721
      %v754 = vpack.c.b16 %v722, %v722
      %v755 = vpack.c.b16 %v723, %v723
      %v756 = vpack.c.b16 %v724, %v724
      %v757 = vpack.c.b16 %v725, %v725
      %v758 = vpack.c.b16 %v726, %v726
      %v759 = vpack.c.b16 %v727, %v727
      %v760 = vpack.c.b16 %v728, %v728
      %v761 = vpack.c.b16 %v729, %v729
      %v762 = vpack.c.b16 %v730, %v730
      %v763 = vpack.c.b16 %v731, %v731
      %v764 = vpack.c.b16 %v732, %v732
      %v765 = vpack.c.b16 %v733, %v733
      %v766 = vpack.c.b16 %v734, %v734
      %799 = vst [vmem:[%s236] sm:$0xf] %v735
      %800 = vst [vmem:[%s236 + $0x4] sm:$0xf] %v736
      %801 = vst [vmem:[%s236 + $0x8] sm:$0xf] %v737
      %802 = vst [vmem:[%s236 + $0xc] sm:$0xf] %v738
      %803 = vst [vmem:[%s236 + $0x10] sm:$0xf] %v739
      %804 = vst [vmem:[%s236 + $0x14] sm:$0xf] %v740
      %805 = vst [vmem:[%s236 + $0x18] sm:$0xf] %v741
      %806 = vst [vmem:[%s236 + $0x1c] sm:$0xf] %v742
      %807 = vst [vmem:[%s236 + $0x20] sm:$0xf] %v743
      %808 = vst [vmem:[%s236 + $0x24] sm:$0xf] %v744
      %809 = vst [vmem:[%s236 + $0x28] sm:$0xf] %v745
      %810 = vst [vmem:[%s236 + $0x2c] sm:$0xf] %v746
      %811 = vst [vmem:[%s236 + $0x30] sm:$0xf] %v747
      %812 = vst [vmem:[%s236 + $0x34] sm:$0xf] %v748
      %813 = vst [vmem:[%s236 + $0x38] sm:$0xf] %v749
      %814 = vst [vmem:[%s236 + $0x3c] sm:$0xf] %v750
      %815 = vst [vmem:[%s236 + $0x40] sm:$0xf] %v751
      %816 = vst [vmem:[%s236 + $0x44] sm:$0xf] %v752
      %817 = vst [vmem:[%s236 + $0x48] sm:$0xf] %v753
      %818 = vst [vmem:[%s236 + $0x4c] sm:$0xf] %v754
      %819 = vst [vmem:[%s236 + $0x50] sm:$0xf] %v755
      %820 = vst [vmem:[%s236 + $0x54] sm:$0xf] %v756
      %821 = vst [vmem:[%s236 + $0x58] sm:$0xf] %v757
      %822 = vst [vmem:[%s236 + $0x5c] sm:$0xf] %v758
      %823 = vst [vmem:[%s236 + $0x60] sm:$0xf] %v759
      %824 = vst [vmem:[%s236 + $0x64] sm:$0xf] %v760
      %825 = vst [vmem:[%s236 + $0x68] sm:$0xf] %v761
      %826 = vst [vmem:[%s236 + $0x6c] sm:$0xf] %v762
      %827 = vst [vmem:[%s236 + $0x70] sm:$0xf] %v763
      %828 = vst [vmem:[%s236 + $0x74] sm:$0xf] %v764
      %829 = vst [vmem:[%s236 + $0x78] sm:$0xf] %v765
      %830 = vst [vmem:[%s236 + $0x7c] sm:$0xf] %v766
      %s831 = smul.u32 32, %s19
      %p832 = scmp.lt.s32.totalorder %s831, 255
      %s833 = scalar_select %p832, %s831, 255
      %p834 = scmp.lt.s32.totalorder %s20, 0
      %s835 = scalar_select %p834, %s20, 0
      %s836 = sadd.s32 %s835, %s833
      %s837 = smul.addr %s836, 4
      %s838 = scalar_lea.vmem %s4, %s837
      // Predicated region
      $region37: #{generator_forward.9} parent=35 // pred_check
        %p839 = pneg %p141
      $region38: #{generator_forward.9} parent=35 // pred_check_branch
        %841 = sbr.rel (%p839) target = $region40
      $region39: #{generator_forward.9} parent=35 // pred_region
        %s842 = smul.u32 32, %s19
      $region40: #{generator_forward.9} parent=35 // pred_fallthru
        _
    $region36: #{generator_forward.9} parent=5 // pred_fallthru
      _
    %p843 = scmp.le.s32.totalorder 2, %s10
    // Predicated region
    $region41: #{generator_forward.9} parent=5 // pred_check
      %p844 = pneg %p843
    $region42: #{generator_forward.9} parent=5 // pred_check_branch
      %846 = sbr.rel (%p844) target = $region44
    $region43: #{generator_forward.9} parent=5 // pred_region
      %s847 = ssub.s32 %s10, 2
      // Predicated region
      $region45: #{generator_forward.9} parent=43 // pred_check
        %p848 = pneg %p147
      $region46: #{generator_forward.9} parent=43 // pred_check_branch
        %850 = sbr.rel (%p848) target = $region48
      $region47: #{generator_forward.9} parent=43 // pred_region
        %s851 = smul.u32 32, %s21
        %p852 = scmp.lt.s32.totalorder %s851, 255
        %s853 = scalar_select %p852, %s851, 255
        %p854 = scmp.lt.s32.totalorder %s22, 0
        %s855 = scalar_select %p854, %s22, 0
        %s856 = sadd.s32 %s855, %s853
        %s857 = smul.addr %s856, 4
        %s858 = scalar_lea.vmem %s4, %s857
      $region48: #{generator_forward.9} parent=43 // pred_fallthru
        _
    $region44: #{generator_forward.9} parent=5 // pred_fallthru
      _
  $region6: #{generator_forward.9} parent=0 // loop_footer
    %s14 = sadd.s32 1, %s10
  $region7: #{generator_forward.9} parent=0 // loop_footer_branch
    %9 = sbr.rel target = $region3
  $region8: #{generator_forward.9} parent=0 // loop_exit
    _

</llo_original>
